<compile_context>
chip_gen: v7x
topology: tpu7x:2x2x1
jax: 0.10.0
libtpu: 0.0.40
codegen_flags: <defaults>
</compile_context>

<pallas_src>
import functools

import jax
import jax.numpy as jnp
from jax.experimental import pallas as pl
from jax.experimental.pallas import tpu as pltpu


_LANE = 128  # pad the classifier output to a full lane group (lane-dense store)


# ----------------------------------------------------------------------------
# Config
# ----------------------------------------------------------------------------

class ViTConfig:
    img_size = 32
    patch_size = 16
    in_channel = 3
    embed_dim = 64
    num_heads = 4
    depth = 2
    mlp_factor = 4
    out_head = 5


# ----------------------------------------------------------------------------
# Fused ViT forward kernel (one grid step == one batch element)
# ----------------------------------------------------------------------------

def _vit_kernel(p_ref, pw_ref, bp_ref, lng_ref, lnb_ref, qkvw_ref, projw_ref,
                projb_ref, fc1w_ref, fc1b_ref, fc2w_ref, fc2b_ref,
                hw_ref, hb_ref, o_ref, *, depth, num_heads, scale):
    f32 = jnp.float32

    def mm(a, b):
        return jnp.dot(a, b, preferred_element_type=f32)

    def layernorm(z, g, bias):
        m = jnp.mean(z, axis=-1, keepdims=True)
        v = jnp.mean((z - m) ** 2, axis=-1, keepdims=True)
        return (z - m) * jax.lax.rsqrt(v + 1e-5) * g + bias

    def gelu(z):  # exact erf-based GELU (torch.nn.GELU default)
        return 0.5 * z * (1.0 + jax.lax.erf(z * (2.0 ** -0.5)))

    # --- patch embedding -----------------------------------------------------
    # p_ref row 0 is an all-zero "cls" patch; bp_ref folds conv bias + cls token
    # + positional embedding into a single additive constant.
    x = mm(p_ref[0].astype(f32), pw_ref[...].astype(f32)) + bp_ref[...].astype(f32)
    N, D = x.shape
    hd = D // num_heads

    # TODO(synk): pos_dropout / atten_drop / proj_drop / mlp drop are identity
    # (p=0.0 defaults) and therefore omitted.

    # --- transformer encoder blocks (unrolled, weights indexed by depth) ------
    for d in range(depth):
        g = lng_ref[d].astype(f32)       # (1, D)  single LN instance per block
        lb = lnb_ref[d].astype(f32)

        # x = norm(x); x = x + MSA(x)   (residual on the normalized activations,
        # exactly as in the reference Encoder_Block.forward)
        xn = layernorm(x, g, lb)

        attn = jnp.zeros((N, D), f32)
        for h in range(num_heads):
            wq = qkvw_ref[(d * 3 + 0) * num_heads + h].astype(f32)  # (D, hd)
            wk = qkvw_ref[(d * 3 + 1) * num_heads + h].astype(f32)
            wv = qkvw_ref[(d * 3 + 2) * num_heads + h].astype(f32)
            q = mm(xn, wq)                                          # (N, hd)
            k = mm(xn, wk)
            v = mm(xn, wv)
            s = mm(q, k.T) * scale                                  # (N, N)
            s = s - jnp.max(s, axis=-1, keepdims=True)
            p = jnp.exp(s)
            p = p / jnp.sum(p, axis=-1, keepdims=True)
            oh = mm(p, v)                                           # (N, hd)
            # concat-over-heads followed by proj == sum_h oh @ proj_w[rows of h]
            attn = attn + mm(oh, projw_ref[d * num_heads + h].astype(f32))
        attn = attn + projb_ref[d].astype(f32)
        x1 = xn + attn

        # x = norm(x); x = x + MLP(x)   (same LayerNorm params reused)
        xn2 = layernorm(x1, g, lb)
        h1 = gelu(mm(xn2, fc1w_ref[d].astype(f32)) + fc1b_ref[d].astype(f32))
        h2 = mm(h1, fc2w_ref[d].astype(f32)) + fc2b_ref[d].astype(f32)
        x = xn2 + h2

    # --- classification head on the cls token (lane-dense padded output) ------
    cls = x[0:1, :]                                                 # (1, D)
    logits = mm(cls, hw_ref[...].astype(f32)) + hb_ref[...].astype(f32)
    o_ref[0] = logits.astype(o_ref.dtype)


# ----------------------------------------------------------------------------
# Parameter init / packing (packing = pure parameter reshapes, done once)
# ----------------------------------------------------------------------------

def init_params(key, cfg):
    def nrm(k, shape, std=0.02):
        return (std * jax.random.normal(k, shape)).astype(jnp.float32)

    D = cfg.embed_dim
    P = cfg.patch_size
    C = cfg.in_channel
    num_patches = (cfg.img_size // P) ** 2
    hidden = D * cfg.mlp_factor

    keys = jax.random.split(key, 8 + cfg.depth)
    params = {
        # Conv2d(kernel=stride=patch) == linear over the flattened (c, ph, pw) patch
        "patch_w": nrm(keys[0], (C * P * P, D)),
        "patch_b": nrm(keys[1], (D,)),
        # NB: the torch module initializes cls_token / pos_embed to zeros; they
        # are learnable, so small random values are used here to exercise the path.
        "cls_token": nrm(keys[2], (1, 1, D), std=0.3),
        "pos_embed": nrm(keys[3], (1, num_patches + 1, D), std=0.3),
        "head_w": nrm(keys[4], (D, cfg.out_head)),
        "head_b": nrm(keys[5], (cfg.out_head,)),
        "blocks": [],
    }
    for d in range(cfg.depth):
        bk = jax.random.split(keys[8 + d], 8)
        params["blocks"].append({
            # single LayerNorm instance per block (shared by both norms)
            "ln_g": jnp.ones((D,), jnp.float32),
            "ln_b": jnp.zeros((D,), jnp.float32),
            "qkv_w": nrm(bk[0], (D, 3 * D)),        # qkv_bias=False
            "proj_w": nrm(bk[1], (D, D)),
            "proj_b": nrm(bk[2], (D,)),
            "fc1_w": nrm(bk[3], (D, hidden)),
            "fc1_b": nrm(bk[4], (hidden,)),
            "fc2_w": nrm(bk[5], (hidden, D)),
            "fc2_b": nrm(bk[6], (D,)),
        })
    return params


def pack_params(params, cfg):
    """Reshape parameters into kernel-ready, per-head / per-depth stacked arrays."""
    D = cfg.embed_dim
    H = cfg.num_heads
    hd = D // H
    depth = cfg.depth
    hidden = D * cfg.mlp_factor
    out_head = cfg.out_head

    blocks = params["blocks"]
    stack = lambda k: jnp.stack([b[k] for b in blocks], axis=0)

    # Fold conv bias + cls token + positional embedding into one (N, D) constant.
    pos = params["pos_embed"][0]                                     # (N, D)
    bias_pos = jnp.concatenate(
        [params["cls_token"].reshape(1, D) + pos[0:1],
         params["patch_b"].reshape(1, D) + pos[1:]], axis=0)         # (N, D)

    # QKV weight columns are ordered (which∈{q,k,v}, head, hd) — same as the
    # reference reshape(B,N,3,H,hd).  Pre-split per head: (depth*3*H, D, hd).
    qkv = stack("qkv_w").reshape(depth, D, 3, H, hd)
    qkv = qkv.transpose(0, 2, 3, 1, 4).reshape(depth * 3 * H, D, hd)

    # proj weight rows are ordered (head, hd) — pre-split: (depth*H, hd, D).
    proj = stack("proj_w").reshape(depth, H, hd, D).reshape(depth * H, hd, D)

    # Pad classifier to a full 128-lane output (lane-dense store).
    head_w = jnp.pad(params["head_w"], ((0, 0), (0, _LANE - out_head)))
    head_b = jnp.pad(params["head_b"], (0, _LANE - out_head)).reshape(1, _LANE)

    return (
        params["patch_w"],
        bias_pos,
        stack("ln_g").reshape(depth, 1, D),
        stack("ln_b").reshape(depth, 1, D),
        qkv,
        proj,
        stack("proj_b").reshape(depth, 1, D),
        stack("fc1_w"),
        stack("fc1_b").reshape(depth, 1, hidden),
        stack("fc2_w"),
        stack("fc2_b").reshape(depth, 1, D),
        head_w,
        head_b,
    )


# ----------------------------------------------------------------------------
# Forward (layout glue + one pallas_call)
# ----------------------------------------------------------------------------

def _extract_patches(x, cfg):
    """NCHW image -> (B, num_patches, C*P*P) row-major (c, ph, pw) patch vectors."""
    B, C, Himg, Wimg = x.shape
    P = cfg.patch_size
    nH, nW = Himg // P, Wimg // P
    p = x.reshape(B, C, nH, P, nW, P).transpose(0, 2, 4, 1, 3, 5)
    return p.reshape(B, nH * nW, C * P * P)


def vit_forward(x, packed, cfg):
    B, C, Himg, Wimg = x.shape
    assert Himg == Wimg and C == 3
    D = cfg.embed_dim
    H = cfg.num_heads
    hd = D // H
    depth = cfg.depth
    hidden = D * cfg.mlp_factor

    # Patch extraction is pure layout plumbing; prepend an all-zero "patch" row
    # for the cls slot so the kernel produces all N token rows in one matmul.
    patches = _extract_patches(x, cfg)                       # (B, nP, CPP)
    CPP = patches.shape[-1]
    patches = jnp.concatenate(
        [jnp.zeros((B, 1, CPP), patches.dtype), patches], axis=1)  # (B, N, CPP)
    N = patches.shape[1]

    (patch_w, bias_pos, ln_g, ln_b, qkv_w, proj_w, proj_b,
     fc1_w, fc1_b, fc2_w, fc2_b, head_w, head_b) = packed

    kernel = functools.partial(_vit_kernel, depth=depth, num_heads=H,
                               scale=hd ** (-0.5))

    out = pl.pallas_call(
        kernel,
        grid=(B,),
        out_shape=jax.ShapeDtypeStruct((B, 1, _LANE), jnp.float32),
        in_specs=[
            pl.BlockSpec((1, N, CPP), lambda b: (b, 0, 0)),           # patches
            pl.BlockSpec((CPP, D), lambda b: (0, 0)),                 # patch_w
            pl.BlockSpec((N, D), lambda b: (0, 0)),                   # bias_pos
            pl.BlockSpec((depth, 1, D), lambda b: (0, 0, 0)),         # ln_g
            pl.BlockSpec((depth, 1, D), lambda b: (0, 0, 0)),         # ln_b
            pl.BlockSpec((depth * 3 * H, D, hd), lambda b: (0, 0, 0)),  # qkv per head
            pl.BlockSpec((depth * H, hd, D), lambda b: (0, 0, 0)),    # proj per head
            pl.BlockSpec((depth, 1, D), lambda b: (0, 0, 0)),         # proj_b
            pl.BlockSpec((depth, D, hidden), lambda b: (0, 0, 0)),    # fc1_w
            pl.BlockSpec((depth, 1, hidden), lambda b: (0, 0, 0)),    # fc1_b
            pl.BlockSpec((depth, hidden, D), lambda b: (0, 0, 0)),    # fc2_w
            pl.BlockSpec((depth, 1, D), lambda b: (0, 0, 0)),         # fc2_b
            pl.BlockSpec((D, _LANE), lambda b: (0, 0)),               # head_w (padded)
            pl.BlockSpec((1, _LANE), lambda b: (0, 0)),               # head_b (padded)
        ],
        out_specs=pl.BlockSpec((1, 1, _LANE), lambda b: (b, 0, 0)),
        compiler_params=pltpu.CompilerParams(
            dimension_semantics=("parallel",)),
    )(patches, patch_w, bias_pos, ln_g, ln_b, qkv_w, proj_w, proj_b,
      fc1_w, fc1_b, fc2_w, fc2_b, head_w, head_b)

    return out.reshape(B, _LANE)[:, :cfg.out_head]


# ----------------------------------------------------------------------------
# Pure-JAX reference (mirrors the PyTorch module) for a correctness check
# ----------------------------------------------------------------------------

def vit_forward_ref(x, params, cfg):
    B = x.shape[0]
    D = cfg.embed_dim
    H = cfg.num_heads
    hd = D // H
    scale = hd ** (-0.5)

    patches = _extract_patches(x, cfg)
    tok = patches @ params["patch_w"] + params["patch_b"]
    cls = jnp.broadcast_to(params["cls_token"], (B, 1, D))
    h = jnp.concatenate([cls, tok], axis=1) + params["pos_embed"]

    def ln(z, g, b):
        m = z.mean(-1, keepdims=True)
        v = ((z - m) ** 2).mean(-1, keepdims=True)
        return (z - m) * jax.lax.rsqrt(v + 1e-5) * g + b

    for blk in params["blocks"]:
        z = ln(h, blk["ln_g"], blk["ln_b"])
        qkv = (z @ blk["qkv_w"]).reshape(B, -1, 3, H, hd).transpose(2, 0, 3, 1, 4)
        q, k, v = qkv[0], qkv[1], qkv[2]
        s = jnp.einsum("bhnd,bhmd->bhnm", q, k) * scale
        p = jax.nn.softmax(s, axis=-1)
        a = jnp.einsum("bhnm,bhmd->bhnd", p, v).transpose(0, 2, 1, 3).reshape(B, -1, D)
        a = a @ blk["proj_w"] + blk["proj_b"]
        x1 = z + a
        z2 = ln(x1, blk["ln_g"], blk["ln_b"])
        m1 = z2 @ blk["fc1_w"] + blk["fc1_b"]
        m1 = 0.5 * m1 * (1.0 + jax.lax.erf(m1 * (2.0 ** -0.5)))
        h = z2 + (m1 @ blk["fc2_w"] + blk["fc2_b"])
    return h[:, 0] @ params["head_w"] + params["head_b"]


# ----------------------------------------------------------------------------
# Driver
# ----------------------------------------------------------------------------

if __name__ == "__main__":
    cfg = ViTConfig()
    key = jax.random.PRNGKey(0)
    k_params, k_input = jax.random.split(key)

    params = init_params(k_params, cfg)
    packed = pack_params(params, cfg)
    x = jax.random.normal(
        k_input, (2, cfg.in_channel, cfg.img_size, cfg.img_size),
        dtype=jnp.float32)

    fwd = jax.jit(lambda xx, pk: vit_forward(xx, pk, cfg))
    logits = fwd(x, packed)
    logits = jax.block_until_ready(logits)
    assert logits.shape == (2, cfg.out_head)

    ref = vit_forward_ref(x, params, cfg)
    assert jnp.allclose(logits, ref, atol=2e-2, rtol=2e-2)

    print("KERNEL_OK")
</pallas_src>

<mosaic_0001>
module attributes {stable_mosaic.version = 11 : i64} {
  func.func @_vit_kernel(%arg0: i32, %arg1: memref<1x5x768xf32, #tpu.memory_space<vmem>>, %arg2: memref<768x64xf32, #tpu.memory_space<vmem>>, %arg3: memref<5x64xf32, #tpu.memory_space<vmem>>, %arg4: memref<2x1x64xf32, #tpu.memory_space<vmem>>, %arg5: memref<2x1x64xf32, #tpu.memory_space<vmem>>, %arg6: memref<24x64x16xf32, #tpu.memory_space<vmem>>, %arg7: memref<8x16x64xf32, #tpu.memory_space<vmem>>, %arg8: memref<2x1x64xf32, #tpu.memory_space<vmem>>, %arg9: memref<2x64x256xf32, #tpu.memory_space<vmem>>, %arg10: memref<2x1x256xf32, #tpu.memory_space<vmem>>, %arg11: memref<2x256x64xf32, #tpu.memory_space<vmem>>, %arg12: memref<2x1x64xf32, #tpu.memory_space<vmem>>, %arg13: memref<64x128xf32, #tpu.memory_space<vmem>>, %arg14: memref<1x128xf32, #tpu.memory_space<vmem>>, %arg15: memref<1x1x128xf32, #tpu.memory_space<vmem>>) attributes {dimension_semantics = [#tpu.dimension_semantics<parallel>], iteration_bounds = array<i64: 2>, scalar_prefetch = 0 : i64, scratch_operands = 0 : i64, tpu.core_type = #tpu.core_type<tc>, window_params = [{transform_indices = @transform_0, window_bounds = array<i64: 1, 5, 768>}, {pipeline_mode = #tpu.pipeline_mode<synchronous>, transform_indices = @transform_1, window_bounds = array<i64: 768, 64>}, {pipeline_mode = #tpu.pipeline_mode<synchronous>, transform_indices = @transform_2, window_bounds = array<i64: 5, 64>}, {pipeline_mode = #tpu.pipeline_mode<synchronous>, transform_indices = @transform_3, window_bounds = array<i64: 2, 1, 64>}, {pipeline_mode = #tpu.pipeline_mode<synchronous>, transform_indices = @transform_4, window_bounds = array<i64: 2, 1, 64>}, {pipeline_mode = #tpu.pipeline_mode<synchronous>, transform_indices = @transform_5, window_bounds = array<i64: 24, 64, 16>}, {pipeline_mode = #tpu.pipeline_mode<synchronous>, transform_indices = @transform_6, window_bounds = array<i64: 8, 16, 64>}, {pipeline_mode = #tpu.pipeline_mode<synchronous>, transform_indices = @transform_7, window_bounds = array<i64: 2, 1, 64>}, {pipeline_mode = #tpu.pipeline_mode<synchronous>, transform_indices = @transform_8, window_bounds = array<i64: 2, 64, 256>}, {pipeline_mode = #tpu.pipeline_mode<synchronous>, transform_indices = @transform_9, window_bounds = array<i64: 2, 1, 256>}, {pipeline_mode = #tpu.pipeline_mode<synchronous>, transform_indices = @transform_10, window_bounds = array<i64: 2, 256, 64>}, {pipeline_mode = #tpu.pipeline_mode<synchronous>, transform_indices = @transform_11, window_bounds = array<i64: 2, 1, 64>}, {pipeline_mode = #tpu.pipeline_mode<synchronous>, transform_indices = @transform_12, window_bounds = array<i64: 64, 128>}, {pipeline_mode = #tpu.pipeline_mode<synchronous>, transform_indices = @transform_13, window_bounds = array<i64: 1, 128>}, {transform_indices = @transform_14, window_bounds = array<i64: 1, 1, 128>}]} {
    %c0 = arith.constant 0 : index
    %c0_0 = arith.constant 0 : index
    %c0_1 = arith.constant 0 : index
    %0 = vector.load %arg1[%c0, %c0_0, %c0_1] : memref<1x5x768xf32, #tpu.memory_space<vmem>>, vector<1x5x768xf32>
    %1 = vector.shape_cast %0 : vector<1x5x768xf32> to vector<5x768xf32>
    %c0_2 = arith.constant 0 : index
    %c0_3 = arith.constant 0 : index
    %2 = vector.load %arg2[%c0_2, %c0_3] : memref<768x64xf32, #tpu.memory_space<vmem>>, vector<768x64xf32>
    %cst = arith.constant dense<0.000000e+00> : vector<5x64xf32>
    %3 = tpu.matmul %1, %2, %cst {dimension_numbers = #tpu.dot_dimension_numbers<[1], [0], [0], [1], [0, 0, 1, 1], [], []>} : vector<5x768xf32>, vector<768x64xf32>, vector<5x64xf32> -> vector<5x64xf32>
    %c0_4 = arith.constant 0 : index
    %c0_5 = arith.constant 0 : index
    %4 = vector.load %arg3[%c0_4, %c0_5] : memref<5x64xf32, #tpu.memory_space<vmem>>, vector<5x64xf32>
    %5 = arith.addf %3, %4 : vector<5x64xf32>
    %c0_6 = arith.constant 0 : index
    %c0_7 = arith.constant 0 : index
    %c0_8 = arith.constant 0 : index
    %6 = vector.load %arg4[%c0_6, %c0_7, %c0_8] : memref<2x1x64xf32, #tpu.memory_space<vmem>>, vector<1x1x64xf32>
    %7 = vector.shape_cast %6 : vector<1x1x64xf32> to vector<1x64xf32>
    %c0_9 = arith.constant 0 : index
    %c0_10 = arith.constant 0 : index
    %c0_11 = arith.constant 0 : index
    %8 = vector.load %arg5[%c0_9, %c0_10, %c0_11] : memref<2x1x64xf32, #tpu.memory_space<vmem>>, vector<1x1x64xf32>
    %9 = vector.shape_cast %8 : vector<1x1x64xf32> to vector<1x64xf32>
    %cst_12 = arith.constant dense<0.000000e+00> : vector<5xf32>
    %10 = vector.multi_reduction <add>, %5, %cst_12 [1] : vector<5x64xf32> to vector<5xf32>
    %11 = vector.shape_cast %10 : vector<5xf32> to vector<5x1xf32>
    %cst_13 = arith.constant 6.400000e+01 : f32
    %12 = vector.broadcast %cst_13 : f32 to vector<5x1xf32>
    %13 = arith.divf %11, %12 : vector<5x1xf32>
    %14 = vector.broadcast %13 : vector<5x1xf32> to vector<5x64xf32>
    %15 = arith.subf %5, %14 : vector<5x64xf32>
    %16 = arith.mulf %15, %15 : vector<5x64xf32>
    %cst_14 = arith.constant dense<0.000000e+00> : vector<5xf32>
    %17 = vector.multi_reduction <add>, %16, %cst_14 [1] : vector<5x64xf32> to vector<5xf32>
    %18 = vector.shape_cast %17 : vector<5xf32> to vector<5x1xf32>
    %cst_15 = arith.constant 6.400000e+01 : f32
    %19 = vector.broadcast %cst_15 : f32 to vector<5x1xf32>
    %20 = arith.divf %18, %19 : vector<5x1xf32>
    %21 = vector.broadcast %13 : vector<5x1xf32> to vector<5x64xf32>
    %22 = arith.subf %5, %21 : vector<5x64xf32>
    %cst_16 = arith.constant 9.99999974E-6 : f32
    %23 = vector.broadcast %cst_16 : f32 to vector<5x1xf32>
    %24 = arith.addf %20, %23 : vector<5x1xf32>
    %25 = math.rsqrt %24 : vector<5x1xf32>
    %26 = vector.broadcast %25 : vector<5x1xf32> to vector<5x64xf32>
    %27 = arith.mulf %22, %26 : vector<5x64xf32>
    %28 = vector.broadcast %7 : vector<1x64xf32> to vector<5x64xf32>
    %29 = arith.mulf %27, %28 : vector<5x64xf32>
    %30 = vector.broadcast %9 : vector<1x64xf32> to vector<5x64xf32>
    %31 = arith.addf %29, %30 : vector<5x64xf32>
    %cst_17 = arith.constant 0.000000e+00 : f32
    %32 = vector.broadcast %cst_17 : f32 to vector<5x64xf32>
    %c0_18 = arith.constant 0 : index
    %c0_19 = arith.constant 0 : index
    %c0_20 = arith.constant 0 : index
    %33 = vector.load %arg6[%c0_18, %c0_19, %c0_20] : memref<24x64x16xf32, #tpu.memory_space<vmem>>, vector<1x64x16xf32>
    %34 = vector.shape_cast %33 : vector<1x64x16xf32> to vector<64x16xf32>
    %c4 = arith.constant 4 : index
    %c0_21 = arith.constant 0 : index
    %c0_22 = arith.constant 0 : index
    %35 = vector.load %arg6[%c4, %c0_21, %c0_22] : memref<24x64x16xf32, #tpu.memory_space<vmem>>, vector<1x64x16xf32>
    %36 = vector.shape_cast %35 : vector<1x64x16xf32> to vector<64x16xf32>
    %c8 = arith.constant 8 : index
    %c0_23 = arith.constant 0 : index
    %c0_24 = arith.constant 0 : index
    %37 = vector.load %arg6[%c8, %c0_23, %c0_24] : memref<24x64x16xf32, #tpu.memory_space<vmem>>, vector<1x64x16xf32>
    %38 = vector.shape_cast %37 : vector<1x64x16xf32> to vector<64x16xf32>
    %cst_25 = arith.constant dense<0.000000e+00> : vector<5x16xf32>
    %39 = tpu.matmul %31, %34, %cst_25 {dimension_numbers = #tpu.dot_dimension_numbers<[1], [0], [0], [1], [0, 0, 1, 1], [], []>} : vector<5x64xf32>, vector<64x16xf32>, vector<5x16xf32> -> vector<5x16xf32>
    %cst_26 = arith.constant dense<0.000000e+00> : vector<5x16xf32>
    %40 = tpu.matmul %31, %36, %cst_26 {dimension_numbers = #tpu.dot_dimension_numbers<[1], [0], [0], [1], [0, 0, 1, 1], [], []>} : vector<5x64xf32>, vector<64x16xf32>, vector<5x16xf32> -> vector<5x16xf32>
    %cst_27 = arith.constant dense<0.000000e+00> : vector<5x16xf32>
    %41 = tpu.matmul %31, %38, %cst_27 {dimension_numbers = #tpu.dot_dimension_numbers<[1], [0], [0], [1], [0, 0, 1, 1], [], []>} : vector<5x64xf32>, vector<64x16xf32>, vector<5x16xf32> -> vector<5x16xf32>
    %42 = tpu.transpose %40, [1, 0] : vector<5x16xf32> -> vector<16x5xf32>
    %cst_28 = arith.constant dense<0.000000e+00> : vector<5x5xf32>
    %43 = tpu.matmul %39, %42, %cst_28 {dimension_numbers = #tpu.dot_dimension_numbers<[1], [0], [0], [1], [0, 0, 1, 1], [], []>} : vector<5x16xf32>, vector<16x5xf32>, vector<5x5xf32> -> vector<5x5xf32>
    %cst_29 = arith.constant 2.500000e-01 : f32
    %44 = vector.broadcast %cst_29 : f32 to vector<5x5xf32>
    %45 = arith.mulf %43, %44 : vector<5x5xf32>
    %cst_30 = arith.constant dense<0xFF800000> : vector<5xf32>
    %46 = vector.multi_reduction <maximumf>, %45, %cst_30 [1] : vector<5x5xf32> to vector<5xf32>
    %47 = vector.shape_cast %46 : vector<5xf32> to vector<5x1xf32>
    %48 = vector.broadcast %47 : vector<5x1xf32> to vector<5x5xf32>
    %49 = arith.subf %45, %48 : vector<5x5xf32>
    %50 = math.exp %49 : vector<5x5xf32>
    %cst_31 = arith.constant dense<0.000000e+00> : vector<5xf32>
    %51 = vector.multi_reduction <add>, %50, %cst_31 [1] : vector<5x5xf32> to vector<5xf32>
    %52 = vector.shape_cast %51 : vector<5xf32> to vector<5x1xf32>
    %53 = vector.broadcast %52 : vector<5x1xf32> to vector<5x5xf32>
    %54 = arith.divf %50, %53 : vector<5x5xf32>
    %cst_32 = arith.constant dense<0.000000e+00> : vector<5x16xf32>
    %55 = tpu.matmul %54, %41, %cst_32 {dimension_numbers = #tpu.dot_dimension_numbers<[1], [0], [0], [1], [0, 0, 1, 1], [], []>} : vector<5x5xf32>, vector<5x16xf32>, vector<5x16xf32> -> vector<5x16xf32>
    %c0_33 = arith.constant 0 : index
    %c0_34 = arith.constant 0 : index
    %c0_35 = arith.constant 0 : index
    %56 = vector.load %arg7[%c0_33, %c0_34, %c0_35] : memref<8x16x64xf32, #tpu.memory_space<vmem>>, vector<1x16x64xf32>
    %57 = vector.shape_cast %56 : vector<1x16x64xf32> to vector<16x64xf32>
    %cst_36 = arith.constant dense<0.000000e+00> : vector<5x64xf32>
    %58 = tpu.matmul %55, %57, %cst_36 {dimension_numbers = #tpu.dot_dimension_numbers<[1], [0], [0], [1], [0, 0, 1, 1], [], []>} : vector<5x16xf32>, vector<16x64xf32>, vector<5x64xf32> -> vector<5x64xf32>
    %59 = arith.addf %32, %58 : vector<5x64xf32>
    %c1 = arith.constant 1 : index
    %c0_37 = arith.constant 0 : index
    %c0_38 = arith.constant 0 : index
    %60 = vector.load %arg6[%c1, %c0_37, %c0_38] : memref<24x64x16xf32, #tpu.memory_space<vmem>>, vector<1x64x16xf32>
    %61 = vector.shape_cast %60 : vector<1x64x16xf32> to vector<64x16xf32>
    %c5 = arith.constant 5 : index
    %c0_39 = arith.constant 0 : index
    %c0_40 = arith.constant 0 : index
    %62 = vector.load %arg6[%c5, %c0_39, %c0_40] : memref<24x64x16xf32, #tpu.memory_space<vmem>>, vector<1x64x16xf32>
    %63 = vector.shape_cast %62 : vector<1x64x16xf32> to vector<64x16xf32>
    %c9 = arith.constant 9 : index
    %c0_41 = arith.constant 0 : index
    %c0_42 = arith.constant 0 : index
    %64 = vector.load %arg6[%c9, %c0_41, %c0_42] : memref<24x64x16xf32, #tpu.memory_space<vmem>>, vector<1x64x16xf32>
    %65 = vector.shape_cast %64 : vector<1x64x16xf32> to vector<64x16xf32>
    %cst_43 = arith.constant dense<0.000000e+00> : vector<5x16xf32>
    %66 = tpu.matmul %31, %61, %cst_43 {dimension_numbers = #tpu.dot_dimension_numbers<[1], [0], [0], [1], [0, 0, 1, 1], [], []>} : vector<5x64xf32>, vector<64x16xf32>, vector<5x16xf32> -> vector<5x16xf32>
    %cst_44 = arith.constant dense<0.000000e+00> : vector<5x16xf32>
    %67 = tpu.matmul %31, %63, %cst_44 {dimension_numbers = #tpu.dot_dimension_numbers<[1], [0], [0], [1], [0, 0, 1, 1], [], []>} : vector<5x64xf32>, vector<64x16xf32>, vector<5x16xf32> -> vector<5x16xf32>
    %cst_45 = arith.constant dense<0.000000e+00> : vector<5x16xf32>
    %68 = tpu.matmul %31, %65, %cst_45 {dimension_numbers = #tpu.dot_dimension_numbers<[1], [0], [0], [1], [0, 0, 1, 1], [], []>} : vector<5x64xf32>, vector<64x16xf32>, vector<5x16xf32> -> vector<5x16xf32>
    %69 = tpu.transpose %67, [1, 0] : vector<5x16xf32> -> vector<16x5xf32>
    %cst_46 = arith.constant dense<0.000000e+00> : vector<5x5xf32>
    %70 = tpu.matmul %66, %69, %cst_46 {dimension_numbers = #tpu.dot_dimension_numbers<[1], [0], [0], [1], [0, 0, 1, 1], [], []>} : vector<5x16xf32>, vector<16x5xf32>, vector<5x5xf32> -> vector<5x5xf32>
    %cst_47 = arith.constant 2.500000e-01 : f32
    %71 = vector.broadcast %cst_47 : f32 to vector<5x5xf32>
    %72 = arith.mulf %70, %71 : vector<5x5xf32>
    %cst_48 = arith.constant dense<0xFF800000> : vector<5xf32>
    %73 = vector.multi_reduction <maximumf>, %72, %cst_48 [1] : vector<5x5xf32> to vector<5xf32>
    %74 = vector.shape_cast %73 : vector<5xf32> to vector<5x1xf32>
    %75 = vector.broadcast %74 : vector<5x1xf32> to vector<5x5xf32>
    %76 = arith.subf %72, %75 : vector<5x5xf32>
    %77 = math.exp %76 : vector<5x5xf32>
    %cst_49 = arith.constant dense<0.000000e+00> : vector<5xf32>
    %78 = vector.multi_reduction <add>, %77, %cst_49 [1] : vector<5x5xf32> to vector<5xf32>
    %79 = vector.shape_cast %78 : vector<5xf32> to vector<5x1xf32>
    %80 = vector.broadcast %79 : vector<5x1xf32> to vector<5x5xf32>
    %81 = arith.divf %77, %80 : vector<5x5xf32>
    %cst_50 = arith.constant dense<0.000000e+00> : vector<5x16xf32>
    %82 = tpu.matmul %81, %68, %cst_50 {dimension_numbers = #tpu.dot_dimension_numbers<[1], [0], [0], [1], [0, 0, 1, 1], [], []>} : vector<5x5xf32>, vector<5x16xf32>, vector<5x16xf32> -> vector<5x16xf32>
    %c1_51 = arith.constant 1 : index
    %c0_52 = arith.constant 0 : index
    %c0_53 = arith.constant 0 : index
    %83 = vector.load %arg7[%c1_51, %c0_52, %c0_53] : memref<8x16x64xf32, #tpu.memory_space<vmem>>, vector<1x16x64xf32>
    %84 = vector.shape_cast %83 : vector<1x16x64xf32> to vector<16x64xf32>
    %cst_54 = arith.constant dense<0.000000e+00> : vector<5x64xf32>
    %85 = tpu.matmul %82, %84, %cst_54 {dimension_numbers = #tpu.dot_dimension_numbers<[1], [0], [0], [1], [0, 0, 1, 1], [], []>} : vector<5x16xf32>, vector<16x64xf32>, vector<5x64xf32> -> vector<5x64xf32>
    %86 = arith.addf %59, %85 : vector<5x64xf32>
    %c2 = arith.constant 2 : index
    %c0_55 = arith.constant 0 : index
    %c0_56 = arith.constant 0 : index
    %87 = vector.load %arg6[%c2, %c0_55, %c0_56] : memref<24x64x16xf32, #tpu.memory_space<vmem>>, vector<1x64x16xf32>
    %88 = vector.shape_cast %87 : vector<1x64x16xf32> to vector<64x16xf32>
    %c6 = arith.constant 6 : index
    %c0_57 = arith.constant 0 : index
    %c0_58 = arith.constant 0 : index
    %89 = vector.load %arg6[%c6, %c0_57, %c0_58] : memref<24x64x16xf32, #tpu.memory_space<vmem>>, vector<1x64x16xf32>
    %90 = vector.shape_cast %89 : vector<1x64x16xf32> to vector<64x16xf32>
    %c10 = arith.constant 10 : index
    %c0_59 = arith.constant 0 : index
    %c0_60 = arith.constant 0 : index
    %91 = vector.load %arg6[%c10, %c0_59, %c0_60] : memref<24x64x16xf32, #tpu.memory_space<vmem>>, vector<1x64x16xf32>
    %92 = vector.shape_cast %91 : vector<1x64x16xf32> to vector<64x16xf32>
    %cst_61 = arith.constant dense<0.000000e+00> : vector<5x16xf32>
    %93 = tpu.matmul %31, %88, %cst_61 {dimension_numbers = #tpu.dot_dimension_numbers<[1], [0], [0], [1], [0, 0, 1, 1], [], []>} : vector<5x64xf32>, vector<64x16xf32>, vector<5x16xf32> -> vector<5x16xf32>
    %cst_62 = arith.constant dense<0.000000e+00> : vector<5x16xf32>
    %94 = tpu.matmul %31, %90, %cst_62 {dimension_numbers = #tpu.dot_dimension_numbers<[1], [0], [0], [1], [0, 0, 1, 1], [], []>} : vector<5x64xf32>, vector<64x16xf32>, vector<5x16xf32> -> vector<5x16xf32>
    %cst_63 = arith.constant dense<0.000000e+00> : vector<5x16xf32>
    %95 = tpu.matmul %31, %92, %cst_63 {dimension_numbers = #tpu.dot_dimension_numbers<[1], [0], [0], [1], [0, 0, 1, 1], [], []>} : vector<5x64xf32>, vector<64x16xf32>, vector<5x16xf32> -> vector<5x16xf32>
    %96 = tpu.transpose %94, [1, 0] : vector<5x16xf32> -> vector<16x5xf32>
    %cst_64 = arith.constant dense<0.000000e+00> : vector<5x5xf32>
    %97 = tpu.matmul %93, %96, %cst_64 {dimension_numbers = #tpu.dot_dimension_numbers<[1], [0], [0], [1], [0, 0, 1, 1], [], []>} : vector<5x16xf32>, vector<16x5xf32>, vector<5x5xf32> -> vector<5x5xf32>
    %cst_65 = arith.constant 2.500000e-01 : f32
    %98 = vector.broadcast %cst_65 : f32 to vector<5x5xf32>
    %99 = arith.mulf %97, %98 : vector<5x5xf32>
    %cst_66 = arith.constant dense<0xFF800000> : vector<5xf32>
    %100 = vector.multi_reduction <maximumf>, %99, %cst_66 [1] : vector<5x5xf32> to vector<5xf32>
    %101 = vector.shape_cast %100 : vector<5xf32> to vector<5x1xf32>
    %102 = vector.broadcast %101 : vector<5x1xf32> to vector<5x5xf32>
    %103 = arith.subf %99, %102 : vector<5x5xf32>
    %104 = math.exp %103 : vector<5x5xf32>
    %cst_67 = arith.constant dense<0.000000e+00> : vector<5xf32>
    %105 = vector.multi_reduction <add>, %104, %cst_67 [1] : vector<5x5xf32> to vector<5xf32>
    %106 = vector.shape_cast %105 : vector<5xf32> to vector<5x1xf32>
    %107 = vector.broadcast %106 : vector<5x1xf32> to vector<5x5xf32>
    %108 = arith.divf %104, %107 : vector<5x5xf32>
    %cst_68 = arith.constant dense<0.000000e+00> : vector<5x16xf32>
    %109 = tpu.matmul %108, %95, %cst_68 {dimension_numbers = #tpu.dot_dimension_numbers<[1], [0], [0], [1], [0, 0, 1, 1], [], []>} : vector<5x5xf32>, vector<5x16xf32>, vector<5x16xf32> -> vector<5x16xf32>
    %c2_69 = arith.constant 2 : index
    %c0_70 = arith.constant 0 : index
    %c0_71 = arith.constant 0 : index
    %110 = vector.load %arg7[%c2_69, %c0_70, %c0_71] : memref<8x16x64xf32, #tpu.memory_space<vmem>>, vector<1x16x64xf32>
    %111 = vector.shape_cast %110 : vector<1x16x64xf32> to vector<16x64xf32>
    %cst_72 = arith.constant dense<0.000000e+00> : vector<5x64xf32>
    %112 = tpu.matmul %109, %111, %cst_72 {dimension_numbers = #tpu.dot_dimension_numbers<[1], [0], [0], [1], [0, 0, 1, 1], [], []>} : vector<5x16xf32>, vector<16x64xf32>, vector<5x64xf32> -> vector<5x64xf32>
    %113 = arith.addf %86, %112 : vector<5x64xf32>
    %c3 = arith.constant 3 : index
    %c0_73 = arith.constant 0 : index
    %c0_74 = arith.constant 0 : index
    %114 = vector.load %arg6[%c3, %c0_73, %c0_74] : memref<24x64x16xf32, #tpu.memory_space<vmem>>, vector<1x64x16xf32>
    %115 = vector.shape_cast %114 : vector<1x64x16xf32> to vector<64x16xf32>
    %c7 = arith.constant 7 : index
    %c0_75 = arith.constant 0 : index
    %c0_76 = arith.constant 0 : index
    %116 = vector.load %arg6[%c7, %c0_75, %c0_76] : memref<24x64x16xf32, #tpu.memory_space<vmem>>, vector<1x64x16xf32>
    %117 = vector.shape_cast %116 : vector<1x64x16xf32> to vector<64x16xf32>
    %c11 = arith.constant 11 : index
    %c0_77 = arith.constant 0 : index
    %c0_78 = arith.constant 0 : index
    %118 = vector.load %arg6[%c11, %c0_77, %c0_78] : memref<24x64x16xf32, #tpu.memory_space<vmem>>, vector<1x64x16xf32>
    %119 = vector.shape_cast %118 : vector<1x64x16xf32> to vector<64x16xf32>
    %cst_79 = arith.constant dense<0.000000e+00> : vector<5x16xf32>
    %120 = tpu.matmul %31, %115, %cst_79 {dimension_numbers = #tpu.dot_dimension_numbers<[1], [0], [0], [1], [0, 0, 1, 1], [], []>} : vector<5x64xf32>, vector<64x16xf32>, vector<5x16xf32> -> vector<5x16xf32>
    %cst_80 = arith.constant dense<0.000000e+00> : vector<5x16xf32>
    %121 = tpu.matmul %31, %117, %cst_80 {dimension_numbers = #tpu.dot_dimension_numbers<[1], [0], [0], [1], [0, 0, 1, 1], [], []>} : vector<5x64xf32>, vector<64x16xf32>, vector<5x16xf32> -> vector<5x16xf32>
    %cst_81 = arith.constant dense<0.000000e+00> : vector<5x16xf32>
    %122 = tpu.matmul %31, %119, %cst_81 {dimension_numbers = #tpu.dot_dimension_numbers<[1], [0], [0], [1], [0, 0, 1, 1], [], []>} : vector<5x64xf32>, vector<64x16xf32>, vector<5x16xf32> -> vector<5x16xf32>
    %123 = tpu.transpose %121, [1, 0] : vector<5x16xf32> -> vector<16x5xf32>
    %cst_82 = arith.constant dense<0.000000e+00> : vector<5x5xf32>
    %124 = tpu.matmul %120, %123, %cst_82 {dimension_numbers = #tpu.dot_dimension_numbers<[1], [0], [0], [1], [0, 0, 1, 1], [], []>} : vector<5x16xf32>, vector<16x5xf32>, vector<5x5xf32> -> vector<5x5xf32>
    %cst_83 = arith.constant 2.500000e-01 : f32
    %125 = vector.broadcast %cst_83 : f32 to vector<5x5xf32>
    %126 = arith.mulf %124, %125 : vector<5x5xf32>
    %cst_84 = arith.constant dense<0xFF800000> : vector<5xf32>
    %127 = vector.multi_reduction <maximumf>, %126, %cst_84 [1] : vector<5x5xf32> to vector<5xf32>
    %128 = vector.shape_cast %127 : vector<5xf32> to vector<5x1xf32>
    %129 = vector.broadcast %128 : vector<5x1xf32> to vector<5x5xf32>
    %130 = arith.subf %126, %129 : vector<5x5xf32>
    %131 = math.exp %130 : vector<5x5xf32>
    %cst_85 = arith.constant dense<0.000000e+00> : vector<5xf32>
    %132 = vector.multi_reduction <add>, %131, %cst_85 [1] : vector<5x5xf32> to vector<5xf32>
    %133 = vector.shape_cast %132 : vector<5xf32> to vector<5x1xf32>
    %134 = vector.broadcast %133 : vector<5x1xf32> to vector<5x5xf32>
    %135 = arith.divf %131, %134 : vector<5x5xf32>
    %cst_86 = arith.constant dense<0.000000e+00> : vector<5x16xf32>
    %136 = tpu.matmul %135, %122, %cst_86 {dimension_numbers = #tpu.dot_dimension_numbers<[1], [0], [0], [1], [0, 0, 1, 1], [], []>} : vector<5x5xf32>, vector<5x16xf32>, vector<5x16xf32> -> vector<5x16xf32>
    %c3_87 = arith.constant 3 : index
    %c0_88 = arith.constant 0 : index
    %c0_89 = arith.constant 0 : index
    %137 = vector.load %arg7[%c3_87, %c0_88, %c0_89] : memref<8x16x64xf32, #tpu.memory_space<vmem>>, vector<1x16x64xf32>
    %138 = vector.shape_cast %137 : vector<1x16x64xf32> to vector<16x64xf32>
    %cst_90 = arith.constant dense<0.000000e+00> : vector<5x64xf32>
    %139 = tpu.matmul %136, %138, %cst_90 {dimension_numbers = #tpu.dot_dimension_numbers<[1], [0], [0], [1], [0, 0, 1, 1], [], []>} : vector<5x16xf32>, vector<16x64xf32>, vector<5x64xf32> -> vector<5x64xf32>
    %140 = arith.addf %113, %139 : vector<5x64xf32>
    %c0_91 = arith.constant 0 : index
    %c0_92 = arith.constant 0 : index
    %c0_93 = arith.constant 0 : index
    %141 = vector.load %arg8[%c0_91, %c0_92, %c0_93] : memref<2x1x64xf32, #tpu.memory_space<vmem>>, vector<1x1x64xf32>
    %142 = vector.shape_cast %141 : vector<1x1x64xf32> to vector<1x64xf32>
    %143 = vector.broadcast %142 : vector<1x64xf32> to vector<5x64xf32>
    %144 = arith.addf %140, %143 : vector<5x64xf32>
    %145 = arith.addf %31, %144 : vector<5x64xf32>
    %cst_94 = arith.constant dense<0.000000e+00> : vector<5xf32>
    %146 = vector.multi_reduction <add>, %145, %cst_94 [1] : vector<5x64xf32> to vector<5xf32>
    %147 = vector.shape_cast %146 : vector<5xf32> to vector<5x1xf32>
    %cst_95 = arith.constant 6.400000e+01 : f32
    %148 = vector.broadcast %cst_95 : f32 to vector<5x1xf32>
    %149 = arith.divf %147, %148 : vector<5x1xf32>
    %150 = vector.broadcast %149 : vector<5x1xf32> to vector<5x64xf32>
    %151 = arith.subf %145, %150 : vector<5x64xf32>
    %152 = arith.mulf %151, %151 : vector<5x64xf32>
    %cst_96 = arith.constant dense<0.000000e+00> : vector<5xf32>
    %153 = vector.multi_reduction <add>, %152, %cst_96 [1] : vector<5x64xf32> to vector<5xf32>
    %154 = vector.shape_cast %153 : vector<5xf32> to vector<5x1xf32>
    %cst_97 = arith.constant 6.400000e+01 : f32
    %155 = vector.broadcast %cst_97 : f32 to vector<5x1xf32>
    %156 = arith.divf %154, %155 : vector<5x1xf32>
    %157 = vector.broadcast %149 : vector<5x1xf32> to vector<5x64xf32>
    %158 = arith.subf %145, %157 : vector<5x64xf32>
    %cst_98 = arith.constant 9.99999974E-6 : f32
    %159 = vector.broadcast %cst_98 : f32 to vector<5x1xf32>
    %160 = arith.addf %156, %159 : vector<5x1xf32>
    %161 = math.rsqrt %160 : vector<5x1xf32>
    %162 = vector.broadcast %161 : vector<5x1xf32> to vector<5x64xf32>
    %163 = arith.mulf %158, %162 : vector<5x64xf32>
    %164 = vector.broadcast %7 : vector<1x64xf32> to vector<5x64xf32>
    %165 = arith.mulf %163, %164 : vector<5x64xf32>
    %166 = vector.broadcast %9 : vector<1x64xf32> to vector<5x64xf32>
    %167 = arith.addf %165, %166 : vector<5x64xf32>
    %c0_99 = arith.constant 0 : index
    %c0_100 = arith.constant 0 : index
    %c0_101 = arith.constant 0 : index
    %168 = vector.load %arg9[%c0_99, %c0_100, %c0_101] : memref<2x64x256xf32, #tpu.memory_space<vmem>>, vector<1x64x256xf32>
    %169 = vector.shape_cast %168 : vector<1x64x256xf32> to vector<64x256xf32>
    %cst_102 = arith.constant dense<0.000000e+00> : vector<5x256xf32>
    %170 = tpu.matmul %167, %169, %cst_102 {dimension_numbers = #tpu.dot_dimension_numbers<[1], [0], [0], [1], [0, 0, 1, 1], [], []>} : vector<5x64xf32>, vector<64x256xf32>, vector<5x256xf32> -> vector<5x256xf32>
    %c0_103 = arith.constant 0 : index
    %c0_104 = arith.constant 0 : index
    %c0_105 = arith.constant 0 : index
    %171 = vector.load %arg10[%c0_103, %c0_104, %c0_105] : memref<2x1x256xf32, #tpu.memory_space<vmem>>, vector<1x1x256xf32>
    %172 = vector.shape_cast %171 : vector<1x1x256xf32> to vector<1x256xf32>
    %173 = vector.broadcast %172 : vector<1x256xf32> to vector<5x256xf32>
    %174 = arith.addf %170, %173 : vector<5x256xf32>
    %cst_106 = arith.constant 5.000000e-01 : f32
    %175 = vector.broadcast %cst_106 : f32 to vector<5x256xf32>
    %176 = arith.mulf %175, %174 : vector<5x256xf32>
    %cst_107 = arith.constant 0.707106769 : f32
    %177 = vector.broadcast %cst_107 : f32 to vector<5x256xf32>
    %178 = arith.mulf %174, %177 : vector<5x256xf32>
    %179 = math.erf %178 : vector<5x256xf32>
    %cst_108 = arith.constant 1.000000e+00 : f32
    %180 = vector.broadcast %cst_108 : f32 to vector<5x256xf32>
    %181 = arith.addf %180, %179 : vector<5x256xf32>
    %182 = arith.mulf %176, %181 : vector<5x256xf32>
    %c0_109 = arith.constant 0 : index
    %c0_110 = arith.constant 0 : index
    %c0_111 = arith.constant 0 : index
    %183 = vector.load %arg11[%c0_109, %c0_110, %c0_111] : memref<2x256x64xf32, #tpu.memory_space<vmem>>, vector<1x256x64xf32>
    %184 = vector.shape_cast %183 : vector<1x256x64xf32> to vector<256x64xf32>
    %cst_112 = arith.constant dense<0.000000e+00> : vector<5x64xf32>
    %185 = tpu.matmul %182, %184, %cst_112 {dimension_numbers = #tpu.dot_dimension_numbers<[1], [0], [0], [1], [0, 0, 1, 1], [], []>} : vector<5x256xf32>, vector<256x64xf32>, vector<5x64xf32> -> vector<5x64xf32>
    %c0_113 = arith.constant 0 : index
    %c0_114 = arith.constant 0 : index
    %c0_115 = arith.constant 0 : index
    %186 = vector.load %arg12[%c0_113, %c0_114, %c0_115] : memref<2x1x64xf32, #tpu.memory_space<vmem>>, vector<1x1x64xf32>
    %187 = vector.shape_cast %186 : vector<1x1x64xf32> to vector<1x64xf32>
    %188 = vector.broadcast %187 : vector<1x64xf32> to vector<5x64xf32>
    %189 = arith.addf %185, %188 : vector<5x64xf32>
    %190 = arith.addf %167, %189 : vector<5x64xf32>
    %c1_116 = arith.constant 1 : index
    %c0_117 = arith.constant 0 : index
    %c0_118 = arith.constant 0 : index
    %191 = vector.load %arg4[%c1_116, %c0_117, %c0_118] : memref<2x1x64xf32, #tpu.memory_space<vmem>>, vector<1x1x64xf32>
    %192 = vector.shape_cast %191 : vector<1x1x64xf32> to vector<1x64xf32>
    %c1_119 = arith.constant 1 : index
    %c0_120 = arith.constant 0 : index
    %c0_121 = arith.constant 0 : index
    %193 = vector.load %arg5[%c1_119, %c0_120, %c0_121] : memref<2x1x64xf32, #tpu.memory_space<vmem>>, vector<1x1x64xf32>
    %194 = vector.shape_cast %193 : vector<1x1x64xf32> to vector<1x64xf32>
    %cst_122 = arith.constant dense<0.000000e+00> : vector<5xf32>
    %195 = vector.multi_reduction <add>, %190, %cst_122 [1] : vector<5x64xf32> to vector<5xf32>
    %196 = vector.shape_cast %195 : vector<5xf32> to vector<5x1xf32>
    %cst_123 = arith.constant 6.400000e+01 : f32
    %197 = vector.broadcast %cst_123 : f32 to vector<5x1xf32>
    %198 = arith.divf %196, %197 : vector<5x1xf32>
    %199 = vector.broadcast %198 : vector<5x1xf32> to vector<5x64xf32>
    %200 = arith.subf %190, %199 : vector<5x64xf32>
    %201 = arith.mulf %200, %200 : vector<5x64xf32>
    %cst_124 = arith.constant dense<0.000000e+00> : vector<5xf32>
    %202 = vector.multi_reduction <add>, %201, %cst_124 [1] : vector<5x64xf32> to vector<5xf32>
    %203 = vector.shape_cast %202 : vector<5xf32> to vector<5x1xf32>
    %cst_125 = arith.constant 6.400000e+01 : f32
    %204 = vector.broadcast %cst_125 : f32 to vector<5x1xf32>
    %205 = arith.divf %203, %204 : vector<5x1xf32>
    %206 = vector.broadcast %198 : vector<5x1xf32> to vector<5x64xf32>
    %207 = arith.subf %190, %206 : vector<5x64xf32>
    %cst_126 = arith.constant 9.99999974E-6 : f32
    %208 = vector.broadcast %cst_126 : f32 to vector<5x1xf32>
    %209 = arith.addf %205, %208 : vector<5x1xf32>
    %210 = math.rsqrt %209 : vector<5x1xf32>
    %211 = vector.broadcast %210 : vector<5x1xf32> to vector<5x64xf32>
    %212 = arith.mulf %207, %211 : vector<5x64xf32>
    %213 = vector.broadcast %192 : vector<1x64xf32> to vector<5x64xf32>
    %214 = arith.mulf %212, %213 : vector<5x64xf32>
    %215 = vector.broadcast %194 : vector<1x64xf32> to vector<5x64xf32>
    %216 = arith.addf %214, %215 : vector<5x64xf32>
    %cst_127 = arith.constant 0.000000e+00 : f32
    %217 = vector.broadcast %cst_127 : f32 to vector<5x64xf32>
    %c12 = arith.constant 12 : index
    %c0_128 = arith.constant 0 : index
    %c0_129 = arith.constant 0 : index
    %218 = vector.load %arg6[%c12, %c0_128, %c0_129] : memref<24x64x16xf32, #tpu.memory_space<vmem>>, vector<1x64x16xf32>
    %219 = vector.shape_cast %218 : vector<1x64x16xf32> to vector<64x16xf32>
    %c16 = arith.constant 16 : index
    %c0_130 = arith.constant 0 : index
    %c0_131 = arith.constant 0 : index
    %220 = vector.load %arg6[%c16, %c0_130, %c0_131] : memref<24x64x16xf32, #tpu.memory_space<vmem>>, vector<1x64x16xf32>
    %221 = vector.shape_cast %220 : vector<1x64x16xf32> to vector<64x16xf32>
    %c20 = arith.constant 20 : index
    %c0_132 = arith.constant 0 : index
    %c0_133 = arith.constant 0 : index
    %222 = vector.load %arg6[%c20, %c0_132, %c0_133] : memref<24x64x16xf32, #tpu.memory_space<vmem>>, vector<1x64x16xf32>
    %223 = vector.shape_cast %222 : vector<1x64x16xf32> to vector<64x16xf32>
    %cst_134 = arith.constant dense<0.000000e+00> : vector<5x16xf32>
    %224 = tpu.matmul %216, %219, %cst_134 {dimension_numbers = #tpu.dot_dimension_numbers<[1], [0], [0], [1], [0, 0, 1, 1], [], []>} : vector<5x64xf32>, vector<64x16xf32>, vector<5x16xf32> -> vector<5x16xf32>
    %cst_135 = arith.constant dense<0.000000e+00> : vector<5x16xf32>
    %225 = tpu.matmul %216, %221, %cst_135 {dimension_numbers = #tpu.dot_dimension_numbers<[1], [0], [0], [1], [0, 0, 1, 1], [], []>} : vector<5x64xf32>, vector<64x16xf32>, vector<5x16xf32> -> vector<5x16xf32>
    %cst_136 = arith.constant dense<0.000000e+00> : vector<5x16xf32>
    %226 = tpu.matmul %216, %223, %cst_136 {dimension_numbers = #tpu.dot_dimension_numbers<[1], [0], [0], [1], [0, 0, 1, 1], [], []>} : vector<5x64xf32>, vector<64x16xf32>, vector<5x16xf32> -> vector<5x16xf32>
    %227 = tpu.transpose %225, [1, 0] : vector<5x16xf32> -> vector<16x5xf32>
    %cst_137 = arith.constant dense<0.000000e+00> : vector<5x5xf32>
    %228 = tpu.matmul %224, %227, %cst_137 {dimension_numbers = #tpu.dot_dimension_numbers<[1], [0], [0], [1], [0, 0, 1, 1], [], []>} : vector<5x16xf32>, vector<16x5xf32>, vector<5x5xf32> -> vector<5x5xf32>
    %cst_138 = arith.constant 2.500000e-01 : f32
    %229 = vector.broadcast %cst_138 : f32 to vector<5x5xf32>
    %230 = arith.mulf %228, %229 : vector<5x5xf32>
    %cst_139 = arith.constant dense<0xFF800000> : vector<5xf32>
    %231 = vector.multi_reduction <maximumf>, %230, %cst_139 [1] : vector<5x5xf32> to vector<5xf32>
    %232 = vector.shape_cast %231 : vector<5xf32> to vector<5x1xf32>
    %233 = vector.broadcast %232 : vector<5x1xf32> to vector<5x5xf32>
    %234 = arith.subf %230, %233 : vector<5x5xf32>
    %235 = math.exp %234 : vector<5x5xf32>
    %cst_140 = arith.constant dense<0.000000e+00> : vector<5xf32>
    %236 = vector.multi_reduction <add>, %235, %cst_140 [1] : vector<5x5xf32> to vector<5xf32>
    %237 = vector.shape_cast %236 : vector<5xf32> to vector<5x1xf32>
    %238 = vector.broadcast %237 : vector<5x1xf32> to vector<5x5xf32>
    %239 = arith.divf %235, %238 : vector<5x5xf32>
    %cst_141 = arith.constant dense<0.000000e+00> : vector<5x16xf32>
    %240 = tpu.matmul %239, %226, %cst_141 {dimension_numbers = #tpu.dot_dimension_numbers<[1], [0], [0], [1], [0, 0, 1, 1], [], []>} : vector<5x5xf32>, vector<5x16xf32>, vector<5x16xf32> -> vector<5x16xf32>
    %c4_142 = arith.constant 4 : index
    %c0_143 = arith.constant 0 : index
    %c0_144 = arith.constant 0 : index
    %241 = vector.load %arg7[%c4_142, %c0_143, %c0_144] : memref<8x16x64xf32, #tpu.memory_space<vmem>>, vector<1x16x64xf32>
    %242 = vector.shape_cast %241 : vector<1x16x64xf32> to vector<16x64xf32>
    %cst_145 = arith.constant dense<0.000000e+00> : vector<5x64xf32>
    %243 = tpu.matmul %240, %242, %cst_145 {dimension_numbers = #tpu.dot_dimension_numbers<[1], [0], [0], [1], [0, 0, 1, 1], [], []>} : vector<5x16xf32>, vector<16x64xf32>, vector<5x64xf32> -> vector<5x64xf32>
    %244 = arith.addf %217, %243 : vector<5x64xf32>
    %c13 = arith.constant 13 : index
    %c0_146 = arith.constant 0 : index
    %c0_147 = arith.constant 0 : index
    %245 = vector.load %arg6[%c13, %c0_146, %c0_147] : memref<24x64x16xf32, #tpu.memory_space<vmem>>, vector<1x64x16xf32>
    %246 = vector.shape_cast %245 : vector<1x64x16xf32> to vector<64x16xf32>
    %c17 = arith.constant 17 : index
    %c0_148 = arith.constant 0 : index
    %c0_149 = arith.constant 0 : index
    %247 = vector.load %arg6[%c17, %c0_148, %c0_149] : memref<24x64x16xf32, #tpu.memory_space<vmem>>, vector<1x64x16xf32>
    %248 = vector.shape_cast %247 : vector<1x64x16xf32> to vector<64x16xf32>
    %c21 = arith.constant 21 : index
    %c0_150 = arith.constant 0 : index
    %c0_151 = arith.constant 0 : index
    %249 = vector.load %arg6[%c21, %c0_150, %c0_151] : memref<24x64x16xf32, #tpu.memory_space<vmem>>, vector<1x64x16xf32>
    %250 = vector.shape_cast %249 : vector<1x64x16xf32> to vector<64x16xf32>
    %cst_152 = arith.constant dense<0.000000e+00> : vector<5x16xf32>
    %251 = tpu.matmul %216, %246, %cst_152 {dimension_numbers = #tpu.dot_dimension_numbers<[1], [0], [0], [1], [0, 0, 1, 1], [], []>} : vector<5x64xf32>, vector<64x16xf32>, vector<5x16xf32> -> vector<5x16xf32>
    %cst_153 = arith.constant dense<0.000000e+00> : vector<5x16xf32>
    %252 = tpu.matmul %216, %248, %cst_153 {dimension_numbers = #tpu.dot_dimension_numbers<[1], [0], [0], [1], [0, 0, 1, 1], [], []>} : vector<5x64xf32>, vector<64x16xf32>, vector<5x16xf32> -> vector<5x16xf32>
    %cst_154 = arith.constant dense<0.000000e+00> : vector<5x16xf32>
    %253 = tpu.matmul %216, %250, %cst_154 {dimension_numbers = #tpu.dot_dimension_numbers<[1], [0], [0], [1], [0, 0, 1, 1], [], []>} : vector<5x64xf32>, vector<64x16xf32>, vector<5x16xf32> -> vector<5x16xf32>
    %254 = tpu.transpose %252, [1, 0] : vector<5x16xf32> -> vector<16x5xf32>
    %cst_155 = arith.constant dense<0.000000e+00> : vector<5x5xf32>
    %255 = tpu.matmul %251, %254, %cst_155 {dimension_numbers = #tpu.dot_dimension_numbers<[1], [0], [0], [1], [0, 0, 1, 1], [], []>} : vector<5x16xf32>, vector<16x5xf32>, vector<5x5xf32> -> vector<5x5xf32>
    %cst_156 = arith.constant 2.500000e-01 : f32
    %256 = vector.broadcast %cst_156 : f32 to vector<5x5xf32>
    %257 = arith.mulf %255, %256 : vector<5x5xf32>
    %cst_157 = arith.constant dense<0xFF800000> : vector<5xf32>
    %258 = vector.multi_reduction <maximumf>, %257, %cst_157 [1] : vector<5x5xf32> to vector<5xf32>
    %259 = vector.shape_cast %258 : vector<5xf32> to vector<5x1xf32>
    %260 = vector.broadcast %259 : vector<5x1xf32> to vector<5x5xf32>
    %261 = arith.subf %257, %260 : vector<5x5xf32>
    %262 = math.exp %261 : vector<5x5xf32>
    %cst_158 = arith.constant dense<0.000000e+00> : vector<5xf32>
    %263 = vector.multi_reduction <add>, %262, %cst_158 [1] : vector<5x5xf32> to vector<5xf32>
    %264 = vector.shape_cast %263 : vector<5xf32> to vector<5x1xf32>
    %265 = vector.broadcast %264 : vector<5x1xf32> to vector<5x5xf32>
    %266 = arith.divf %262, %265 : vector<5x5xf32>
    %cst_159 = arith.constant dense<0.000000e+00> : vector<5x16xf32>
    %267 = tpu.matmul %266, %253, %cst_159 {dimension_numbers = #tpu.dot_dimension_numbers<[1], [0], [0], [1], [0, 0, 1, 1], [], []>} : vector<5x5xf32>, vector<5x16xf32>, vector<5x16xf32> -> vector<5x16xf32>
    %c5_160 = arith.constant 5 : index
    %c0_161 = arith.constant 0 : index
    %c0_162 = arith.constant 0 : index
    %268 = vector.load %arg7[%c5_160, %c0_161, %c0_162] : memref<8x16x64xf32, #tpu.memory_space<vmem>>, vector<1x16x64xf32>
    %269 = vector.shape_cast %268 : vector<1x16x64xf32> to vector<16x64xf32>
    %cst_163 = arith.constant dense<0.000000e+00> : vector<5x64xf32>
    %270 = tpu.matmul %267, %269, %cst_163 {dimension_numbers = #tpu.dot_dimension_numbers<[1], [0], [0], [1], [0, 0, 1, 1], [], []>} : vector<5x16xf32>, vector<16x64xf32>, vector<5x64xf32> -> vector<5x64xf32>
    %271 = arith.addf %244, %270 : vector<5x64xf32>
    %c14 = arith.constant 14 : index
    %c0_164 = arith.constant 0 : index
    %c0_165 = arith.constant 0 : index
    %272 = vector.load %arg6[%c14, %c0_164, %c0_165] : memref<24x64x16xf32, #tpu.memory_space<vmem>>, vector<1x64x16xf32>
    %273 = vector.shape_cast %272 : vector<1x64x16xf32> to vector<64x16xf32>
    %c18 = arith.constant 18 : index
    %c0_166 = arith.constant 0 : index
    %c0_167 = arith.constant 0 : index
    %274 = vector.load %arg6[%c18, %c0_166, %c0_167] : memref<24x64x16xf32, #tpu.memory_space<vmem>>, vector<1x64x16xf32>
    %275 = vector.shape_cast %274 : vector<1x64x16xf32> to vector<64x16xf32>
    %c22 = arith.constant 22 : index
    %c0_168 = arith.constant 0 : index
    %c0_169 = arith.constant 0 : index
    %276 = vector.load %arg6[%c22, %c0_168, %c0_169] : memref<24x64x16xf32, #tpu.memory_space<vmem>>, vector<1x64x16xf32>
    %277 = vector.shape_cast %276 : vector<1x64x16xf32> to vector<64x16xf32>
    %cst_170 = arith.constant dense<0.000000e+00> : vector<5x16xf32>
    %278 = tpu.matmul %216, %273, %cst_170 {dimension_numbers = #tpu.dot_dimension_numbers<[1], [0], [0], [1], [0, 0, 1, 1], [], []>} : vector<5x64xf32>, vector<64x16xf32>, vector<5x16xf32> -> vector<5x16xf32>
    %cst_171 = arith.constant dense<0.000000e+00> : vector<5x16xf32>
    %279 = tpu.matmul %216, %275, %cst_171 {dimension_numbers = #tpu.dot_dimension_numbers<[1], [0], [0], [1], [0, 0, 1, 1], [], []>} : vector<5x64xf32>, vector<64x16xf32>, vector<5x16xf32> -> vector<5x16xf32>
    %cst_172 = arith.constant dense<0.000000e+00> : vector<5x16xf32>
    %280 = tpu.matmul %216, %277, %cst_172 {dimension_numbers = #tpu.dot_dimension_numbers<[1], [0], [0], [1], [0, 0, 1, 1], [], []>} : vector<5x64xf32>, vector<64x16xf32>, vector<5x16xf32> -> vector<5x16xf32>
    %281 = tpu.transpose %279, [1, 0] : vector<5x16xf32> -> vector<16x5xf32>
    %cst_173 = arith.constant dense<0.000000e+00> : vector<5x5xf32>
    %282 = tpu.matmul %278, %281, %cst_173 {dimension_numbers = #tpu.dot_dimension_numbers<[1], [0], [0], [1], [0, 0, 1, 1], [], []>} : vector<5x16xf32>, vector<16x5xf32>, vector<5x5xf32> -> vector<5x5xf32>
    %cst_174 = arith.constant 2.500000e-01 : f32
    %283 = vector.broadcast %cst_174 : f32 to vector<5x5xf32>
    %284 = arith.mulf %282, %283 : vector<5x5xf32>
    %cst_175 = arith.constant dense<0xFF800000> : vector<5xf32>
    %285 = vector.multi_reduction <maximumf>, %284, %cst_175 [1] : vector<5x5xf32> to vector<5xf32>
    %286 = vector.shape_cast %285 : vector<5xf32> to vector<5x1xf32>
    %287 = vector.broadcast %286 : vector<5x1xf32> to vector<5x5xf32>
    %288 = arith.subf %284, %287 : vector<5x5xf32>
    %289 = math.exp %288 : vector<5x5xf32>
    %cst_176 = arith.constant dense<0.000000e+00> : vector<5xf32>
    %290 = vector.multi_reduction <add>, %289, %cst_176 [1] : vector<5x5xf32> to vector<5xf32>
    %291 = vector.shape_cast %290 : vector<5xf32> to vector<5x1xf32>
    %292 = vector.broadcast %291 : vector<5x1xf32> to vector<5x5xf32>
    %293 = arith.divf %289, %292 : vector<5x5xf32>
    %cst_177 = arith.constant dense<0.000000e+00> : vector<5x16xf32>
    %294 = tpu.matmul %293, %280, %cst_177 {dimension_numbers = #tpu.dot_dimension_numbers<[1], [0], [0], [1], [0, 0, 1, 1], [], []>} : vector<5x5xf32>, vector<5x16xf32>, vector<5x16xf32> -> vector<5x16xf32>
    %c6_178 = arith.constant 6 : index
    %c0_179 = arith.constant 0 : index
    %c0_180 = arith.constant 0 : index
    %295 = vector.load %arg7[%c6_178, %c0_179, %c0_180] : memref<8x16x64xf32, #tpu.memory_space<vmem>>, vector<1x16x64xf32>
    %296 = vector.shape_cast %295 : vector<1x16x64xf32> to vector<16x64xf32>
    %cst_181 = arith.constant dense<0.000000e+00> : vector<5x64xf32>
    %297 = tpu.matmul %294, %296, %cst_181 {dimension_numbers = #tpu.dot_dimension_numbers<[1], [0], [0], [1], [0, 0, 1, 1], [], []>} : vector<5x16xf32>, vector<16x64xf32>, vector<5x64xf32> -> vector<5x64xf32>
    %298 = arith.addf %271, %297 : vector<5x64xf32>
    %c15 = arith.constant 15 : index
    %c0_182 = arith.constant 0 : index
    %c0_183 = arith.constant 0 : index
    %299 = vector.load %arg6[%c15, %c0_182, %c0_183] : memref<24x64x16xf32, #tpu.memory_space<vmem>>, vector<1x64x16xf32>
    %300 = vector.shape_cast %299 : vector<1x64x16xf32> to vector<64x16xf32>
    %c19 = arith.constant 19 : index
    %c0_184 = arith.constant 0 : index
    %c0_185 = arith.constant 0 : index
    %301 = vector.load %arg6[%c19, %c0_184, %c0_185] : memref<24x64x16xf32, #tpu.memory_space<vmem>>, vector<1x64x16xf32>
    %302 = vector.shape_cast %301 : vector<1x64x16xf32> to vector<64x16xf32>
    %c23 = arith.constant 23 : index
    %c0_186 = arith.constant 0 : index
    %c0_187 = arith.constant 0 : index
    %303 = vector.load %arg6[%c23, %c0_186, %c0_187] : memref<24x64x16xf32, #tpu.memory_space<vmem>>, vector<1x64x16xf32>
    %304 = vector.shape_cast %303 : vector<1x64x16xf32> to vector<64x16xf32>
    %cst_188 = arith.constant dense<0.000000e+00> : vector<5x16xf32>
    %305 = tpu.matmul %216, %300, %cst_188 {dimension_numbers = #tpu.dot_dimension_numbers<[1], [0], [0], [1], [0, 0, 1, 1], [], []>} : vector<5x64xf32>, vector<64x16xf32>, vector<5x16xf32> -> vector<5x16xf32>
    %cst_189 = arith.constant dense<0.000000e+00> : vector<5x16xf32>
    %306 = tpu.matmul %216, %302, %cst_189 {dimension_numbers = #tpu.dot_dimension_numbers<[1], [0], [0], [1], [0, 0, 1, 1], [], []>} : vector<5x64xf32>, vector<64x16xf32>, vector<5x16xf32> -> vector<5x16xf32>
    %cst_190 = arith.constant dense<0.000000e+00> : vector<5x16xf32>
    %307 = tpu.matmul %216, %304, %cst_190 {dimension_numbers = #tpu.dot_dimension_numbers<[1], [0], [0], [1], [0, 0, 1, 1], [], []>} : vector<5x64xf32>, vector<64x16xf32>, vector<5x16xf32> -> vector<5x16xf32>
    %308 = tpu.transpose %306, [1, 0] : vector<5x16xf32> -> vector<16x5xf32>
    %cst_191 = arith.constant dense<0.000000e+00> : vector<5x5xf32>
    %309 = tpu.matmul %305, %308, %cst_191 {dimension_numbers = #tpu.dot_dimension_numbers<[1], [0], [0], [1], [0, 0, 1, 1], [], []>} : vector<5x16xf32>, vector<16x5xf32>, vector<5x5xf32> -> vector<5x5xf32>
    %cst_192 = arith.constant 2.500000e-01 : f32
    %310 = vector.broadcast %cst_192 : f32 to vector<5x5xf32>
    %311 = arith.mulf %309, %310 : vector<5x5xf32>
    %cst_193 = arith.constant dense<0xFF800000> : vector<5xf32>
    %312 = vector.multi_reduction <maximumf>, %311, %cst_193 [1] : vector<5x5xf32> to vector<5xf32>
    %313 = vector.shape_cast %312 : vector<5xf32> to vector<5x1xf32>
    %314 = vector.broadcast %313 : vector<5x1xf32> to vector<5x5xf32>
    %315 = arith.subf %311, %314 : vector<5x5xf32>
    %316 = math.exp %315 : vector<5x5xf32>
    %cst_194 = arith.constant dense<0.000000e+00> : vector<5xf32>
    %317 = vector.multi_reduction <add>, %316, %cst_194 [1] : vector<5x5xf32> to vector<5xf32>
    %318 = vector.shape_cast %317 : vector<5xf32> to vector<5x1xf32>
    %319 = vector.broadcast %318 : vector<5x1xf32> to vector<5x5xf32>
    %320 = arith.divf %316, %319 : vector<5x5xf32>
    %cst_195 = arith.constant dense<0.000000e+00> : vector<5x16xf32>
    %321 = tpu.matmul %320, %307, %cst_195 {dimension_numbers = #tpu.dot_dimension_numbers<[1], [0], [0], [1], [0, 0, 1, 1], [], []>} : vector<5x5xf32>, vector<5x16xf32>, vector<5x16xf32> -> vector<5x16xf32>
    %c7_196 = arith.constant 7 : index
    %c0_197 = arith.constant 0 : index
    %c0_198 = arith.constant 0 : index
    %322 = vector.load %arg7[%c7_196, %c0_197, %c0_198] : memref<8x16x64xf32, #tpu.memory_space<vmem>>, vector<1x16x64xf32>
    %323 = vector.shape_cast %322 : vector<1x16x64xf32> to vector<16x64xf32>
    %cst_199 = arith.constant dense<0.000000e+00> : vector<5x64xf32>
    %324 = tpu.matmul %321, %323, %cst_199 {dimension_numbers = #tpu.dot_dimension_numbers<[1], [0], [0], [1], [0, 0, 1, 1], [], []>} : vector<5x16xf32>, vector<16x64xf32>, vector<5x64xf32> -> vector<5x64xf32>
    %325 = arith.addf %298, %324 : vector<5x64xf32>
    %c1_200 = arith.constant 1 : index
    %c0_201 = arith.constant 0 : index
    %c0_202 = arith.constant 0 : index
    %326 = vector.load %arg8[%c1_200, %c0_201, %c0_202] : memref<2x1x64xf32, #tpu.memory_space<vmem>>, vector<1x1x64xf32>
    %327 = vector.shape_cast %326 : vector<1x1x64xf32> to vector<1x64xf32>
    %328 = vector.broadcast %327 : vector<1x64xf32> to vector<5x64xf32>
    %329 = arith.addf %325, %328 : vector<5x64xf32>
    %330 = arith.addf %216, %329 : vector<5x64xf32>
    %cst_203 = arith.constant dense<0.000000e+00> : vector<5xf32>
    %331 = vector.multi_reduction <add>, %330, %cst_203 [1] : vector<5x64xf32> to vector<5xf32>
    %332 = vector.shape_cast %331 : vector<5xf32> to vector<5x1xf32>
    %cst_204 = arith.constant 6.400000e+01 : f32
    %333 = vector.broadcast %cst_204 : f32 to vector<5x1xf32>
    %334 = arith.divf %332, %333 : vector<5x1xf32>
    %335 = vector.broadcast %334 : vector<5x1xf32> to vector<5x64xf32>
    %336 = arith.subf %330, %335 : vector<5x64xf32>
    %337 = arith.mulf %336, %336 : vector<5x64xf32>
    %cst_205 = arith.constant dense<0.000000e+00> : vector<5xf32>
    %338 = vector.multi_reduction <add>, %337, %cst_205 [1] : vector<5x64xf32> to vector<5xf32>
    %339 = vector.shape_cast %338 : vector<5xf32> to vector<5x1xf32>
    %cst_206 = arith.constant 6.400000e+01 : f32
    %340 = vector.broadcast %cst_206 : f32 to vector<5x1xf32>
    %341 = arith.divf %339, %340 : vector<5x1xf32>
    %342 = vector.broadcast %334 : vector<5x1xf32> to vector<5x64xf32>
    %343 = arith.subf %330, %342 : vector<5x64xf32>
    %cst_207 = arith.constant 9.99999974E-6 : f32
    %344 = vector.broadcast %cst_207 : f32 to vector<5x1xf32>
    %345 = arith.addf %341, %344 : vector<5x1xf32>
    %346 = math.rsqrt %345 : vector<5x1xf32>
    %347 = vector.broadcast %346 : vector<5x1xf32> to vector<5x64xf32>
    %348 = arith.mulf %343, %347 : vector<5x64xf32>
    %349 = vector.broadcast %192 : vector<1x64xf32> to vector<5x64xf32>
    %350 = arith.mulf %348, %349 : vector<5x64xf32>
    %351 = vector.broadcast %194 : vector<1x64xf32> to vector<5x64xf32>
    %352 = arith.addf %350, %351 : vector<5x64xf32>
    %c1_208 = arith.constant 1 : index
    %c0_209 = arith.constant 0 : index
    %c0_210 = arith.constant 0 : index
    %353 = vector.load %arg9[%c1_208, %c0_209, %c0_210] : memref<2x64x256xf32, #tpu.memory_space<vmem>>, vector<1x64x256xf32>
    %354 = vector.shape_cast %353 : vector<1x64x256xf32> to vector<64x256xf32>
    %cst_211 = arith.constant dense<0.000000e+00> : vector<5x256xf32>
    %355 = tpu.matmul %352, %354, %cst_211 {dimension_numbers = #tpu.dot_dimension_numbers<[1], [0], [0], [1], [0, 0, 1, 1], [], []>} : vector<5x64xf32>, vector<64x256xf32>, vector<5x256xf32> -> vector<5x256xf32>
    %c1_212 = arith.constant 1 : index
    %c0_213 = arith.constant 0 : index
    %c0_214 = arith.constant 0 : index
    %356 = vector.load %arg10[%c1_212, %c0_213, %c0_214] : memref<2x1x256xf32, #tpu.memory_space<vmem>>, vector<1x1x256xf32>
    %357 = vector.shape_cast %356 : vector<1x1x256xf32> to vector<1x256xf32>
    %358 = vector.broadcast %357 : vector<1x256xf32> to vector<5x256xf32>
    %359 = arith.addf %355, %358 : vector<5x256xf32>
    %cst_215 = arith.constant 5.000000e-01 : f32
    %360 = vector.broadcast %cst_215 : f32 to vector<5x256xf32>
    %361 = arith.mulf %360, %359 : vector<5x256xf32>
    %cst_216 = arith.constant 0.707106769 : f32
    %362 = vector.broadcast %cst_216 : f32 to vector<5x256xf32>
    %363 = arith.mulf %359, %362 : vector<5x256xf32>
    %364 = math.erf %363 : vector<5x256xf32>
    %cst_217 = arith.constant 1.000000e+00 : f32
    %365 = vector.broadcast %cst_217 : f32 to vector<5x256xf32>
    %366 = arith.addf %365, %364 : vector<5x256xf32>
    %367 = arith.mulf %361, %366 : vector<5x256xf32>
    %c1_218 = arith.constant 1 : index
    %c0_219 = arith.constant 0 : index
    %c0_220 = arith.constant 0 : index
    %368 = vector.load %arg11[%c1_218, %c0_219, %c0_220] : memref<2x256x64xf32, #tpu.memory_space<vmem>>, vector<1x256x64xf32>
    %369 = vector.shape_cast %368 : vector<1x256x64xf32> to vector<256x64xf32>
    %cst_221 = arith.constant dense<0.000000e+00> : vector<5x64xf32>
    %370 = tpu.matmul %367, %369, %cst_221 {dimension_numbers = #tpu.dot_dimension_numbers<[1], [0], [0], [1], [0, 0, 1, 1], [], []>} : vector<5x256xf32>, vector<256x64xf32>, vector<5x64xf32> -> vector<5x64xf32>
    %c1_222 = arith.constant 1 : index
    %c0_223 = arith.constant 0 : index
    %c0_224 = arith.constant 0 : index
    %371 = vector.load %arg12[%c1_222, %c0_223, %c0_224] : memref<2x1x64xf32, #tpu.memory_space<vmem>>, vector<1x1x64xf32>
    %372 = vector.shape_cast %371 : vector<1x1x64xf32> to vector<1x64xf32>
    %373 = vector.broadcast %372 : vector<1x64xf32> to vector<5x64xf32>
    %374 = arith.addf %370, %373 : vector<5x64xf32>
    %375 = arith.addf %352, %374 : vector<5x64xf32>
    %376 = vector.extract_strided_slice %375 {offsets = [0, 0], sizes = [1, 64], strides = [1, 1]} : vector<5x64xf32> to vector<1x64xf32>
    %c0_225 = arith.constant 0 : index
    %c0_226 = arith.constant 0 : index
    %377 = vector.load %arg13[%c0_225, %c0_226] : memref<64x128xf32, #tpu.memory_space<vmem>>, vector<64x128xf32>
    %cst_227 = arith.constant dense<0.000000e+00> : vector<1x128xf32>
    %378 = tpu.matmul %376, %377, %cst_227 {dimension_numbers = #tpu.dot_dimension_numbers<[1], [0], [0], [1], [0, 0, 1, 1], [], []>} : vector<1x64xf32>, vector<64x128xf32>, vector<1x128xf32> -> vector<1x128xf32>
    %c0_228 = arith.constant 0 : index
    %c0_229 = arith.constant 0 : index
    %379 = vector.load %arg14[%c0_228, %c0_229] : memref<1x128xf32, #tpu.memory_space<vmem>>, vector<1x128xf32>
    %380 = arith.addf %378, %379 : vector<1x128xf32>
    %c0_230 = arith.constant 0 : index
    %c0_231 = arith.constant 0 : index
    %c0_232 = arith.constant 0 : index
    %381 = vector.load %arg15[%c0_230, %c0_231, %c0_232] : memref<1x1x128xf32, #tpu.memory_space<vmem>>, vector<1x1x128xf32>
    %382 = vector.shape_cast %381 : vector<1x1x128xf32> to vector<1x128xf32>
    %383 = vector.shape_cast %380 : vector<1x128xf32> to vector<1x1x128xf32>
    tpu.vector_store %arg15[%c0_230, %c0_231, %c0_232], %383 {strides = array<i32>} : memref<1x1x128xf32, #tpu.memory_space<vmem>>, vector<1x1x128xf32>,
    return
  }
  func.func @transform_0(%arg0: i32) -> (i32, i32, i32) {
    %c0_i32 = arith.constant 0 : i32
    %c0_i32_0 = arith.constant 0 : i32
    %c0_i32_1 = arith.constant 0 : i32
    return %arg0, %c0_i32, %c0_i32_0 : i32, i32, i32
  }
  func.func @transform_1(%arg0: i32) -> (i32, i32) {
    %c0_i32 = arith.constant 0 : i32
    %c0_i32_0 = arith.constant 0 : i32
    %c0_i32_1 = arith.constant 0 : i32
    return %c0_i32, %c0_i32_0 : i32, i32
  }
  func.func @transform_2(%arg0: i32) -> (i32, i32) {
    %c0_i32 = arith.constant 0 : i32
    %c0_i32_0 = arith.constant 0 : i32
    %c0_i32_1 = arith.constant 0 : i32
    return %c0_i32, %c0_i32_0 : i32, i32
  }
  func.func @transform_3(%arg0: i32) -> (i32, i32, i32) {
    %c0_i32 = arith.constant 0 : i32
    %c0_i32_0 = arith.constant 0 : i32
    %c0_i32_1 = arith.constant 0 : i32
    %c0_i32_2 = arith.constant 0 : i32
    return %c0_i32, %c0_i32_0, %c0_i32_1 : i32, i32, i32
  }
  func.func @transform_4(%arg0: i32) -> (i32, i32, i32) {
    %c0_i32 = arith.constant 0 : i32
    %c0_i32_0 = arith.constant 0 : i32
    %c0_i32_1 = arith.constant 0 : i32
    %c0_i32_2 = arith.constant 0 : i32
    return %c0_i32, %c0_i32_0, %c0_i32_1 : i32, i32, i32
  }
  func.func @transform_5(%arg0: i32) -> (i32, i32, i32) {
    %c0_i32 = arith.constant 0 : i32
    %c0_i32_0 = arith.constant 0 : i32
    %c0_i32_1 = arith.constant 0 : i32
    %c0_i32_2 = arith.constant 0 : i32
    return %c0_i32, %c0_i32_0, %c0_i32_1 : i32, i32, i32
  }
  func.func @transform_6(%arg0: i32) -> (i32, i32, i32) {
    %c0_i32 = arith.constant 0 : i32
    %c0_i32_0 = arith.constant 0 : i32
    %c0_i32_1 = arith.constant 0 : i32
    %c0_i32_2 = arith.constant 0 : i32
    return %c0_i32, %c0_i32_0, %c0_i32_1 : i32, i32, i32
  }
  func.func @transform_7(%arg0: i32) -> (i32, i32, i32) {
    %c0_i32 = arith.constant 0 : i32
    %c0_i32_0 = arith.constant 0 : i32
    %c0_i32_1 = arith.constant 0 : i32
    %c0_i32_2 = arith.constant 0 : i32
    return %c0_i32, %c0_i32_0, %c0_i32_1 : i32, i32, i32
  }
  func.func @transform_8(%arg0: i32) -> (i32, i32, i32) {
    %c0_i32 = arith.constant 0 : i32
    %c0_i32_0 = arith.constant 0 : i32
    %c0_i32_1 = arith.constant 0 : i32
    %c0_i32_2 = arith.constant 0 : i32
    return %c0_i32, %c0_i32_0, %c0_i32_1 : i32, i32, i32
  }
  func.func @transform_9(%arg0: i32) -> (i32, i32, i32) {
    %c0_i32 = arith.constant 0 : i32
    %c0_i32_0 = arith.constant 0 : i32
    %c0_i32_1 = arith.constant 0 : i32
    %c0_i32_2 = arith.constant 0 : i32
    return %c0_i32, %c0_i32_0, %c0_i32_1 : i32, i32, i32
  }
  func.func @transform_10(%arg0: i32) -> (i32, i32, i32) {
    %c0_i32 = arith.constant 0 : i32
    %c0_i32_0 = arith.constant 0 : i32
    %c0_i32_1 = arith.constant 0 : i32
    %c0_i32_2 = arith.constant 0 : i32
    return %c0_i32, %c0_i32_0, %c0_i32_1 : i32, i32, i32
  }
  func.func @transform_11(%arg0: i32) -> (i32, i32, i32) {
    %c0_i32 = arith.constant 0 : i32
    %c0_i32_0 = arith.constant 0 : i32
    %c0_i32_1 = arith.constant 0 : i32
    %c0_i32_2 = arith.constant 0 : i32
    return %c0_i32, %c0_i32_0, %c0_i32_1 : i32, i32, i32
  }
  func.func @transform_12(%arg0: i32) -> (i32, i32) {
    %c0_i32 = arith.constant 0 : i32
    %c0_i32_0 = arith.constant 0 : i32
    %c0_i32_1 = arith.constant 0 : i32
    return %c0_i32, %c0_i32_0 : i32, i32
  }
  func.func @transform_13(%arg0: i32) -> (i32, i32) {
    %c0_i32 = arith.constant 0 : i32
    %c0_i32_0 = arith.constant 0 : i32
    %c0_i32_1 = arith.constant 0 : i32
    return %c0_i32, %c0_i32_0 : i32, i32
  }
  func.func @transform_14(%arg0: i32) -> (i32, i32, i32) {
    %c0_i32 = arith.constant 0 : i32
    %c0_i32_0 = arith.constant 0 : i32
    %c0_i32_1 = arith.constant 0 : i32
    return %arg0, %c0_i32, %c0_i32_0 : i32, i32, i32
  }
}

</mosaic_0001>

<llo_original>
// kernel: _lambda_.1
$region0: #{_lambda_.1}
  #allocation0 [shape = 'u32[]', space=smem, size = 0x4, offset = 0x4, fixed_abs, tag = 'smem constant byte address 0x4 - core index']
  #allocation1 [shape = 'u32[144,128]{1,0:T(1,128)}', space=vmem, size = 0x12000, scoped, tag = 'internal scratch']
  %s0 = inlined_call_operand.vmem [shape: f32[2,5,768], index: 0, kind: input, shape index: {}]
  %s1 = inlined_call_operand.vmem [shape: f32[768,64], index: 1, kind: input, shape index: {}]
  %s2 = inlined_call_operand.vmem [shape: f32[5,64], index: 2, kind: input, shape index: {}]
  %s3 = inlined_call_operand.vmem [shape: f32[2,1,64], index: 3, kind: input, shape index: {}]
  %s4 = inlined_call_operand.vmem [shape: f32[2,1,64], index: 4, kind: input, shape index: {}]
  %s5 = inlined_call_operand.vmem [shape: f32[24,64,16], index: 5, kind: input, shape index: {}]
  %s6 = inlined_call_operand.vmem [shape: f32[8,16,64], index: 6, kind: input, shape index: {}]
  %s7 = inlined_call_operand.vmem [shape: f32[2,1,64], index: 7, kind: input, shape index: {}]
  %s8 = inlined_call_operand.vmem [shape: f32[2,64,256], index: 8, kind: input, shape index: {}]
  %s9 = inlined_call_operand.vmem [shape: f32[2,1,256], index: 9, kind: input, shape index: {}]
  %s10 = inlined_call_operand.vmem [shape: f32[2,256,64], index: 10, kind: input, shape index: {}]
  %s11 = inlined_call_operand.vmem [shape: f32[2,1,64], index: 11, kind: input, shape index: {}]
  %s12 = inlined_call_operand.vmem [shape: f32[64,128], index: 12, kind: input, shape index: {}]
  %s13 = inlined_call_operand.vmem [shape: f32[1,128], index: 13, kind: input, shape index: {}]
  %s14 = inlined_call_operand.hbm [shape: f32[2,1,128], index: 14, kind: output, shape index: {}]
  %s15 = sld [smem:[#allocation0]]
  $region89: #{_lambda_.1} parent=0
    _
  %s17 = ssub.s32 1, %s15
  %s18 = scalar_select 0, %s17, %s15
  $region1: #{_lambda_.1} parent=0
    #allocation2 [shape = 'u8[1024]{0}', space=vmem, size = 0x400, scoped, tag = 'output window, operand 0']
    #allocation3 [shape = 's32[2]{0}', space=sflag, size = 0x8, scoped, tag = 'scoped memory for _lambda_.1']
    %19 = vsyncpa [#allocation3], 0
    %s20 = scalar_lea.sflag [#allocation3], 1
    %21 = vsyncpa %s20, 0
    loop: start=0, step=1, limit=4
    $region2: #{_lambda_.1} parent=1 // loop_pre_header
      _
    $region3: #{_lambda_.1} parent=1 // loop_header
      %s23 = sphi 0, %s27
      %p24 = scmp.ge.s32.totalorder %s23, 4
      %s33 = sphi 0, %s35
      %s36 = sphi 0, %s33
      %s37 = sphi 0, %s36
      %s53 = sphi 0, %s37
      %s57 = sphi 0, %s57
      %s59 = sphi 0, %s57
      %s60 = sphi 0, %s59
      %s74 = sphi 0, %s60
      %s78 = sphi 0, %s78
      %s80 = sphi 0, %s78
      %s81 = sphi 0, %s80
      %s95 = sphi 0, %s81
      %s99 = sphi 0, %s99
      %s101 = sphi 0, %s99
      %s102 = sphi 0, %s101
      %s116 = sphi 0, %s102
      %s120 = sphi 0, %s120
      %s122 = sphi 0, %s120
      %s123 = sphi 0, %s122
      %s137 = sphi 0, %s123
      %s141 = sphi 0, %s141
      %s143 = sphi 0, %s141
      %s144 = sphi 0, %s143
      %s158 = sphi 0, %s144
      %s162 = sphi 0, %s162
      %s164 = sphi 0, %s162
      %s165 = sphi 0, %s164
      %s179 = sphi 0, %s165
      %s183 = sphi 0, %s183
      %s185 = sphi 0, %s183
      %s186 = sphi 0, %s185
      %s200 = sphi 0, %s186
      %s204 = sphi 0, %s204
      %s206 = sphi 0, %s204
      %s207 = sphi 0, %s206
      %s221 = sphi 0, %s207
      %s225 = sphi 0, %s225
      %s227 = sphi 0, %s225
      %s228 = sphi 0, %s227
      %s242 = sphi 0, %s228
      %s246 = sphi 0, %s246
      %s248 = sphi 0, %s246
      %s249 = sphi 0, %s248
      %s263 = sphi 0, %s249
      %s267 = sphi 0, %s267
      %s269 = sphi 0, %s267
      %s270 = sphi 0, %s269
      %s284 = sphi 0, %s270
      %s288 = sphi 0, %s288
      %s290 = sphi 0, %s288
      %s291 = sphi 0, %s290
      %s305 = sphi 0, %s291
      %s309 = sphi 0, %s309
      %s311 = sphi 0, %s309
      %s312 = sphi 0, %s311
      %s326 = sphi 0, %s312
      %s332 = sphi 0, %s334
      %s335 = sphi 0, %s332
      %s336 = sphi 0, %s335
      %s352 = sphi 0, %s336
    $region4: #{_lambda_.1} parent=1 // loop_header_branch
      %26 = sbr.rel (%p24) target = $region8
    $region5: #{_lambda_.1} parent=1 // loop_body
      %s28 = ssub.s32 %s23, 1
      %s29 = ssub.s32 %s23, 2
      %s30 = sadd.s32 %s23, 1
      %s31 = ssub.s32 %s23, %s30
      %p32 = scmp.eq.s32.totalorder %s31, 0
      %s34 = sadd.s32 %s33, 1
      %s35 = scalar_select %p32, %s33, %s34
      %p38 = pneg %p32
      %p39 = scmp.eq.s32.totalorder %s23, 1
      %p40 = por %p38, %p39
      %p41 = scmp.ne.s32.totalorder %s33, %s36
      %p42 = scmp.eq.s32.totalorder %s23, 0
      %p43 = por %p41, %p42
      %p44 = scmp.ne.s32.totalorder %s33, %s36
      %p45 = scmp.eq.s32.totalorder %s28, 1
      %p46 = por %p44, %p45
      %p47 = scmp.ne.s32.totalorder %s36, %s37
      %p48 = scmp.eq.s32.totalorder %s28, 0
      %p49 = por %p47, %p48
      %p50 = scmp.ne.s32.totalorder %s36, %s37
      %p51 = scmp.eq.s32.totalorder %s29, 1
      %p52 = por %p50, %p51
      %p54 = scmp.ne.s32.totalorder %s37, %s53
      %p55 = scmp.eq.s32.totalorder %s29, 0
      %p56 = por %p54, %p55
      %s58 = sadd.s32 %s57, 1
      %p61 = scmp.eq.s32.totalorder %s23, 1
      %p62 = scmp.ne.s32.totalorder %s57, %s59
      %p63 = scmp.eq.s32.totalorder %s23, 0
      %p64 = por %p62, %p63
      %p65 = scmp.ne.s32.totalorder %s57, %s59
      %p66 = scmp.eq.s32.totalorder %s28, 1
      %p67 = por %p65, %p66
      %p68 = scmp.ne.s32.totalorder %s59, %s60
      %p69 = scmp.eq.s32.totalorder %s28, 0
      %p70 = por %p68, %p69
      %p71 = scmp.ne.s32.totalorder %s59, %s60
      %p72 = scmp.eq.s32.totalorder %s29, 1
      %p73 = por %p71, %p72
      %p75 = scmp.ne.s32.totalorder %s60, %s74
      %p76 = scmp.eq.s32.totalorder %s29, 0
      %p77 = por %p75, %p76
      %s79 = sadd.s32 %s78, 1
      %p82 = scmp.eq.s32.totalorder %s23, 1
      %p83 = scmp.ne.s32.totalorder %s78, %s80
      %p84 = scmp.eq.s32.totalorder %s23, 0
      %p85 = por %p83, %p84
      %p86 = scmp.ne.s32.totalorder %s78, %s80
      %p87 = scmp.eq.s32.totalorder %s28, 1
      %p88 = por %p86, %p87
      %p89 = scmp.ne.s32.totalorder %s80, %s81
      %p90 = scmp.eq.s32.totalorder %s28, 0
      %p91 = por %p89, %p90
      %p92 = scmp.ne.s32.totalorder %s80, %s81
      %p93 = scmp.eq.s32.totalorder %s29, 1
      %p94 = por %p92, %p93
      %p96 = scmp.ne.s32.totalorder %s81, %s95
      %p97 = scmp.eq.s32.totalorder %s29, 0
      %p98 = por %p96, %p97
      %s100 = sadd.s32 %s99, 1
      %p103 = scmp.eq.s32.totalorder %s23, 1
      %p104 = scmp.ne.s32.totalorder %s99, %s101
      %p105 = scmp.eq.s32.totalorder %s23, 0
      %p106 = por %p104, %p105
      %p107 = scmp.ne.s32.totalorder %s99, %s101
      %p108 = scmp.eq.s32.totalorder %s28, 1
      %p109 = por %p107, %p108
      %p110 = scmp.ne.s32.totalorder %s101, %s102
      %p111 = scmp.eq.s32.totalorder %s28, 0
      %p112 = por %p110, %p111
      %p113 = scmp.ne.s32.totalorder %s101, %s102
      %p114 = scmp.eq.s32.totalorder %s29, 1
      %p115 = por %p113, %p114
      %p117 = scmp.ne.s32.totalorder %s102, %s116
      %p118 = scmp.eq.s32.totalorder %s29, 0
      %p119 = por %p117, %p118
      %s121 = sadd.s32 %s120, 1
      %p124 = scmp.eq.s32.totalorder %s23, 1
      %p125 = scmp.ne.s32.totalorder %s120, %s122
      %p126 = scmp.eq.s32.totalorder %s23, 0
      %p127 = por %p125, %p126
      %p128 = scmp.ne.s32.totalorder %s120, %s122
      %p129 = scmp.eq.s32.totalorder %s28, 1
      %p130 = por %p128, %p129
      %p131 = scmp.ne.s32.totalorder %s122, %s123
      %p132 = scmp.eq.s32.totalorder %s28, 0
      %p133 = por %p131, %p132
      %p134 = scmp.ne.s32.totalorder %s122, %s123
      %p135 = scmp.eq.s32.totalorder %s29, 1
      %p136 = por %p134, %p135
      %p138 = scmp.ne.s32.totalorder %s123, %s137
      %p139 = scmp.eq.s32.totalorder %s29, 0
      %p140 = por %p138, %p139
      %s142 = sadd.s32 %s141, 1
      %p145 = scmp.eq.s32.totalorder %s23, 1
      %p146 = scmp.ne.s32.totalorder %s141, %s143
      %p147 = scmp.eq.s32.totalorder %s23, 0
      %p148 = por %p146, %p147
      %p149 = scmp.ne.s32.totalorder %s141, %s143
      %p150 = scmp.eq.s32.totalorder %s28, 1
      %p151 = por %p149, %p150
      %p152 = scmp.ne.s32.totalorder %s143, %s144
      %p153 = scmp.eq.s32.totalorder %s28, 0
      %p154 = por %p152, %p153
      %p155 = scmp.ne.s32.totalorder %s143, %s144
      %p156 = scmp.eq.s32.totalorder %s29, 1
      %p157 = por %p155, %p156
      %p159 = scmp.ne.s32.totalorder %s144, %s158
      %p160 = scmp.eq.s32.totalorder %s29, 0
      %p161 = por %p159, %p160
      %s163 = sadd.s32 %s162, 1
      %p166 = scmp.eq.s32.totalorder %s23, 1
      %p167 = scmp.ne.s32.totalorder %s162, %s164
      %p168 = scmp.eq.s32.totalorder %s23, 0
      %p169 = por %p167, %p168
      %p170 = scmp.ne.s32.totalorder %s162, %s164
      %p171 = scmp.eq.s32.totalorder %s28, 1
      %p172 = por %p170, %p171
      %p173 = scmp.ne.s32.totalorder %s164, %s165
      %p174 = scmp.eq.s32.totalorder %s28, 0
      %p175 = por %p173, %p174
      %p176 = scmp.ne.s32.totalorder %s164, %s165
      %p177 = scmp.eq.s32.totalorder %s29, 1
      %p178 = por %p176, %p177
      %p180 = scmp.ne.s32.totalorder %s165, %s179
      %p181 = scmp.eq.s32.totalorder %s29, 0
      %p182 = por %p180, %p181
      %s184 = sadd.s32 %s183, 1
      %p187 = scmp.eq.s32.totalorder %s23, 1
      %p188 = scmp.ne.s32.totalorder %s183, %s185
      %p189 = scmp.eq.s32.totalorder %s23, 0
      %p190 = por %p188, %p189
      %p191 = scmp.ne.s32.totalorder %s183, %s185
      %p192 = scmp.eq.s32.totalorder %s28, 1
      %p193 = por %p191, %p192
      %p194 = scmp.ne.s32.totalorder %s185, %s186
      %p195 = scmp.eq.s32.totalorder %s28, 0
      %p196 = por %p194, %p195
      %p197 = scmp.ne.s32.totalorder %s185, %s186
      %p198 = scmp.eq.s32.totalorder %s29, 1
      %p199 = por %p197, %p198
      %p201 = scmp.ne.s32.totalorder %s186, %s200
      %p202 = scmp.eq.s32.totalorder %s29, 0
      %p203 = por %p201, %p202
      %s205 = sadd.s32 %s204, 1
      %p208 = scmp.eq.s32.totalorder %s23, 1
      %p209 = scmp.ne.s32.totalorder %s204, %s206
      %p210 = scmp.eq.s32.totalorder %s23, 0
      %p211 = por %p209, %p210
      %p212 = scmp.ne.s32.totalorder %s204, %s206
      %p213 = scmp.eq.s32.totalorder %s28, 1
      %p214 = por %p212, %p213
      %p215 = scmp.ne.s32.totalorder %s206, %s207
      %p216 = scmp.eq.s32.totalorder %s28, 0
      %p217 = por %p215, %p216
      %p218 = scmp.ne.s32.totalorder %s206, %s207
      %p219 = scmp.eq.s32.totalorder %s29, 1
      %p220 = por %p218, %p219
      %p222 = scmp.ne.s32.totalorder %s207, %s221
      %p223 = scmp.eq.s32.totalorder %s29, 0
      %p224 = por %p222, %p223
      %s226 = sadd.s32 %s225, 1
      %p229 = scmp.eq.s32.totalorder %s23, 1
      %p230 = scmp.ne.s32.totalorder %s225, %s227
      %p231 = scmp.eq.s32.totalorder %s23, 0
      %p232 = por %p230, %p231
      %p233 = scmp.ne.s32.totalorder %s225, %s227
      %p234 = scmp.eq.s32.totalorder %s28, 1
      %p235 = por %p233, %p234
      %p236 = scmp.ne.s32.totalorder %s227, %s228
      %p237 = scmp.eq.s32.totalorder %s28, 0
      %p238 = por %p236, %p237
      %p239 = scmp.ne.s32.totalorder %s227, %s228
      %p240 = scmp.eq.s32.totalorder %s29, 1
      %p241 = por %p239, %p240
      %p243 = scmp.ne.s32.totalorder %s228, %s242
      %p244 = scmp.eq.s32.totalorder %s29, 0
      %p245 = por %p243, %p244
      %s247 = sadd.s32 %s246, 1
      %p250 = scmp.eq.s32.totalorder %s23, 1
      %p251 = scmp.ne.s32.totalorder %s246, %s248
      %p252 = scmp.eq.s32.totalorder %s23, 0
      %p253 = por %p251, %p252
      %p254 = scmp.ne.s32.totalorder %s246, %s248
      %p255 = scmp.eq.s32.totalorder %s28, 1
      %p256 = por %p254, %p255
      %p257 = scmp.ne.s32.totalorder %s248, %s249
      %p258 = scmp.eq.s32.totalorder %s28, 0
      %p259 = por %p257, %p258
      %p260 = scmp.ne.s32.totalorder %s248, %s249
      %p261 = scmp.eq.s32.totalorder %s29, 1
      %p262 = por %p260, %p261
      %p264 = scmp.ne.s32.totalorder %s249, %s263
      %p265 = scmp.eq.s32.totalorder %s29, 0
      %p266 = por %p264, %p265
      %s268 = sadd.s32 %s267, 1
      %p271 = scmp.eq.s32.totalorder %s23, 1
      %p272 = scmp.ne.s32.totalorder %s267, %s269
      %p273 = scmp.eq.s32.totalorder %s23, 0
      %p274 = por %p272, %p273
      %p275 = scmp.ne.s32.totalorder %s267, %s269
      %p276 = scmp.eq.s32.totalorder %s28, 1
      %p277 = por %p275, %p276
      %p278 = scmp.ne.s32.totalorder %s269, %s270
      %p279 = scmp.eq.s32.totalorder %s28, 0
      %p280 = por %p278, %p279
      %p281 = scmp.ne.s32.totalorder %s269, %s270
      %p282 = scmp.eq.s32.totalorder %s29, 1
      %p283 = por %p281, %p282
      %p285 = scmp.ne.s32.totalorder %s270, %s284
      %p286 = scmp.eq.s32.totalorder %s29, 0
      %p287 = por %p285, %p286
      %s289 = sadd.s32 %s288, 1
      %p292 = scmp.eq.s32.totalorder %s23, 1
      %p293 = scmp.ne.s32.totalorder %s288, %s290
      %p294 = scmp.eq.s32.totalorder %s23, 0
      %p295 = por %p293, %p294
      %p296 = scmp.ne.s32.totalorder %s288, %s290
      %p297 = scmp.eq.s32.totalorder %s28, 1
      %p298 = por %p296, %p297
      %p299 = scmp.ne.s32.totalorder %s290, %s291
      %p300 = scmp.eq.s32.totalorder %s28, 0
      %p301 = por %p299, %p300
      %p302 = scmp.ne.s32.totalorder %s290, %s291
      %p303 = scmp.eq.s32.totalorder %s29, 1
      %p304 = por %p302, %p303
      %p306 = scmp.ne.s32.totalorder %s291, %s305
      %p307 = scmp.eq.s32.totalorder %s29, 0
      %p308 = por %p306, %p307
      %s310 = sadd.s32 %s309, 1
      %p313 = scmp.eq.s32.totalorder %s23, 1
      %p314 = scmp.ne.s32.totalorder %s309, %s311
      %p315 = scmp.eq.s32.totalorder %s23, 0
      %p316 = por %p314, %p315
      %p317 = scmp.ne.s32.totalorder %s309, %s311
      %p318 = scmp.eq.s32.totalorder %s28, 1
      %p319 = por %p317, %p318
      %p320 = scmp.ne.s32.totalorder %s311, %s312
      %p321 = scmp.eq.s32.totalorder %s28, 0
      %p322 = por %p320, %p321
      %p323 = scmp.ne.s32.totalorder %s311, %s312
      %p324 = scmp.eq.s32.totalorder %s29, 1
      %p325 = por %p323, %p324
      %p327 = scmp.ne.s32.totalorder %s312, %s326
      %p328 = scmp.eq.s32.totalorder %s29, 0
      %p329 = por %p327, %p328
      %s330 = ssub.s32 %s23, %s30
      %p331 = scmp.eq.s32.totalorder %s330, 0
      %s333 = sadd.s32 %s332, 1
      %s334 = scalar_select %p331, %s332, %s333
      %p337 = pneg %p331
      %p338 = scmp.eq.s32.totalorder %s23, 1
      %p339 = por %p337, %p338
      %p340 = scmp.ne.s32.totalorder %s332, %s335
      %p341 = scmp.eq.s32.totalorder %s23, 0
      %p342 = por %p340, %p341
      %p343 = scmp.ne.s32.totalorder %s332, %s335
      %p344 = scmp.eq.s32.totalorder %s28, 1
      %p345 = por %p343, %p344
      %p346 = scmp.ne.s32.totalorder %s335, %s336
      %p347 = scmp.eq.s32.totalorder %s28, 0
      %p348 = por %p346, %p347
      %p349 = scmp.ne.s32.totalorder %s335, %s336
      %p350 = scmp.eq.s32.totalorder %s29, 1
      %p351 = por %p349, %p350
      %p353 = scmp.ne.s32.totalorder %s336, %s352
      %p354 = scmp.eq.s32.totalorder %s29, 0
      %p355 = por %p353, %p354
      %p356 = scmp.le.s32.totalorder 1, %s23
      %p357 = scmp.lt.s32.totalorder %s23, 3
      %p358 = pnand %p356, %p357
      %p359 = pneg %p358
      // Predicated region
      $region9: #{_lambda_.1} parent=5 // pred_check
        _
      $region10: #{_lambda_.1} parent=5 // pred_check_branch
        %361 = sbr.rel (%p358) target = $region12
      $region11: #{_lambda_.1} parent=5 // pred_region
        %s362 = ssub.s32 %s23, 1
        // Predicated region
        $region13: #{_lambda_.1} parent=11 // pred_check
          %p363 = pneg %p70
        $region14: #{_lambda_.1} parent=11 // pred_check_branch
          %365 = sbr.rel (%p363) target = $region16
        $region15: #{_lambda_.1} parent=11 // pred_region
          _
        $region16: #{_lambda_.1} parent=11 // pred_fallthru
          _
        // Predicated region
        $region17: #{_lambda_.1} parent=11 // pred_check
          %p366 = pneg %p91
        $region18: #{_lambda_.1} parent=11 // pred_check_branch
          %368 = sbr.rel (%p366) target = $region20
        $region19: #{_lambda_.1} parent=11 // pred_region
          _
        $region20: #{_lambda_.1} parent=11 // pred_fallthru
          _
        // Predicated region
        $region21: #{_lambda_.1} parent=11 // pred_check
          %p369 = pneg %p112
        $region22: #{_lambda_.1} parent=11 // pred_check_branch
          %371 = sbr.rel (%p369) target = $region24
        $region23: #{_lambda_.1} parent=11 // pred_region
          _
        $region24: #{_lambda_.1} parent=11 // pred_fallthru
          _
        // Predicated region
        $region25: #{_lambda_.1} parent=11 // pred_check
          %p372 = pneg %p133
        $region26: #{_lambda_.1} parent=11 // pred_check_branch
          %374 = sbr.rel (%p372) target = $region28
        $region27: #{_lambda_.1} parent=11 // pred_region
          _
        $region28: #{_lambda_.1} parent=11 // pred_fallthru
          _
        // Predicated region
        $region29: #{_lambda_.1} parent=11 // pred_check
          %p375 = pneg %p154
        $region30: #{_lambda_.1} parent=11 // pred_check_branch
          %377 = sbr.rel (%p375) target = $region32
        $region31: #{_lambda_.1} parent=11 // pred_region
          _
        $region32: #{_lambda_.1} parent=11 // pred_fallthru
          _
        // Predicated region
        $region33: #{_lambda_.1} parent=11 // pred_check
          %p378 = pneg %p175
        $region34: #{_lambda_.1} parent=11 // pred_check_branch
          %380 = sbr.rel (%p378) target = $region36
        $region35: #{_lambda_.1} parent=11 // pred_region
          _
        $region36: #{_lambda_.1} parent=11 // pred_fallthru
          _
        // Predicated region
        $region37: #{_lambda_.1} parent=11 // pred_check
          %p381 = pneg %p196
        $region38: #{_lambda_.1} parent=11 // pred_check_branch
          %383 = sbr.rel (%p381) target = $region40
        $region39: #{_lambda_.1} parent=11 // pred_region
          _
        $region40: #{_lambda_.1} parent=11 // pred_fallthru
          _
        // Predicated region
        $region41: #{_lambda_.1} parent=11 // pred_check
          %p384 = pneg %p217
        $region42: #{_lambda_.1} parent=11 // pred_check_branch
          %386 = sbr.rel (%p384) target = $region44
        $region43: #{_lambda_.1} parent=11 // pred_region
          _
        $region44: #{_lambda_.1} parent=11 // pred_fallthru
          _
        // Predicated region
        $region45: #{_lambda_.1} parent=11 // pred_check
          %p387 = pneg %p238
        $region46: #{_lambda_.1} parent=11 // pred_check_branch
          %389 = sbr.rel (%p387) target = $region48
        $region47: #{_lambda_.1} parent=11 // pred_region
          _
        $region48: #{_lambda_.1} parent=11 // pred_fallthru
          _
        // Predicated region
        $region49: #{_lambda_.1} parent=11 // pred_check
          %p390 = pneg %p259
        $region50: #{_lambda_.1} parent=11 // pred_check_branch
          %392 = sbr.rel (%p390) target = $region52
        $region51: #{_lambda_.1} parent=11 // pred_region
          _
        $region52: #{_lambda_.1} parent=11 // pred_fallthru
          _
        // Predicated region
        $region53: #{_lambda_.1} parent=11 // pred_check
          %p393 = pneg %p280
        $region54: #{_lambda_.1} parent=11 // pred_check_branch
          %395 = sbr.rel (%p393) target = $region56
        $region55: #{_lambda_.1} parent=11 // pred_region
          _
        $region56: #{_lambda_.1} parent=11 // pred_fallthru
          _
        // Predicated region
        $region57: #{_lambda_.1} parent=11 // pred_check
          %p396 = pneg %p301
        $region58: #{_lambda_.1} parent=11 // pred_check_branch
          %398 = sbr.rel (%p396) target = $region60
        $region59: #{_lambda_.1} parent=11 // pred_region
          _
        $region60: #{_lambda_.1} parent=11 // pred_fallthru
          _
        // Predicated region
        $region61: #{_lambda_.1} parent=11 // pred_check
          %p399 = pneg %p322
        $region62: #{_lambda_.1} parent=11 // pred_check_branch
          %401 = sbr.rel (%p399) target = $region64
        $region63: #{_lambda_.1} parent=11 // pred_region
          _
        $region64: #{_lambda_.1} parent=11 // pred_fallthru
          _
      $region12: #{_lambda_.1} parent=5 // pred_fallthru
        _
      %p402 = scmp.lt.s32.totalorder %s23, 2
      // Predicated region
      $region65: #{_lambda_.1} parent=5 // pred_check
        %p403 = pneg %p402
      $region66: #{_lambda_.1} parent=5 // pred_check_branch
        %405 = sbr.rel (%p403) target = $region68
      $region67: #{_lambda_.1} parent=5 // pred_region
        // Predicated region
        $region69: #{_lambda_.1} parent=67 // pred_check
          %p406 = pneg %p43
        $region70: #{_lambda_.1} parent=67 // pred_check_branch
          %408 = sbr.rel (%p406) target = $region72
        $region71: #{_lambda_.1} parent=67 // pred_region
          %p409 = scmp.lt.s32.totalorder %s23, 1
          %s410 = scalar_select %p409, %s23, 1
          %s411 = smul.addr %s410, 6
          %s412 = smul.addr %s411, 8
          %s413 = scalar_lea.vmem %s0, %s412
        $region72: #{_lambda_.1} parent=67 // pred_fallthru
          _
      $region68: #{_lambda_.1} parent=5 // pred_fallthru
        _
      %p414 = scmp.le.s32.totalorder 1, %s23
      %p415 = scmp.lt.s32.totalorder %s23, 3
      %p416 = pnand %p414, %p415
      %p417 = pneg %p416
      // Predicated region
      $region73: #{_lambda_.1} parent=5 // pred_check
        _
      $region74: #{_lambda_.1} parent=5 // pred_check_branch
        %419 = sbr.rel (%p416) target = $region76
      $region75: #{_lambda_.1} parent=5 // pred_region
        %s420 = ssub.s32 %s23, 1
        %p421 = scmp.lt.s32.totalorder %s28, 1
        %s422 = scalar_select %p421, %s28, 1
        %s423 = smul.addr %s422, 6
        %s424 = smul.addr %s423, 8
        %s425 = scalar_lea.vmem %s0, %s424
        %p426 = pneg %p49
        %p427 = pneg %p46
        %p428 = pneg %p70
        %p429 = pneg %p67
        %p430 = pneg %p91
        %p431 = pneg %p88
        %p432 = pneg %p112
        %p433 = pneg %p109
        %p434 = pneg %p133
        %p435 = pneg %p130
        %p436 = pneg %p154
        %p437 = pneg %p151
        %p438 = pneg %p175
        %p439 = pneg %p172
        %p440 = pneg %p196
        %p441 = pneg %p193
        %p442 = pneg %p217
        %p443 = pneg %p214
        %p444 = pneg %p238
        %p445 = pneg %p235
        %p446 = pneg %p259
        %p447 = pneg %p256
        %p448 = pneg %p280
        %p449 = pneg %p277
        %p450 = pneg %p301
        %p451 = pneg %p298
        %p452 = pneg %p322
        %p453 = pneg %p319
        %p454 = pneg %p348
        %p455 = pneg %p345
        %s456 = sand.u32 %s335, 1
        %s457 = scalar_lea.sflag [#allocation3], %s456
        %s458 = sand.u32 %s335, 1
        %s459 = scalar_lea.vmem [#allocation2], %s458
        %p460 = scmp.lt.s32.totalorder %s28, 1
        %s461 = scalar_select %p460, %s28, 1
        %s462 = smul.addr %s461, 6
        %s463 = smul.addr %s462, 8
        %s464 = scalar_lea.vmem %s0, %s463
        %v465 = vld [vmem:[%s464] sm:$0x1f]
        %v466 = vld [vmem:[%s464 + $0x8] sm:$0x1f]
        %v467 = vld [vmem:[%s464 + $0x10] sm:$0x1f]
        %v468 = vld [vmem:[%s464 + $0x18] sm:$0x1f]
        %v469 = vld [vmem:[%s464 + $0x20] sm:$0x1f]
        %v470 = vld [vmem:[%s464 + $0x28] sm:$0x1f]
        %v471 = vld [vmem:[%s1] sm:$0xff]
        %v472 = vld [vmem:[%s1 + $0x8] sm:$0xff]
        %v473 = vld [vmem:[%s1 + $0x10] sm:$0xff]
        %v474 = vld [vmem:[%s1 + $0x18] sm:$0xff]
        %v475 = vld [vmem:[%s1 + $0x20] sm:$0xff]
        %v476 = vld [vmem:[%s1 + $0x28] sm:$0xff]
        %v477 = vld [vmem:[%s1 + $0x30] sm:$0xff]
        %v478 = vld [vmem:[%s1 + $0x38] sm:$0xff]
        %v479 = vld [vmem:[%s1 + $0x40] sm:$0xff]
        %v480 = vld [vmem:[%s1 + $0x48] sm:$0xff]
        %v481 = vld [vmem:[%s1 + $0x50] sm:$0xff]
        %v482 = vld [vmem:[%s1 + $0x58] sm:$0xff]
        %v483 = vld [vmem:[%s1 + $0x60] sm:$0xff]
        %v484 = vld [vmem:[%s1 + $0x68] sm:$0xff]
        %v485 = vld [vmem:[%s1 + $0x70] sm:$0xff]
        %v486 = vld [vmem:[%s1 + $0x78] sm:$0xff]
        %v487 = vld [vmem:[%s1 + $0x80] sm:$0xff]
        %v488 = vld [vmem:[%s1 + $0x88] sm:$0xff]
        %v489 = vld [vmem:[%s1 + $0x90] sm:$0xff]
        %v490 = vld [vmem:[%s1 + $0x98] sm:$0xff]
        %v491 = vld [vmem:[%s1 + $0xa0] sm:$0xff]
        %v492 = vld [vmem:[%s1 + $0xa8] sm:$0xff]
        %v493 = vld [vmem:[%s1 + $0xb0] sm:$0xff]
        %v494 = vld [vmem:[%s1 + $0xb8] sm:$0xff]
        %v495 = vld [vmem:[%s1 + $0xc0] sm:$0xff]
        %v496 = vld [vmem:[%s1 + $0xc8] sm:$0xff]
        %v497 = vld [vmem:[%s1 + $0xd0] sm:$0xff]
        %v498 = vld [vmem:[%s1 + $0xd8] sm:$0xff]
        %v499 = vld [vmem:[%s1 + $0xe0] sm:$0xff]
        %v500 = vld [vmem:[%s1 + $0xe8] sm:$0xff]
        %v501 = vld [vmem:[%s1 + $0xf0] sm:$0xff]
        %v502 = vld [vmem:[%s1 + $0xf8] sm:$0xff]
        %v503 = vld [vmem:[%s1 + $0x100] sm:$0xff]
        %v504 = vld [vmem:[%s1 + $0x108] sm:$0xff]
        %v505 = vld [vmem:[%s1 + $0x110] sm:$0xff]
        %v506 = vld [vmem:[%s1 + $0x118] sm:$0xff]
        %v507 = vld [vmem:[%s1 + $0x120] sm:$0xff]
        %v508 = vld [vmem:[%s1 + $0x128] sm:$0xff]
        %v509 = vld [vmem:[%s1 + $0x130] sm:$0xff]
        %v510 = vld [vmem:[%s1 + $0x138] sm:$0xff]
        %v511 = vld [vmem:[%s1 + $0x140] sm:$0xff]
        %v512 = vld [vmem:[%s1 + $0x148] sm:$0xff]
        %v513 = vld [vmem:[%s1 + $0x150] sm:$0xff]
        %v514 = vld [vmem:[%s1 + $0x158] sm:$0xff]
        %v515 = vld [vmem:[%s1 + $0x160] sm:$0xff]
        %v516 = vld [vmem:[%s1 + $0x168] sm:$0xff]
        %v517 = vld [vmem:[%s1 + $0x170] sm:$0xff]
        %v518 = vld [vmem:[%s1 + $0x178] sm:$0xff]
        %v519 = vld [vmem:[%s1 + $0x180] sm:$0xff]
        %v520 = vld [vmem:[%s1 + $0x188] sm:$0xff]
        %v521 = vld [vmem:[%s1 + $0x190] sm:$0xff]
        %v522 = vld [vmem:[%s1 + $0x198] sm:$0xff]
        %v523 = vld [vmem:[%s1 + $0x1a0] sm:$0xff]
        %v524 = vld [vmem:[%s1 + $0x1a8] sm:$0xff]
        %v525 = vld [vmem:[%s1 + $0x1b0] sm:$0xff]
        %v526 = vld [vmem:[%s1 + $0x1b8] sm:$0xff]
        %v527 = vld [vmem:[%s1 + $0x1c0] sm:$0xff]
        %v528 = vld [vmem:[%s1 + $0x1c8] sm:$0xff]
        %v529 = vld [vmem:[%s1 + $0x1d0] sm:$0xff]
        %v530 = vld [vmem:[%s1 + $0x1d8] sm:$0xff]
        %v531 = vld [vmem:[%s1 + $0x1e0] sm:$0xff]
        %v532 = vld [vmem:[%s1 + $0x1e8] sm:$0xff]
        %v533 = vld [vmem:[%s1 + $0x1f0] sm:$0xff]
        %v534 = vld [vmem:[%s1 + $0x1f8] sm:$0xff]
        %v535 = vld [vmem:[%s1 + $0x200] sm:$0xff]
        %v536 = vld [vmem:[%s1 + $0x208] sm:$0xff]
        %v537 = vld [vmem:[%s1 + $0x210] sm:$0xff]
        %v538 = vld [vmem:[%s1 + $0x218] sm:$0xff]
        %v539 = vld [vmem:[%s1 + $0x220] sm:$0xff]
        %v540 = vld [vmem:[%s1 + $0x228] sm:$0xff]
        %v541 = vld [vmem:[%s1 + $0x230] sm:$0xff]
        %v542 = vld [vmem:[%s1 + $0x238] sm:$0xff]
        %v543 = vld [vmem:[%s1 + $0x240] sm:$0xff]
        %v544 = vld [vmem:[%s1 + $0x248] sm:$0xff]
        %v545 = vld [vmem:[%s1 + $0x250] sm:$0xff]
        %v546 = vld [vmem:[%s1 + $0x258] sm:$0xff]
        %v547 = vld [vmem:[%s1 + $0x260] sm:$0xff]
        %v548 = vld [vmem:[%s1 + $0x268] sm:$0xff]
        %v549 = vld [vmem:[%s1 + $0x270] sm:$0xff]
        %v550 = vld [vmem:[%s1 + $0x278] sm:$0xff]
        %v551 = vld [vmem:[%s1 + $0x280] sm:$0xff]
        %v552 = vld [vmem:[%s1 + $0x288] sm:$0xff]
        %v553 = vld [vmem:[%s1 + $0x290] sm:$0xff]
        %v554 = vld [vmem:[%s1 + $0x298] sm:$0xff]
        %v555 = vld [vmem:[%s1 + $0x2a0] sm:$0xff]
        %v556 = vld [vmem:[%s1 + $0x2a8] sm:$0xff]
        %v557 = vld [vmem:[%s1 + $0x2b0] sm:$0xff]
        %v558 = vld [vmem:[%s1 + $0x2b8] sm:$0xff]
        %v559 = vld [vmem:[%s1 + $0x2c0] sm:$0xff]
        %v560 = vld [vmem:[%s1 + $0x2c8] sm:$0xff]
        %v561 = vld [vmem:[%s1 + $0x2d0] sm:$0xff]
        %v562 = vld [vmem:[%s1 + $0x2d8] sm:$0xff]
        %v563 = vld [vmem:[%s1 + $0x2e0] sm:$0xff]
        %v564 = vld [vmem:[%s1 + $0x2e8] sm:$0xff]
        %v565 = vld [vmem:[%s1 + $0x2f0] sm:$0xff]
        %v566 = vld [vmem:[%s1 + $0x2f8] sm:$0xff]
        %v567 = vld [vmem:[%s2] sm:$0x1f]
        %568 = vmatprep.subr.mxu0 0.0
        %569 = vmatpush1.msra.mxu0 %v471
        %570 = vmatprep.subr.mxu0 0.0
        %571 = vmatpush1.msra.mxu0 %v472
        %572 = vmatprep.subr.mxu0 0.0
        %573 = vmatpush1.msra.mxu0 %v473
        %574 = vmatprep.subr.mxu0 0.0
        %575 = vmatpush1.msra.mxu0 %v474
        %576 = vmatprep.subr.mxu0 0.0
        %577 = vmatpush1.msra.mxu0 %v475
        %578 = vmatprep.subr.mxu0 0.0
        %579 = vmatpush1.msra.mxu0 %v476
        %580 = vmatprep.subr.mxu0 0.0
        %581 = vmatpush1.msra.mxu0 %v477
        %582 = vmatprep.subr.mxu0 0.0
        %583 = vmatpush1.msra.mxu0 %v478
        %584 = vmatprep.subr.mxu0 0.0
        %585 = vmatpush1.msra.mxu0 %v479
        %586 = vmatprep.subr.mxu0 0.0
        %587 = vmatpush1.msra.mxu0 %v480
        %588 = vmatprep.subr.mxu0 0.0
        %589 = vmatpush1.msra.mxu0 %v481
        %590 = vmatprep.subr.mxu0 0.0
        %591 = vmatpush1.msra.mxu0 %v482
        %592 = vmatprep.subr.mxu0 0.0
        %593 = vmatpush1.msra.mxu0 %v483
        %594 = vmatprep.subr.mxu0 0.0
        %595 = vmatpush1.msra.mxu0 %v484
        %596 = vmatprep.subr.mxu0 0.0
        %597 = vmatpush1.msra.mxu0 %v485
        %598 = vmatprep.subr.mxu0 0.0
        %599 = vmatpush1.msra.mxu0 %v486
        %600 = vmatprep.subr.mxu0 0.0
        %601 = vmatpush1.msra.mxu0 %v487
        %602 = vmatprep.subr.mxu0 0.0
        %603 = vmatpush1.msra.mxu0 %v488
        %604 = vmatprep.subr.mxu0 0.0
        %605 = vmatpush1.msra.mxu0 %v489
        %606 = vmatprep.subr.mxu0 0.0
        %607 = vmatpush1.msra.mxu0 %v490
        %608 = vmatprep.subr.mxu0 0.0
        %609 = vmatpush1.msra.mxu0 %v491
        %610 = vmatprep.subr.mxu0 0.0
        %611 = vmatpush1.msra.mxu0 %v492
        %612 = vmatprep.subr.mxu0 0.0
        %613 = vmatpush1.msra.mxu0 %v493
        %614 = vmatprep.subr.mxu0 0.0
        %615 = vmatpush1.msra.mxu0 %v494
        %616 = vmatprep.subr.mxu0 0.0
        %617 = vmatpush1.msra.mxu0 %v495
        %618 = vmatprep.subr.mxu0 0.0
        %619 = vmatpush1.msra.mxu0 %v496
        %620 = vmatprep.subr.mxu0 0.0
        %621 = vmatpush1.msra.mxu0 %v497
        %622 = vmatprep.subr.mxu0 0.0
        %623 = vmatpush1.msra.mxu0 %v498
        %624 = vmatprep.subr.mxu0 0.0
        %625 = vmatpush1.msra.mxu0 %v499
        %626 = vmatprep.subr.mxu0 0.0
        %627 = vmatpush1.msra.mxu0 %v500
        %628 = vmatprep.subr.mxu0 0.0
        %629 = vmatpush1.msra.mxu0 %v501
        %630 = vmatprep.subr.mxu0 0.0
        %631 = vmatpush1.msra.mxu0 %v502
        %632 = vmatprep.mubr.f32.mxu0 %v466
        %633 = vmatmul.mubr.f32.gmra.mrb[0].mxu0 %v465
        %v634 = vpop.f32.mrb[0].mxu0
        %v635 = vadd.f32 %v567, %v634
        %v636 = vpop.f32.mrb[0].mxu0
        %637 = vdwg.mxu0
        %638 = vmatprep.subr.mxu0 0.0
        %639 = vmatpush1.msra.mxu0 %v503
        %640 = vmatprep.subr.mxu0 0.0
        %641 = vmatpush1.msra.mxu0 %v504
        %642 = vmatprep.subr.mxu0 0.0
        %643 = vmatpush1.msra.mxu0 %v505
        %644 = vmatprep.subr.mxu0 0.0
        %645 = vmatpush1.msra.mxu0 %v506
        %646 = vmatprep.subr.mxu0 0.0
        %647 = vmatpush1.msra.mxu0 %v507
        %648 = vmatprep.subr.mxu0 0.0
        %649 = vmatpush1.msra.mxu0 %v508
        %650 = vmatprep.subr.mxu0 0.0
        %651 = vmatpush1.msra.mxu0 %v509
        %652 = vmatprep.subr.mxu0 0.0
        %653 = vmatpush1.msra.mxu0 %v510
        %654 = vmatprep.subr.mxu0 0.0
        %655 = vmatpush1.msra.mxu0 %v511
        %656 = vmatprep.subr.mxu0 0.0
        %657 = vmatpush1.msra.mxu0 %v512
        %658 = vmatprep.subr.mxu0 0.0
        %659 = vmatpush1.msra.mxu0 %v513
        %660 = vmatprep.subr.mxu0 0.0
        %661 = vmatpush1.msra.mxu0 %v514
        %662 = vmatprep.subr.mxu0 0.0
        %663 = vmatpush1.msra.mxu0 %v515
        %664 = vmatprep.subr.mxu0 0.0
        %665 = vmatpush1.msra.mxu0 %v516
        %666 = vmatprep.subr.mxu0 0.0
        %667 = vmatpush1.msra.mxu0 %v517
        %668 = vmatprep.subr.mxu0 0.0
        %669 = vmatpush1.msra.mxu0 %v518
        %670 = vmatprep.subr.mxu0 0.0
        %671 = vmatpush1.msra.mxu0 %v519
        %672 = vmatprep.subr.mxu0 0.0
        %673 = vmatpush1.msra.mxu0 %v520
        %674 = vmatprep.subr.mxu0 0.0
        %675 = vmatpush1.msra.mxu0 %v521
        %676 = vmatprep.subr.mxu0 0.0
        %677 = vmatpush1.msra.mxu0 %v522
        %678 = vmatprep.subr.mxu0 0.0
        %679 = vmatpush1.msra.mxu0 %v523
        %680 = vmatprep.subr.mxu0 0.0
        %681 = vmatpush1.msra.mxu0 %v524
        %682 = vmatprep.subr.mxu0 0.0
        %683 = vmatpush1.msra.mxu0 %v525
        %684 = vmatprep.subr.mxu0 0.0
        %685 = vmatpush1.msra.mxu0 %v526
        %686 = vmatprep.subr.mxu0 0.0
        %687 = vmatpush1.msra.mxu0 %v527
        %688 = vmatprep.subr.mxu0 0.0
        %689 = vmatpush1.msra.mxu0 %v528
        %690 = vmatprep.subr.mxu0 0.0
        %691 = vmatpush1.msra.mxu0 %v529
        %692 = vmatprep.subr.mxu0 0.0
        %693 = vmatpush1.msra.mxu0 %v530
        %694 = vmatprep.subr.mxu0 0.0
        %695 = vmatpush1.msra.mxu0 %v531
        %696 = vmatprep.subr.mxu0 0.0
        %697 = vmatpush1.msra.mxu0 %v532
        %698 = vmatprep.subr.mxu0 0.0
        %699 = vmatpush1.msra.mxu0 %v533
        %700 = vmatprep.subr.mxu0 0.0
        %701 = vmatpush1.msra.mxu0 %v534
        %702 = vmatprep.mubr.f32.mxu0 %v468
        %703 = vmatmul.mubr.f32.gmra.mrb[0].mxu0 %v467
        %v704 = vpop.f32.mrb[0].mxu0
        %v705 = vadd.f32 %v635, %v704
        %v706 = vpop.f32.mrb[0].mxu0
        %707 = vdwg.mxu0
        %708 = vmatprep.subr.mxu0 0.0
        %709 = vmatpush1.msra.mxu0 %v535
        %710 = vmatprep.subr.mxu0 0.0
        %711 = vmatpush1.msra.mxu0 %v536
        %712 = vmatprep.subr.mxu0 0.0
        %713 = vmatpush1.msra.mxu0 %v537
        %714 = vmatprep.subr.mxu0 0.0
        %715 = vmatpush1.msra.mxu0 %v538
        %716 = vmatprep.subr.mxu0 0.0
        %717 = vmatpush1.msra.mxu0 %v539
        %718 = vmatprep.subr.mxu0 0.0
        %719 = vmatpush1.msra.mxu0 %v540
        %720 = vmatprep.subr.mxu0 0.0
        %721 = vmatpush1.msra.mxu0 %v541
        %722 = vmatprep.subr.mxu0 0.0
        %723 = vmatpush1.msra.mxu0 %v542
        %724 = vmatprep.subr.mxu0 0.0
        %725 = vmatpush1.msra.mxu0 %v543
        %726 = vmatprep.subr.mxu0 0.0
        %727 = vmatpush1.msra.mxu0 %v544
        %728 = vmatprep.subr.mxu0 0.0
        %729 = vmatpush1.msra.mxu0 %v545
        %730 = vmatprep.subr.mxu0 0.0
        %731 = vmatpush1.msra.mxu0 %v546
        %732 = vmatprep.subr.mxu0 0.0
        %733 = vmatpush1.msra.mxu0 %v547
        %734 = vmatprep.subr.mxu0 0.0
        %735 = vmatpush1.msra.mxu0 %v548
        %736 = vmatprep.subr.mxu0 0.0
        %737 = vmatpush1.msra.mxu0 %v549
        %738 = vmatprep.subr.mxu0 0.0
        %739 = vmatpush1.msra.mxu0 %v550
        %740 = vmatprep.subr.mxu0 0.0
        %741 = vmatpush1.msra.mxu0 %v551
        %742 = vmatprep.subr.mxu0 0.0
        %743 = vmatpush1.msra.mxu0 %v552
        %744 = vmatprep.subr.mxu0 0.0
        %745 = vmatpush1.msra.mxu0 %v553
        %746 = vmatprep.subr.mxu0 0.0
        %747 = vmatpush1.msra.mxu0 %v554
        %748 = vmatprep.subr.mxu0 0.0
        %749 = vmatpush1.msra.mxu0 %v555
        %750 = vmatprep.subr.mxu0 0.0
        %751 = vmatpush1.msra.mxu0 %v556
        %752 = vmatprep.subr.mxu0 0.0
        %753 = vmatpush1.msra.mxu0 %v557
        %754 = vmatprep.subr.mxu0 0.0
        %755 = vmatpush1.msra.mxu0 %v558
        %756 = vmatprep.subr.mxu0 0.0
        %757 = vmatpush1.msra.mxu0 %v559
        %758 = vmatprep.subr.mxu0 0.0
        %759 = vmatpush1.msra.mxu0 %v560
        %760 = vmatprep.subr.mxu0 0.0
        %761 = vmatpush1.msra.mxu0 %v561
        %762 = vmatprep.subr.mxu0 0.0
        %763 = vmatpush1.msra.mxu0 %v562
        %764 = vmatprep.subr.mxu0 0.0
        %765 = vmatpush1.msra.mxu0 %v563
        %766 = vmatprep.subr.mxu0 0.0
        %767 = vmatpush1.msra.mxu0 %v564
        %768 = vmatprep.subr.mxu0 0.0
        %769 = vmatpush1.msra.mxu0 %v565
        %770 = vmatprep.subr.mxu0 0.0
        %771 = vmatpush1.msra.mxu0 %v566
        %772 = vmatprep.mubr.f32.mxu0 %v470
        %773 = vmatmul.mubr.f32.gmra.mrb[0].mxu0 %v469
        %v774 = vpop.f32.mrb[0].mxu0
        %v775 = vadd.f32 %v705, %v774
        %v776 = vpop.f32.mrb[0].mxu0
        %777 = vdwg.mxu0
        %v778 = vld [vmem:[%s3] sm:$0x1]
        %v779 = vld [vmem:[%s4] sm:$0x1]
        %vm780 = vcmask 520192
        %v781 = vsel %vm780, %v775, 0.0
        %782 = vadd.xlane.f32.xlu0 %v781
        %v783 = vpop.xlane.xlu0 %782
        %v784 = vrcp.pop 64.0
        %v785 = vmul.f32 %v783, %v784
        %v786 = vsub.f32 %v775, %v785
        %v787 = vmul.f32 %v786, %v786
        %v788 = vsel %vm780, %v787, 0.0
        %789 = vadd.xlane.f32.xlu0 %v788
        %v790 = vpop.xlane.xlu0 %789
        %v791 = vmul.f32 %v790, %v784
        %v792 = vadd.f32 %v791, 1e-05
        %v793 = vrsqrt.pop %v792
        %v794 = vmul.f32 %v786, %v793
        %v796 = vlaneseq
        %v797 = vshrl.u32 %v796, 7
        %v798 = vsub.s32 0, %v797
        %v799 = vrot.slane %v778, %v798
        %v801 = vmul.f32 %v794, %v799
        %v803 = vlaneseq
        %v804 = vshrl.u32 %v803, 7
        %v805 = vsub.s32 0, %v804
        %v806 = vrot.slane %v779, %v805
        %v808 = vadd.f32 %v801, %v806
        %v809 = vld [vmem:[%s5] sm:$0xff]
        %v810 = vld [vmem:[%s5 + $0x8] sm:$0xff]
        %v811 = vld [vmem:[%s5 + $0x10] sm:$0xff]
        %v812 = vld [vmem:[%s5 + $0x18] sm:$0xff]
        %v813 = vld [vmem:[%s5 + $0x20] sm:$0xff]
        %v814 = vld [vmem:[%s5 + $0x28] sm:$0xff]
        %v815 = vld [vmem:[%s5 + $0x30] sm:$0xff]
        %v816 = vld [vmem:[%s5 + $0x38] sm:$0xff]
        %s817 = scalar_lea.vmem %s5, 256
        %v818 = vld [vmem:[%s817] sm:$0xff]
        %v819 = vld [vmem:[%s817 + $0x8] sm:$0xff]
        %v820 = vld [vmem:[%s817 + $0x10] sm:$0xff]
        %v821 = vld [vmem:[%s817 + $0x18] sm:$0xff]
        %v822 = vld [vmem:[%s817 + $0x20] sm:$0xff]
        %v823 = vld [vmem:[%s817 + $0x28] sm:$0xff]
        %v824 = vld [vmem:[%s817 + $0x30] sm:$0xff]
        %v825 = vld [vmem:[%s817 + $0x38] sm:$0xff]
        %s826 = scalar_lea.vmem %s5, 512
        %v827 = vld [vmem:[%s826] sm:$0xff]
        %v828 = vld [vmem:[%s826 + $0x8] sm:$0xff]
        %v829 = vld [vmem:[%s826 + $0x10] sm:$0xff]
        %v830 = vld [vmem:[%s826 + $0x18] sm:$0xff]
        %v831 = vld [vmem:[%s826 + $0x20] sm:$0xff]
        %v832 = vld [vmem:[%s826 + $0x28] sm:$0xff]
        %v833 = vld [vmem:[%s826 + $0x30] sm:$0xff]
        %v834 = vld [vmem:[%s826 + $0x38] sm:$0xff]
        %vm835 = vcmask 523264
        %v837 = vsel %vm835, %v808, 0
        %839 = vmatprep.subr.mxu0 0.0
        %840 = vmatpush1.msra.mxu0 %v809
        %841 = vmatprep.subr.mxu0 0.0
        %842 = vmatpush1.msra.mxu0 %v810
        %843 = vmatprep.subr.mxu0 0.0
        %844 = vmatpush1.msra.mxu0 %v811
        %845 = vmatprep.subr.mxu0 0.0
        %846 = vmatpush1.msra.mxu0 %v812
        %847 = vmatprep.subr.mxu0 0.0
        %848 = vmatpush1.msra.mxu0 %v813
        %849 = vmatprep.subr.mxu0 0.0
        %850 = vmatpush1.msra.mxu0 %v814
        %851 = vmatprep.subr.mxu0 0.0
        %852 = vmatpush1.msra.mxu0 %v815
        %853 = vmatprep.subr.mxu0 0.0
        %854 = vmatpush1.msra.mxu0 %v816
        %855 = vmatprep.subr.mxu0 0.0
        %856 = vmatpush1.msra.mxu0 0.0
        %857 = vmatprep.subr.mxu0 0.0
        %858 = vmatpush1.msra.mxu0 0.0
        %859 = vmatprep.subr.mxu0 0.0
        %860 = vmatpush1.msra.mxu0 0.0
        %861 = vmatprep.subr.mxu0 0.0
        %862 = vmatpush1.msra.mxu0 0.0
        %863 = vmatprep.subr.mxu0 0.0
        %864 = vmatpush1.msra.mxu0 0.0
        %865 = vmatprep.subr.mxu0 0.0
        %866 = vmatpush1.msra.mxu0 0.0
        %867 = vmatprep.subr.mxu0 0.0
        %868 = vmatpush1.msra.mxu0 0.0
        %869 = vmatprep.subr.mxu0 0.0
        %870 = vmatpush1.msra.mxu0 0.0
        %871 = vmatprep.subr.mxu0 0.0
        %872 = vmatpush1.msra.mxu0 0.0
        %873 = vmatprep.subr.mxu0 0.0
        %874 = vmatpush1.msra.mxu0 0.0
        %875 = vmatprep.subr.mxu0 0.0
        %876 = vmatpush1.msra.mxu0 0.0
        %877 = vmatprep.subr.mxu0 0.0
        %878 = vmatpush1.msra.mxu0 0.0
        %879 = vmatprep.subr.mxu0 0.0
        %880 = vmatpush1.msra.mxu0 0.0
        %881 = vmatprep.subr.mxu0 0.0
        %882 = vmatpush1.msra.mxu0 0.0
        %883 = vmatprep.subr.mxu0 0.0
        %884 = vmatpush1.msra.mxu0 0.0
        %885 = vmatprep.subr.mxu0 0.0
        %886 = vmatpush1.msra.mxu0 0.0
        %887 = vmatprep.subr.mxu0 0.0
        %888 = vmatpush1.msra.mxu0 0.0
        %889 = vmatprep.subr.mxu0 0.0
        %890 = vmatpush1.msra.mxu0 0.0
        %891 = vmatprep.subr.mxu0 0.0
        %892 = vmatpush1.msra.mxu0 0.0
        %893 = vmatprep.subr.mxu0 0.0
        %894 = vmatpush1.msra.mxu0 0.0
        %895 = vmatprep.subr.mxu0 0.0
        %896 = vmatpush1.msra.mxu0 0.0
        %897 = vmatprep.subr.mxu0 0.0
        %898 = vmatpush1.msra.mxu0 0.0
        %899 = vmatprep.subr.mxu0 0.0
        %900 = vmatpush1.msra.mxu0 0.0
        %901 = vmatprep.subr.mxu0 0.0
        %902 = vmatpush1.msra.mxu0 0.0
        %903 = vmatprep.mubr.f32.mxu0 0.0
        %904 = vmatmul.mubr.f32.gmra.mrb[0].mxu0 %v837
        %v905 = vpop.f32.mrb[0].mxu0
        %v906 = vadd.f32 0.0, %v905
        %v907 = vpop.f32.mrb[0].mxu0
        %908 = vdwg.mxu0
        %909 = vmatprep.subr.mxu0 0.0
        %910 = vmatpush1.msra.mxu0 %v818
        %911 = vmatprep.subr.mxu0 0.0
        %912 = vmatpush1.msra.mxu0 %v819
        %913 = vmatprep.subr.mxu0 0.0
        %914 = vmatpush1.msra.mxu0 %v820
        %915 = vmatprep.subr.mxu0 0.0
        %916 = vmatpush1.msra.mxu0 %v821
        %917 = vmatprep.subr.mxu0 0.0
        %918 = vmatpush1.msra.mxu0 %v822
        %919 = vmatprep.subr.mxu0 0.0
        %920 = vmatpush1.msra.mxu0 %v823
        %921 = vmatprep.subr.mxu0 0.0
        %922 = vmatpush1.msra.mxu0 %v824
        %923 = vmatprep.subr.mxu0 0.0
        %924 = vmatpush1.msra.mxu0 %v825
        %925 = vmatprep.subr.mxu0 0.0
        %926 = vmatpush1.msra.mxu0 0.0
        %927 = vmatprep.subr.mxu0 0.0
        %928 = vmatpush1.msra.mxu0 0.0
        %929 = vmatprep.subr.mxu0 0.0
        %930 = vmatpush1.msra.mxu0 0.0
        %931 = vmatprep.subr.mxu0 0.0
        %932 = vmatpush1.msra.mxu0 0.0
        %933 = vmatprep.subr.mxu0 0.0
        %934 = vmatpush1.msra.mxu0 0.0
        %935 = vmatprep.subr.mxu0 0.0
        %936 = vmatpush1.msra.mxu0 0.0
        %937 = vmatprep.subr.mxu0 0.0
        %938 = vmatpush1.msra.mxu0 0.0
        %939 = vmatprep.subr.mxu0 0.0
        %940 = vmatpush1.msra.mxu0 0.0
        %941 = vmatprep.subr.mxu0 0.0
        %942 = vmatpush1.msra.mxu0 0.0
        %943 = vmatprep.subr.mxu0 0.0
        %944 = vmatpush1.msra.mxu0 0.0
        %945 = vmatprep.subr.mxu0 0.0
        %946 = vmatpush1.msra.mxu0 0.0
        %947 = vmatprep.subr.mxu0 0.0
        %948 = vmatpush1.msra.mxu0 0.0
        %949 = vmatprep.subr.mxu0 0.0
        %950 = vmatpush1.msra.mxu0 0.0
        %951 = vmatprep.subr.mxu0 0.0
        %952 = vmatpush1.msra.mxu0 0.0
        %953 = vmatprep.subr.mxu0 0.0
        %954 = vmatpush1.msra.mxu0 0.0
        %955 = vmatprep.subr.mxu0 0.0
        %956 = vmatpush1.msra.mxu0 0.0
        %957 = vmatprep.subr.mxu0 0.0
        %958 = vmatpush1.msra.mxu0 0.0
        %959 = vmatprep.subr.mxu0 0.0
        %960 = vmatpush1.msra.mxu0 0.0
        %961 = vmatprep.subr.mxu0 0.0
        %962 = vmatpush1.msra.mxu0 0.0
        %963 = vmatprep.subr.mxu0 0.0
        %964 = vmatpush1.msra.mxu0 0.0
        %965 = vmatprep.subr.mxu0 0.0
        %966 = vmatpush1.msra.mxu0 0.0
        %967 = vmatprep.subr.mxu0 0.0
        %968 = vmatpush1.msra.mxu0 0.0
        %969 = vmatprep.subr.mxu0 0.0
        %970 = vmatpush1.msra.mxu0 0.0
        %971 = vmatprep.subr.mxu0 0.0
        %972 = vmatpush1.msra.mxu0 0.0
        %973 = vmatprep.mubr.f32.mxu0 0.0
        %974 = vmatmul.mubr.f32.gmra.mrb[0].mxu0 %v837
        %v975 = vpop.f32.mrb[0].mxu0
        %v976 = vadd.f32 0.0, %v975
        %v977 = vpop.f32.mrb[0].mxu0
        %978 = vdwg.mxu0
        %979 = vmatprep.subr.mxu0 0.0
        %980 = vmatpush1.msra.mxu0 %v827
        %981 = vmatprep.subr.mxu0 0.0
        %982 = vmatpush1.msra.mxu0 %v828
        %983 = vmatprep.subr.mxu0 0.0
        %984 = vmatpush1.msra.mxu0 %v829
        %985 = vmatprep.subr.mxu0 0.0
        %986 = vmatpush1.msra.mxu0 %v830
        %987 = vmatprep.subr.mxu0 0.0
        %988 = vmatpush1.msra.mxu0 %v831
        %989 = vmatprep.subr.mxu0 0.0
        %990 = vmatpush1.msra.mxu0 %v832
        %991 = vmatprep.subr.mxu0 0.0
        %992 = vmatpush1.msra.mxu0 %v833
        %993 = vmatprep.subr.mxu0 0.0
        %994 = vmatpush1.msra.mxu0 %v834
        %995 = vmatprep.subr.mxu0 0.0
        %996 = vmatpush1.msra.mxu0 0.0
        %997 = vmatprep.subr.mxu0 0.0
        %998 = vmatpush1.msra.mxu0 0.0
        %999 = vmatprep.subr.mxu0 0.0
        %1000 = vmatpush1.msra.mxu0 0.0
        %1001 = vmatprep.subr.mxu0 0.0
        %1002 = vmatpush1.msra.mxu0 0.0
        %1003 = vmatprep.subr.mxu0 0.0
        %1004 = vmatpush1.msra.mxu0 0.0
        %1005 = vmatprep.subr.mxu0 0.0
        %1006 = vmatpush1.msra.mxu0 0.0
        %1007 = vmatprep.subr.mxu0 0.0
        %1008 = vmatpush1.msra.mxu0 0.0
        %1009 = vmatprep.subr.mxu0 0.0
        %1010 = vmatpush1.msra.mxu0 0.0
        %1011 = vmatprep.subr.mxu0 0.0
        %1012 = vmatpush1.msra.mxu0 0.0
        %1013 = vmatprep.subr.mxu0 0.0
        %1014 = vmatpush1.msra.mxu0 0.0
        %1015 = vmatprep.subr.mxu0 0.0
        %1016 = vmatpush1.msra.mxu0 0.0
        %1017 = vmatprep.subr.mxu0 0.0
        %1018 = vmatpush1.msra.mxu0 0.0
        %1019 = vmatprep.subr.mxu0 0.0
        %1020 = vmatpush1.msra.mxu0 0.0
        %1021 = vmatprep.subr.mxu0 0.0
        %1022 = vmatpush1.msra.mxu0 0.0
        %1023 = vmatprep.subr.mxu0 0.0
        %1024 = vmatpush1.msra.mxu0 0.0
        %1025 = vmatprep.subr.mxu0 0.0
        %1026 = vmatpush1.msra.mxu0 0.0
        %1027 = vmatprep.subr.mxu0 0.0
        %1028 = vmatpush1.msra.mxu0 0.0
        %1029 = vmatprep.subr.mxu0 0.0
        %1030 = vmatpush1.msra.mxu0 0.0
        %1031 = vmatprep.subr.mxu0 0.0
        %1032 = vmatpush1.msra.mxu0 0.0
        %1033 = vmatprep.subr.mxu0 0.0
        %1034 = vmatpush1.msra.mxu0 0.0
        %1035 = vmatprep.subr.mxu0 0.0
        %1036 = vmatpush1.msra.mxu0 0.0
        %1037 = vmatprep.subr.mxu0 0.0
        %1038 = vmatpush1.msra.mxu0 0.0
        %1039 = vmatprep.subr.mxu0 0.0
        %1040 = vmatpush1.msra.mxu0 0.0
        %1041 = vmatprep.subr.mxu0 0.0
        %1042 = vmatpush1.msra.mxu0 0.0
        %1043 = vmatprep.mubr.f32.mxu0 0.0
        %1044 = vmatmul.mubr.f32.gmra.mrb[0].mxu0 %v837
        %v1045 = vpop.f32.mrb[0].mxu0
        %v1046 = vadd.f32 0.0, %v1045
        %v1047 = vpop.f32.mrb[0].mxu0
        %1048 = vdwg.mxu0
        %vm1049 = vcmask 130048
        %v1051 = vsel %vm1049, %v906, 0
        %v1054 = vsel %vm1049, %v976, 0
        %1056 = vmatprep.subr.mxu0 0.0
        %1057 = vmatpush1.xpose.msra.mxu0 %v1054
        %1058 = vmatprep.subr.mxu0 0.0
        %1059 = vmatpush1.xpose.msra.mxu0 0.0
        %1060 = vmatprep.subr.mxu0 0.0
        %1061 = vmatpush1.xpose.msra.mxu0 0.0
        %1062 = vmatprep.subr.mxu0 0.0
        %1063 = vmatpush1.xpose.msra.mxu0 0.0
        %1064 = vmatprep.subr.mxu0 0.0
        %1065 = vmatpush1.xpose.msra.mxu0 0.0
        %1066 = vmatprep.subr.mxu0 0.0
        %1067 = vmatpush1.xpose.msra.mxu0 0.0
        %1068 = vmatprep.subr.mxu0 0.0
        %1069 = vmatpush1.xpose.msra.mxu0 0.0
        %1070 = vmatprep.subr.mxu0 0.0
        %1071 = vmatpush1.xpose.msra.mxu0 0.0
        %1072 = vmatprep.subr.mxu0 0.0
        %1073 = vmatpush1.xpose.msra.mxu0 0.0
        %1074 = vmatprep.subr.mxu0 0.0
        %1075 = vmatpush1.xpose.msra.mxu0 0.0
        %1076 = vmatprep.subr.mxu0 0.0
        %1077 = vmatpush1.xpose.msra.mxu0 0.0
        %1078 = vmatprep.subr.mxu0 0.0
        %1079 = vmatpush1.xpose.msra.mxu0 0.0
        %1080 = vmatprep.subr.mxu0 0.0
        %1081 = vmatpush1.xpose.msra.mxu0 0.0
        %1082 = vmatprep.subr.mxu0 0.0
        %1083 = vmatpush1.xpose.msra.mxu0 0.0
        %1084 = vmatprep.subr.mxu0 0.0
        %1085 = vmatpush1.xpose.msra.mxu0 0.0
        %1086 = vmatprep.subr.mxu0 0.0
        %1087 = vmatpush1.xpose.msra.mxu0 0.0
        %1088 = vmatprep.subr.mxu0 0.0
        %1089 = vmatpush1.xpose.msra.mxu0 0.0
        %1090 = vmatprep.subr.mxu0 0.0
        %1091 = vmatpush1.xpose.msra.mxu0 0.0
        %1092 = vmatprep.subr.mxu0 0.0
        %1093 = vmatpush1.xpose.msra.mxu0 0.0
        %1094 = vmatprep.subr.mxu0 0.0
        %1095 = vmatpush1.xpose.msra.mxu0 0.0
        %1096 = vmatprep.subr.mxu0 0.0
        %1097 = vmatpush1.xpose.msra.mxu0 0.0
        %1098 = vmatprep.subr.mxu0 0.0
        %1099 = vmatpush1.xpose.msra.mxu0 0.0
        %1100 = vmatprep.subr.mxu0 0.0
        %1101 = vmatpush1.xpose.msra.mxu0 0.0
        %1102 = vmatprep.subr.mxu0 0.0
        %1103 = vmatpush1.xpose.msra.mxu0 0.0
        %1104 = vmatprep.subr.mxu0 0.0
        %1105 = vmatpush1.xpose.msra.mxu0 0.0
        %1106 = vmatprep.subr.mxu0 0.0
        %1107 = vmatpush1.xpose.msra.mxu0 0.0
        %1108 = vmatprep.subr.mxu0 0.0
        %1109 = vmatpush1.xpose.msra.mxu0 0.0
        %1110 = vmatprep.subr.mxu0 0.0
        %1111 = vmatpush1.xpose.msra.mxu0 0.0
        %1112 = vmatprep.subr.mxu0 0.0
        %1113 = vmatpush1.xpose.msra.mxu0 0.0
        %1114 = vmatprep.subr.mxu0 0.0
        %1115 = vmatpush1.xpose.msra.mxu0 0.0
        %1116 = vmatprep.subr.mxu0 0.0
        %1117 = vmatpush1.xpose.msra.mxu0 0.0
        %1118 = vmatprep.subr.mxu0 0.0
        %1119 = vmatpush1.xpose.msra.mxu0 0.0
        %1120 = vmatprep.mubr.f32.mxu0 0.0
        %1121 = vmatmul.mubr.f32.gmra.mrb[0].mxu0 %v1051
        %v1122 = vpop.f32.mrb[0].mxu0
        %v1123 = vadd.f32 0.0, %v1122
        %v1124 = vpop.f32.mrb[0].mxu0
        %1125 = vdwg.mxu0
        %v1126 = vmul.f32 %v1123, 0.25
        %vm1127 = vcmask 36864
        %v1128 = vsel %vm1127, %v1126, -inf
        %1129 = vmax.xlane.f32.xlu0 %v1128
        %v1130 = vpop.xlane.xlu0 %1129
        %v1131 = vsub.f32 %v1126, %v1130
        %v1132 = vmul.f32 %v1131, 1.442695
        %v1133 = vpow.pop %v1132
        %v1134 = vsel %vm1127, %v1133, 0.0
        %1135 = vadd.xlane.f32.xlu0 %v1134
        %v1136 = vpop.xlane.xlu0 %1135
        %v1137 = vrcp.pop %v1136
        %v1138 = vmul.f32 %v1133, %v1137
        %vm1139 = vcmask 39936
        %v1141 = vsel %vm1139, %v1138, 0
        %vm1143 = vcmask 1044480
        %v1145 = vsel %vm1143, %v1046, 0
        %1147 = vmatprep.subr.mxu0 0.0
        %1148 = vmatpush1.msra.mxu0 %v1145
        %1149 = vmatprep.subr.mxu0 0.0
        %1150 = vmatpush1.msra.mxu0 0.0
        %1151 = vmatprep.subr.mxu0 0.0
        %1152 = vmatpush1.msra.mxu0 0.0
        %1153 = vmatprep.subr.mxu0 0.0
        %1154 = vmatpush1.msra.mxu0 0.0
        %1155 = vmatprep.subr.mxu0 0.0
        %1156 = vmatpush1.msra.mxu0 0.0
        %1157 = vmatprep.subr.mxu0 0.0
        %1158 = vmatpush1.msra.mxu0 0.0
        %1159 = vmatprep.subr.mxu0 0.0
        %1160 = vmatpush1.msra.mxu0 0.0
        %1161 = vmatprep.subr.mxu0 0.0
        %1162 = vmatpush1.msra.mxu0 0.0
        %1163 = vmatprep.subr.mxu0 0.0
        %1164 = vmatpush1.msra.mxu0 0.0
        %1165 = vmatprep.subr.mxu0 0.0
        %1166 = vmatpush1.msra.mxu0 0.0
        %1167 = vmatprep.subr.mxu0 0.0
        %1168 = vmatpush1.msra.mxu0 0.0
        %1169 = vmatprep.subr.mxu0 0.0
        %1170 = vmatpush1.msra.mxu0 0.0
        %1171 = vmatprep.subr.mxu0 0.0
        %1172 = vmatpush1.msra.mxu0 0.0
        %1173 = vmatprep.subr.mxu0 0.0
        %1174 = vmatpush1.msra.mxu0 0.0
        %1175 = vmatprep.subr.mxu0 0.0
        %1176 = vmatpush1.msra.mxu0 0.0
        %1177 = vmatprep.subr.mxu0 0.0
        %1178 = vmatpush1.msra.mxu0 0.0
        %1179 = vmatprep.subr.mxu0 0.0
        %1180 = vmatpush1.msra.mxu0 0.0
        %1181 = vmatprep.subr.mxu0 0.0
        %1182 = vmatpush1.msra.mxu0 0.0
        %1183 = vmatprep.subr.mxu0 0.0
        %1184 = vmatpush1.msra.mxu0 0.0
        %1185 = vmatprep.subr.mxu0 0.0
        %1186 = vmatpush1.msra.mxu0 0.0
        %1187 = vmatprep.subr.mxu0 0.0
        %1188 = vmatpush1.msra.mxu0 0.0
        %1189 = vmatprep.subr.mxu0 0.0
        %1190 = vmatpush1.msra.mxu0 0.0
        %1191 = vmatprep.subr.mxu0 0.0
        %1192 = vmatpush1.msra.mxu0 0.0
        %1193 = vmatprep.subr.mxu0 0.0
        %1194 = vmatpush1.msra.mxu0 0.0
        %1195 = vmatprep.subr.mxu0 0.0
        %1196 = vmatpush1.msra.mxu0 0.0
        %1197 = vmatprep.subr.mxu0 0.0
        %1198 = vmatpush1.msra.mxu0 0.0
        %1199 = vmatprep.subr.mxu0 0.0
        %1200 = vmatpush1.msra.mxu0 0.0
        %1201 = vmatprep.subr.mxu0 0.0
        %1202 = vmatpush1.msra.mxu0 0.0
        %1203 = vmatprep.subr.mxu0 0.0
        %1204 = vmatpush1.msra.mxu0 0.0
        %1205 = vmatprep.subr.mxu0 0.0
        %1206 = vmatpush1.msra.mxu0 0.0
        %1207 = vmatprep.subr.mxu0 0.0
        %1208 = vmatpush1.msra.mxu0 0.0
        %1209 = vmatprep.subr.mxu0 0.0
        %1210 = vmatpush1.msra.mxu0 0.0
        %1211 = vmatprep.mubr.f32.mxu0 0.0
        %1212 = vmatmul.mubr.f32.gmra.mrb[0].mxu0 %v1141
        %v1213 = vpop.f32.mrb[0].mxu0
        %v1214 = vadd.f32 0.0, %v1213
        %v1215 = vpop.f32.mrb[0].mxu0
        %1216 = vdwg.mxu0
        %v1217 = vld [vmem:[%s6] sm:$0xff]
        %v1218 = vld [vmem:[%s6 + $0x8] sm:$0xff]
        %s1219 = scalar_lea.vmem %s5, 64
        %v1220 = vld [vmem:[%s1219] sm:$0xff]
        %v1221 = vld [vmem:[%s1219 + $0x8] sm:$0xff]
        %v1222 = vld [vmem:[%s1219 + $0x10] sm:$0xff]
        %v1223 = vld [vmem:[%s1219 + $0x18] sm:$0xff]
        %v1224 = vld [vmem:[%s1219 + $0x20] sm:$0xff]
        %v1225 = vld [vmem:[%s1219 + $0x28] sm:$0xff]
        %v1226 = vld [vmem:[%s1219 + $0x30] sm:$0xff]
        %v1227 = vld [vmem:[%s1219 + $0x38] sm:$0xff]
        %s1228 = scalar_lea.vmem %s5, 320
        %v1229 = vld [vmem:[%s1228] sm:$0xff]
        %v1230 = vld [vmem:[%s1228 + $0x8] sm:$0xff]
        %v1231 = vld [vmem:[%s1228 + $0x10] sm:$0xff]
        %v1232 = vld [vmem:[%s1228 + $0x18] sm:$0xff]
        %v1233 = vld [vmem:[%s1228 + $0x20] sm:$0xff]
        %v1234 = vld [vmem:[%s1228 + $0x28] sm:$0xff]
        %v1235 = vld [vmem:[%s1228 + $0x30] sm:$0xff]
        %v1236 = vld [vmem:[%s1228 + $0x38] sm:$0xff]
        %s1237 = scalar_lea.vmem %s5, 576
        %v1238 = vld [vmem:[%s1237] sm:$0xff]
        %v1239 = vld [vmem:[%s1237 + $0x8] sm:$0xff]
        %v1240 = vld [vmem:[%s1237 + $0x10] sm:$0xff]
        %v1241 = vld [vmem:[%s1237 + $0x18] sm:$0xff]
        %v1242 = vld [vmem:[%s1237 + $0x20] sm:$0xff]
        %v1243 = vld [vmem:[%s1237 + $0x28] sm:$0xff]
        %v1244 = vld [vmem:[%s1237 + $0x30] sm:$0xff]
        %v1245 = vld [vmem:[%s1237 + $0x38] sm:$0xff]
        %1246 = vmatprep.subr.mxu0 0.0
        %1247 = vmatpush1.msra.mxu0 %v1220
        %1248 = vmatprep.subr.mxu0 0.0
        %1249 = vmatpush1.msra.mxu0 %v1221
        %1250 = vmatprep.subr.mxu0 0.0
        %1251 = vmatpush1.msra.mxu0 %v1222
        %1252 = vmatprep.subr.mxu0 0.0
        %1253 = vmatpush1.msra.mxu0 %v1223
        %1254 = vmatprep.subr.mxu0 0.0
        %1255 = vmatpush1.msra.mxu0 %v1224
        %1256 = vmatprep.subr.mxu0 0.0
        %1257 = vmatpush1.msra.mxu0 %v1225
        %1258 = vmatprep.subr.mxu0 0.0
        %1259 = vmatpush1.msra.mxu0 %v1226
        %1260 = vmatprep.subr.mxu0 0.0
        %1261 = vmatpush1.msra.mxu0 %v1227
        %1262 = vmatprep.subr.mxu0 0.0
        %1263 = vmatpush1.msra.mxu0 0.0
        %1264 = vmatprep.subr.mxu0 0.0
        %1265 = vmatpush1.msra.mxu0 0.0
        %1266 = vmatprep.subr.mxu0 0.0
        %1267 = vmatpush1.msra.mxu0 0.0
        %1268 = vmatprep.subr.mxu0 0.0
        %1269 = vmatpush1.msra.mxu0 0.0
        %1270 = vmatprep.subr.mxu0 0.0
        %1271 = vmatpush1.msra.mxu0 0.0
        %1272 = vmatprep.subr.mxu0 0.0
        %1273 = vmatpush1.msra.mxu0 0.0
        %1274 = vmatprep.subr.mxu0 0.0
        %1275 = vmatpush1.msra.mxu0 0.0
        %1276 = vmatprep.subr.mxu0 0.0
        %1277 = vmatpush1.msra.mxu0 0.0
        %1278 = vmatprep.subr.mxu0 0.0
        %1279 = vmatpush1.msra.mxu0 0.0
        %1280 = vmatprep.subr.mxu0 0.0
        %1281 = vmatpush1.msra.mxu0 0.0
        %1282 = vmatprep.subr.mxu0 0.0
        %1283 = vmatpush1.msra.mxu0 0.0
        %1284 = vmatprep.subr.mxu0 0.0
        %1285 = vmatpush1.msra.mxu0 0.0
        %1286 = vmatprep.subr.mxu0 0.0
        %1287 = vmatpush1.msra.mxu0 0.0
        %1288 = vmatprep.subr.mxu0 0.0
        %1289 = vmatpush1.msra.mxu0 0.0
        %1290 = vmatprep.subr.mxu0 0.0
        %1291 = vmatpush1.msra.mxu0 0.0
        %1292 = vmatprep.subr.mxu0 0.0
        %1293 = vmatpush1.msra.mxu0 0.0
        %1294 = vmatprep.subr.mxu0 0.0
        %1295 = vmatpush1.msra.mxu0 0.0
        %1296 = vmatprep.subr.mxu0 0.0
        %1297 = vmatpush1.msra.mxu0 0.0
        %1298 = vmatprep.subr.mxu0 0.0
        %1299 = vmatpush1.msra.mxu0 0.0
        %1300 = vmatprep.subr.mxu0 0.0
        %1301 = vmatpush1.msra.mxu0 0.0
        %1302 = vmatprep.subr.mxu0 0.0
        %1303 = vmatpush1.msra.mxu0 0.0
        %1304 = vmatprep.subr.mxu0 0.0
        %1305 = vmatpush1.msra.mxu0 0.0
        %1306 = vmatprep.subr.mxu0 0.0
        %1307 = vmatpush1.msra.mxu0 0.0
        %1308 = vmatprep.subr.mxu0 0.0
        %1309 = vmatpush1.msra.mxu0 0.0
        %1310 = vmatprep.mubr.f32.mxu0 0.0
        %1311 = vmatmul.mubr.f32.gmra.mrb[0].mxu0 %v837
        %v1312 = vpop.f32.mrb[0].mxu0
        %v1313 = vadd.f32 0.0, %v1312
        %v1314 = vpop.f32.mrb[0].mxu0
        %1315 = vdwg.mxu0
        %1316 = vmatprep.subr.mxu0 0.0
        %1317 = vmatpush1.msra.mxu0 %v1229
        %1318 = vmatprep.subr.mxu0 0.0
        %1319 = vmatpush1.msra.mxu0 %v1230
        %1320 = vmatprep.subr.mxu0 0.0
        %1321 = vmatpush1.msra.mxu0 %v1231
        %1322 = vmatprep.subr.mxu0 0.0
        %1323 = vmatpush1.msra.mxu0 %v1232
        %1324 = vmatprep.subr.mxu0 0.0
        %1325 = vmatpush1.msra.mxu0 %v1233
        %1326 = vmatprep.subr.mxu0 0.0
        %1327 = vmatpush1.msra.mxu0 %v1234
        %1328 = vmatprep.subr.mxu0 0.0
        %1329 = vmatpush1.msra.mxu0 %v1235
        %1330 = vmatprep.subr.mxu0 0.0
        %1331 = vmatpush1.msra.mxu0 %v1236
        %1332 = vmatprep.subr.mxu0 0.0
        %1333 = vmatpush1.msra.mxu0 0.0
        %1334 = vmatprep.subr.mxu0 0.0
        %1335 = vmatpush1.msra.mxu0 0.0
        %1336 = vmatprep.subr.mxu0 0.0
        %1337 = vmatpush1.msra.mxu0 0.0
        %1338 = vmatprep.subr.mxu0 0.0
        %1339 = vmatpush1.msra.mxu0 0.0
        %1340 = vmatprep.subr.mxu0 0.0
        %1341 = vmatpush1.msra.mxu0 0.0
        %1342 = vmatprep.subr.mxu0 0.0
        %1343 = vmatpush1.msra.mxu0 0.0
        %1344 = vmatprep.subr.mxu0 0.0
        %1345 = vmatpush1.msra.mxu0 0.0
        %1346 = vmatprep.subr.mxu0 0.0
        %1347 = vmatpush1.msra.mxu0 0.0
        %1348 = vmatprep.subr.mxu0 0.0
        %1349 = vmatpush1.msra.mxu0 0.0
        %1350 = vmatprep.subr.mxu0 0.0
        %1351 = vmatpush1.msra.mxu0 0.0
        %1352 = vmatprep.subr.mxu0 0.0
        %1353 = vmatpush1.msra.mxu0 0.0
        %1354 = vmatprep.subr.mxu0 0.0
        %1355 = vmatpush1.msra.mxu0 0.0
        %1356 = vmatprep.subr.mxu0 0.0
        %1357 = vmatpush1.msra.mxu0 0.0
        %1358 = vmatprep.subr.mxu0 0.0
        %1359 = vmatpush1.msra.mxu0 0.0
        %1360 = vmatprep.subr.mxu0 0.0
        %1361 = vmatpush1.msra.mxu0 0.0
        %1362 = vmatprep.subr.mxu0 0.0
        %1363 = vmatpush1.msra.mxu0 0.0
        %1364 = vmatprep.subr.mxu0 0.0
        %1365 = vmatpush1.msra.mxu0 0.0
        %1366 = vmatprep.subr.mxu0 0.0
        %1367 = vmatpush1.msra.mxu0 0.0
        %1368 = vmatprep.subr.mxu0 0.0
        %1369 = vmatpush1.msra.mxu0 0.0
        %1370 = vmatprep.subr.mxu0 0.0
        %1371 = vmatpush1.msra.mxu0 0.0
        %1372 = vmatprep.subr.mxu0 0.0
        %1373 = vmatpush1.msra.mxu0 0.0
        %1374 = vmatprep.subr.mxu0 0.0
        %1375 = vmatpush1.msra.mxu0 0.0
        %1376 = vmatprep.subr.mxu0 0.0
        %1377 = vmatpush1.msra.mxu0 0.0
        %1378 = vmatprep.subr.mxu0 0.0
        %1379 = vmatpush1.msra.mxu0 0.0
        %1380 = vmatprep.mubr.f32.mxu0 0.0
        %1381 = vmatmul.mubr.f32.gmra.mrb[0].mxu0 %v837
        %v1382 = vpop.f32.mrb[0].mxu0
        %v1383 = vadd.f32 0.0, %v1382
        %v1384 = vpop.f32.mrb[0].mxu0
        %1385 = vdwg.mxu0
        %1386 = vmatprep.subr.mxu0 0.0
        %1387 = vmatpush1.msra.mxu0 %v1238
        %1388 = vmatprep.subr.mxu0 0.0
        %1389 = vmatpush1.msra.mxu0 %v1239
        %1390 = vmatprep.subr.mxu0 0.0
        %1391 = vmatpush1.msra.mxu0 %v1240
        %1392 = vmatprep.subr.mxu0 0.0
        %1393 = vmatpush1.msra.mxu0 %v1241
        %1394 = vmatprep.subr.mxu0 0.0
        %1395 = vmatpush1.msra.mxu0 %v1242
        %1396 = vmatprep.subr.mxu0 0.0
        %1397 = vmatpush1.msra.mxu0 %v1243
        %1398 = vmatprep.subr.mxu0 0.0
        %1399 = vmatpush1.msra.mxu0 %v1244
        %1400 = vmatprep.subr.mxu0 0.0
        %1401 = vmatpush1.msra.mxu0 %v1245
        %1402 = vmatprep.subr.mxu0 0.0
        %1403 = vmatpush1.msra.mxu0 0.0
        %1404 = vmatprep.subr.mxu0 0.0
        %1405 = vmatpush1.msra.mxu0 0.0
        %1406 = vmatprep.subr.mxu0 0.0
        %1407 = vmatpush1.msra.mxu0 0.0
        %1408 = vmatprep.subr.mxu0 0.0
        %1409 = vmatpush1.msra.mxu0 0.0
        %1410 = vmatprep.subr.mxu0 0.0
        %1411 = vmatpush1.msra.mxu0 0.0
        %1412 = vmatprep.subr.mxu0 0.0
        %1413 = vmatpush1.msra.mxu0 0.0
        %1414 = vmatprep.subr.mxu0 0.0
        %1415 = vmatpush1.msra.mxu0 0.0
        %1416 = vmatprep.subr.mxu0 0.0
        %1417 = vmatpush1.msra.mxu0 0.0
        %1418 = vmatprep.subr.mxu0 0.0
        %1419 = vmatpush1.msra.mxu0 0.0
        %1420 = vmatprep.subr.mxu0 0.0
        %1421 = vmatpush1.msra.mxu0 0.0
        %1422 = vmatprep.subr.mxu0 0.0
        %1423 = vmatpush1.msra.mxu0 0.0
        %1424 = vmatprep.subr.mxu0 0.0
        %1425 = vmatpush1.msra.mxu0 0.0
        %1426 = vmatprep.subr.mxu0 0.0
        %1427 = vmatpush1.msra.mxu0 0.0
        %1428 = vmatprep.subr.mxu0 0.0
        %1429 = vmatpush1.msra.mxu0 0.0
        %1430 = vmatprep.subr.mxu0 0.0
        %1431 = vmatpush1.msra.mxu0 0.0
        %1432 = vmatprep.subr.mxu0 0.0
        %1433 = vmatpush1.msra.mxu0 0.0
        %1434 = vmatprep.subr.mxu0 0.0
        %1435 = vmatpush1.msra.mxu0 0.0
        %1436 = vmatprep.subr.mxu0 0.0
        %1437 = vmatpush1.msra.mxu0 0.0
        %1438 = vmatprep.subr.mxu0 0.0
        %1439 = vmatpush1.msra.mxu0 0.0
        %1440 = vmatprep.subr.mxu0 0.0
        %1441 = vmatpush1.msra.mxu0 0.0
        %1442 = vmatprep.subr.mxu0 0.0
        %1443 = vmatpush1.msra.mxu0 0.0
        %1444 = vmatprep.subr.mxu0 0.0
        %1445 = vmatpush1.msra.mxu0 0.0
        %1446 = vmatprep.subr.mxu0 0.0
        %1447 = vmatpush1.msra.mxu0 0.0
        %1448 = vmatprep.subr.mxu0 0.0
        %1449 = vmatpush1.msra.mxu0 0.0
        %1450 = vmatprep.mubr.f32.mxu0 0.0
        %1451 = vmatmul.mubr.f32.gmra.mrb[0].mxu0 %v837
        %v1452 = vpop.f32.mrb[0].mxu0
        %v1453 = vadd.f32 0.0, %v1452
        %v1454 = vpop.f32.mrb[0].mxu0
        %1455 = vdwg.mxu0
        %v1457 = vsel %vm1049, %v1313, 0
        %v1460 = vsel %vm1049, %v1383, 0
        %1462 = vmatprep.subr.mxu0 0.0
        %1463 = vmatpush1.xpose.msra.mxu0 %v1460
        %1464 = vmatprep.subr.mxu0 0.0
        %1465 = vmatpush1.xpose.msra.mxu0 0.0
        %1466 = vmatprep.subr.mxu0 0.0
        %1467 = vmatpush1.xpose.msra.mxu0 0.0
        %1468 = vmatprep.subr.mxu0 0.0
        %1469 = vmatpush1.xpose.msra.mxu0 0.0
        %1470 = vmatprep.subr.mxu0 0.0
        %1471 = vmatpush1.xpose.msra.mxu0 0.0
        %1472 = vmatprep.subr.mxu0 0.0
        %1473 = vmatpush1.xpose.msra.mxu0 0.0
        %1474 = vmatprep.subr.mxu0 0.0
        %1475 = vmatpush1.xpose.msra.mxu0 0.0
        %1476 = vmatprep.subr.mxu0 0.0
        %1477 = vmatpush1.xpose.msra.mxu0 0.0
        %1478 = vmatprep.subr.mxu0 0.0
        %1479 = vmatpush1.xpose.msra.mxu0 0.0
        %1480 = vmatprep.subr.mxu0 0.0
        %1481 = vmatpush1.xpose.msra.mxu0 0.0
        %1482 = vmatprep.subr.mxu0 0.0
        %1483 = vmatpush1.xpose.msra.mxu0 0.0
        %1484 = vmatprep.subr.mxu0 0.0
        %1485 = vmatpush1.xpose.msra.mxu0 0.0
        %1486 = vmatprep.subr.mxu0 0.0
        %1487 = vmatpush1.xpose.msra.mxu0 0.0
        %1488 = vmatprep.subr.mxu0 0.0
        %1489 = vmatpush1.xpose.msra.mxu0 0.0
        %1490 = vmatprep.subr.mxu0 0.0
        %1491 = vmatpush1.xpose.msra.mxu0 0.0
        %1492 = vmatprep.subr.mxu0 0.0
        %1493 = vmatpush1.xpose.msra.mxu0 0.0
        %1494 = vmatprep.subr.mxu0 0.0
        %1495 = vmatpush1.xpose.msra.mxu0 0.0
        %1496 = vmatprep.subr.mxu0 0.0
        %1497 = vmatpush1.xpose.msra.mxu0 0.0
        %1498 = vmatprep.subr.mxu0 0.0
        %1499 = vmatpush1.xpose.msra.mxu0 0.0
        %1500 = vmatprep.subr.mxu0 0.0
        %1501 = vmatpush1.xpose.msra.mxu0 0.0
        %1502 = vmatprep.subr.mxu0 0.0
        %1503 = vmatpush1.xpose.msra.mxu0 0.0
        %1504 = vmatprep.subr.mxu0 0.0
        %1505 = vmatpush1.xpose.msra.mxu0 0.0
        %1506 = vmatprep.subr.mxu0 0.0
        %1507 = vmatpush1.xpose.msra.mxu0 0.0
        %1508 = vmatprep.subr.mxu0 0.0
        %1509 = vmatpush1.xpose.msra.mxu0 0.0
        %1510 = vmatprep.subr.mxu0 0.0
        %1511 = vmatpush1.xpose.msra.mxu0 0.0
        %1512 = vmatprep.subr.mxu0 0.0
        %1513 = vmatpush1.xpose.msra.mxu0 0.0
        %1514 = vmatprep.subr.mxu0 0.0
        %1515 = vmatpush1.xpose.msra.mxu0 0.0
        %1516 = vmatprep.subr.mxu0 0.0
        %1517 = vmatpush1.xpose.msra.mxu0 0.0
        %1518 = vmatprep.subr.mxu0 0.0
        %1519 = vmatpush1.xpose.msra.mxu0 0.0
        %1520 = vmatprep.subr.mxu0 0.0
        %1521 = vmatpush1.xpose.msra.mxu0 0.0
        %1522 = vmatprep.subr.mxu0 0.0
        %1523 = vmatpush1.xpose.msra.mxu0 0.0
        %1524 = vmatprep.subr.mxu0 0.0
        %1525 = vmatpush1.xpose.msra.mxu0 0.0
        %1526 = vmatprep.mubr.f32.mxu0 0.0
        %1527 = vmatmul.mubr.f32.gmra.mrb[0].mxu0 %v1457
        %v1528 = vpop.f32.mrb[0].mxu0
        %v1529 = vadd.f32 0.0, %v1528
        %v1530 = vpop.f32.mrb[0].mxu0
        %1531 = vdwg.mxu0
        %v1532 = vmul.f32 %v1529, 0.25
        %v1533 = vsel %vm1127, %v1532, -inf
        %1534 = vmax.xlane.f32.xlu0 %v1533
        %v1535 = vpop.xlane.xlu0 %1534
        %v1536 = vsub.f32 %v1532, %v1535
        %v1537 = vmul.f32 %v1536, 1.442695
        %v1538 = vpow.pop %v1537
        %v1539 = vsel %vm1127, %v1538, 0.0
        %1540 = vadd.xlane.f32.xlu0 %v1539
        %v1541 = vpop.xlane.xlu0 %1540
        %v1542 = vrcp.pop %v1541
        %v1543 = vmul.f32 %v1538, %v1542
        %v1545 = vsel %vm1139, %v1543, 0
        %v1548 = vsel %vm1143, %v1453, 0
        %1550 = vmatprep.subr.mxu0 0.0
        %1551 = vmatpush1.msra.mxu0 %v1548
        %1552 = vmatprep.subr.mxu0 0.0
        %1553 = vmatpush1.msra.mxu0 0.0
        %1554 = vmatprep.subr.mxu0 0.0
        %1555 = vmatpush1.msra.mxu0 0.0
        %1556 = vmatprep.subr.mxu0 0.0
        %1557 = vmatpush1.msra.mxu0 0.0
        %1558 = vmatprep.subr.mxu0 0.0
        %1559 = vmatpush1.msra.mxu0 0.0
        %1560 = vmatprep.subr.mxu0 0.0
        %1561 = vmatpush1.msra.mxu0 0.0
        %1562 = vmatprep.subr.mxu0 0.0
        %1563 = vmatpush1.msra.mxu0 0.0
        %1564 = vmatprep.subr.mxu0 0.0
        %1565 = vmatpush1.msra.mxu0 0.0
        %1566 = vmatprep.subr.mxu0 0.0
        %1567 = vmatpush1.msra.mxu0 0.0
        %1568 = vmatprep.subr.mxu0 0.0
        %1569 = vmatpush1.msra.mxu0 0.0
        %1570 = vmatprep.subr.mxu0 0.0
        %1571 = vmatpush1.msra.mxu0 0.0
        %1572 = vmatprep.subr.mxu0 0.0
        %1573 = vmatpush1.msra.mxu0 0.0
        %1574 = vmatprep.subr.mxu0 0.0
        %1575 = vmatpush1.msra.mxu0 0.0
        %1576 = vmatprep.subr.mxu0 0.0
        %1577 = vmatpush1.msra.mxu0 0.0
        %1578 = vmatprep.subr.mxu0 0.0
        %1579 = vmatpush1.msra.mxu0 0.0
        %1580 = vmatprep.subr.mxu0 0.0
        %1581 = vmatpush1.msra.mxu0 0.0
        %1582 = vmatprep.subr.mxu0 0.0
        %1583 = vmatpush1.msra.mxu0 0.0
        %1584 = vmatprep.subr.mxu0 0.0
        %1585 = vmatpush1.msra.mxu0 0.0
        %1586 = vmatprep.subr.mxu0 0.0
        %1587 = vmatpush1.msra.mxu0 0.0
        %1588 = vmatprep.subr.mxu0 0.0
        %1589 = vmatpush1.msra.mxu0 0.0
        %1590 = vmatprep.subr.mxu0 0.0
        %1591 = vmatpush1.msra.mxu0 0.0
        %1592 = vmatprep.subr.mxu0 0.0
        %1593 = vmatpush1.msra.mxu0 0.0
        %1594 = vmatprep.subr.mxu0 0.0
        %1595 = vmatpush1.msra.mxu0 0.0
        %1596 = vmatprep.subr.mxu0 0.0
        %1597 = vmatpush1.msra.mxu0 0.0
        %1598 = vmatprep.subr.mxu0 0.0
        %1599 = vmatpush1.msra.mxu0 0.0
        %1600 = vmatprep.subr.mxu0 0.0
        %1601 = vmatpush1.msra.mxu0 0.0
        %1602 = vmatprep.subr.mxu0 0.0
        %1603 = vmatpush1.msra.mxu0 0.0
        %1604 = vmatprep.subr.mxu0 0.0
        %1605 = vmatpush1.msra.mxu0 0.0
        %1606 = vmatprep.subr.mxu0 0.0
        %1607 = vmatpush1.msra.mxu0 0.0
        %1608 = vmatprep.subr.mxu0 0.0
        %1609 = vmatpush1.msra.mxu0 0.0
        %1610 = vmatprep.subr.mxu0 0.0
        %1611 = vmatpush1.msra.mxu0 0.0
        %1612 = vmatprep.subr.mxu0 0.0
        %1613 = vmatpush1.msra.mxu0 0.0
        %1614 = vmatprep.mubr.f32.mxu0 0.0
        %1615 = vmatmul.mubr.f32.gmra.mrb[0].mxu0 %v1545
        %v1616 = vpop.f32.mrb[0].mxu0
        %v1617 = vadd.f32 0.0, %v1616
        %v1618 = vpop.f32.mrb[0].mxu0
        %1619 = vdwg.mxu0
        %s1620 = scalar_lea.vmem %s6, 16
        %v1621 = vld [vmem:[%s1620] sm:$0xff]
        %v1622 = vld [vmem:[%s1620 + $0x8] sm:$0xff]
        %v1624 = vsel %vm1049, %v1617, 0
        %1626 = vmatprep.subr.mxu0 0.0
        %1627 = vmatpush1.msra.mxu0 %v1621
        %1628 = vmatprep.subr.mxu0 0.0
        %1629 = vmatpush1.msra.mxu0 %v1622
        %1630 = vmatprep.subr.mxu0 0.0
        %1631 = vmatpush1.msra.mxu0 0.0
        %1632 = vmatprep.subr.mxu0 0.0
        %1633 = vmatpush1.msra.mxu0 0.0
        %1634 = vmatprep.subr.mxu0 0.0
        %1635 = vmatpush1.msra.mxu0 0.0
        %1636 = vmatprep.subr.mxu0 0.0
        %1637 = vmatpush1.msra.mxu0 0.0
        %1638 = vmatprep.subr.mxu0 0.0
        %1639 = vmatpush1.msra.mxu0 0.0
        %1640 = vmatprep.subr.mxu0 0.0
        %1641 = vmatpush1.msra.mxu0 0.0
        %1642 = vmatprep.subr.mxu0 0.0
        %1643 = vmatpush1.msra.mxu0 0.0
        %1644 = vmatprep.subr.mxu0 0.0
        %1645 = vmatpush1.msra.mxu0 0.0
        %1646 = vmatprep.subr.mxu0 0.0
        %1647 = vmatpush1.msra.mxu0 0.0
        %1648 = vmatprep.subr.mxu0 0.0
        %1649 = vmatpush1.msra.mxu0 0.0
        %1650 = vmatprep.subr.mxu0 0.0
        %1651 = vmatpush1.msra.mxu0 0.0
        %1652 = vmatprep.subr.mxu0 0.0
        %1653 = vmatpush1.msra.mxu0 0.0
        %1654 = vmatprep.subr.mxu0 0.0
        %1655 = vmatpush1.msra.mxu0 0.0
        %1656 = vmatprep.subr.mxu0 0.0
        %1657 = vmatpush1.msra.mxu0 0.0
        %1658 = vmatprep.subr.mxu0 0.0
        %1659 = vmatpush1.msra.mxu0 0.0
        %1660 = vmatprep.subr.mxu0 0.0
        %1661 = vmatpush1.msra.mxu0 0.0
        %1662 = vmatprep.subr.mxu0 0.0
        %1663 = vmatpush1.msra.mxu0 0.0
        %1664 = vmatprep.subr.mxu0 0.0
        %1665 = vmatpush1.msra.mxu0 0.0
        %1666 = vmatprep.subr.mxu0 0.0
        %1667 = vmatpush1.msra.mxu0 0.0
        %1668 = vmatprep.subr.mxu0 0.0
        %1669 = vmatpush1.msra.mxu0 0.0
        %1670 = vmatprep.subr.mxu0 0.0
        %1671 = vmatpush1.msra.mxu0 0.0
        %1672 = vmatprep.subr.mxu0 0.0
        %1673 = vmatpush1.msra.mxu0 0.0
        %1674 = vmatprep.subr.mxu0 0.0
        %1675 = vmatpush1.msra.mxu0 0.0
        %1676 = vmatprep.subr.mxu0 0.0
        %1677 = vmatpush1.msra.mxu0 0.0
        %1678 = vmatprep.subr.mxu0 0.0
        %1679 = vmatpush1.msra.mxu0 0.0
        %1680 = vmatprep.subr.mxu0 0.0
        %1681 = vmatpush1.msra.mxu0 0.0
        %1682 = vmatprep.subr.mxu0 0.0
        %1683 = vmatpush1.msra.mxu0 0.0
        %1684 = vmatprep.subr.mxu0 0.0
        %1685 = vmatpush1.msra.mxu0 0.0
        %1686 = vmatprep.subr.mxu0 0.0
        %1687 = vmatpush1.msra.mxu0 0.0
        %1688 = vmatprep.subr.mxu0 0.0
        %1689 = vmatpush1.msra.mxu0 0.0
        %1690 = vmatprep.mubr.f32.mxu0 0.0
        %1691 = vmatmul.mubr.f32.gmra.mrb[0].mxu0 %v1624
        %v1692 = vpop.f32.mrb[0].mxu0
        %v1693 = vadd.f32 0.0, %v1692
        %v1694 = vpop.f32.mrb[0].mxu0
        %1695 = vdwg.mxu0
        %v1697 = vsel %vm1049, %v1214, 0
        %1699 = vmatprep.subr.mxu0 0.0
        %1700 = vmatpush1.msra.mxu0 %v1217
        %1701 = vmatprep.subr.mxu0 0.0
        %1702 = vmatpush1.msra.mxu0 %v1218
        %1703 = vmatprep.subr.mxu0 0.0
        %1704 = vmatpush1.msra.mxu0 0.0
        %1705 = vmatprep.subr.mxu0 0.0
        %1706 = vmatpush1.msra.mxu0 0.0
        %1707 = vmatprep.subr.mxu0 0.0
        %1708 = vmatpush1.msra.mxu0 0.0
        %1709 = vmatprep.subr.mxu0 0.0
        %1710 = vmatpush1.msra.mxu0 0.0
        %1711 = vmatprep.subr.mxu0 0.0
        %1712 = vmatpush1.msra.mxu0 0.0
        %1713 = vmatprep.subr.mxu0 0.0
        %1714 = vmatpush1.msra.mxu0 0.0
        %1715 = vmatprep.subr.mxu0 0.0
        %1716 = vmatpush1.msra.mxu0 0.0
        %1717 = vmatprep.subr.mxu0 0.0
        %1718 = vmatpush1.msra.mxu0 0.0
        %1719 = vmatprep.subr.mxu0 0.0
        %1720 = vmatpush1.msra.mxu0 0.0
        %1721 = vmatprep.subr.mxu0 0.0
        %1722 = vmatpush1.msra.mxu0 0.0
        %1723 = vmatprep.subr.mxu0 0.0
        %1724 = vmatpush1.msra.mxu0 0.0
        %1725 = vmatprep.subr.mxu0 0.0
        %1726 = vmatpush1.msra.mxu0 0.0
        %1727 = vmatprep.subr.mxu0 0.0
        %1728 = vmatpush1.msra.mxu0 0.0
        %1729 = vmatprep.subr.mxu0 0.0
        %1730 = vmatpush1.msra.mxu0 0.0
        %1731 = vmatprep.subr.mxu0 0.0
        %1732 = vmatpush1.msra.mxu0 0.0
        %1733 = vmatprep.subr.mxu0 0.0
        %1734 = vmatpush1.msra.mxu0 0.0
        %1735 = vmatprep.subr.mxu0 0.0
        %1736 = vmatpush1.msra.mxu0 0.0
        %1737 = vmatprep.subr.mxu0 0.0
        %1738 = vmatpush1.msra.mxu0 0.0
        %1739 = vmatprep.subr.mxu0 0.0
        %1740 = vmatpush1.msra.mxu0 0.0
        %1741 = vmatprep.subr.mxu0 0.0
        %1742 = vmatpush1.msra.mxu0 0.0
        %1743 = vmatprep.subr.mxu0 0.0
        %1744 = vmatpush1.msra.mxu0 0.0
        %1745 = vmatprep.subr.mxu0 0.0
        %1746 = vmatpush1.msra.mxu0 0.0
        %1747 = vmatprep.subr.mxu0 0.0
        %1748 = vmatpush1.msra.mxu0 0.0
        %1749 = vmatprep.subr.mxu0 0.0
        %1750 = vmatpush1.msra.mxu0 0.0
        %1751 = vmatprep.subr.mxu0 0.0
        %1752 = vmatpush1.msra.mxu0 0.0
        %1753 = vmatprep.subr.mxu0 0.0
        %1754 = vmatpush1.msra.mxu0 0.0
        %1755 = vmatprep.subr.mxu0 0.0
        %1756 = vmatpush1.msra.mxu0 0.0
        %1757 = vmatprep.subr.mxu0 0.0
        %1758 = vmatpush1.msra.mxu0 0.0
        %1759 = vmatprep.subr.mxu0 0.0
        %1760 = vmatpush1.msra.mxu0 0.0
        %1761 = vmatprep.subr.mxu0 0.0
        %1762 = vmatpush1.msra.mxu0 0.0
        %1763 = vmatprep.mubr.f32.mxu0 0.0
        %1764 = vmatmul.mubr.f32.gmra.mrb[0].mxu0 %v1697
        %v1765 = vpop.f32.mrb[0].mxu0
        %v1766 = vadd.f32 %v1693, %v1765
        %v1767 = vpop.f32.mrb[0].mxu0
        %1768 = vdwg.mxu0
        %s1769 = scalar_lea.vmem %s5, 128
        %v1770 = vld [vmem:[%s1769] sm:$0xff]
        %v1771 = vld [vmem:[%s1769 + $0x8] sm:$0xff]
        %v1772 = vld [vmem:[%s1769 + $0x10] sm:$0xff]
        %v1773 = vld [vmem:[%s1769 + $0x18] sm:$0xff]
        %v1774 = vld [vmem:[%s1769 + $0x20] sm:$0xff]
        %v1775 = vld [vmem:[%s1769 + $0x28] sm:$0xff]
        %v1776 = vld [vmem:[%s1769 + $0x30] sm:$0xff]
        %v1777 = vld [vmem:[%s1769 + $0x38] sm:$0xff]
        %s1778 = scalar_lea.vmem %s5, 384
        %v1779 = vld [vmem:[%s1778] sm:$0xff]
        %v1780 = vld [vmem:[%s1778 + $0x8] sm:$0xff]
        %v1781 = vld [vmem:[%s1778 + $0x10] sm:$0xff]
        %v1782 = vld [vmem:[%s1778 + $0x18] sm:$0xff]
        %v1783 = vld [vmem:[%s1778 + $0x20] sm:$0xff]
        %v1784 = vld [vmem:[%s1778 + $0x28] sm:$0xff]
        %v1785 = vld [vmem:[%s1778 + $0x30] sm:$0xff]
        %v1786 = vld [vmem:[%s1778 + $0x38] sm:$0xff]
        %s1787 = scalar_lea.vmem %s5, 640
        %v1788 = vld [vmem:[%s1787] sm:$0xff]
        %v1789 = vld [vmem:[%s1787 + $0x8] sm:$0xff]
        %v1790 = vld [vmem:[%s1787 + $0x10] sm:$0xff]
        %v1791 = vld [vmem:[%s1787 + $0x18] sm:$0xff]
        %v1792 = vld [vmem:[%s1787 + $0x20] sm:$0xff]
        %v1793 = vld [vmem:[%s1787 + $0x28] sm:$0xff]
        %v1794 = vld [vmem:[%s1787 + $0x30] sm:$0xff]
        %v1795 = vld [vmem:[%s1787 + $0x38] sm:$0xff]
        %1796 = vmatprep.subr.mxu0 0.0
        %1797 = vmatpush1.msra.mxu0 %v1770
        %1798 = vmatprep.subr.mxu0 0.0
        %1799 = vmatpush1.msra.mxu0 %v1771
        %1800 = vmatprep.subr.mxu0 0.0
        %1801 = vmatpush1.msra.mxu0 %v1772
        %1802 = vmatprep.subr.mxu0 0.0
        %1803 = vmatpush1.msra.mxu0 %v1773
        %1804 = vmatprep.subr.mxu0 0.0
        %1805 = vmatpush1.msra.mxu0 %v1774
        %1806 = vmatprep.subr.mxu0 0.0
        %1807 = vmatpush1.msra.mxu0 %v1775
        %1808 = vmatprep.subr.mxu0 0.0
        %1809 = vmatpush1.msra.mxu0 %v1776
        %1810 = vmatprep.subr.mxu0 0.0
        %1811 = vmatpush1.msra.mxu0 %v1777
        %1812 = vmatprep.subr.mxu0 0.0
        %1813 = vmatpush1.msra.mxu0 0.0
        %1814 = vmatprep.subr.mxu0 0.0
        %1815 = vmatpush1.msra.mxu0 0.0
        %1816 = vmatprep.subr.mxu0 0.0
        %1817 = vmatpush1.msra.mxu0 0.0
        %1818 = vmatprep.subr.mxu0 0.0
        %1819 = vmatpush1.msra.mxu0 0.0
        %1820 = vmatprep.subr.mxu0 0.0
        %1821 = vmatpush1.msra.mxu0 0.0
        %1822 = vmatprep.subr.mxu0 0.0
        %1823 = vmatpush1.msra.mxu0 0.0
        %1824 = vmatprep.subr.mxu0 0.0
        %1825 = vmatpush1.msra.mxu0 0.0
        %1826 = vmatprep.subr.mxu0 0.0
        %1827 = vmatpush1.msra.mxu0 0.0
        %1828 = vmatprep.subr.mxu0 0.0
        %1829 = vmatpush1.msra.mxu0 0.0
        %1830 = vmatprep.subr.mxu0 0.0
        %1831 = vmatpush1.msra.mxu0 0.0
        %1832 = vmatprep.subr.mxu0 0.0
        %1833 = vmatpush1.msra.mxu0 0.0
        %1834 = vmatprep.subr.mxu0 0.0
        %1835 = vmatpush1.msra.mxu0 0.0
        %1836 = vmatprep.subr.mxu0 0.0
        %1837 = vmatpush1.msra.mxu0 0.0
        %1838 = vmatprep.subr.mxu0 0.0
        %1839 = vmatpush1.msra.mxu0 0.0
        %1840 = vmatprep.subr.mxu0 0.0
        %1841 = vmatpush1.msra.mxu0 0.0
        %1842 = vmatprep.subr.mxu0 0.0
        %1843 = vmatpush1.msra.mxu0 0.0
        %1844 = vmatprep.subr.mxu0 0.0
        %1845 = vmatpush1.msra.mxu0 0.0
        %1846 = vmatprep.subr.mxu0 0.0
        %1847 = vmatpush1.msra.mxu0 0.0
        %1848 = vmatprep.subr.mxu0 0.0
        %1849 = vmatpush1.msra.mxu0 0.0
        %1850 = vmatprep.subr.mxu0 0.0
        %1851 = vmatpush1.msra.mxu0 0.0
        %1852 = vmatprep.subr.mxu0 0.0
        %1853 = vmatpush1.msra.mxu0 0.0
        %1854 = vmatprep.subr.mxu0 0.0
        %1855 = vmatpush1.msra.mxu0 0.0
        %1856 = vmatprep.subr.mxu0 0.0
        %1857 = vmatpush1.msra.mxu0 0.0
        %1858 = vmatprep.subr.mxu0 0.0
        %1859 = vmatpush1.msra.mxu0 0.0
        %1860 = vmatprep.mubr.f32.mxu0 0.0
        %1861 = vmatmul.mubr.f32.gmra.mrb[0].mxu0 %v837
        %v1862 = vpop.f32.mrb[0].mxu0
        %v1863 = vadd.f32 0.0, %v1862
        %v1864 = vpop.f32.mrb[0].mxu0
        %1865 = vdwg.mxu0
        %1866 = vmatprep.subr.mxu0 0.0
        %1867 = vmatpush1.msra.mxu0 %v1779
        %1868 = vmatprep.subr.mxu0 0.0
        %1869 = vmatpush1.msra.mxu0 %v1780
        %1870 = vmatprep.subr.mxu0 0.0
        %1871 = vmatpush1.msra.mxu0 %v1781
        %1872 = vmatprep.subr.mxu0 0.0
        %1873 = vmatpush1.msra.mxu0 %v1782
        %1874 = vmatprep.subr.mxu0 0.0
        %1875 = vmatpush1.msra.mxu0 %v1783
        %1876 = vmatprep.subr.mxu0 0.0
        %1877 = vmatpush1.msra.mxu0 %v1784
        %1878 = vmatprep.subr.mxu0 0.0
        %1879 = vmatpush1.msra.mxu0 %v1785
        %1880 = vmatprep.subr.mxu0 0.0
        %1881 = vmatpush1.msra.mxu0 %v1786
        %1882 = vmatprep.subr.mxu0 0.0
        %1883 = vmatpush1.msra.mxu0 0.0
        %1884 = vmatprep.subr.mxu0 0.0
        %1885 = vmatpush1.msra.mxu0 0.0
        %1886 = vmatprep.subr.mxu0 0.0
        %1887 = vmatpush1.msra.mxu0 0.0
        %1888 = vmatprep.subr.mxu0 0.0
        %1889 = vmatpush1.msra.mxu0 0.0
        %1890 = vmatprep.subr.mxu0 0.0
        %1891 = vmatpush1.msra.mxu0 0.0
        %1892 = vmatprep.subr.mxu0 0.0
        %1893 = vmatpush1.msra.mxu0 0.0
        %1894 = vmatprep.subr.mxu0 0.0
        %1895 = vmatpush1.msra.mxu0 0.0
        %1896 = vmatprep.subr.mxu0 0.0
        %1897 = vmatpush1.msra.mxu0 0.0
        %1898 = vmatprep.subr.mxu0 0.0
        %1899 = vmatpush1.msra.mxu0 0.0
        %1900 = vmatprep.subr.mxu0 0.0
        %1901 = vmatpush1.msra.mxu0 0.0
        %1902 = vmatprep.subr.mxu0 0.0
        %1903 = vmatpush1.msra.mxu0 0.0
        %1904 = vmatprep.subr.mxu0 0.0
        %1905 = vmatpush1.msra.mxu0 0.0
        %1906 = vmatprep.subr.mxu0 0.0
        %1907 = vmatpush1.msra.mxu0 0.0
        %1908 = vmatprep.subr.mxu0 0.0
        %1909 = vmatpush1.msra.mxu0 0.0
        %1910 = vmatprep.subr.mxu0 0.0
        %1911 = vmatpush1.msra.mxu0 0.0
        %1912 = vmatprep.subr.mxu0 0.0
        %1913 = vmatpush1.msra.mxu0 0.0
        %1914 = vmatprep.subr.mxu0 0.0
        %1915 = vmatpush1.msra.mxu0 0.0
        %1916 = vmatprep.subr.mxu0 0.0
        %1917 = vmatpush1.msra.mxu0 0.0
        %1918 = vmatprep.subr.mxu0 0.0
        %1919 = vmatpush1.msra.mxu0 0.0
        %1920 = vmatprep.subr.mxu0 0.0
        %1921 = vmatpush1.msra.mxu0 0.0
        %1922 = vmatprep.subr.mxu0 0.0
        %1923 = vmatpush1.msra.mxu0 0.0
        %1924 = vmatprep.subr.mxu0 0.0
        %1925 = vmatpush1.msra.mxu0 0.0
        %1926 = vmatprep.subr.mxu0 0.0
        %1927 = vmatpush1.msra.mxu0 0.0
        %1928 = vmatprep.subr.mxu0 0.0
        %1929 = vmatpush1.msra.mxu0 0.0
        %1930 = vmatprep.mubr.f32.mxu0 0.0
        %1931 = vmatmul.mubr.f32.gmra.mrb[0].mxu0 %v837
        %v1932 = vpop.f32.mrb[0].mxu0
        %v1933 = vadd.f32 0.0, %v1932
        %v1934 = vpop.f32.mrb[0].mxu0
        %1935 = vdwg.mxu0
        %1936 = vmatprep.subr.mxu0 0.0
        %1937 = vmatpush1.msra.mxu0 %v1788
        %1938 = vmatprep.subr.mxu0 0.0
        %1939 = vmatpush1.msra.mxu0 %v1789
        %1940 = vmatprep.subr.mxu0 0.0
        %1941 = vmatpush1.msra.mxu0 %v1790
        %1942 = vmatprep.subr.mxu0 0.0
        %1943 = vmatpush1.msra.mxu0 %v1791
        %1944 = vmatprep.subr.mxu0 0.0
        %1945 = vmatpush1.msra.mxu0 %v1792
        %1946 = vmatprep.subr.mxu0 0.0
        %1947 = vmatpush1.msra.mxu0 %v1793
        %1948 = vmatprep.subr.mxu0 0.0
        %1949 = vmatpush1.msra.mxu0 %v1794
        %1950 = vmatprep.subr.mxu0 0.0
        %1951 = vmatpush1.msra.mxu0 %v1795
        %1952 = vmatprep.subr.mxu0 0.0
        %1953 = vmatpush1.msra.mxu0 0.0
        %1954 = vmatprep.subr.mxu0 0.0
        %1955 = vmatpush1.msra.mxu0 0.0
        %1956 = vmatprep.subr.mxu0 0.0
        %1957 = vmatpush1.msra.mxu0 0.0
        %1958 = vmatprep.subr.mxu0 0.0
        %1959 = vmatpush1.msra.mxu0 0.0
        %1960 = vmatprep.subr.mxu0 0.0
        %1961 = vmatpush1.msra.mxu0 0.0
        %1962 = vmatprep.subr.mxu0 0.0
        %1963 = vmatpush1.msra.mxu0 0.0
        %1964 = vmatprep.subr.mxu0 0.0
        %1965 = vmatpush1.msra.mxu0 0.0
        %1966 = vmatprep.subr.mxu0 0.0
        %1967 = vmatpush1.msra.mxu0 0.0
        %1968 = vmatprep.subr.mxu0 0.0
        %1969 = vmatpush1.msra.mxu0 0.0
        %1970 = vmatprep.subr.mxu0 0.0
        %1971 = vmatpush1.msra.mxu0 0.0
        %1972 = vmatprep.subr.mxu0 0.0
        %1973 = vmatpush1.msra.mxu0 0.0
        %1974 = vmatprep.subr.mxu0 0.0
        %1975 = vmatpush1.msra.mxu0 0.0
        %1976 = vmatprep.subr.mxu0 0.0
        %1977 = vmatpush1.msra.mxu0 0.0
        %1978 = vmatprep.subr.mxu0 0.0
        %1979 = vmatpush1.msra.mxu0 0.0
        %1980 = vmatprep.subr.mxu0 0.0
        %1981 = vmatpush1.msra.mxu0 0.0
        %1982 = vmatprep.subr.mxu0 0.0
        %1983 = vmatpush1.msra.mxu0 0.0
        %1984 = vmatprep.subr.mxu0 0.0
        %1985 = vmatpush1.msra.mxu0 0.0
        %1986 = vmatprep.subr.mxu0 0.0
        %1987 = vmatpush1.msra.mxu0 0.0
        %1988 = vmatprep.subr.mxu0 0.0
        %1989 = vmatpush1.msra.mxu0 0.0
        %1990 = vmatprep.subr.mxu0 0.0
        %1991 = vmatpush1.msra.mxu0 0.0
        %1992 = vmatprep.subr.mxu0 0.0
        %1993 = vmatpush1.msra.mxu0 0.0
        %1994 = vmatprep.subr.mxu0 0.0
        %1995 = vmatpush1.msra.mxu0 0.0
        %1996 = vmatprep.subr.mxu0 0.0
        %1997 = vmatpush1.msra.mxu0 0.0
        %1998 = vmatprep.subr.mxu0 0.0
        %1999 = vmatpush1.msra.mxu0 0.0
        %2000 = vmatprep.mubr.f32.mxu0 0.0
        %2001 = vmatmul.mubr.f32.gmra.mrb[0].mxu0 %v837
        %v2002 = vpop.f32.mrb[0].mxu0
        %v2003 = vadd.f32 0.0, %v2002
        %v2004 = vpop.f32.mrb[0].mxu0
        %2005 = vdwg.mxu0
        %v2007 = vsel %vm1049, %v1863, 0
        %v2010 = vsel %vm1049, %v1933, 0
        %2012 = vmatprep.subr.mxu0 0.0
        %2013 = vmatpush1.xpose.msra.mxu0 %v2010
        %2014 = vmatprep.subr.mxu0 0.0
        %2015 = vmatpush1.xpose.msra.mxu0 0.0
        %2016 = vmatprep.subr.mxu0 0.0
        %2017 = vmatpush1.xpose.msra.mxu0 0.0
        %2018 = vmatprep.subr.mxu0 0.0
        %2019 = vmatpush1.xpose.msra.mxu0 0.0
        %2020 = vmatprep.subr.mxu0 0.0
        %2021 = vmatpush1.xpose.msra.mxu0 0.0
        %2022 = vmatprep.subr.mxu0 0.0
        %2023 = vmatpush1.xpose.msra.mxu0 0.0
        %2024 = vmatprep.subr.mxu0 0.0
        %2025 = vmatpush1.xpose.msra.mxu0 0.0
        %2026 = vmatprep.subr.mxu0 0.0
        %2027 = vmatpush1.xpose.msra.mxu0 0.0
        %2028 = vmatprep.subr.mxu0 0.0
        %2029 = vmatpush1.xpose.msra.mxu0 0.0
        %2030 = vmatprep.subr.mxu0 0.0
        %2031 = vmatpush1.xpose.msra.mxu0 0.0
        %2032 = vmatprep.subr.mxu0 0.0
        %2033 = vmatpush1.xpose.msra.mxu0 0.0
        %2034 = vmatprep.subr.mxu0 0.0
        %2035 = vmatpush1.xpose.msra.mxu0 0.0
        %2036 = vmatprep.subr.mxu0 0.0
        %2037 = vmatpush1.xpose.msra.mxu0 0.0
        %2038 = vmatprep.subr.mxu0 0.0
        %2039 = vmatpush1.xpose.msra.mxu0 0.0
        %2040 = vmatprep.subr.mxu0 0.0
        %2041 = vmatpush1.xpose.msra.mxu0 0.0
        %2042 = vmatprep.subr.mxu0 0.0
        %2043 = vmatpush1.xpose.msra.mxu0 0.0
        %2044 = vmatprep.subr.mxu0 0.0
        %2045 = vmatpush1.xpose.msra.mxu0 0.0
        %2046 = vmatprep.subr.mxu0 0.0
        %2047 = vmatpush1.xpose.msra.mxu0 0.0
        %2048 = vmatprep.subr.mxu0 0.0
        %2049 = vmatpush1.xpose.msra.mxu0 0.0
        %2050 = vmatprep.subr.mxu0 0.0
        %2051 = vmatpush1.xpose.msra.mxu0 0.0
        %2052 = vmatprep.subr.mxu0 0.0
        %2053 = vmatpush1.xpose.msra.mxu0 0.0
        %2054 = vmatprep.subr.mxu0 0.0
        %2055 = vmatpush1.xpose.msra.mxu0 0.0
        %2056 = vmatprep.subr.mxu0 0.0
        %2057 = vmatpush1.xpose.msra.mxu0 0.0
        %2058 = vmatprep.subr.mxu0 0.0
        %2059 = vmatpush1.xpose.msra.mxu0 0.0
        %2060 = vmatprep.subr.mxu0 0.0
        %2061 = vmatpush1.xpose.msra.mxu0 0.0
        %2062 = vmatprep.subr.mxu0 0.0
        %2063 = vmatpush1.xpose.msra.mxu0 0.0
        %2064 = vmatprep.subr.mxu0 0.0
        %2065 = vmatpush1.xpose.msra.mxu0 0.0
        %2066 = vmatprep.subr.mxu0 0.0
        %2067 = vmatpush1.xpose.msra.mxu0 0.0
        %2068 = vmatprep.subr.mxu0 0.0
        %2069 = vmatpush1.xpose.msra.mxu0 0.0
        %2070 = vmatprep.subr.mxu0 0.0
        %2071 = vmatpush1.xpose.msra.mxu0 0.0
        %2072 = vmatprep.subr.mxu0 0.0
        %2073 = vmatpush1.xpose.msra.mxu0 0.0
        %2074 = vmatprep.subr.mxu0 0.0
        %2075 = vmatpush1.xpose.msra.mxu0 0.0
        %2076 = vmatprep.mubr.f32.mxu0 0.0
        %2077 = vmatmul.mubr.f32.gmra.mrb[0].mxu0 %v2007
        %v2078 = vpop.f32.mrb[0].mxu0
        %v2079 = vadd.f32 0.0, %v2078
        %v2080 = vpop.f32.mrb[0].mxu0
        %2081 = vdwg.mxu0
        %v2082 = vmul.f32 %v2079, 0.25
        %v2083 = vsel %vm1127, %v2082, -inf
        %2084 = vmax.xlane.f32.xlu0 %v2083
        %v2085 = vpop.xlane.xlu0 %2084
        %v2086 = vsub.f32 %v2082, %v2085
        %v2087 = vmul.f32 %v2086, 1.442695
        %v2088 = vpow.pop %v2087
        %v2089 = vsel %vm1127, %v2088, 0.0
        %2090 = vadd.xlane.f32.xlu0 %v2089
        %v2091 = vpop.xlane.xlu0 %2090
        %v2092 = vrcp.pop %v2091
        %v2093 = vmul.f32 %v2088, %v2092
        %v2095 = vsel %vm1139, %v2093, 0
        %v2098 = vsel %vm1143, %v2003, 0
        %2100 = vmatprep.subr.mxu0 0.0
        %2101 = vmatpush1.msra.mxu0 %v2098
        %2102 = vmatprep.subr.mxu0 0.0
        %2103 = vmatpush1.msra.mxu0 0.0
        %2104 = vmatprep.subr.mxu0 0.0
        %2105 = vmatpush1.msra.mxu0 0.0
        %2106 = vmatprep.subr.mxu0 0.0
        %2107 = vmatpush1.msra.mxu0 0.0
        %2108 = vmatprep.subr.mxu0 0.0
        %2109 = vmatpush1.msra.mxu0 0.0
        %2110 = vmatprep.subr.mxu0 0.0
        %2111 = vmatpush1.msra.mxu0 0.0
        %2112 = vmatprep.subr.mxu0 0.0
        %2113 = vmatpush1.msra.mxu0 0.0
        %2114 = vmatprep.subr.mxu0 0.0
        %2115 = vmatpush1.msra.mxu0 0.0
        %2116 = vmatprep.subr.mxu0 0.0
        %2117 = vmatpush1.msra.mxu0 0.0
        %2118 = vmatprep.subr.mxu0 0.0
        %2119 = vmatpush1.msra.mxu0 0.0
        %2120 = vmatprep.subr.mxu0 0.0
        %2121 = vmatpush1.msra.mxu0 0.0
        %2122 = vmatprep.subr.mxu0 0.0
        %2123 = vmatpush1.msra.mxu0 0.0
        %2124 = vmatprep.subr.mxu0 0.0
        %2125 = vmatpush1.msra.mxu0 0.0
        %2126 = vmatprep.subr.mxu0 0.0
        %2127 = vmatpush1.msra.mxu0 0.0
        %2128 = vmatprep.subr.mxu0 0.0
        %2129 = vmatpush1.msra.mxu0 0.0
        %2130 = vmatprep.subr.mxu0 0.0
        %2131 = vmatpush1.msra.mxu0 0.0
        %2132 = vmatprep.subr.mxu0 0.0
        %2133 = vmatpush1.msra.mxu0 0.0
        %2134 = vmatprep.subr.mxu0 0.0
        %2135 = vmatpush1.msra.mxu0 0.0
        %2136 = vmatprep.subr.mxu0 0.0
        %2137 = vmatpush1.msra.mxu0 0.0
        %2138 = vmatprep.subr.mxu0 0.0
        %2139 = vmatpush1.msra.mxu0 0.0
        %2140 = vmatprep.subr.mxu0 0.0
        %2141 = vmatpush1.msra.mxu0 0.0
        %2142 = vmatprep.subr.mxu0 0.0
        %2143 = vmatpush1.msra.mxu0 0.0
        %2144 = vmatprep.subr.mxu0 0.0
        %2145 = vmatpush1.msra.mxu0 0.0
        %2146 = vmatprep.subr.mxu0 0.0
        %2147 = vmatpush1.msra.mxu0 0.0
        %2148 = vmatprep.subr.mxu0 0.0
        %2149 = vmatpush1.msra.mxu0 0.0
        %2150 = vmatprep.subr.mxu0 0.0
        %2151 = vmatpush1.msra.mxu0 0.0
        %2152 = vmatprep.subr.mxu0 0.0
        %2153 = vmatpush1.msra.mxu0 0.0
        %2154 = vmatprep.subr.mxu0 0.0
        %2155 = vmatpush1.msra.mxu0 0.0
        %2156 = vmatprep.subr.mxu0 0.0
        %2157 = vmatpush1.msra.mxu0 0.0
        %2158 = vmatprep.subr.mxu0 0.0
        %2159 = vmatpush1.msra.mxu0 0.0
        %2160 = vmatprep.subr.mxu0 0.0
        %2161 = vmatpush1.msra.mxu0 0.0
        %2162 = vmatprep.subr.mxu0 0.0
        %2163 = vmatpush1.msra.mxu0 0.0
        %2164 = vmatprep.mubr.f32.mxu0 0.0
        %2165 = vmatmul.mubr.f32.gmra.mrb[0].mxu0 %v2095
        %v2166 = vpop.f32.mrb[0].mxu0
        %v2167 = vadd.f32 0.0, %v2166
        %v2168 = vpop.f32.mrb[0].mxu0
        %2169 = vdwg.mxu0
        %s2170 = scalar_lea.vmem %s6, 32
        %v2171 = vld [vmem:[%s2170] sm:$0xff]
        %v2172 = vld [vmem:[%s2170 + $0x8] sm:$0xff]
        %v2174 = vsel %vm1049, %v2167, 0
        %2176 = vmatprep.subr.mxu0 0.0
        %2177 = vmatpush1.msra.mxu0 %v2171
        %2178 = vmatprep.subr.mxu0 0.0
        %2179 = vmatpush1.msra.mxu0 %v2172
        %2180 = vmatprep.subr.mxu0 0.0
        %2181 = vmatpush1.msra.mxu0 0.0
        %2182 = vmatprep.subr.mxu0 0.0
        %2183 = vmatpush1.msra.mxu0 0.0
        %2184 = vmatprep.subr.mxu0 0.0
        %2185 = vmatpush1.msra.mxu0 0.0
        %2186 = vmatprep.subr.mxu0 0.0
        %2187 = vmatpush1.msra.mxu0 0.0
        %2188 = vmatprep.subr.mxu0 0.0
        %2189 = vmatpush1.msra.mxu0 0.0
        %2190 = vmatprep.subr.mxu0 0.0
        %2191 = vmatpush1.msra.mxu0 0.0
        %2192 = vmatprep.subr.mxu0 0.0
        %2193 = vmatpush1.msra.mxu0 0.0
        %2194 = vmatprep.subr.mxu0 0.0
        %2195 = vmatpush1.msra.mxu0 0.0
        %2196 = vmatprep.subr.mxu0 0.0
        %2197 = vmatpush1.msra.mxu0 0.0
        %2198 = vmatprep.subr.mxu0 0.0
        %2199 = vmatpush1.msra.mxu0 0.0
        %2200 = vmatprep.subr.mxu0 0.0
        %2201 = vmatpush1.msra.mxu0 0.0
        %2202 = vmatprep.subr.mxu0 0.0
        %2203 = vmatpush1.msra.mxu0 0.0
        %2204 = vmatprep.subr.mxu0 0.0
        %2205 = vmatpush1.msra.mxu0 0.0
        %2206 = vmatprep.subr.mxu0 0.0
        %2207 = vmatpush1.msra.mxu0 0.0
        %2208 = vmatprep.subr.mxu0 0.0
        %2209 = vmatpush1.msra.mxu0 0.0
        %2210 = vmatprep.subr.mxu0 0.0
        %2211 = vmatpush1.msra.mxu0 0.0
        %2212 = vmatprep.subr.mxu0 0.0
        %2213 = vmatpush1.msra.mxu0 0.0
        %2214 = vmatprep.subr.mxu0 0.0
        %2215 = vmatpush1.msra.mxu0 0.0
        %2216 = vmatprep.subr.mxu0 0.0
        %2217 = vmatpush1.msra.mxu0 0.0
        %2218 = vmatprep.subr.mxu0 0.0
        %2219 = vmatpush1.msra.mxu0 0.0
        %2220 = vmatprep.subr.mxu0 0.0
        %2221 = vmatpush1.msra.mxu0 0.0
        %2222 = vmatprep.subr.mxu0 0.0
        %2223 = vmatpush1.msra.mxu0 0.0
        %2224 = vmatprep.subr.mxu0 0.0
        %2225 = vmatpush1.msra.mxu0 0.0
        %2226 = vmatprep.subr.mxu0 0.0
        %2227 = vmatpush1.msra.mxu0 0.0
        %2228 = vmatprep.subr.mxu0 0.0
        %2229 = vmatpush1.msra.mxu0 0.0
        %2230 = vmatprep.subr.mxu0 0.0
        %2231 = vmatpush1.msra.mxu0 0.0
        %2232 = vmatprep.subr.mxu0 0.0
        %2233 = vmatpush1.msra.mxu0 0.0
        %2234 = vmatprep.subr.mxu0 0.0
        %2235 = vmatpush1.msra.mxu0 0.0
        %2236 = vmatprep.subr.mxu0 0.0
        %2237 = vmatpush1.msra.mxu0 0.0
        %2238 = vmatprep.subr.mxu0 0.0
        %2239 = vmatpush1.msra.mxu0 0.0
        %2240 = vmatprep.mubr.f32.mxu0 0.0
        %2241 = vmatmul.mubr.f32.gmra.mrb[0].mxu0 %v2174
        %v2242 = vpop.f32.mrb[0].mxu0
        %v2243 = vadd.f32 0.0, %v2242
        %v2244 = vpop.f32.mrb[0].mxu0
        %2245 = vdwg.mxu0
        %v2246 = vadd.f32 %v1766, %v2243
        %s2247 = scalar_lea.vmem %s5, 192
        %v2248 = vld [vmem:[%s2247] sm:$0xff]
        %v2249 = vld [vmem:[%s2247 + $0x8] sm:$0xff]
        %v2250 = vld [vmem:[%s2247 + $0x10] sm:$0xff]
        %v2251 = vld [vmem:[%s2247 + $0x18] sm:$0xff]
        %v2252 = vld [vmem:[%s2247 + $0x20] sm:$0xff]
        %v2253 = vld [vmem:[%s2247 + $0x28] sm:$0xff]
        %v2254 = vld [vmem:[%s2247 + $0x30] sm:$0xff]
        %v2255 = vld [vmem:[%s2247 + $0x38] sm:$0xff]
        %s2256 = scalar_lea.vmem %s5, 448
        %v2257 = vld [vmem:[%s2256] sm:$0xff]
        %v2258 = vld [vmem:[%s2256 + $0x8] sm:$0xff]
        %v2259 = vld [vmem:[%s2256 + $0x10] sm:$0xff]
        %v2260 = vld [vmem:[%s2256 + $0x18] sm:$0xff]
        %v2261 = vld [vmem:[%s2256 + $0x20] sm:$0xff]
        %v2262 = vld [vmem:[%s2256 + $0x28] sm:$0xff]
        %v2263 = vld [vmem:[%s2256 + $0x30] sm:$0xff]
        %v2264 = vld [vmem:[%s2256 + $0x38] sm:$0xff]
        %s2265 = scalar_lea.vmem %s5, 704
        %v2266 = vld [vmem:[%s2265] sm:$0xff]
        %v2267 = vld [vmem:[%s2265 + $0x8] sm:$0xff]
        %v2268 = vld [vmem:[%s2265 + $0x10] sm:$0xff]
        %v2269 = vld [vmem:[%s2265 + $0x18] sm:$0xff]
        %v2270 = vld [vmem:[%s2265 + $0x20] sm:$0xff]
        %v2271 = vld [vmem:[%s2265 + $0x28] sm:$0xff]
        %v2272 = vld [vmem:[%s2265 + $0x30] sm:$0xff]
        %v2273 = vld [vmem:[%s2265 + $0x38] sm:$0xff]
        %2274 = vmatprep.subr.mxu0 0.0
        %2275 = vmatpush1.msra.mxu0 %v2248
        %2276 = vmatprep.subr.mxu0 0.0
        %2277 = vmatpush1.msra.mxu0 %v2249
        %2278 = vmatprep.subr.mxu0 0.0
        %2279 = vmatpush1.msra.mxu0 %v2250
        %2280 = vmatprep.subr.mxu0 0.0
        %2281 = vmatpush1.msra.mxu0 %v2251
        %2282 = vmatprep.subr.mxu0 0.0
        %2283 = vmatpush1.msra.mxu0 %v2252
        %2284 = vmatprep.subr.mxu0 0.0
        %2285 = vmatpush1.msra.mxu0 %v2253
        %2286 = vmatprep.subr.mxu0 0.0
        %2287 = vmatpush1.msra.mxu0 %v2254
        %2288 = vmatprep.subr.mxu0 0.0
        %2289 = vmatpush1.msra.mxu0 %v2255
        %2290 = vmatprep.subr.mxu0 0.0
        %2291 = vmatpush1.msra.mxu0 0.0
        %2292 = vmatprep.subr.mxu0 0.0
        %2293 = vmatpush1.msra.mxu0 0.0
        %2294 = vmatprep.subr.mxu0 0.0
        %2295 = vmatpush1.msra.mxu0 0.0
        %2296 = vmatprep.subr.mxu0 0.0
        %2297 = vmatpush1.msra.mxu0 0.0
        %2298 = vmatprep.subr.mxu0 0.0
        %2299 = vmatpush1.msra.mxu0 0.0
        %2300 = vmatprep.subr.mxu0 0.0
        %2301 = vmatpush1.msra.mxu0 0.0
        %2302 = vmatprep.subr.mxu0 0.0
        %2303 = vmatpush1.msra.mxu0 0.0
        %2304 = vmatprep.subr.mxu0 0.0
        %2305 = vmatpush1.msra.mxu0 0.0
        %2306 = vmatprep.subr.mxu0 0.0
        %2307 = vmatpush1.msra.mxu0 0.0
        %2308 = vmatprep.subr.mxu0 0.0
        %2309 = vmatpush1.msra.mxu0 0.0
        %2310 = vmatprep.subr.mxu0 0.0
        %2311 = vmatpush1.msra.mxu0 0.0
        %2312 = vmatprep.subr.mxu0 0.0
        %2313 = vmatpush1.msra.mxu0 0.0
        %2314 = vmatprep.subr.mxu0 0.0
        %2315 = vmatpush1.msra.mxu0 0.0
        %2316 = vmatprep.subr.mxu0 0.0
        %2317 = vmatpush1.msra.mxu0 0.0
        %2318 = vmatprep.subr.mxu0 0.0
        %2319 = vmatpush1.msra.mxu0 0.0
        %2320 = vmatprep.subr.mxu0 0.0
        %2321 = vmatpush1.msra.mxu0 0.0
        %2322 = vmatprep.subr.mxu0 0.0
        %2323 = vmatpush1.msra.mxu0 0.0
        %2324 = vmatprep.subr.mxu0 0.0
        %2325 = vmatpush1.msra.mxu0 0.0
        %2326 = vmatprep.subr.mxu0 0.0
        %2327 = vmatpush1.msra.mxu0 0.0
        %2328 = vmatprep.subr.mxu0 0.0
        %2329 = vmatpush1.msra.mxu0 0.0
        %2330 = vmatprep.subr.mxu0 0.0
        %2331 = vmatpush1.msra.mxu0 0.0
        %2332 = vmatprep.subr.mxu0 0.0
        %2333 = vmatpush1.msra.mxu0 0.0
        %2334 = vmatprep.subr.mxu0 0.0
        %2335 = vmatpush1.msra.mxu0 0.0
        %2336 = vmatprep.subr.mxu0 0.0
        %2337 = vmatpush1.msra.mxu0 0.0
        %2338 = vmatprep.mubr.f32.mxu0 0.0
        %2339 = vmatmul.mubr.f32.gmra.mrb[0].mxu0 %v837
        %v2340 = vpop.f32.mrb[0].mxu0
        %v2341 = vadd.f32 0.0, %v2340
        %v2342 = vpop.f32.mrb[0].mxu0
        %2343 = vdwg.mxu0
        %2344 = vmatprep.subr.mxu0 0.0
        %2345 = vmatpush1.msra.mxu0 %v2257
        %2346 = vmatprep.subr.mxu0 0.0
        %2347 = vmatpush1.msra.mxu0 %v2258
        %2348 = vmatprep.subr.mxu0 0.0
        %2349 = vmatpush1.msra.mxu0 %v2259
        %2350 = vmatprep.subr.mxu0 0.0
        %2351 = vmatpush1.msra.mxu0 %v2260
        %2352 = vmatprep.subr.mxu0 0.0
        %2353 = vmatpush1.msra.mxu0 %v2261
        %2354 = vmatprep.subr.mxu0 0.0
        %2355 = vmatpush1.msra.mxu0 %v2262
        %2356 = vmatprep.subr.mxu0 0.0
        %2357 = vmatpush1.msra.mxu0 %v2263
        %2358 = vmatprep.subr.mxu0 0.0
        %2359 = vmatpush1.msra.mxu0 %v2264
        %2360 = vmatprep.subr.mxu0 0.0
        %2361 = vmatpush1.msra.mxu0 0.0
        %2362 = vmatprep.subr.mxu0 0.0
        %2363 = vmatpush1.msra.mxu0 0.0
        %2364 = vmatprep.subr.mxu0 0.0
        %2365 = vmatpush1.msra.mxu0 0.0
        %2366 = vmatprep.subr.mxu0 0.0
        %2367 = vmatpush1.msra.mxu0 0.0
        %2368 = vmatprep.subr.mxu0 0.0
        %2369 = vmatpush1.msra.mxu0 0.0
        %2370 = vmatprep.subr.mxu0 0.0
        %2371 = vmatpush1.msra.mxu0 0.0
        %2372 = vmatprep.subr.mxu0 0.0
        %2373 = vmatpush1.msra.mxu0 0.0
        %2374 = vmatprep.subr.mxu0 0.0
        %2375 = vmatpush1.msra.mxu0 0.0
        %2376 = vmatprep.subr.mxu0 0.0
        %2377 = vmatpush1.msra.mxu0 0.0
        %2378 = vmatprep.subr.mxu0 0.0
        %2379 = vmatpush1.msra.mxu0 0.0
        %2380 = vmatprep.subr.mxu0 0.0
        %2381 = vmatpush1.msra.mxu0 0.0
        %2382 = vmatprep.subr.mxu0 0.0
        %2383 = vmatpush1.msra.mxu0 0.0
        %2384 = vmatprep.subr.mxu0 0.0
        %2385 = vmatpush1.msra.mxu0 0.0
        %2386 = vmatprep.subr.mxu0 0.0
        %2387 = vmatpush1.msra.mxu0 0.0
        %2388 = vmatprep.subr.mxu0 0.0
        %2389 = vmatpush1.msra.mxu0 0.0
        %2390 = vmatprep.subr.mxu0 0.0
        %2391 = vmatpush1.msra.mxu0 0.0
        %2392 = vmatprep.subr.mxu0 0.0
        %2393 = vmatpush1.msra.mxu0 0.0
        %2394 = vmatprep.subr.mxu0 0.0
        %2395 = vmatpush1.msra.mxu0 0.0
        %2396 = vmatprep.subr.mxu0 0.0
        %2397 = vmatpush1.msra.mxu0 0.0
        %2398 = vmatprep.subr.mxu0 0.0
        %2399 = vmatpush1.msra.mxu0 0.0
        %2400 = vmatprep.subr.mxu0 0.0
        %2401 = vmatpush1.msra.mxu0 0.0
        %2402 = vmatprep.subr.mxu0 0.0
        %2403 = vmatpush1.msra.mxu0 0.0
        %2404 = vmatprep.subr.mxu0 0.0
        %2405 = vmatpush1.msra.mxu0 0.0
        %2406 = vmatprep.subr.mxu0 0.0
        %2407 = vmatpush1.msra.mxu0 0.0
        %2408 = vmatprep.mubr.f32.mxu0 0.0
        %2409 = vmatmul.mubr.f32.gmra.mrb[0].mxu0 %v837
        %v2410 = vpop.f32.mrb[0].mxu0
        %v2411 = vadd.f32 0.0, %v2410
        %v2412 = vpop.f32.mrb[0].mxu0
        %2413 = vdwg.mxu0
        %2414 = vmatprep.subr.mxu0 0.0
        %2415 = vmatpush1.msra.mxu0 %v2266
        %2416 = vmatprep.subr.mxu0 0.0
        %2417 = vmatpush1.msra.mxu0 %v2267
        %2418 = vmatprep.subr.mxu0 0.0
        %2419 = vmatpush1.msra.mxu0 %v2268
        %2420 = vmatprep.subr.mxu0 0.0
        %2421 = vmatpush1.msra.mxu0 %v2269
        %2422 = vmatprep.subr.mxu0 0.0
        %2423 = vmatpush1.msra.mxu0 %v2270
        %2424 = vmatprep.subr.mxu0 0.0
        %2425 = vmatpush1.msra.mxu0 %v2271
        %2426 = vmatprep.subr.mxu0 0.0
        %2427 = vmatpush1.msra.mxu0 %v2272
        %2428 = vmatprep.subr.mxu0 0.0
        %2429 = vmatpush1.msra.mxu0 %v2273
        %2430 = vmatprep.subr.mxu0 0.0
        %2431 = vmatpush1.msra.mxu0 0.0
        %2432 = vmatprep.subr.mxu0 0.0
        %2433 = vmatpush1.msra.mxu0 0.0
        %2434 = vmatprep.subr.mxu0 0.0
        %2435 = vmatpush1.msra.mxu0 0.0
        %2436 = vmatprep.subr.mxu0 0.0
        %2437 = vmatpush1.msra.mxu0 0.0
        %2438 = vmatprep.subr.mxu0 0.0
        %2439 = vmatpush1.msra.mxu0 0.0
        %2440 = vmatprep.subr.mxu0 0.0
        %2441 = vmatpush1.msra.mxu0 0.0
        %2442 = vmatprep.subr.mxu0 0.0
        %2443 = vmatpush1.msra.mxu0 0.0
        %2444 = vmatprep.subr.mxu0 0.0
        %2445 = vmatpush1.msra.mxu0 0.0
        %2446 = vmatprep.subr.mxu0 0.0
        %2447 = vmatpush1.msra.mxu0 0.0
        %2448 = vmatprep.subr.mxu0 0.0
        %2449 = vmatpush1.msra.mxu0 0.0
        %2450 = vmatprep.subr.mxu0 0.0
        %2451 = vmatpush1.msra.mxu0 0.0
        %2452 = vmatprep.subr.mxu0 0.0
        %2453 = vmatpush1.msra.mxu0 0.0
        %2454 = vmatprep.subr.mxu0 0.0
        %2455 = vmatpush1.msra.mxu0 0.0
        %2456 = vmatprep.subr.mxu0 0.0
        %2457 = vmatpush1.msra.mxu0 0.0
        %2458 = vmatprep.subr.mxu0 0.0
        %2459 = vmatpush1.msra.mxu0 0.0
        %2460 = vmatprep.subr.mxu0 0.0
        %2461 = vmatpush1.msra.mxu0 0.0
        %2462 = vmatprep.subr.mxu0 0.0
        %2463 = vmatpush1.msra.mxu0 0.0
        %2464 = vmatprep.subr.mxu0 0.0
        %2465 = vmatpush1.msra.mxu0 0.0
        %2466 = vmatprep.subr.mxu0 0.0
        %2467 = vmatpush1.msra.mxu0 0.0
        %2468 = vmatprep.subr.mxu0 0.0
        %2469 = vmatpush1.msra.mxu0 0.0
        %2470 = vmatprep.subr.mxu0 0.0
        %2471 = vmatpush1.msra.mxu0 0.0
        %2472 = vmatprep.subr.mxu0 0.0
        %2473 = vmatpush1.msra.mxu0 0.0
        %2474 = vmatprep.subr.mxu0 0.0
        %2475 = vmatpush1.msra.mxu0 0.0
        %2476 = vmatprep.subr.mxu0 0.0
        %2477 = vmatpush1.msra.mxu0 0.0
        %2478 = vmatprep.mubr.f32.mxu0 0.0
        %2479 = vmatmul.mubr.f32.gmra.mrb[0].mxu0 %v837
        %v2480 = vpop.f32.mrb[0].mxu0
        %v2481 = vadd.f32 0.0, %v2480
        %v2482 = vpop.f32.mrb[0].mxu0
        %2483 = vdwg.mxu0
        %v2485 = vsel %vm1049, %v2341, 0
        %v2488 = vsel %vm1049, %v2411, 0
        %2490 = vmatprep.subr.mxu0 0.0
        %2491 = vmatpush1.xpose.msra.mxu0 %v2488
        %2492 = vmatprep.subr.mxu0 0.0
        %2493 = vmatpush1.xpose.msra.mxu0 0.0
        %2494 = vmatprep.subr.mxu0 0.0
        %2495 = vmatpush1.xpose.msra.mxu0 0.0
        %2496 = vmatprep.subr.mxu0 0.0
        %2497 = vmatpush1.xpose.msra.mxu0 0.0
        %2498 = vmatprep.subr.mxu0 0.0
        %2499 = vmatpush1.xpose.msra.mxu0 0.0
        %2500 = vmatprep.subr.mxu0 0.0
        %2501 = vmatpush1.xpose.msra.mxu0 0.0
        %2502 = vmatprep.subr.mxu0 0.0
        %2503 = vmatpush1.xpose.msra.mxu0 0.0
        %2504 = vmatprep.subr.mxu0 0.0
        %2505 = vmatpush1.xpose.msra.mxu0 0.0
        %2506 = vmatprep.subr.mxu0 0.0
        %2507 = vmatpush1.xpose.msra.mxu0 0.0
        %2508 = vmatprep.subr.mxu0 0.0
        %2509 = vmatpush1.xpose.msra.mxu0 0.0
        %2510 = vmatprep.subr.mxu0 0.0
        %2511 = vmatpush1.xpose.msra.mxu0 0.0
        %2512 = vmatprep.subr.mxu0 0.0
        %2513 = vmatpush1.xpose.msra.mxu0 0.0
        %2514 = vmatprep.subr.mxu0 0.0
        %2515 = vmatpush1.xpose.msra.mxu0 0.0
        %2516 = vmatprep.subr.mxu0 0.0
        %2517 = vmatpush1.xpose.msra.mxu0 0.0
        %2518 = vmatprep.subr.mxu0 0.0
        %2519 = vmatpush1.xpose.msra.mxu0 0.0
        %2520 = vmatprep.subr.mxu0 0.0
        %2521 = vmatpush1.xpose.msra.mxu0 0.0
        %2522 = vmatprep.subr.mxu0 0.0
        %2523 = vmatpush1.xpose.msra.mxu0 0.0
        %2524 = vmatprep.subr.mxu0 0.0
        %2525 = vmatpush1.xpose.msra.mxu0 0.0
        %2526 = vmatprep.subr.mxu0 0.0
        %2527 = vmatpush1.xpose.msra.mxu0 0.0
        %2528 = vmatprep.subr.mxu0 0.0
        %2529 = vmatpush1.xpose.msra.mxu0 0.0
        %2530 = vmatprep.subr.mxu0 0.0
        %2531 = vmatpush1.xpose.msra.mxu0 0.0
        %2532 = vmatprep.subr.mxu0 0.0
        %2533 = vmatpush1.xpose.msra.mxu0 0.0
        %2534 = vmatprep.subr.mxu0 0.0
        %2535 = vmatpush1.xpose.msra.mxu0 0.0
        %2536 = vmatprep.subr.mxu0 0.0
        %2537 = vmatpush1.xpose.msra.mxu0 0.0
        %2538 = vmatprep.subr.mxu0 0.0
        %2539 = vmatpush1.xpose.msra.mxu0 0.0
        %2540 = vmatprep.subr.mxu0 0.0
        %2541 = vmatpush1.xpose.msra.mxu0 0.0
        %2542 = vmatprep.subr.mxu0 0.0
        %2543 = vmatpush1.xpose.msra.mxu0 0.0
        %2544 = vmatprep.subr.mxu0 0.0
        %2545 = vmatpush1.xpose.msra.mxu0 0.0
        %2546 = vmatprep.subr.mxu0 0.0
        %2547 = vmatpush1.xpose.msra.mxu0 0.0
        %2548 = vmatprep.subr.mxu0 0.0
        %2549 = vmatpush1.xpose.msra.mxu0 0.0
        %2550 = vmatprep.subr.mxu0 0.0
        %2551 = vmatpush1.xpose.msra.mxu0 0.0
        %2552 = vmatprep.subr.mxu0 0.0
        %2553 = vmatpush1.xpose.msra.mxu0 0.0
        %2554 = vmatprep.mubr.f32.mxu0 0.0
        %2555 = vmatmul.mubr.f32.gmra.mrb[0].mxu0 %v2485
        %v2556 = vpop.f32.mrb[0].mxu0
        %v2557 = vadd.f32 0.0, %v2556
        %v2558 = vpop.f32.mrb[0].mxu0
        %2559 = vdwg.mxu0
        %v2560 = vmul.f32 %v2557, 0.25
        %v2561 = vsel %vm1127, %v2560, -inf
        %2562 = vmax.xlane.f32.xlu0 %v2561
        %v2563 = vpop.xlane.xlu0 %2562
        %v2564 = vsub.f32 %v2560, %v2563
        %v2565 = vmul.f32 %v2564, 1.442695
        %v2566 = vpow.pop %v2565
        %v2567 = vsel %vm1127, %v2566, 0.0
        %2568 = vadd.xlane.f32.xlu0 %v2567
        %v2569 = vpop.xlane.xlu0 %2568
        %v2570 = vrcp.pop %v2569
        %v2571 = vmul.f32 %v2566, %v2570
        %v2573 = vsel %vm1139, %v2571, 0
        %v2576 = vsel %vm1143, %v2481, 0
        %2578 = vmatprep.subr.mxu0 0.0
        %2579 = vmatpush1.msra.mxu0 %v2576
        %2580 = vmatprep.subr.mxu0 0.0
        %2581 = vmatpush1.msra.mxu0 0.0
        %2582 = vmatprep.subr.mxu0 0.0
        %2583 = vmatpush1.msra.mxu0 0.0
        %2584 = vmatprep.subr.mxu0 0.0
        %2585 = vmatpush1.msra.mxu0 0.0
        %2586 = vmatprep.subr.mxu0 0.0
        %2587 = vmatpush1.msra.mxu0 0.0
        %2588 = vmatprep.subr.mxu0 0.0
        %2589 = vmatpush1.msra.mxu0 0.0
        %2590 = vmatprep.subr.mxu0 0.0
        %2591 = vmatpush1.msra.mxu0 0.0
        %2592 = vmatprep.subr.mxu0 0.0
        %2593 = vmatpush1.msra.mxu0 0.0
        %2594 = vmatprep.subr.mxu0 0.0
        %2595 = vmatpush1.msra.mxu0 0.0
        %2596 = vmatprep.subr.mxu0 0.0
        %2597 = vmatpush1.msra.mxu0 0.0
        %2598 = vmatprep.subr.mxu0 0.0
        %2599 = vmatpush1.msra.mxu0 0.0
        %2600 = vmatprep.subr.mxu0 0.0
        %2601 = vmatpush1.msra.mxu0 0.0
        %2602 = vmatprep.subr.mxu0 0.0
        %2603 = vmatpush1.msra.mxu0 0.0
        %2604 = vmatprep.subr.mxu0 0.0
        %2605 = vmatpush1.msra.mxu0 0.0
        %2606 = vmatprep.subr.mxu0 0.0
        %2607 = vmatpush1.msra.mxu0 0.0
        %2608 = vmatprep.subr.mxu0 0.0
        %2609 = vmatpush1.msra.mxu0 0.0
        %2610 = vmatprep.subr.mxu0 0.0
        %2611 = vmatpush1.msra.mxu0 0.0
        %2612 = vmatprep.subr.mxu0 0.0
        %2613 = vmatpush1.msra.mxu0 0.0
        %2614 = vmatprep.subr.mxu0 0.0
        %2615 = vmatpush1.msra.mxu0 0.0
        %2616 = vmatprep.subr.mxu0 0.0
        %2617 = vmatpush1.msra.mxu0 0.0
        %2618 = vmatprep.subr.mxu0 0.0
        %2619 = vmatpush1.msra.mxu0 0.0
        %2620 = vmatprep.subr.mxu0 0.0
        %2621 = vmatpush1.msra.mxu0 0.0
        %2622 = vmatprep.subr.mxu0 0.0
        %2623 = vmatpush1.msra.mxu0 0.0
        %2624 = vmatprep.subr.mxu0 0.0
        %2625 = vmatpush1.msra.mxu0 0.0
        %2626 = vmatprep.subr.mxu0 0.0
        %2627 = vmatpush1.msra.mxu0 0.0
        %2628 = vmatprep.subr.mxu0 0.0
        %2629 = vmatpush1.msra.mxu0 0.0
        %2630 = vmatprep.subr.mxu0 0.0
        %2631 = vmatpush1.msra.mxu0 0.0
        %2632 = vmatprep.subr.mxu0 0.0
        %2633 = vmatpush1.msra.mxu0 0.0
        %2634 = vmatprep.subr.mxu0 0.0
        %2635 = vmatpush1.msra.mxu0 0.0
        %2636 = vmatprep.subr.mxu0 0.0
        %2637 = vmatpush1.msra.mxu0 0.0
        %2638 = vmatprep.subr.mxu0 0.0
        %2639 = vmatpush1.msra.mxu0 0.0
        %2640 = vmatprep.subr.mxu0 0.0
        %2641 = vmatpush1.msra.mxu0 0.0
        %2642 = vmatprep.mubr.f32.mxu0 0.0
        %2643 = vmatmul.mubr.f32.gmra.mrb[0].mxu0 %v2573
        %v2644 = vpop.f32.mrb[0].mxu0
        %v2645 = vadd.f32 0.0, %v2644
        %v2646 = vpop.f32.mrb[0].mxu0
        %2647 = vdwg.mxu0
        %s2648 = scalar_lea.vmem %s6, 48
        %v2649 = vld [vmem:[%s2648] sm:$0xff]
        %v2650 = vld [vmem:[%s2648 + $0x8] sm:$0xff]
        %v2652 = vsel %vm1049, %v2645, 0
        %2654 = vmatprep.subr.mxu0 0.0
        %2655 = vmatpush1.msra.mxu0 %v2649
        %2656 = vmatprep.subr.mxu0 0.0
        %2657 = vmatpush1.msra.mxu0 %v2650
        %2658 = vmatprep.subr.mxu0 0.0
        %2659 = vmatpush1.msra.mxu0 0.0
        %2660 = vmatprep.subr.mxu0 0.0
        %2661 = vmatpush1.msra.mxu0 0.0
        %2662 = vmatprep.subr.mxu0 0.0
        %2663 = vmatpush1.msra.mxu0 0.0
        %2664 = vmatprep.subr.mxu0 0.0
        %2665 = vmatpush1.msra.mxu0 0.0
        %2666 = vmatprep.subr.mxu0 0.0
        %2667 = vmatpush1.msra.mxu0 0.0
        %2668 = vmatprep.subr.mxu0 0.0
        %2669 = vmatpush1.msra.mxu0 0.0
        %2670 = vmatprep.subr.mxu0 0.0
        %2671 = vmatpush1.msra.mxu0 0.0
        %2672 = vmatprep.subr.mxu0 0.0
        %2673 = vmatpush1.msra.mxu0 0.0
        %2674 = vmatprep.subr.mxu0 0.0
        %2675 = vmatpush1.msra.mxu0 0.0
        %2676 = vmatprep.subr.mxu0 0.0
        %2677 = vmatpush1.msra.mxu0 0.0
        %2678 = vmatprep.subr.mxu0 0.0
        %2679 = vmatpush1.msra.mxu0 0.0
        %2680 = vmatprep.subr.mxu0 0.0
        %2681 = vmatpush1.msra.mxu0 0.0
        %2682 = vmatprep.subr.mxu0 0.0
        %2683 = vmatpush1.msra.mxu0 0.0
        %2684 = vmatprep.subr.mxu0 0.0
        %2685 = vmatpush1.msra.mxu0 0.0
        %2686 = vmatprep.subr.mxu0 0.0
        %2687 = vmatpush1.msra.mxu0 0.0
        %2688 = vmatprep.subr.mxu0 0.0
        %2689 = vmatpush1.msra.mxu0 0.0
        %2690 = vmatprep.subr.mxu0 0.0
        %2691 = vmatpush1.msra.mxu0 0.0
        %2692 = vmatprep.subr.mxu0 0.0
        %2693 = vmatpush1.msra.mxu0 0.0
        %2694 = vmatprep.subr.mxu0 0.0
        %2695 = vmatpush1.msra.mxu0 0.0
        %2696 = vmatprep.subr.mxu0 0.0
        %2697 = vmatpush1.msra.mxu0 0.0
        %2698 = vmatprep.subr.mxu0 0.0
        %2699 = vmatpush1.msra.mxu0 0.0
        %2700 = vmatprep.subr.mxu0 0.0
        %2701 = vmatpush1.msra.mxu0 0.0
        %2702 = vmatprep.subr.mxu0 0.0
        %2703 = vmatpush1.msra.mxu0 0.0
        %2704 = vmatprep.subr.mxu0 0.0
        %2705 = vmatpush1.msra.mxu0 0.0
        %2706 = vmatprep.subr.mxu0 0.0
        %2707 = vmatpush1.msra.mxu0 0.0
        %2708 = vmatprep.subr.mxu0 0.0
        %2709 = vmatpush1.msra.mxu0 0.0
        %2710 = vmatprep.subr.mxu0 0.0
        %2711 = vmatpush1.msra.mxu0 0.0
        %2712 = vmatprep.subr.mxu0 0.0
        %2713 = vmatpush1.msra.mxu0 0.0
        %2714 = vmatprep.subr.mxu0 0.0
        %2715 = vmatpush1.msra.mxu0 0.0
        %2716 = vmatprep.subr.mxu0 0.0
        %2717 = vmatpush1.msra.mxu0 0.0
        %2718 = vmatprep.mubr.f32.mxu0 0.0
        %2719 = vmatmul.mubr.f32.gmra.mrb[0].mxu0 %v2652
        %v2720 = vpop.f32.mrb[0].mxu0
        %v2721 = vadd.f32 0.0, %v2720
        %v2722 = vpop.f32.mrb[0].mxu0
        %2723 = vdwg.mxu0
        %v2724 = vadd.f32 %v2246, %v2721
        %v2725 = vld [vmem:[%s7] sm:$0x1]
        %v2727 = vlaneseq
        %v2728 = vshrl.u32 %v2727, 7
        %v2729 = vsub.s32 0, %v2728
        %v2730 = vrot.slane %v2725, %v2729
        %v2732 = vadd.f32 %v2724, %v2730
        %v2733 = vadd.f32 %v808, %v2732
        %v2734 = vsel %vm780, %v2733, 0.0
        %2735 = vadd.xlane.f32.xlu0 %v2734
        %v2736 = vpop.xlane.xlu0 %2735
        %v2737 = vmul.f32 %v2736, %v784
        %v2738 = vsub.f32 %v2733, %v2737
        %v2739 = vmul.f32 %v2738, %v2738
        %v2740 = vsel %vm780, %v2739, 0.0
        %2741 = vadd.xlane.f32.xlu0 %v2740
        %v2742 = vpop.xlane.xlu0 %2741
        %v2743 = vmul.f32 %v2742, %v784
        %v2744 = vadd.f32 %v2743, 1e-05
        %v2745 = vrsqrt.pop %v2744
        %v2746 = vmul.f32 %v2738, %v2745
        %v2747 = vmul.f32 %v2746, %v799
        %v2748 = vadd.f32 %v2747, %v806
        %v2749 = vld [vmem:[%s8] sm:$0xff]
        %v2750 = vld [vmem:[%s8 + $0x8] sm:$0xff]
        %v2751 = vld [vmem:[%s8 + $0x10] sm:$0xff]
        %v2752 = vld [vmem:[%s8 + $0x18] sm:$0xff]
        %v2753 = vld [vmem:[%s8 + $0x20] sm:$0xff]
        %v2754 = vld [vmem:[%s8 + $0x28] sm:$0xff]
        %v2755 = vld [vmem:[%s8 + $0x30] sm:$0xff]
        %v2756 = vld [vmem:[%s8 + $0x38] sm:$0xff]
        %v2757 = vld [vmem:[%s8 + $0x40] sm:$0xff]
        %v2758 = vld [vmem:[%s8 + $0x48] sm:$0xff]
        %v2759 = vld [vmem:[%s8 + $0x50] sm:$0xff]
        %v2760 = vld [vmem:[%s8 + $0x58] sm:$0xff]
        %v2761 = vld [vmem:[%s8 + $0x60] sm:$0xff]
        %v2762 = vld [vmem:[%s8 + $0x68] sm:$0xff]
        %v2763 = vld [vmem:[%s8 + $0x70] sm:$0xff]
        %v2764 = vld [vmem:[%s8 + $0x78] sm:$0xff]
        %v2765 = vld [vmem:[%s9] sm:$0x3]
        %v2767 = vlaneseq
        %v2768 = vshrl.u32 %v2767, 7
        %v2769 = vsub.s32 0, %v2768
        %v2770 = vrot.slane %v2765, %v2769
        %v2771 = vlaneseq
        %v2772 = vshrl.u32 %v2771, 7
        %v2773 = vsub.s32 1, %v2772
        %v2774 = vrot.slane %v2765, %v2773
        %v2778 = vsel %vm835, %v2748, 0
        %2780 = vmatprep.subr.mxu0 %v2750
        %2781 = vmatpush1.msra.mxu0 %v2749
        %2782 = vmatprep.subr.mxu0 %v2752
        %2783 = vmatpush1.msra.mxu0 %v2751
        %2784 = vmatprep.subr.mxu0 %v2754
        %2785 = vmatpush1.msra.mxu0 %v2753
        %2786 = vmatprep.subr.mxu0 %v2756
        %2787 = vmatpush1.msra.mxu0 %v2755
        %2788 = vmatprep.subr.mxu0 %v2758
        %2789 = vmatpush1.msra.mxu0 %v2757
        %2790 = vmatprep.subr.mxu0 %v2760
        %2791 = vmatpush1.msra.mxu0 %v2759
        %2792 = vmatprep.subr.mxu0 %v2762
        %2793 = vmatpush1.msra.mxu0 %v2761
        %2794 = vmatprep.subr.mxu0 %v2764
        %2795 = vmatpush1.msra.mxu0 %v2763
        %2796 = vmatprep.subr.mxu0 0.0
        %2797 = vmatpush1.msra.mxu0 0.0
        %2798 = vmatprep.subr.mxu0 0.0
        %2799 = vmatpush1.msra.mxu0 0.0
        %2800 = vmatprep.subr.mxu0 0.0
        %2801 = vmatpush1.msra.mxu0 0.0
        %2802 = vmatprep.subr.mxu0 0.0
        %2803 = vmatpush1.msra.mxu0 0.0
        %2804 = vmatprep.subr.mxu0 0.0
        %2805 = vmatpush1.msra.mxu0 0.0
        %2806 = vmatprep.subr.mxu0 0.0
        %2807 = vmatpush1.msra.mxu0 0.0
        %2808 = vmatprep.subr.mxu0 0.0
        %2809 = vmatpush1.msra.mxu0 0.0
        %2810 = vmatprep.subr.mxu0 0.0
        %2811 = vmatpush1.msra.mxu0 0.0
        %2812 = vmatprep.subr.mxu0 0.0
        %2813 = vmatpush1.msra.mxu0 0.0
        %2814 = vmatprep.subr.mxu0 0.0
        %2815 = vmatpush1.msra.mxu0 0.0
        %2816 = vmatprep.subr.mxu0 0.0
        %2817 = vmatpush1.msra.mxu0 0.0
        %2818 = vmatprep.subr.mxu0 0.0
        %2819 = vmatpush1.msra.mxu0 0.0
        %2820 = vmatprep.subr.mxu0 0.0
        %2821 = vmatpush1.msra.mxu0 0.0
        %2822 = vmatprep.subr.mxu0 0.0
        %2823 = vmatpush1.msra.mxu0 0.0
        %2824 = vmatprep.subr.mxu0 0.0
        %2825 = vmatpush1.msra.mxu0 0.0
        %2826 = vmatprep.subr.mxu0 0.0
        %2827 = vmatpush1.msra.mxu0 0.0
        %2828 = vmatprep.subr.mxu0 0.0
        %2829 = vmatpush1.msra.mxu0 0.0
        %2830 = vmatprep.subr.mxu0 0.0
        %2831 = vmatpush1.msra.mxu0 0.0
        %2832 = vmatprep.subr.mxu0 0.0
        %2833 = vmatpush1.msra.mxu0 0.0
        %2834 = vmatprep.subr.mxu0 0.0
        %2835 = vmatpush1.msra.mxu0 0.0
        %2836 = vmatprep.subr.mxu0 0.0
        %2837 = vmatpush1.msra.mxu0 0.0
        %2838 = vmatprep.subr.mxu0 0.0
        %2839 = vmatpush1.msra.mxu0 0.0
        %2840 = vmatprep.subr.mxu0 0.0
        %2841 = vmatpush1.msra.mxu0 0.0
        %2842 = vmatprep.subr.mxu0 0.0
        %2843 = vmatpush1.msra.mxu0 0.0
        %2844 = vmatprep.mubr.f32.mxu0 0.0
        %2845 = vmatmul.mubr.f32.gmra.mrb[0].mxu0 %v2778
        %v2846 = vpop.f32.mrb[0].mxu0
        %v2847 = vadd.f32 %v2770, %v2846
        %v2848 = vpop.f32.mrb[0].mxu0
        %v2849 = vadd.f32 %v2774, %v2848
        %2850 = vdwg.mxu0
        %v2851 = vmul.f32 %v2847, 0.5
        %v2852 = vmul.f32 %v2849, 0.5
        %v2853 = vmul.f32 %v2847, 0.70710677
        %v2854 = vmul.f32 %v2849, 0.70710677
        %v2855 = verf.f32.pop %v2853
        %v2856 = verf.f32.pop %v2854
        %v2857 = vadd.f32 %v2855, 1.0
        %v2858 = vadd.f32 %v2856, 1.0
        %v2859 = vmul.f32 %v2851, %v2857
        %v2860 = vmul.f32 %v2852, %v2858
        %v2861 = vld [vmem:[%s10] sm:$0xff]
        %v2862 = vld [vmem:[%s10 + $0x8] sm:$0xff]
        %v2863 = vld [vmem:[%s10 + $0x10] sm:$0xff]
        %v2864 = vld [vmem:[%s10 + $0x18] sm:$0xff]
        %v2865 = vld [vmem:[%s10 + $0x20] sm:$0xff]
        %v2866 = vld [vmem:[%s10 + $0x28] sm:$0xff]
        %v2867 = vld [vmem:[%s10 + $0x30] sm:$0xff]
        %v2868 = vld [vmem:[%s10 + $0x38] sm:$0xff]
        %v2869 = vld [vmem:[%s10 + $0x40] sm:$0xff]
        %v2870 = vld [vmem:[%s10 + $0x48] sm:$0xff]
        %v2871 = vld [vmem:[%s10 + $0x50] sm:$0xff]
        %v2872 = vld [vmem:[%s10 + $0x58] sm:$0xff]
        %v2873 = vld [vmem:[%s10 + $0x60] sm:$0xff]
        %v2874 = vld [vmem:[%s10 + $0x68] sm:$0xff]
        %v2875 = vld [vmem:[%s10 + $0x70] sm:$0xff]
        %v2876 = vld [vmem:[%s10 + $0x78] sm:$0xff]
        %v2877 = vld [vmem:[%s10 + $0x80] sm:$0xff]
        %v2878 = vld [vmem:[%s10 + $0x88] sm:$0xff]
        %v2879 = vld [vmem:[%s10 + $0x90] sm:$0xff]
        %v2880 = vld [vmem:[%s10 + $0x98] sm:$0xff]
        %v2881 = vld [vmem:[%s10 + $0xa0] sm:$0xff]
        %v2882 = vld [vmem:[%s10 + $0xa8] sm:$0xff]
        %v2883 = vld [vmem:[%s10 + $0xb0] sm:$0xff]
        %v2884 = vld [vmem:[%s10 + $0xb8] sm:$0xff]
        %v2885 = vld [vmem:[%s10 + $0xc0] sm:$0xff]
        %v2886 = vld [vmem:[%s10 + $0xc8] sm:$0xff]
        %v2887 = vld [vmem:[%s10 + $0xd0] sm:$0xff]
        %v2888 = vld [vmem:[%s10 + $0xd8] sm:$0xff]
        %v2889 = vld [vmem:[%s10 + $0xe0] sm:$0xff]
        %v2890 = vld [vmem:[%s10 + $0xe8] sm:$0xff]
        %v2891 = vld [vmem:[%s10 + $0xf0] sm:$0xff]
        %v2892 = vld [vmem:[%s10 + $0xf8] sm:$0xff]
        %v2893 = vld [vmem:[%s11] sm:$0x1]
        %v2895 = vlaneseq
        %v2896 = vshrl.u32 %v2895, 7
        %v2897 = vsub.s32 0, %v2896
        %v2898 = vrot.slane %v2893, %v2897
        %2900 = vmatprep.subr.mxu0 0.0
        %2901 = vmatpush1.msra.mxu0 %v2861
        %2902 = vmatprep.subr.mxu0 0.0
        %2903 = vmatpush1.msra.mxu0 %v2862
        %2904 = vmatprep.subr.mxu0 0.0
        %2905 = vmatpush1.msra.mxu0 %v2863
        %2906 = vmatprep.subr.mxu0 0.0
        %2907 = vmatpush1.msra.mxu0 %v2864
        %2908 = vmatprep.subr.mxu0 0.0
        %2909 = vmatpush1.msra.mxu0 %v2865
        %2910 = vmatprep.subr.mxu0 0.0
        %2911 = vmatpush1.msra.mxu0 %v2866
        %2912 = vmatprep.subr.mxu0 0.0
        %2913 = vmatpush1.msra.mxu0 %v2867
        %2914 = vmatprep.subr.mxu0 0.0
        %2915 = vmatpush1.msra.mxu0 %v2868
        %2916 = vmatprep.subr.mxu0 0.0
        %2917 = vmatpush1.msra.mxu0 %v2869
        %2918 = vmatprep.subr.mxu0 0.0
        %2919 = vmatpush1.msra.mxu0 %v2870
        %2920 = vmatprep.subr.mxu0 0.0
        %2921 = vmatpush1.msra.mxu0 %v2871
        %2922 = vmatprep.subr.mxu0 0.0
        %2923 = vmatpush1.msra.mxu0 %v2872
        %2924 = vmatprep.subr.mxu0 0.0
        %2925 = vmatpush1.msra.mxu0 %v2873
        %2926 = vmatprep.subr.mxu0 0.0
        %2927 = vmatpush1.msra.mxu0 %v2874
        %2928 = vmatprep.subr.mxu0 0.0
        %2929 = vmatpush1.msra.mxu0 %v2875
        %2930 = vmatprep.subr.mxu0 0.0
        %2931 = vmatpush1.msra.mxu0 %v2876
        %2932 = vmatprep.subr.mxu0 0.0
        %2933 = vmatpush1.msra.mxu0 %v2877
        %2934 = vmatprep.subr.mxu0 0.0
        %2935 = vmatpush1.msra.mxu0 %v2878
        %2936 = vmatprep.subr.mxu0 0.0
        %2937 = vmatpush1.msra.mxu0 %v2879
        %2938 = vmatprep.subr.mxu0 0.0
        %2939 = vmatpush1.msra.mxu0 %v2880
        %2940 = vmatprep.subr.mxu0 0.0
        %2941 = vmatpush1.msra.mxu0 %v2881
        %2942 = vmatprep.subr.mxu0 0.0
        %2943 = vmatpush1.msra.mxu0 %v2882
        %2944 = vmatprep.subr.mxu0 0.0
        %2945 = vmatpush1.msra.mxu0 %v2883
        %2946 = vmatprep.subr.mxu0 0.0
        %2947 = vmatpush1.msra.mxu0 %v2884
        %2948 = vmatprep.subr.mxu0 0.0
        %2949 = vmatpush1.msra.mxu0 %v2885
        %2950 = vmatprep.subr.mxu0 0.0
        %2951 = vmatpush1.msra.mxu0 %v2886
        %2952 = vmatprep.subr.mxu0 0.0
        %2953 = vmatpush1.msra.mxu0 %v2887
        %2954 = vmatprep.subr.mxu0 0.0
        %2955 = vmatpush1.msra.mxu0 %v2888
        %2956 = vmatprep.subr.mxu0 0.0
        %2957 = vmatpush1.msra.mxu0 %v2889
        %2958 = vmatprep.subr.mxu0 0.0
        %2959 = vmatpush1.msra.mxu0 %v2890
        %2960 = vmatprep.subr.mxu0 0.0
        %2961 = vmatpush1.msra.mxu0 %v2891
        %2962 = vmatprep.subr.mxu0 0.0
        %2963 = vmatpush1.msra.mxu0 %v2892
        %2964 = vmatprep.mubr.f32.mxu0 %v2860
        %2965 = vmatmul.mubr.f32.gmra.mrb[0].mxu0 %v2859
        %v2966 = vpop.f32.mrb[0].mxu0
        %v2967 = vadd.f32 %v2898, %v2966
        %v2968 = vpop.f32.mrb[0].mxu0
        %2969 = vdwg.mxu0
        %v2970 = vadd.f32 %v2748, %v2967
        %s2971 = scalar_lea.vmem %s3, 1
        %v2972 = vld [vmem:[%s2971] sm:$0x1]
        %s2973 = scalar_lea.vmem %s4, 1
        %v2974 = vld [vmem:[%s2973] sm:$0x1]
        %v2975 = vsel %vm780, %v2970, 0.0
        %2976 = vadd.xlane.f32.xlu0 %v2975
        %v2977 = vpop.xlane.xlu0 %2976
        %v2978 = vmul.f32 %v2977, %v784
        %v2979 = vsub.f32 %v2970, %v2978
        %v2980 = vmul.f32 %v2979, %v2979
        %v2981 = vsel %vm780, %v2980, 0.0
        %2982 = vadd.xlane.f32.xlu0 %v2981
        %v2983 = vpop.xlane.xlu0 %2982
        %v2984 = vmul.f32 %v2983, %v784
        %v2985 = vadd.f32 %v2984, 1e-05
        %v2986 = vrsqrt.pop %v2985
        %v2987 = vmul.f32 %v2979, %v2986
        %v2989 = vlaneseq
        %v2990 = vshrl.u32 %v2989, 7
        %v2991 = vsub.s32 0, %v2990
        %v2992 = vrot.slane %v2972, %v2991
        %v2994 = vmul.f32 %v2987, %v2992
        %v2996 = vlaneseq
        %v2997 = vshrl.u32 %v2996, 7
        %v2998 = vsub.s32 0, %v2997
        %v2999 = vrot.slane %v2974, %v2998
        %v3001 = vadd.f32 %v2994, %v2999
        %s3002 = scalar_lea.vmem %s5, 768
        %v3003 = vld [vmem:[%s3002] sm:$0xff]
        %v3004 = vld [vmem:[%s3002 + $0x8] sm:$0xff]
        %v3005 = vld [vmem:[%s3002 + $0x10] sm:$0xff]
        %v3006 = vld [vmem:[%s3002 + $0x18] sm:$0xff]
        %v3007 = vld [vmem:[%s3002 + $0x20] sm:$0xff]
        %v3008 = vld [vmem:[%s3002 + $0x28] sm:$0xff]
        %v3009 = vld [vmem:[%s3002 + $0x30] sm:$0xff]
        %v3010 = vld [vmem:[%s3002 + $0x38] sm:$0xff]
        %s3011 = scalar_lea.vmem %s5, 1024
        %v3012 = vld [vmem:[%s3011] sm:$0xff]
        %v3013 = vld [vmem:[%s3011 + $0x8] sm:$0xff]
        %v3014 = vld [vmem:[%s3011 + $0x10] sm:$0xff]
        %v3015 = vld [vmem:[%s3011 + $0x18] sm:$0xff]
        %v3016 = vld [vmem:[%s3011 + $0x20] sm:$0xff]
        %v3017 = vld [vmem:[%s3011 + $0x28] sm:$0xff]
        %v3018 = vld [vmem:[%s3011 + $0x30] sm:$0xff]
        %v3019 = vld [vmem:[%s3011 + $0x38] sm:$0xff]
        %s3020 = scalar_lea.vmem %s5, 1280
        %v3021 = vld [vmem:[%s3020] sm:$0xff]
        %v3022 = vld [vmem:[%s3020 + $0x8] sm:$0xff]
        %v3023 = vld [vmem:[%s3020 + $0x10] sm:$0xff]
        %v3024 = vld [vmem:[%s3020 + $0x18] sm:$0xff]
        %v3025 = vld [vmem:[%s3020 + $0x20] sm:$0xff]
        %v3026 = vld [vmem:[%s3020 + $0x28] sm:$0xff]
        %v3027 = vld [vmem:[%s3020 + $0x30] sm:$0xff]
        %v3028 = vld [vmem:[%s3020 + $0x38] sm:$0xff]
        %v3030 = vsel %vm835, %v3001, 0
        %3032 = vmatprep.subr.mxu0 0.0
        %3033 = vmatpush1.msra.mxu0 %v3003
        %3034 = vmatprep.subr.mxu0 0.0
        %3035 = vmatpush1.msra.mxu0 %v3004
        %3036 = vmatprep.subr.mxu0 0.0
        %3037 = vmatpush1.msra.mxu0 %v3005
        %3038 = vmatprep.subr.mxu0 0.0
        %3039 = vmatpush1.msra.mxu0 %v3006
        %3040 = vmatprep.subr.mxu0 0.0
        %3041 = vmatpush1.msra.mxu0 %v3007
        %3042 = vmatprep.subr.mxu0 0.0
        %3043 = vmatpush1.msra.mxu0 %v3008
        %3044 = vmatprep.subr.mxu0 0.0
        %3045 = vmatpush1.msra.mxu0 %v3009
        %3046 = vmatprep.subr.mxu0 0.0
        %3047 = vmatpush1.msra.mxu0 %v3010
        %3048 = vmatprep.subr.mxu0 0.0
        %3049 = vmatpush1.msra.mxu0 0.0
        %3050 = vmatprep.subr.mxu0 0.0
        %3051 = vmatpush1.msra.mxu0 0.0
        %3052 = vmatprep.subr.mxu0 0.0
        %3053 = vmatpush1.msra.mxu0 0.0
        %3054 = vmatprep.subr.mxu0 0.0
        %3055 = vmatpush1.msra.mxu0 0.0
        %3056 = vmatprep.subr.mxu0 0.0
        %3057 = vmatpush1.msra.mxu0 0.0
        %3058 = vmatprep.subr.mxu0 0.0
        %3059 = vmatpush1.msra.mxu0 0.0
        %3060 = vmatprep.subr.mxu0 0.0
        %3061 = vmatpush1.msra.mxu0 0.0
        %3062 = vmatprep.subr.mxu0 0.0
        %3063 = vmatpush1.msra.mxu0 0.0
        %3064 = vmatprep.subr.mxu0 0.0
        %3065 = vmatpush1.msra.mxu0 0.0
        %3066 = vmatprep.subr.mxu0 0.0
        %3067 = vmatpush1.msra.mxu0 0.0
        %3068 = vmatprep.subr.mxu0 0.0
        %3069 = vmatpush1.msra.mxu0 0.0
        %3070 = vmatprep.subr.mxu0 0.0
        %3071 = vmatpush1.msra.mxu0 0.0
        %3072 = vmatprep.subr.mxu0 0.0
        %3073 = vmatpush1.msra.mxu0 0.0
        %3074 = vmatprep.subr.mxu0 0.0
        %3075 = vmatpush1.msra.mxu0 0.0
        %3076 = vmatprep.subr.mxu0 0.0
        %3077 = vmatpush1.msra.mxu0 0.0
        %3078 = vmatprep.subr.mxu0 0.0
        %3079 = vmatpush1.msra.mxu0 0.0
        %3080 = vmatprep.subr.mxu0 0.0
        %3081 = vmatpush1.msra.mxu0 0.0
        %3082 = vmatprep.subr.mxu0 0.0
        %3083 = vmatpush1.msra.mxu0 0.0
        %3084 = vmatprep.subr.mxu0 0.0
        %3085 = vmatpush1.msra.mxu0 0.0
        %3086 = vmatprep.subr.mxu0 0.0
        %3087 = vmatpush1.msra.mxu0 0.0
        %3088 = vmatprep.subr.mxu0 0.0
        %3089 = vmatpush1.msra.mxu0 0.0
        %3090 = vmatprep.subr.mxu0 0.0
        %3091 = vmatpush1.msra.mxu0 0.0
        %3092 = vmatprep.subr.mxu0 0.0
        %3093 = vmatpush1.msra.mxu0 0.0
        %3094 = vmatprep.subr.mxu0 0.0
        %3095 = vmatpush1.msra.mxu0 0.0
        %3096 = vmatprep.mubr.f32.mxu0 0.0
        %3097 = vmatmul.mubr.f32.gmra.mrb[0].mxu0 %v3030
        %v3098 = vpop.f32.mrb[0].mxu0
        %v3099 = vadd.f32 0.0, %v3098
        %v3100 = vpop.f32.mrb[0].mxu0
        %3101 = vdwg.mxu0
        %3102 = vmatprep.subr.mxu0 0.0
        %3103 = vmatpush1.msra.mxu0 %v3012
        %3104 = vmatprep.subr.mxu0 0.0
        %3105 = vmatpush1.msra.mxu0 %v3013
        %3106 = vmatprep.subr.mxu0 0.0
        %3107 = vmatpush1.msra.mxu0 %v3014
        %3108 = vmatprep.subr.mxu0 0.0
        %3109 = vmatpush1.msra.mxu0 %v3015
        %3110 = vmatprep.subr.mxu0 0.0
        %3111 = vmatpush1.msra.mxu0 %v3016
        %3112 = vmatprep.subr.mxu0 0.0
        %3113 = vmatpush1.msra.mxu0 %v3017
        %3114 = vmatprep.subr.mxu0 0.0
        %3115 = vmatpush1.msra.mxu0 %v3018
        %3116 = vmatprep.subr.mxu0 0.0
        %3117 = vmatpush1.msra.mxu0 %v3019
        %3118 = vmatprep.subr.mxu0 0.0
        %3119 = vmatpush1.msra.mxu0 0.0
        %3120 = vmatprep.subr.mxu0 0.0
        %3121 = vmatpush1.msra.mxu0 0.0
        %3122 = vmatprep.subr.mxu0 0.0
        %3123 = vmatpush1.msra.mxu0 0.0
        %3124 = vmatprep.subr.mxu0 0.0
        %3125 = vmatpush1.msra.mxu0 0.0
        %3126 = vmatprep.subr.mxu0 0.0
        %3127 = vmatpush1.msra.mxu0 0.0
        %3128 = vmatprep.subr.mxu0 0.0
        %3129 = vmatpush1.msra.mxu0 0.0
        %3130 = vmatprep.subr.mxu0 0.0
        %3131 = vmatpush1.msra.mxu0 0.0
        %3132 = vmatprep.subr.mxu0 0.0
        %3133 = vmatpush1.msra.mxu0 0.0
        %3134 = vmatprep.subr.mxu0 0.0
        %3135 = vmatpush1.msra.mxu0 0.0
        %3136 = vmatprep.subr.mxu0 0.0
        %3137 = vmatpush1.msra.mxu0 0.0
        %3138 = vmatprep.subr.mxu0 0.0
        %3139 = vmatpush1.msra.mxu0 0.0
        %3140 = vmatprep.subr.mxu0 0.0
        %3141 = vmatpush1.msra.mxu0 0.0
        %3142 = vmatprep.subr.mxu0 0.0
        %3143 = vmatpush1.msra.mxu0 0.0
        %3144 = vmatprep.subr.mxu0 0.0
        %3145 = vmatpush1.msra.mxu0 0.0
        %3146 = vmatprep.subr.mxu0 0.0
        %3147 = vmatpush1.msra.mxu0 0.0
        %3148 = vmatprep.subr.mxu0 0.0
        %3149 = vmatpush1.msra.mxu0 0.0
        %3150 = vmatprep.subr.mxu0 0.0
        %3151 = vmatpush1.msra.mxu0 0.0
        %3152 = vmatprep.subr.mxu0 0.0
        %3153 = vmatpush1.msra.mxu0 0.0
        %3154 = vmatprep.subr.mxu0 0.0
        %3155 = vmatpush1.msra.mxu0 0.0
        %3156 = vmatprep.subr.mxu0 0.0
        %3157 = vmatpush1.msra.mxu0 0.0
        %3158 = vmatprep.subr.mxu0 0.0
        %3159 = vmatpush1.msra.mxu0 0.0
        %3160 = vmatprep.subr.mxu0 0.0
        %3161 = vmatpush1.msra.mxu0 0.0
        %3162 = vmatprep.subr.mxu0 0.0
        %3163 = vmatpush1.msra.mxu0 0.0
        %3164 = vmatprep.subr.mxu0 0.0
        %3165 = vmatpush1.msra.mxu0 0.0
        %3166 = vmatprep.mubr.f32.mxu0 0.0
        %3167 = vmatmul.mubr.f32.gmra.mrb[0].mxu0 %v3030
        %v3168 = vpop.f32.mrb[0].mxu0
        %v3169 = vadd.f32 0.0, %v3168
        %v3170 = vpop.f32.mrb[0].mxu0
        %3171 = vdwg.mxu0
        %3172 = vmatprep.subr.mxu0 0.0
        %3173 = vmatpush1.msra.mxu0 %v3021
        %3174 = vmatprep.subr.mxu0 0.0
        %3175 = vmatpush1.msra.mxu0 %v3022
        %3176 = vmatprep.subr.mxu0 0.0
        %3177 = vmatpush1.msra.mxu0 %v3023
        %3178 = vmatprep.subr.mxu0 0.0
        %3179 = vmatpush1.msra.mxu0 %v3024
        %3180 = vmatprep.subr.mxu0 0.0
        %3181 = vmatpush1.msra.mxu0 %v3025
        %3182 = vmatprep.subr.mxu0 0.0
        %3183 = vmatpush1.msra.mxu0 %v3026
        %3184 = vmatprep.subr.mxu0 0.0
        %3185 = vmatpush1.msra.mxu0 %v3027
        %3186 = vmatprep.subr.mxu0 0.0
        %3187 = vmatpush1.msra.mxu0 %v3028
        %3188 = vmatprep.subr.mxu0 0.0
        %3189 = vmatpush1.msra.mxu0 0.0
        %3190 = vmatprep.subr.mxu0 0.0
        %3191 = vmatpush1.msra.mxu0 0.0
        %3192 = vmatprep.subr.mxu0 0.0
        %3193 = vmatpush1.msra.mxu0 0.0
        %3194 = vmatprep.subr.mxu0 0.0
        %3195 = vmatpush1.msra.mxu0 0.0
        %3196 = vmatprep.subr.mxu0 0.0
        %3197 = vmatpush1.msra.mxu0 0.0
        %3198 = vmatprep.subr.mxu0 0.0
        %3199 = vmatpush1.msra.mxu0 0.0
        %3200 = vmatprep.subr.mxu0 0.0
        %3201 = vmatpush1.msra.mxu0 0.0
        %3202 = vmatprep.subr.mxu0 0.0
        %3203 = vmatpush1.msra.mxu0 0.0
        %3204 = vmatprep.subr.mxu0 0.0
        %3205 = vmatpush1.msra.mxu0 0.0
        %3206 = vmatprep.subr.mxu0 0.0
        %3207 = vmatpush1.msra.mxu0 0.0
        %3208 = vmatprep.subr.mxu0 0.0
        %3209 = vmatpush1.msra.mxu0 0.0
        %3210 = vmatprep.subr.mxu0 0.0
        %3211 = vmatpush1.msra.mxu0 0.0
        %3212 = vmatprep.subr.mxu0 0.0
        %3213 = vmatpush1.msra.mxu0 0.0
        %3214 = vmatprep.subr.mxu0 0.0
        %3215 = vmatpush1.msra.mxu0 0.0
        %3216 = vmatprep.subr.mxu0 0.0
        %3217 = vmatpush1.msra.mxu0 0.0
        %3218 = vmatprep.subr.mxu0 0.0
        %3219 = vmatpush1.msra.mxu0 0.0
        %3220 = vmatprep.subr.mxu0 0.0
        %3221 = vmatpush1.msra.mxu0 0.0
        %3222 = vmatprep.subr.mxu0 0.0
        %3223 = vmatpush1.msra.mxu0 0.0
        %3224 = vmatprep.subr.mxu0 0.0
        %3225 = vmatpush1.msra.mxu0 0.0
        %3226 = vmatprep.subr.mxu0 0.0
        %3227 = vmatpush1.msra.mxu0 0.0
        %3228 = vmatprep.subr.mxu0 0.0
        %3229 = vmatpush1.msra.mxu0 0.0
        %3230 = vmatprep.subr.mxu0 0.0
        %3231 = vmatpush1.msra.mxu0 0.0
        %3232 = vmatprep.subr.mxu0 0.0
        %3233 = vmatpush1.msra.mxu0 0.0
        %3234 = vmatprep.subr.mxu0 0.0
        %3235 = vmatpush1.msra.mxu0 0.0
        %3236 = vmatprep.mubr.f32.mxu0 0.0
        %3237 = vmatmul.mubr.f32.gmra.mrb[0].mxu0 %v3030
        %v3238 = vpop.f32.mrb[0].mxu0
        %v3239 = vadd.f32 0.0, %v3238
        %v3240 = vpop.f32.mrb[0].mxu0
        %3241 = vdwg.mxu0
        %v3243 = vsel %vm1049, %v3099, 0
        %v3246 = vsel %vm1049, %v3169, 0
        %3248 = vmatprep.subr.mxu0 0.0
        %3249 = vmatpush1.xpose.msra.mxu0 %v3246
        %3250 = vmatprep.subr.mxu0 0.0
        %3251 = vmatpush1.xpose.msra.mxu0 0.0
        %3252 = vmatprep.subr.mxu0 0.0
        %3253 = vmatpush1.xpose.msra.mxu0 0.0
        %3254 = vmatprep.subr.mxu0 0.0
        %3255 = vmatpush1.xpose.msra.mxu0 0.0
        %3256 = vmatprep.subr.mxu0 0.0
        %3257 = vmatpush1.xpose.msra.mxu0 0.0
        %3258 = vmatprep.subr.mxu0 0.0
        %3259 = vmatpush1.xpose.msra.mxu0 0.0
        %3260 = vmatprep.subr.mxu0 0.0
        %3261 = vmatpush1.xpose.msra.mxu0 0.0
        %3262 = vmatprep.subr.mxu0 0.0
        %3263 = vmatpush1.xpose.msra.mxu0 0.0
        %3264 = vmatprep.subr.mxu0 0.0
        %3265 = vmatpush1.xpose.msra.mxu0 0.0
        %3266 = vmatprep.subr.mxu0 0.0
        %3267 = vmatpush1.xpose.msra.mxu0 0.0
        %3268 = vmatprep.subr.mxu0 0.0
        %3269 = vmatpush1.xpose.msra.mxu0 0.0
        %3270 = vmatprep.subr.mxu0 0.0
        %3271 = vmatpush1.xpose.msra.mxu0 0.0
        %3272 = vmatprep.subr.mxu0 0.0
        %3273 = vmatpush1.xpose.msra.mxu0 0.0
        %3274 = vmatprep.subr.mxu0 0.0
        %3275 = vmatpush1.xpose.msra.mxu0 0.0
        %3276 = vmatprep.subr.mxu0 0.0
        %3277 = vmatpush1.xpose.msra.mxu0 0.0
        %3278 = vmatprep.subr.mxu0 0.0
        %3279 = vmatpush1.xpose.msra.mxu0 0.0
        %3280 = vmatprep.subr.mxu0 0.0
        %3281 = vmatpush1.xpose.msra.mxu0 0.0
        %3282 = vmatprep.subr.mxu0 0.0
        %3283 = vmatpush1.xpose.msra.mxu0 0.0
        %3284 = vmatprep.subr.mxu0 0.0
        %3285 = vmatpush1.xpose.msra.mxu0 0.0
        %3286 = vmatprep.subr.mxu0 0.0
        %3287 = vmatpush1.xpose.msra.mxu0 0.0
        %3288 = vmatprep.subr.mxu0 0.0
        %3289 = vmatpush1.xpose.msra.mxu0 0.0
        %3290 = vmatprep.subr.mxu0 0.0
        %3291 = vmatpush1.xpose.msra.mxu0 0.0
        %3292 = vmatprep.subr.mxu0 0.0
        %3293 = vmatpush1.xpose.msra.mxu0 0.0
        %3294 = vmatprep.subr.mxu0 0.0
        %3295 = vmatpush1.xpose.msra.mxu0 0.0
        %3296 = vmatprep.subr.mxu0 0.0
        %3297 = vmatpush1.xpose.msra.mxu0 0.0
        %3298 = vmatprep.subr.mxu0 0.0
        %3299 = vmatpush1.xpose.msra.mxu0 0.0
        %3300 = vmatprep.subr.mxu0 0.0
        %3301 = vmatpush1.xpose.msra.mxu0 0.0
        %3302 = vmatprep.subr.mxu0 0.0
        %3303 = vmatpush1.xpose.msra.mxu0 0.0
        %3304 = vmatprep.subr.mxu0 0.0
        %3305 = vmatpush1.xpose.msra.mxu0 0.0
        %3306 = vmatprep.subr.mxu0 0.0
        %3307 = vmatpush1.xpose.msra.mxu0 0.0
        %3308 = vmatprep.subr.mxu0 0.0
        %3309 = vmatpush1.xpose.msra.mxu0 0.0
        %3310 = vmatprep.subr.mxu0 0.0
        %3311 = vmatpush1.xpose.msra.mxu0 0.0
        %3312 = vmatprep.mubr.f32.mxu0 0.0
        %3313 = vmatmul.mubr.f32.gmra.mrb[0].mxu0 %v3243
        %v3314 = vpop.f32.mrb[0].mxu0
        %v3315 = vadd.f32 0.0, %v3314
        %v3316 = vpop.f32.mrb[0].mxu0
        %3317 = vdwg.mxu0
        %v3318 = vmul.f32 %v3315, 0.25
        %v3319 = vsel %vm1127, %v3318, -inf
        %3320 = vmax.xlane.f32.xlu0 %v3319
        %v3321 = vpop.xlane.xlu0 %3320
        %v3322 = vsub.f32 %v3318, %v3321
        %v3323 = vmul.f32 %v3322, 1.442695
        %v3324 = vpow.pop %v3323
        %v3325 = vsel %vm1127, %v3324, 0.0
        %3326 = vadd.xlane.f32.xlu0 %v3325
        %v3327 = vpop.xlane.xlu0 %3326
        %v3328 = vrcp.pop %v3327
        %v3329 = vmul.f32 %v3324, %v3328
        %v3331 = vsel %vm1139, %v3329, 0
        %v3334 = vsel %vm1143, %v3239, 0
        %3336 = vmatprep.subr.mxu0 0.0
        %3337 = vmatpush1.msra.mxu0 %v3334
        %3338 = vmatprep.subr.mxu0 0.0
        %3339 = vmatpush1.msra.mxu0 0.0
        %3340 = vmatprep.subr.mxu0 0.0
        %3341 = vmatpush1.msra.mxu0 0.0
        %3342 = vmatprep.subr.mxu0 0.0
        %3343 = vmatpush1.msra.mxu0 0.0
        %3344 = vmatprep.subr.mxu0 0.0
        %3345 = vmatpush1.msra.mxu0 0.0
        %3346 = vmatprep.subr.mxu0 0.0
        %3347 = vmatpush1.msra.mxu0 0.0
        %3348 = vmatprep.subr.mxu0 0.0
        %3349 = vmatpush1.msra.mxu0 0.0
        %3350 = vmatprep.subr.mxu0 0.0
        %3351 = vmatpush1.msra.mxu0 0.0
        %3352 = vmatprep.subr.mxu0 0.0
        %3353 = vmatpush1.msra.mxu0 0.0
        %3354 = vmatprep.subr.mxu0 0.0
        %3355 = vmatpush1.msra.mxu0 0.0
        %3356 = vmatprep.subr.mxu0 0.0
        %3357 = vmatpush1.msra.mxu0 0.0
        %3358 = vmatprep.subr.mxu0 0.0
        %3359 = vmatpush1.msra.mxu0 0.0
        %3360 = vmatprep.subr.mxu0 0.0
        %3361 = vmatpush1.msra.mxu0 0.0
        %3362 = vmatprep.subr.mxu0 0.0
        %3363 = vmatpush1.msra.mxu0 0.0
        %3364 = vmatprep.subr.mxu0 0.0
        %3365 = vmatpush1.msra.mxu0 0.0
        %3366 = vmatprep.subr.mxu0 0.0
        %3367 = vmatpush1.msra.mxu0 0.0
        %3368 = vmatprep.subr.mxu0 0.0
        %3369 = vmatpush1.msra.mxu0 0.0
        %3370 = vmatprep.subr.mxu0 0.0
        %3371 = vmatpush1.msra.mxu0 0.0
        %3372 = vmatprep.subr.mxu0 0.0
        %3373 = vmatpush1.msra.mxu0 0.0
        %3374 = vmatprep.subr.mxu0 0.0
        %3375 = vmatpush1.msra.mxu0 0.0
        %3376 = vmatprep.subr.mxu0 0.0
        %3377 = vmatpush1.msra.mxu0 0.0
        %3378 = vmatprep.subr.mxu0 0.0
        %3379 = vmatpush1.msra.mxu0 0.0
        %3380 = vmatprep.subr.mxu0 0.0
        %3381 = vmatpush1.msra.mxu0 0.0
        %3382 = vmatprep.subr.mxu0 0.0
        %3383 = vmatpush1.msra.mxu0 0.0
        %3384 = vmatprep.subr.mxu0 0.0
        %3385 = vmatpush1.msra.mxu0 0.0
        %3386 = vmatprep.subr.mxu0 0.0
        %3387 = vmatpush1.msra.mxu0 0.0
        %3388 = vmatprep.subr.mxu0 0.0
        %3389 = vmatpush1.msra.mxu0 0.0
        %3390 = vmatprep.subr.mxu0 0.0
        %3391 = vmatpush1.msra.mxu0 0.0
        %3392 = vmatprep.subr.mxu0 0.0
        %3393 = vmatpush1.msra.mxu0 0.0
        %3394 = vmatprep.subr.mxu0 0.0
        %3395 = vmatpush1.msra.mxu0 0.0
        %3396 = vmatprep.subr.mxu0 0.0
        %3397 = vmatpush1.msra.mxu0 0.0
        %3398 = vmatprep.subr.mxu0 0.0
        %3399 = vmatpush1.msra.mxu0 0.0
        %3400 = vmatprep.mubr.f32.mxu0 0.0
        %3401 = vmatmul.mubr.f32.gmra.mrb[0].mxu0 %v3331
        %v3402 = vpop.f32.mrb[0].mxu0
        %v3403 = vadd.f32 0.0, %v3402
        %v3404 = vpop.f32.mrb[0].mxu0
        %3405 = vdwg.mxu0
        %s3406 = scalar_lea.vmem %s6, 64
        %v3407 = vld [vmem:[%s3406] sm:$0xff]
        %v3408 = vld [vmem:[%s3406 + $0x8] sm:$0xff]
        %s3409 = scalar_lea.vmem %s5, 832
        %v3410 = vld [vmem:[%s3409] sm:$0xff]
        %v3411 = vld [vmem:[%s3409 + $0x8] sm:$0xff]
        %v3412 = vld [vmem:[%s3409 + $0x10] sm:$0xff]
        %v3413 = vld [vmem:[%s3409 + $0x18] sm:$0xff]
        %v3414 = vld [vmem:[%s3409 + $0x20] sm:$0xff]
        %v3415 = vld [vmem:[%s3409 + $0x28] sm:$0xff]
        %v3416 = vld [vmem:[%s3409 + $0x30] sm:$0xff]
        %v3417 = vld [vmem:[%s3409 + $0x38] sm:$0xff]
        %s3418 = scalar_lea.vmem %s5, 1088
        %v3419 = vld [vmem:[%s3418] sm:$0xff]
        %v3420 = vld [vmem:[%s3418 + $0x8] sm:$0xff]
        %v3421 = vld [vmem:[%s3418 + $0x10] sm:$0xff]
        %v3422 = vld [vmem:[%s3418 + $0x18] sm:$0xff]
        %v3423 = vld [vmem:[%s3418 + $0x20] sm:$0xff]
        %v3424 = vld [vmem:[%s3418 + $0x28] sm:$0xff]
        %v3425 = vld [vmem:[%s3418 + $0x30] sm:$0xff]
        %v3426 = vld [vmem:[%s3418 + $0x38] sm:$0xff]
        %s3427 = scalar_lea.vmem %s5, 1344
        %v3428 = vld [vmem:[%s3427] sm:$0xff]
        %v3429 = vld [vmem:[%s3427 + $0x8] sm:$0xff]
        %v3430 = vld [vmem:[%s3427 + $0x10] sm:$0xff]
        %v3431 = vld [vmem:[%s3427 + $0x18] sm:$0xff]
        %v3432 = vld [vmem:[%s3427 + $0x20] sm:$0xff]
        %v3433 = vld [vmem:[%s3427 + $0x28] sm:$0xff]
        %v3434 = vld [vmem:[%s3427 + $0x30] sm:$0xff]
        %v3435 = vld [vmem:[%s3427 + $0x38] sm:$0xff]
        %3436 = vmatprep.subr.mxu0 0.0
        %3437 = vmatpush1.msra.mxu0 %v3410
        %3438 = vmatprep.subr.mxu0 0.0
        %3439 = vmatpush1.msra.mxu0 %v3411
        %3440 = vmatprep.subr.mxu0 0.0
        %3441 = vmatpush1.msra.mxu0 %v3412
        %3442 = vmatprep.subr.mxu0 0.0
        %3443 = vmatpush1.msra.mxu0 %v3413
        %3444 = vmatprep.subr.mxu0 0.0
        %3445 = vmatpush1.msra.mxu0 %v3414
        %3446 = vmatprep.subr.mxu0 0.0
        %3447 = vmatpush1.msra.mxu0 %v3415
        %3448 = vmatprep.subr.mxu0 0.0
        %3449 = vmatpush1.msra.mxu0 %v3416
        %3450 = vmatprep.subr.mxu0 0.0
        %3451 = vmatpush1.msra.mxu0 %v3417
        %3452 = vmatprep.subr.mxu0 0.0
        %3453 = vmatpush1.msra.mxu0 0.0
        %3454 = vmatprep.subr.mxu0 0.0
        %3455 = vmatpush1.msra.mxu0 0.0
        %3456 = vmatprep.subr.mxu0 0.0
        %3457 = vmatpush1.msra.mxu0 0.0
        %3458 = vmatprep.subr.mxu0 0.0
        %3459 = vmatpush1.msra.mxu0 0.0
        %3460 = vmatprep.subr.mxu0 0.0
        %3461 = vmatpush1.msra.mxu0 0.0
        %3462 = vmatprep.subr.mxu0 0.0
        %3463 = vmatpush1.msra.mxu0 0.0
        %3464 = vmatprep.subr.mxu0 0.0
        %3465 = vmatpush1.msra.mxu0 0.0
        %3466 = vmatprep.subr.mxu0 0.0
        %3467 = vmatpush1.msra.mxu0 0.0
        %3468 = vmatprep.subr.mxu0 0.0
        %3469 = vmatpush1.msra.mxu0 0.0
        %3470 = vmatprep.subr.mxu0 0.0
        %3471 = vmatpush1.msra.mxu0 0.0
        %3472 = vmatprep.subr.mxu0 0.0
        %3473 = vmatpush1.msra.mxu0 0.0
        %3474 = vmatprep.subr.mxu0 0.0
        %3475 = vmatpush1.msra.mxu0 0.0
        %3476 = vmatprep.subr.mxu0 0.0
        %3477 = vmatpush1.msra.mxu0 0.0
        %3478 = vmatprep.subr.mxu0 0.0
        %3479 = vmatpush1.msra.mxu0 0.0
        %3480 = vmatprep.subr.mxu0 0.0
        %3481 = vmatpush1.msra.mxu0 0.0
        %3482 = vmatprep.subr.mxu0 0.0
        %3483 = vmatpush1.msra.mxu0 0.0
        %3484 = vmatprep.subr.mxu0 0.0
        %3485 = vmatpush1.msra.mxu0 0.0
        %3486 = vmatprep.subr.mxu0 0.0
        %3487 = vmatpush1.msra.mxu0 0.0
        %3488 = vmatprep.subr.mxu0 0.0
        %3489 = vmatpush1.msra.mxu0 0.0
        %3490 = vmatprep.subr.mxu0 0.0
        %3491 = vmatpush1.msra.mxu0 0.0
        %3492 = vmatprep.subr.mxu0 0.0
        %3493 = vmatpush1.msra.mxu0 0.0
        %3494 = vmatprep.subr.mxu0 0.0
        %3495 = vmatpush1.msra.mxu0 0.0
        %3496 = vmatprep.subr.mxu0 0.0
        %3497 = vmatpush1.msra.mxu0 0.0
        %3498 = vmatprep.subr.mxu0 0.0
        %3499 = vmatpush1.msra.mxu0 0.0
        %3500 = vmatprep.mubr.f32.mxu0 0.0
        %3501 = vmatmul.mubr.f32.gmra.mrb[0].mxu0 %v3030
        %v3502 = vpop.f32.mrb[0].mxu0
        %v3503 = vadd.f32 0.0, %v3502
        %v3504 = vpop.f32.mrb[0].mxu0
        %3505 = vdwg.mxu0
        %3506 = vmatprep.subr.mxu0 0.0
        %3507 = vmatpush1.msra.mxu0 %v3419
        %3508 = vmatprep.subr.mxu0 0.0
        %3509 = vmatpush1.msra.mxu0 %v3420
        %3510 = vmatprep.subr.mxu0 0.0
        %3511 = vmatpush1.msra.mxu0 %v3421
        %3512 = vmatprep.subr.mxu0 0.0
        %3513 = vmatpush1.msra.mxu0 %v3422
        %3514 = vmatprep.subr.mxu0 0.0
        %3515 = vmatpush1.msra.mxu0 %v3423
        %3516 = vmatprep.subr.mxu0 0.0
        %3517 = vmatpush1.msra.mxu0 %v3424
        %3518 = vmatprep.subr.mxu0 0.0
        %3519 = vmatpush1.msra.mxu0 %v3425
        %3520 = vmatprep.subr.mxu0 0.0
        %3521 = vmatpush1.msra.mxu0 %v3426
        %3522 = vmatprep.subr.mxu0 0.0
        %3523 = vmatpush1.msra.mxu0 0.0
        %3524 = vmatprep.subr.mxu0 0.0
        %3525 = vmatpush1.msra.mxu0 0.0
        %3526 = vmatprep.subr.mxu0 0.0
        %3527 = vmatpush1.msra.mxu0 0.0
        %3528 = vmatprep.subr.mxu0 0.0
        %3529 = vmatpush1.msra.mxu0 0.0
        %3530 = vmatprep.subr.mxu0 0.0
        %3531 = vmatpush1.msra.mxu0 0.0
        %3532 = vmatprep.subr.mxu0 0.0
        %3533 = vmatpush1.msra.mxu0 0.0
        %3534 = vmatprep.subr.mxu0 0.0
        %3535 = vmatpush1.msra.mxu0 0.0
        %3536 = vmatprep.subr.mxu0 0.0
        %3537 = vmatpush1.msra.mxu0 0.0
        %3538 = vmatprep.subr.mxu0 0.0
        %3539 = vmatpush1.msra.mxu0 0.0
        %3540 = vmatprep.subr.mxu0 0.0
        %3541 = vmatpush1.msra.mxu0 0.0
        %3542 = vmatprep.subr.mxu0 0.0
        %3543 = vmatpush1.msra.mxu0 0.0
        %3544 = vmatprep.subr.mxu0 0.0
        %3545 = vmatpush1.msra.mxu0 0.0
        %3546 = vmatprep.subr.mxu0 0.0
        %3547 = vmatpush1.msra.mxu0 0.0
        %3548 = vmatprep.subr.mxu0 0.0
        %3549 = vmatpush1.msra.mxu0 0.0
        %3550 = vmatprep.subr.mxu0 0.0
        %3551 = vmatpush1.msra.mxu0 0.0
        %3552 = vmatprep.subr.mxu0 0.0
        %3553 = vmatpush1.msra.mxu0 0.0
        %3554 = vmatprep.subr.mxu0 0.0
        %3555 = vmatpush1.msra.mxu0 0.0
        %3556 = vmatprep.subr.mxu0 0.0
        %3557 = vmatpush1.msra.mxu0 0.0
        %3558 = vmatprep.subr.mxu0 0.0
        %3559 = vmatpush1.msra.mxu0 0.0
        %3560 = vmatprep.subr.mxu0 0.0
        %3561 = vmatpush1.msra.mxu0 0.0
        %3562 = vmatprep.subr.mxu0 0.0
        %3563 = vmatpush1.msra.mxu0 0.0
        %3564 = vmatprep.subr.mxu0 0.0
        %3565 = vmatpush1.msra.mxu0 0.0
        %3566 = vmatprep.subr.mxu0 0.0
        %3567 = vmatpush1.msra.mxu0 0.0
        %3568 = vmatprep.subr.mxu0 0.0
        %3569 = vmatpush1.msra.mxu0 0.0
        %3570 = vmatprep.mubr.f32.mxu0 0.0
        %3571 = vmatmul.mubr.f32.gmra.mrb[0].mxu0 %v3030
        %v3572 = vpop.f32.mrb[0].mxu0
        %v3573 = vadd.f32 0.0, %v3572
        %v3574 = vpop.f32.mrb[0].mxu0
        %3575 = vdwg.mxu0
        %3576 = vmatprep.subr.mxu0 0.0
        %3577 = vmatpush1.msra.mxu0 %v3428
        %3578 = vmatprep.subr.mxu0 0.0
        %3579 = vmatpush1.msra.mxu0 %v3429
        %3580 = vmatprep.subr.mxu0 0.0
        %3581 = vmatpush1.msra.mxu0 %v3430
        %3582 = vmatprep.subr.mxu0 0.0
        %3583 = vmatpush1.msra.mxu0 %v3431
        %3584 = vmatprep.subr.mxu0 0.0
        %3585 = vmatpush1.msra.mxu0 %v3432
        %3586 = vmatprep.subr.mxu0 0.0
        %3587 = vmatpush1.msra.mxu0 %v3433
        %3588 = vmatprep.subr.mxu0 0.0
        %3589 = vmatpush1.msra.mxu0 %v3434
        %3590 = vmatprep.subr.mxu0 0.0
        %3591 = vmatpush1.msra.mxu0 %v3435
        %3592 = vmatprep.subr.mxu0 0.0
        %3593 = vmatpush1.msra.mxu0 0.0
        %3594 = vmatprep.subr.mxu0 0.0
        %3595 = vmatpush1.msra.mxu0 0.0
        %3596 = vmatprep.subr.mxu0 0.0
        %3597 = vmatpush1.msra.mxu0 0.0
        %3598 = vmatprep.subr.mxu0 0.0
        %3599 = vmatpush1.msra.mxu0 0.0
        %3600 = vmatprep.subr.mxu0 0.0
        %3601 = vmatpush1.msra.mxu0 0.0
        %3602 = vmatprep.subr.mxu0 0.0
        %3603 = vmatpush1.msra.mxu0 0.0
        %3604 = vmatprep.subr.mxu0 0.0
        %3605 = vmatpush1.msra.mxu0 0.0
        %3606 = vmatprep.subr.mxu0 0.0
        %3607 = vmatpush1.msra.mxu0 0.0
        %3608 = vmatprep.subr.mxu0 0.0
        %3609 = vmatpush1.msra.mxu0 0.0
        %3610 = vmatprep.subr.mxu0 0.0
        %3611 = vmatpush1.msra.mxu0 0.0
        %3612 = vmatprep.subr.mxu0 0.0
        %3613 = vmatpush1.msra.mxu0 0.0
        %3614 = vmatprep.subr.mxu0 0.0
        %3615 = vmatpush1.msra.mxu0 0.0
        %3616 = vmatprep.subr.mxu0 0.0
        %3617 = vmatpush1.msra.mxu0 0.0
        %3618 = vmatprep.subr.mxu0 0.0
        %3619 = vmatpush1.msra.mxu0 0.0
        %3620 = vmatprep.subr.mxu0 0.0
        %3621 = vmatpush1.msra.mxu0 0.0
        %3622 = vmatprep.subr.mxu0 0.0
        %3623 = vmatpush1.msra.mxu0 0.0
        %3624 = vmatprep.subr.mxu0 0.0
        %3625 = vmatpush1.msra.mxu0 0.0
        %3626 = vmatprep.subr.mxu0 0.0
        %3627 = vmatpush1.msra.mxu0 0.0
        %3628 = vmatprep.subr.mxu0 0.0
        %3629 = vmatpush1.msra.mxu0 0.0
        %3630 = vmatprep.subr.mxu0 0.0
        %3631 = vmatpush1.msra.mxu0 0.0
        %3632 = vmatprep.subr.mxu0 0.0
        %3633 = vmatpush1.msra.mxu0 0.0
        %3634 = vmatprep.subr.mxu0 0.0
        %3635 = vmatpush1.msra.mxu0 0.0
        %3636 = vmatprep.subr.mxu0 0.0
        %3637 = vmatpush1.msra.mxu0 0.0
        %3638 = vmatprep.subr.mxu0 0.0
        %3639 = vmatpush1.msra.mxu0 0.0
        %3640 = vmatprep.mubr.f32.mxu0 0.0
        %3641 = vmatmul.mubr.f32.gmra.mrb[0].mxu0 %v3030
        %v3642 = vpop.f32.mrb[0].mxu0
        %v3643 = vadd.f32 0.0, %v3642
        %v3644 = vpop.f32.mrb[0].mxu0
        %3645 = vdwg.mxu0
        %v3647 = vsel %vm1049, %v3503, 0
        %v3650 = vsel %vm1049, %v3573, 0
        %3652 = vmatprep.subr.mxu0 0.0
        %3653 = vmatpush1.xpose.msra.mxu0 %v3650
        %3654 = vmatprep.subr.mxu0 0.0
        %3655 = vmatpush1.xpose.msra.mxu0 0.0
        %3656 = vmatprep.subr.mxu0 0.0
        %3657 = vmatpush1.xpose.msra.mxu0 0.0
        %3658 = vmatprep.subr.mxu0 0.0
        %3659 = vmatpush1.xpose.msra.mxu0 0.0
        %3660 = vmatprep.subr.mxu0 0.0
        %3661 = vmatpush1.xpose.msra.mxu0 0.0
        %3662 = vmatprep.subr.mxu0 0.0
        %3663 = vmatpush1.xpose.msra.mxu0 0.0
        %3664 = vmatprep.subr.mxu0 0.0
        %3665 = vmatpush1.xpose.msra.mxu0 0.0
        %3666 = vmatprep.subr.mxu0 0.0
        %3667 = vmatpush1.xpose.msra.mxu0 0.0
        %3668 = vmatprep.subr.mxu0 0.0
        %3669 = vmatpush1.xpose.msra.mxu0 0.0
        %3670 = vmatprep.subr.mxu0 0.0
        %3671 = vmatpush1.xpose.msra.mxu0 0.0
        %3672 = vmatprep.subr.mxu0 0.0
        %3673 = vmatpush1.xpose.msra.mxu0 0.0
        %3674 = vmatprep.subr.mxu0 0.0
        %3675 = vmatpush1.xpose.msra.mxu0 0.0
        %3676 = vmatprep.subr.mxu0 0.0
        %3677 = vmatpush1.xpose.msra.mxu0 0.0
        %3678 = vmatprep.subr.mxu0 0.0
        %3679 = vmatpush1.xpose.msra.mxu0 0.0
        %3680 = vmatprep.subr.mxu0 0.0
        %3681 = vmatpush1.xpose.msra.mxu0 0.0
        %3682 = vmatprep.subr.mxu0 0.0
        %3683 = vmatpush1.xpose.msra.mxu0 0.0
        %3684 = vmatprep.subr.mxu0 0.0
        %3685 = vmatpush1.xpose.msra.mxu0 0.0
        %3686 = vmatprep.subr.mxu0 0.0
        %3687 = vmatpush1.xpose.msra.mxu0 0.0
        %3688 = vmatprep.subr.mxu0 0.0
        %3689 = vmatpush1.xpose.msra.mxu0 0.0
        %3690 = vmatprep.subr.mxu0 0.0
        %3691 = vmatpush1.xpose.msra.mxu0 0.0
        %3692 = vmatprep.subr.mxu0 0.0
        %3693 = vmatpush1.xpose.msra.mxu0 0.0
        %3694 = vmatprep.subr.mxu0 0.0
        %3695 = vmatpush1.xpose.msra.mxu0 0.0
        %3696 = vmatprep.subr.mxu0 0.0
        %3697 = vmatpush1.xpose.msra.mxu0 0.0
        %3698 = vmatprep.subr.mxu0 0.0
        %3699 = vmatpush1.xpose.msra.mxu0 0.0
        %3700 = vmatprep.subr.mxu0 0.0
        %3701 = vmatpush1.xpose.msra.mxu0 0.0
        %3702 = vmatprep.subr.mxu0 0.0
        %3703 = vmatpush1.xpose.msra.mxu0 0.0
        %3704 = vmatprep.subr.mxu0 0.0
        %3705 = vmatpush1.xpose.msra.mxu0 0.0
        %3706 = vmatprep.subr.mxu0 0.0
        %3707 = vmatpush1.xpose.msra.mxu0 0.0
        %3708 = vmatprep.subr.mxu0 0.0
        %3709 = vmatpush1.xpose.msra.mxu0 0.0
        %3710 = vmatprep.subr.mxu0 0.0
        %3711 = vmatpush1.xpose.msra.mxu0 0.0
        %3712 = vmatprep.subr.mxu0 0.0
        %3713 = vmatpush1.xpose.msra.mxu0 0.0
        %3714 = vmatprep.subr.mxu0 0.0
        %3715 = vmatpush1.xpose.msra.mxu0 0.0
        %3716 = vmatprep.mubr.f32.mxu0 0.0
        %3717 = vmatmul.mubr.f32.gmra.mrb[0].mxu0 %v3647
        %v3718 = vpop.f32.mrb[0].mxu0
        %v3719 = vadd.f32 0.0, %v3718
        %v3720 = vpop.f32.mrb[0].mxu0
        %3721 = vdwg.mxu0
        %v3722 = vmul.f32 %v3719, 0.25
        %v3723 = vsel %vm1127, %v3722, -inf
        %3724 = vmax.xlane.f32.xlu0 %v3723
        %v3725 = vpop.xlane.xlu0 %3724
        %v3726 = vsub.f32 %v3722, %v3725
        %v3727 = vmul.f32 %v3726, 1.442695
        %v3728 = vpow.pop %v3727
        %v3729 = vsel %vm1127, %v3728, 0.0
        %3730 = vadd.xlane.f32.xlu0 %v3729
        %v3731 = vpop.xlane.xlu0 %3730
        %v3732 = vrcp.pop %v3731
        %v3733 = vmul.f32 %v3728, %v3732
        %v3735 = vsel %vm1139, %v3733, 0
        %v3738 = vsel %vm1143, %v3643, 0
        %3740 = vmatprep.subr.mxu0 0.0
        %3741 = vmatpush1.msra.mxu0 %v3738
        %3742 = vmatprep.subr.mxu0 0.0
        %3743 = vmatpush1.msra.mxu0 0.0
        %3744 = vmatprep.subr.mxu0 0.0
        %3745 = vmatpush1.msra.mxu0 0.0
        %3746 = vmatprep.subr.mxu0 0.0
        %3747 = vmatpush1.msra.mxu0 0.0
        %3748 = vmatprep.subr.mxu0 0.0
        %3749 = vmatpush1.msra.mxu0 0.0
        %3750 = vmatprep.subr.mxu0 0.0
        %3751 = vmatpush1.msra.mxu0 0.0
        %3752 = vmatprep.subr.mxu0 0.0
        %3753 = vmatpush1.msra.mxu0 0.0
        %3754 = vmatprep.subr.mxu0 0.0
        %3755 = vmatpush1.msra.mxu0 0.0
        %3756 = vmatprep.subr.mxu0 0.0
        %3757 = vmatpush1.msra.mxu0 0.0
        %3758 = vmatprep.subr.mxu0 0.0
        %3759 = vmatpush1.msra.mxu0 0.0
        %3760 = vmatprep.subr.mxu0 0.0
        %3761 = vmatpush1.msra.mxu0 0.0
        %3762 = vmatprep.subr.mxu0 0.0
        %3763 = vmatpush1.msra.mxu0 0.0
        %3764 = vmatprep.subr.mxu0 0.0
        %3765 = vmatpush1.msra.mxu0 0.0
        %3766 = vmatprep.subr.mxu0 0.0
        %3767 = vmatpush1.msra.mxu0 0.0
        %3768 = vmatprep.subr.mxu0 0.0
        %3769 = vmatpush1.msra.mxu0 0.0
        %3770 = vmatprep.subr.mxu0 0.0
        %3771 = vmatpush1.msra.mxu0 0.0
        %3772 = vmatprep.subr.mxu0 0.0
        %3773 = vmatpush1.msra.mxu0 0.0
        %3774 = vmatprep.subr.mxu0 0.0
        %3775 = vmatpush1.msra.mxu0 0.0
        %3776 = vmatprep.subr.mxu0 0.0
        %3777 = vmatpush1.msra.mxu0 0.0
        %3778 = vmatprep.subr.mxu0 0.0
        %3779 = vmatpush1.msra.mxu0 0.0
        %3780 = vmatprep.subr.mxu0 0.0
        %3781 = vmatpush1.msra.mxu0 0.0
        %3782 = vmatprep.subr.mxu0 0.0
        %3783 = vmatpush1.msra.mxu0 0.0
        %3784 = vmatprep.subr.mxu0 0.0
        %3785 = vmatpush1.msra.mxu0 0.0
        %3786 = vmatprep.subr.mxu0 0.0
        %3787 = vmatpush1.msra.mxu0 0.0
        %3788 = vmatprep.subr.mxu0 0.0
        %3789 = vmatpush1.msra.mxu0 0.0
        %3790 = vmatprep.subr.mxu0 0.0
        %3791 = vmatpush1.msra.mxu0 0.0
        %3792 = vmatprep.subr.mxu0 0.0
        %3793 = vmatpush1.msra.mxu0 0.0
        %3794 = vmatprep.subr.mxu0 0.0
        %3795 = vmatpush1.msra.mxu0 0.0
        %3796 = vmatprep.subr.mxu0 0.0
        %3797 = vmatpush1.msra.mxu0 0.0
        %3798 = vmatprep.subr.mxu0 0.0
        %3799 = vmatpush1.msra.mxu0 0.0
        %3800 = vmatprep.subr.mxu0 0.0
        %3801 = vmatpush1.msra.mxu0 0.0
        %3802 = vmatprep.subr.mxu0 0.0
        %3803 = vmatpush1.msra.mxu0 0.0
        %3804 = vmatprep.mubr.f32.mxu0 0.0
        %3805 = vmatmul.mubr.f32.gmra.mrb[0].mxu0 %v3735
        %v3806 = vpop.f32.mrb[0].mxu0
        %v3807 = vadd.f32 0.0, %v3806
        %v3808 = vpop.f32.mrb[0].mxu0
        %3809 = vdwg.mxu0
        %s3810 = scalar_lea.vmem %s6, 80
        %v3811 = vld [vmem:[%s3810] sm:$0xff]
        %v3812 = vld [vmem:[%s3810 + $0x8] sm:$0xff]
        %v3814 = vsel %vm1049, %v3807, 0
        %3816 = vmatprep.subr.mxu0 0.0
        %3817 = vmatpush1.msra.mxu0 %v3811
        %3818 = vmatprep.subr.mxu0 0.0
        %3819 = vmatpush1.msra.mxu0 %v3812
        %3820 = vmatprep.subr.mxu0 0.0
        %3821 = vmatpush1.msra.mxu0 0.0
        %3822 = vmatprep.subr.mxu0 0.0
        %3823 = vmatpush1.msra.mxu0 0.0
        %3824 = vmatprep.subr.mxu0 0.0
        %3825 = vmatpush1.msra.mxu0 0.0
        %3826 = vmatprep.subr.mxu0 0.0
        %3827 = vmatpush1.msra.mxu0 0.0
        %3828 = vmatprep.subr.mxu0 0.0
        %3829 = vmatpush1.msra.mxu0 0.0
        %3830 = vmatprep.subr.mxu0 0.0
        %3831 = vmatpush1.msra.mxu0 0.0
        %3832 = vmatprep.subr.mxu0 0.0
        %3833 = vmatpush1.msra.mxu0 0.0
        %3834 = vmatprep.subr.mxu0 0.0
        %3835 = vmatpush1.msra.mxu0 0.0
        %3836 = vmatprep.subr.mxu0 0.0
        %3837 = vmatpush1.msra.mxu0 0.0
        %3838 = vmatprep.subr.mxu0 0.0
        %3839 = vmatpush1.msra.mxu0 0.0
        %3840 = vmatprep.subr.mxu0 0.0
        %3841 = vmatpush1.msra.mxu0 0.0
        %3842 = vmatprep.subr.mxu0 0.0
        %3843 = vmatpush1.msra.mxu0 0.0
        %3844 = vmatprep.subr.mxu0 0.0
        %3845 = vmatpush1.msra.mxu0 0.0
        %3846 = vmatprep.subr.mxu0 0.0
        %3847 = vmatpush1.msra.mxu0 0.0
        %3848 = vmatprep.subr.mxu0 0.0
        %3849 = vmatpush1.msra.mxu0 0.0
        %3850 = vmatprep.subr.mxu0 0.0
        %3851 = vmatpush1.msra.mxu0 0.0
        %3852 = vmatprep.subr.mxu0 0.0
        %3853 = vmatpush1.msra.mxu0 0.0
        %3854 = vmatprep.subr.mxu0 0.0
        %3855 = vmatpush1.msra.mxu0 0.0
        %3856 = vmatprep.subr.mxu0 0.0
        %3857 = vmatpush1.msra.mxu0 0.0
        %3858 = vmatprep.subr.mxu0 0.0
        %3859 = vmatpush1.msra.mxu0 0.0
        %3860 = vmatprep.subr.mxu0 0.0
        %3861 = vmatpush1.msra.mxu0 0.0
        %3862 = vmatprep.subr.mxu0 0.0
        %3863 = vmatpush1.msra.mxu0 0.0
        %3864 = vmatprep.subr.mxu0 0.0
        %3865 = vmatpush1.msra.mxu0 0.0
        %3866 = vmatprep.subr.mxu0 0.0
        %3867 = vmatpush1.msra.mxu0 0.0
        %3868 = vmatprep.subr.mxu0 0.0
        %3869 = vmatpush1.msra.mxu0 0.0
        %3870 = vmatprep.subr.mxu0 0.0
        %3871 = vmatpush1.msra.mxu0 0.0
        %3872 = vmatprep.subr.mxu0 0.0
        %3873 = vmatpush1.msra.mxu0 0.0
        %3874 = vmatprep.subr.mxu0 0.0
        %3875 = vmatpush1.msra.mxu0 0.0
        %3876 = vmatprep.subr.mxu0 0.0
        %3877 = vmatpush1.msra.mxu0 0.0
        %3878 = vmatprep.subr.mxu0 0.0
        %3879 = vmatpush1.msra.mxu0 0.0
        %3880 = vmatprep.mubr.f32.mxu0 0.0
        %3881 = vmatmul.mubr.f32.gmra.mrb[0].mxu0 %v3814
        %v3882 = vpop.f32.mrb[0].mxu0
        %v3883 = vadd.f32 0.0, %v3882
        %v3884 = vpop.f32.mrb[0].mxu0
        %3885 = vdwg.mxu0
        %v3887 = vsel %vm1049, %v3403, 0
        %3889 = vmatprep.subr.mxu0 0.0
        %3890 = vmatpush1.msra.mxu0 %v3407
        %3891 = vmatprep.subr.mxu0 0.0
        %3892 = vmatpush1.msra.mxu0 %v3408
        %3893 = vmatprep.subr.mxu0 0.0
        %3894 = vmatpush1.msra.mxu0 0.0
        %3895 = vmatprep.subr.mxu0 0.0
        %3896 = vmatpush1.msra.mxu0 0.0
        %3897 = vmatprep.subr.mxu0 0.0
        %3898 = vmatpush1.msra.mxu0 0.0
        %3899 = vmatprep.subr.mxu0 0.0
        %3900 = vmatpush1.msra.mxu0 0.0
        %3901 = vmatprep.subr.mxu0 0.0
        %3902 = vmatpush1.msra.mxu0 0.0
        %3903 = vmatprep.subr.mxu0 0.0
        %3904 = vmatpush1.msra.mxu0 0.0
        %3905 = vmatprep.subr.mxu0 0.0
        %3906 = vmatpush1.msra.mxu0 0.0
        %3907 = vmatprep.subr.mxu0 0.0
        %3908 = vmatpush1.msra.mxu0 0.0
        %3909 = vmatprep.subr.mxu0 0.0
        %3910 = vmatpush1.msra.mxu0 0.0
        %3911 = vmatprep.subr.mxu0 0.0
        %3912 = vmatpush1.msra.mxu0 0.0
        %3913 = vmatprep.subr.mxu0 0.0
        %3914 = vmatpush1.msra.mxu0 0.0
        %3915 = vmatprep.subr.mxu0 0.0
        %3916 = vmatpush1.msra.mxu0 0.0
        %3917 = vmatprep.subr.mxu0 0.0
        %3918 = vmatpush1.msra.mxu0 0.0
        %3919 = vmatprep.subr.mxu0 0.0
        %3920 = vmatpush1.msra.mxu0 0.0
        %3921 = vmatprep.subr.mxu0 0.0
        %3922 = vmatpush1.msra.mxu0 0.0
        %3923 = vmatprep.subr.mxu0 0.0
        %3924 = vmatpush1.msra.mxu0 0.0
        %3925 = vmatprep.subr.mxu0 0.0
        %3926 = vmatpush1.msra.mxu0 0.0
        %3927 = vmatprep.subr.mxu0 0.0
        %3928 = vmatpush1.msra.mxu0 0.0
        %3929 = vmatprep.subr.mxu0 0.0
        %3930 = vmatpush1.msra.mxu0 0.0
        %3931 = vmatprep.subr.mxu0 0.0
        %3932 = vmatpush1.msra.mxu0 0.0
        %3933 = vmatprep.subr.mxu0 0.0
        %3934 = vmatpush1.msra.mxu0 0.0
        %3935 = vmatprep.subr.mxu0 0.0
        %3936 = vmatpush1.msra.mxu0 0.0
        %3937 = vmatprep.subr.mxu0 0.0
        %3938 = vmatpush1.msra.mxu0 0.0
        %3939 = vmatprep.subr.mxu0 0.0
        %3940 = vmatpush1.msra.mxu0 0.0
        %3941 = vmatprep.subr.mxu0 0.0
        %3942 = vmatpush1.msra.mxu0 0.0
        %3943 = vmatprep.subr.mxu0 0.0
        %3944 = vmatpush1.msra.mxu0 0.0
        %3945 = vmatprep.subr.mxu0 0.0
        %3946 = vmatpush1.msra.mxu0 0.0
        %3947 = vmatprep.subr.mxu0 0.0
        %3948 = vmatpush1.msra.mxu0 0.0
        %3949 = vmatprep.subr.mxu0 0.0
        %3950 = vmatpush1.msra.mxu0 0.0
        %3951 = vmatprep.subr.mxu0 0.0
        %3952 = vmatpush1.msra.mxu0 0.0
        %3953 = vmatprep.mubr.f32.mxu0 0.0
        %3954 = vmatmul.mubr.f32.gmra.mrb[0].mxu0 %v3887
        %v3955 = vpop.f32.mrb[0].mxu0
        %v3956 = vadd.f32 %v3883, %v3955
        %v3957 = vpop.f32.mrb[0].mxu0
        %3958 = vdwg.mxu0
        %s3959 = scalar_lea.vmem %s5, 896
        %v3960 = vld [vmem:[%s3959] sm:$0xff]
        %v3961 = vld [vmem:[%s3959 + $0x8] sm:$0xff]
        %v3962 = vld [vmem:[%s3959 + $0x10] sm:$0xff]
        %v3963 = vld [vmem:[%s3959 + $0x18] sm:$0xff]
        %v3964 = vld [vmem:[%s3959 + $0x20] sm:$0xff]
        %v3965 = vld [vmem:[%s3959 + $0x28] sm:$0xff]
        %v3966 = vld [vmem:[%s3959 + $0x30] sm:$0xff]
        %v3967 = vld [vmem:[%s3959 + $0x38] sm:$0xff]
        %s3968 = scalar_lea.vmem %s5, 1152
        %v3969 = vld [vmem:[%s3968] sm:$0xff]
        %v3970 = vld [vmem:[%s3968 + $0x8] sm:$0xff]
        %v3971 = vld [vmem:[%s3968 + $0x10] sm:$0xff]
        %v3972 = vld [vmem:[%s3968 + $0x18] sm:$0xff]
        %v3973 = vld [vmem:[%s3968 + $0x20] sm:$0xff]
        %v3974 = vld [vmem:[%s3968 + $0x28] sm:$0xff]
        %v3975 = vld [vmem:[%s3968 + $0x30] sm:$0xff]
        %v3976 = vld [vmem:[%s3968 + $0x38] sm:$0xff]
        %s3977 = scalar_lea.vmem %s5, 1408
        %v3978 = vld [vmem:[%s3977] sm:$0xff]
        %v3979 = vld [vmem:[%s3977 + $0x8] sm:$0xff]
        %v3980 = vld [vmem:[%s3977 + $0x10] sm:$0xff]
        %v3981 = vld [vmem:[%s3977 + $0x18] sm:$0xff]
        %v3982 = vld [vmem:[%s3977 + $0x20] sm:$0xff]
        %v3983 = vld [vmem:[%s3977 + $0x28] sm:$0xff]
        %v3984 = vld [vmem:[%s3977 + $0x30] sm:$0xff]
        %v3985 = vld [vmem:[%s3977 + $0x38] sm:$0xff]
        %3986 = vmatprep.subr.mxu0 0.0
        %3987 = vmatpush1.msra.mxu0 %v3960
        %3988 = vmatprep.subr.mxu0 0.0
        %3989 = vmatpush1.msra.mxu0 %v3961
        %3990 = vmatprep.subr.mxu0 0.0
        %3991 = vmatpush1.msra.mxu0 %v3962
        %3992 = vmatprep.subr.mxu0 0.0
        %3993 = vmatpush1.msra.mxu0 %v3963
        %3994 = vmatprep.subr.mxu0 0.0
        %3995 = vmatpush1.msra.mxu0 %v3964
        %3996 = vmatprep.subr.mxu0 0.0
        %3997 = vmatpush1.msra.mxu0 %v3965
        %3998 = vmatprep.subr.mxu0 0.0
        %3999 = vmatpush1.msra.mxu0 %v3966
        %4000 = vmatprep.subr.mxu0 0.0
        %4001 = vmatpush1.msra.mxu0 %v3967
        %4002 = vmatprep.subr.mxu0 0.0
        %4003 = vmatpush1.msra.mxu0 0.0
        %4004 = vmatprep.subr.mxu0 0.0
        %4005 = vmatpush1.msra.mxu0 0.0
        %4006 = vmatprep.subr.mxu0 0.0
        %4007 = vmatpush1.msra.mxu0 0.0
        %4008 = vmatprep.subr.mxu0 0.0
        %4009 = vmatpush1.msra.mxu0 0.0
        %4010 = vmatprep.subr.mxu0 0.0
        %4011 = vmatpush1.msra.mxu0 0.0
        %4012 = vmatprep.subr.mxu0 0.0
        %4013 = vmatpush1.msra.mxu0 0.0
        %4014 = vmatprep.subr.mxu0 0.0
        %4015 = vmatpush1.msra.mxu0 0.0
        %4016 = vmatprep.subr.mxu0 0.0
        %4017 = vmatpush1.msra.mxu0 0.0
        %4018 = vmatprep.subr.mxu0 0.0
        %4019 = vmatpush1.msra.mxu0 0.0
        %4020 = vmatprep.subr.mxu0 0.0
        %4021 = vmatpush1.msra.mxu0 0.0
        %4022 = vmatprep.subr.mxu0 0.0
        %4023 = vmatpush1.msra.mxu0 0.0
        %4024 = vmatprep.subr.mxu0 0.0
        %4025 = vmatpush1.msra.mxu0 0.0
        %4026 = vmatprep.subr.mxu0 0.0
        %4027 = vmatpush1.msra.mxu0 0.0
        %4028 = vmatprep.subr.mxu0 0.0
        %4029 = vmatpush1.msra.mxu0 0.0
        %4030 = vmatprep.subr.mxu0 0.0
        %4031 = vmatpush1.msra.mxu0 0.0
        %4032 = vmatprep.subr.mxu0 0.0
        %4033 = vmatpush1.msra.mxu0 0.0
        %4034 = vmatprep.subr.mxu0 0.0
        %4035 = vmatpush1.msra.mxu0 0.0
        %4036 = vmatprep.subr.mxu0 0.0
        %4037 = vmatpush1.msra.mxu0 0.0
        %4038 = vmatprep.subr.mxu0 0.0
        %4039 = vmatpush1.msra.mxu0 0.0
        %4040 = vmatprep.subr.mxu0 0.0
        %4041 = vmatpush1.msra.mxu0 0.0
        %4042 = vmatprep.subr.mxu0 0.0
        %4043 = vmatpush1.msra.mxu0 0.0
        %4044 = vmatprep.subr.mxu0 0.0
        %4045 = vmatpush1.msra.mxu0 0.0
        %4046 = vmatprep.subr.mxu0 0.0
        %4047 = vmatpush1.msra.mxu0 0.0
        %4048 = vmatprep.subr.mxu0 0.0
        %4049 = vmatpush1.msra.mxu0 0.0
        %4050 = vmatprep.mubr.f32.mxu0 0.0
        %4051 = vmatmul.mubr.f32.gmra.mrb[0].mxu0 %v3030
        %v4052 = vpop.f32.mrb[0].mxu0
        %v4053 = vadd.f32 0.0, %v4052
        %v4054 = vpop.f32.mrb[0].mxu0
        %4055 = vdwg.mxu0
        %4056 = vmatprep.subr.mxu0 0.0
        %4057 = vmatpush1.msra.mxu0 %v3969
        %4058 = vmatprep.subr.mxu0 0.0
        %4059 = vmatpush1.msra.mxu0 %v3970
        %4060 = vmatprep.subr.mxu0 0.0
        %4061 = vmatpush1.msra.mxu0 %v3971
        %4062 = vmatprep.subr.mxu0 0.0
        %4063 = vmatpush1.msra.mxu0 %v3972
        %4064 = vmatprep.subr.mxu0 0.0
        %4065 = vmatpush1.msra.mxu0 %v3973
        %4066 = vmatprep.subr.mxu0 0.0
        %4067 = vmatpush1.msra.mxu0 %v3974
        %4068 = vmatprep.subr.mxu0 0.0
        %4069 = vmatpush1.msra.mxu0 %v3975
        %4070 = vmatprep.subr.mxu0 0.0
        %4071 = vmatpush1.msra.mxu0 %v3976
        %4072 = vmatprep.subr.mxu0 0.0
        %4073 = vmatpush1.msra.mxu0 0.0
        %4074 = vmatprep.subr.mxu0 0.0
        %4075 = vmatpush1.msra.mxu0 0.0
        %4076 = vmatprep.subr.mxu0 0.0
        %4077 = vmatpush1.msra.mxu0 0.0
        %4078 = vmatprep.subr.mxu0 0.0
        %4079 = vmatpush1.msra.mxu0 0.0
        %4080 = vmatprep.subr.mxu0 0.0
        %4081 = vmatpush1.msra.mxu0 0.0
        %4082 = vmatprep.subr.mxu0 0.0
        %4083 = vmatpush1.msra.mxu0 0.0
        %4084 = vmatprep.subr.mxu0 0.0
        %4085 = vmatpush1.msra.mxu0 0.0
        %4086 = vmatprep.subr.mxu0 0.0
        %4087 = vmatpush1.msra.mxu0 0.0
        %4088 = vmatprep.subr.mxu0 0.0
        %4089 = vmatpush1.msra.mxu0 0.0
        %4090 = vmatprep.subr.mxu0 0.0
        %4091 = vmatpush1.msra.mxu0 0.0
        %4092 = vmatprep.subr.mxu0 0.0
        %4093 = vmatpush1.msra.mxu0 0.0
        %4094 = vmatprep.subr.mxu0 0.0
        %4095 = vmatpush1.msra.mxu0 0.0
        %4096 = vmatprep.subr.mxu0 0.0
        %4097 = vmatpush1.msra.mxu0 0.0
        %4098 = vmatprep.subr.mxu0 0.0
        %4099 = vmatpush1.msra.mxu0 0.0
        %4100 = vmatprep.subr.mxu0 0.0
        %4101 = vmatpush1.msra.mxu0 0.0
        %4102 = vmatprep.subr.mxu0 0.0
        %4103 = vmatpush1.msra.mxu0 0.0
        %4104 = vmatprep.subr.mxu0 0.0
        %4105 = vmatpush1.msra.mxu0 0.0
        %4106 = vmatprep.subr.mxu0 0.0
        %4107 = vmatpush1.msra.mxu0 0.0
        %4108 = vmatprep.subr.mxu0 0.0
        %4109 = vmatpush1.msra.mxu0 0.0
        %4110 = vmatprep.subr.mxu0 0.0
        %4111 = vmatpush1.msra.mxu0 0.0
        %4112 = vmatprep.subr.mxu0 0.0
        %4113 = vmatpush1.msra.mxu0 0.0
        %4114 = vmatprep.subr.mxu0 0.0
        %4115 = vmatpush1.msra.mxu0 0.0
        %4116 = vmatprep.subr.mxu0 0.0
        %4117 = vmatpush1.msra.mxu0 0.0
        %4118 = vmatprep.subr.mxu0 0.0
        %4119 = vmatpush1.msra.mxu0 0.0
        %4120 = vmatprep.mubr.f32.mxu0 0.0
        %4121 = vmatmul.mubr.f32.gmra.mrb[0].mxu0 %v3030
        %v4122 = vpop.f32.mrb[0].mxu0
        %v4123 = vadd.f32 0.0, %v4122
        %v4124 = vpop.f32.mrb[0].mxu0
        %4125 = vdwg.mxu0
        %4126 = vmatprep.subr.mxu0 0.0
        %4127 = vmatpush1.msra.mxu0 %v3978
        %4128 = vmatprep.subr.mxu0 0.0
        %4129 = vmatpush1.msra.mxu0 %v3979
        %4130 = vmatprep.subr.mxu0 0.0
        %4131 = vmatpush1.msra.mxu0 %v3980
        %4132 = vmatprep.subr.mxu0 0.0
        %4133 = vmatpush1.msra.mxu0 %v3981
        %4134 = vmatprep.subr.mxu0 0.0
        %4135 = vmatpush1.msra.mxu0 %v3982
        %4136 = vmatprep.subr.mxu0 0.0
        %4137 = vmatpush1.msra.mxu0 %v3983
        %4138 = vmatprep.subr.mxu0 0.0
        %4139 = vmatpush1.msra.mxu0 %v3984
        %4140 = vmatprep.subr.mxu0 0.0
        %4141 = vmatpush1.msra.mxu0 %v3985
        %4142 = vmatprep.subr.mxu0 0.0
        %4143 = vmatpush1.msra.mxu0 0.0
        %4144 = vmatprep.subr.mxu0 0.0
        %4145 = vmatpush1.msra.mxu0 0.0
        %4146 = vmatprep.subr.mxu0 0.0
        %4147 = vmatpush1.msra.mxu0 0.0
        %4148 = vmatprep.subr.mxu0 0.0
        %4149 = vmatpush1.msra.mxu0 0.0
        %4150 = vmatprep.subr.mxu0 0.0
        %4151 = vmatpush1.msra.mxu0 0.0
        %4152 = vmatprep.subr.mxu0 0.0
        %4153 = vmatpush1.msra.mxu0 0.0
        %4154 = vmatprep.subr.mxu0 0.0
        %4155 = vmatpush1.msra.mxu0 0.0
        %4156 = vmatprep.subr.mxu0 0.0
        %4157 = vmatpush1.msra.mxu0 0.0
        %4158 = vmatprep.subr.mxu0 0.0
        %4159 = vmatpush1.msra.mxu0 0.0
        %4160 = vmatprep.subr.mxu0 0.0
        %4161 = vmatpush1.msra.mxu0 0.0
        %4162 = vmatprep.subr.mxu0 0.0
        %4163 = vmatpush1.msra.mxu0 0.0
        %4164 = vmatprep.subr.mxu0 0.0
        %4165 = vmatpush1.msra.mxu0 0.0
        %4166 = vmatprep.subr.mxu0 0.0
        %4167 = vmatpush1.msra.mxu0 0.0
        %4168 = vmatprep.subr.mxu0 0.0
        %4169 = vmatpush1.msra.mxu0 0.0
        %4170 = vmatprep.subr.mxu0 0.0
        %4171 = vmatpush1.msra.mxu0 0.0
        %4172 = vmatprep.subr.mxu0 0.0
        %4173 = vmatpush1.msra.mxu0 0.0
        %4174 = vmatprep.subr.mxu0 0.0
        %4175 = vmatpush1.msra.mxu0 0.0
        %4176 = vmatprep.subr.mxu0 0.0
        %4177 = vmatpush1.msra.mxu0 0.0
        %4178 = vmatprep.subr.mxu0 0.0
        %4179 = vmatpush1.msra.mxu0 0.0
        %4180 = vmatprep.subr.mxu0 0.0
        %4181 = vmatpush1.msra.mxu0 0.0
        %4182 = vmatprep.subr.mxu0 0.0
        %4183 = vmatpush1.msra.mxu0 0.0
        %4184 = vmatprep.subr.mxu0 0.0
        %4185 = vmatpush1.msra.mxu0 0.0
        %4186 = vmatprep.subr.mxu0 0.0
        %4187 = vmatpush1.msra.mxu0 0.0
        %4188 = vmatprep.subr.mxu0 0.0
        %4189 = vmatpush1.msra.mxu0 0.0
        %4190 = vmatprep.mubr.f32.mxu0 0.0
        %4191 = vmatmul.mubr.f32.gmra.mrb[0].mxu0 %v3030
        %v4192 = vpop.f32.mrb[0].mxu0
        %v4193 = vadd.f32 0.0, %v4192
        %v4194 = vpop.f32.mrb[0].mxu0
        %4195 = vdwg.mxu0
        %v4197 = vsel %vm1049, %v4053, 0
        %v4200 = vsel %vm1049, %v4123, 0
        %4202 = vmatprep.subr.mxu0 0.0
        %4203 = vmatpush1.xpose.msra.mxu0 %v4200
        %4204 = vmatprep.subr.mxu0 0.0
        %4205 = vmatpush1.xpose.msra.mxu0 0.0
        %4206 = vmatprep.subr.mxu0 0.0
        %4207 = vmatpush1.xpose.msra.mxu0 0.0
        %4208 = vmatprep.subr.mxu0 0.0
        %4209 = vmatpush1.xpose.msra.mxu0 0.0
        %4210 = vmatprep.subr.mxu0 0.0
        %4211 = vmatpush1.xpose.msra.mxu0 0.0
        %4212 = vmatprep.subr.mxu0 0.0
        %4213 = vmatpush1.xpose.msra.mxu0 0.0
        %4214 = vmatprep.subr.mxu0 0.0
        %4215 = vmatpush1.xpose.msra.mxu0 0.0
        %4216 = vmatprep.subr.mxu0 0.0
        %4217 = vmatpush1.xpose.msra.mxu0 0.0
        %4218 = vmatprep.subr.mxu0 0.0
        %4219 = vmatpush1.xpose.msra.mxu0 0.0
        %4220 = vmatprep.subr.mxu0 0.0
        %4221 = vmatpush1.xpose.msra.mxu0 0.0
        %4222 = vmatprep.subr.mxu0 0.0
        %4223 = vmatpush1.xpose.msra.mxu0 0.0
        %4224 = vmatprep.subr.mxu0 0.0
        %4225 = vmatpush1.xpose.msra.mxu0 0.0
        %4226 = vmatprep.subr.mxu0 0.0
        %4227 = vmatpush1.xpose.msra.mxu0 0.0
        %4228 = vmatprep.subr.mxu0 0.0
        %4229 = vmatpush1.xpose.msra.mxu0 0.0
        %4230 = vmatprep.subr.mxu0 0.0
        %4231 = vmatpush1.xpose.msra.mxu0 0.0
        %4232 = vmatprep.subr.mxu0 0.0
        %4233 = vmatpush1.xpose.msra.mxu0 0.0
        %4234 = vmatprep.subr.mxu0 0.0
        %4235 = vmatpush1.xpose.msra.mxu0 0.0
        %4236 = vmatprep.subr.mxu0 0.0
        %4237 = vmatpush1.xpose.msra.mxu0 0.0
        %4238 = vmatprep.subr.mxu0 0.0
        %4239 = vmatpush1.xpose.msra.mxu0 0.0
        %4240 = vmatprep.subr.mxu0 0.0
        %4241 = vmatpush1.xpose.msra.mxu0 0.0
        %4242 = vmatprep.subr.mxu0 0.0
        %4243 = vmatpush1.xpose.msra.mxu0 0.0
        %4244 = vmatprep.subr.mxu0 0.0
        %4245 = vmatpush1.xpose.msra.mxu0 0.0
        %4246 = vmatprep.subr.mxu0 0.0
        %4247 = vmatpush1.xpose.msra.mxu0 0.0
        %4248 = vmatprep.subr.mxu0 0.0
        %4249 = vmatpush1.xpose.msra.mxu0 0.0
        %4250 = vmatprep.subr.mxu0 0.0
        %4251 = vmatpush1.xpose.msra.mxu0 0.0
        %4252 = vmatprep.subr.mxu0 0.0
        %4253 = vmatpush1.xpose.msra.mxu0 0.0
        %4254 = vmatprep.subr.mxu0 0.0
        %4255 = vmatpush1.xpose.msra.mxu0 0.0
        %4256 = vmatprep.subr.mxu0 0.0
        %4257 = vmatpush1.xpose.msra.mxu0 0.0
        %4258 = vmatprep.subr.mxu0 0.0
        %4259 = vmatpush1.xpose.msra.mxu0 0.0
        %4260 = vmatprep.subr.mxu0 0.0
        %4261 = vmatpush1.xpose.msra.mxu0 0.0
        %4262 = vmatprep.subr.mxu0 0.0
        %4263 = vmatpush1.xpose.msra.mxu0 0.0
        %4264 = vmatprep.subr.mxu0 0.0
        %4265 = vmatpush1.xpose.msra.mxu0 0.0
        %4266 = vmatprep.mubr.f32.mxu0 0.0
        %4267 = vmatmul.mubr.f32.gmra.mrb[0].mxu0 %v4197
        %v4268 = vpop.f32.mrb[0].mxu0
        %v4269 = vadd.f32 0.0, %v4268
        %v4270 = vpop.f32.mrb[0].mxu0
        %4271 = vdwg.mxu0
        %v4272 = vmul.f32 %v4269, 0.25
        %v4273 = vsel %vm1127, %v4272, -inf
        %4274 = vmax.xlane.f32.xlu0 %v4273
        %v4275 = vpop.xlane.xlu0 %4274
        %v4276 = vsub.f32 %v4272, %v4275
        %v4277 = vmul.f32 %v4276, 1.442695
        %v4278 = vpow.pop %v4277
        %v4279 = vsel %vm1127, %v4278, 0.0
        %4280 = vadd.xlane.f32.xlu0 %v4279
        %v4281 = vpop.xlane.xlu0 %4280
        %v4282 = vrcp.pop %v4281
        %v4283 = vmul.f32 %v4278, %v4282
        %v4285 = vsel %vm1139, %v4283, 0
        %v4288 = vsel %vm1143, %v4193, 0
        %4290 = vmatprep.subr.mxu0 0.0
        %4291 = vmatpush1.msra.mxu0 %v4288
        %4292 = vmatprep.subr.mxu0 0.0
        %4293 = vmatpush1.msra.mxu0 0.0
        %4294 = vmatprep.subr.mxu0 0.0
        %4295 = vmatpush1.msra.mxu0 0.0
        %4296 = vmatprep.subr.mxu0 0.0
        %4297 = vmatpush1.msra.mxu0 0.0
        %4298 = vmatprep.subr.mxu0 0.0
        %4299 = vmatpush1.msra.mxu0 0.0
        %4300 = vmatprep.subr.mxu0 0.0
        %4301 = vmatpush1.msra.mxu0 0.0
        %4302 = vmatprep.subr.mxu0 0.0
        %4303 = vmatpush1.msra.mxu0 0.0
        %4304 = vmatprep.subr.mxu0 0.0
        %4305 = vmatpush1.msra.mxu0 0.0
        %4306 = vmatprep.subr.mxu0 0.0
        %4307 = vmatpush1.msra.mxu0 0.0
        %4308 = vmatprep.subr.mxu0 0.0
        %4309 = vmatpush1.msra.mxu0 0.0
        %4310 = vmatprep.subr.mxu0 0.0
        %4311 = vmatpush1.msra.mxu0 0.0
        %4312 = vmatprep.subr.mxu0 0.0
        %4313 = vmatpush1.msra.mxu0 0.0
        %4314 = vmatprep.subr.mxu0 0.0
        %4315 = vmatpush1.msra.mxu0 0.0
        %4316 = vmatprep.subr.mxu0 0.0
        %4317 = vmatpush1.msra.mxu0 0.0
        %4318 = vmatprep.subr.mxu0 0.0
        %4319 = vmatpush1.msra.mxu0 0.0
        %4320 = vmatprep.subr.mxu0 0.0
        %4321 = vmatpush1.msra.mxu0 0.0
        %4322 = vmatprep.subr.mxu0 0.0
        %4323 = vmatpush1.msra.mxu0 0.0
        %4324 = vmatprep.subr.mxu0 0.0
        %4325 = vmatpush1.msra.mxu0 0.0
        %4326 = vmatprep.subr.mxu0 0.0
        %4327 = vmatpush1.msra.mxu0 0.0
        %4328 = vmatprep.subr.mxu0 0.0
        %4329 = vmatpush1.msra.mxu0 0.0
        %4330 = vmatprep.subr.mxu0 0.0
        %4331 = vmatpush1.msra.mxu0 0.0
        %4332 = vmatprep.subr.mxu0 0.0
        %4333 = vmatpush1.msra.mxu0 0.0
        %4334 = vmatprep.subr.mxu0 0.0
        %4335 = vmatpush1.msra.mxu0 0.0
        %4336 = vmatprep.subr.mxu0 0.0
        %4337 = vmatpush1.msra.mxu0 0.0
        %4338 = vmatprep.subr.mxu0 0.0
        %4339 = vmatpush1.msra.mxu0 0.0
        %4340 = vmatprep.subr.mxu0 0.0
        %4341 = vmatpush1.msra.mxu0 0.0
        %4342 = vmatprep.subr.mxu0 0.0
        %4343 = vmatpush1.msra.mxu0 0.0
        %4344 = vmatprep.subr.mxu0 0.0
        %4345 = vmatpush1.msra.mxu0 0.0
        %4346 = vmatprep.subr.mxu0 0.0
        %4347 = vmatpush1.msra.mxu0 0.0
        %4348 = vmatprep.subr.mxu0 0.0
        %4349 = vmatpush1.msra.mxu0 0.0
        %4350 = vmatprep.subr.mxu0 0.0
        %4351 = vmatpush1.msra.mxu0 0.0
        %4352 = vmatprep.subr.mxu0 0.0
        %4353 = vmatpush1.msra.mxu0 0.0
        %4354 = vmatprep.mubr.f32.mxu0 0.0
        %4355 = vmatmul.mubr.f32.gmra.mrb[0].mxu0 %v4285
        %v4356 = vpop.f32.mrb[0].mxu0
        %v4357 = vadd.f32 0.0, %v4356
        %v4358 = vpop.f32.mrb[0].mxu0
        %4359 = vdwg.mxu0
        %s4360 = scalar_lea.vmem %s6, 96
        %v4361 = vld [vmem:[%s4360] sm:$0xff]
        %v4362 = vld [vmem:[%s4360 + $0x8] sm:$0xff]
        %v4364 = vsel %vm1049, %v4357, 0
        %4366 = vmatprep.subr.mxu0 0.0
        %4367 = vmatpush1.msra.mxu0 %v4361
        %4368 = vmatprep.subr.mxu0 0.0
        %4369 = vmatpush1.msra.mxu0 %v4362
        %4370 = vmatprep.subr.mxu0 0.0
        %4371 = vmatpush1.msra.mxu0 0.0
        %4372 = vmatprep.subr.mxu0 0.0
        %4373 = vmatpush1.msra.mxu0 0.0
        %4374 = vmatprep.subr.mxu0 0.0
        %4375 = vmatpush1.msra.mxu0 0.0
        %4376 = vmatprep.subr.mxu0 0.0
        %4377 = vmatpush1.msra.mxu0 0.0
        %4378 = vmatprep.subr.mxu0 0.0
        %4379 = vmatpush1.msra.mxu0 0.0
        %4380 = vmatprep.subr.mxu0 0.0
        %4381 = vmatpush1.msra.mxu0 0.0
        %4382 = vmatprep.subr.mxu0 0.0
        %4383 = vmatpush1.msra.mxu0 0.0
        %4384 = vmatprep.subr.mxu0 0.0
        %4385 = vmatpush1.msra.mxu0 0.0
        %4386 = vmatprep.subr.mxu0 0.0
        %4387 = vmatpush1.msra.mxu0 0.0
        %4388 = vmatprep.subr.mxu0 0.0
        %4389 = vmatpush1.msra.mxu0 0.0
        %4390 = vmatprep.subr.mxu0 0.0
        %4391 = vmatpush1.msra.mxu0 0.0
        %4392 = vmatprep.subr.mxu0 0.0
        %4393 = vmatpush1.msra.mxu0 0.0
        %4394 = vmatprep.subr.mxu0 0.0
        %4395 = vmatpush1.msra.mxu0 0.0
        %4396 = vmatprep.subr.mxu0 0.0
        %4397 = vmatpush1.msra.mxu0 0.0
        %4398 = vmatprep.subr.mxu0 0.0
        %4399 = vmatpush1.msra.mxu0 0.0
        %4400 = vmatprep.subr.mxu0 0.0
        %4401 = vmatpush1.msra.mxu0 0.0
        %4402 = vmatprep.subr.mxu0 0.0
        %4403 = vmatpush1.msra.mxu0 0.0
        %4404 = vmatprep.subr.mxu0 0.0
        %4405 = vmatpush1.msra.mxu0 0.0
        %4406 = vmatprep.subr.mxu0 0.0
        %4407 = vmatpush1.msra.mxu0 0.0
        %4408 = vmatprep.subr.mxu0 0.0
        %4409 = vmatpush1.msra.mxu0 0.0
        %4410 = vmatprep.subr.mxu0 0.0
        %4411 = vmatpush1.msra.mxu0 0.0
        %4412 = vmatprep.subr.mxu0 0.0
        %4413 = vmatpush1.msra.mxu0 0.0
        %4414 = vmatprep.subr.mxu0 0.0
        %4415 = vmatpush1.msra.mxu0 0.0
        %4416 = vmatprep.subr.mxu0 0.0
        %4417 = vmatpush1.msra.mxu0 0.0
        %4418 = vmatprep.subr.mxu0 0.0
        %4419 = vmatpush1.msra.mxu0 0.0
        %4420 = vmatprep.subr.mxu0 0.0
        %4421 = vmatpush1.msra.mxu0 0.0
        %4422 = vmatprep.subr.mxu0 0.0
        %4423 = vmatpush1.msra.mxu0 0.0
        %4424 = vmatprep.subr.mxu0 0.0
        %4425 = vmatpush1.msra.mxu0 0.0
        %4426 = vmatprep.subr.mxu0 0.0
        %4427 = vmatpush1.msra.mxu0 0.0
        %4428 = vmatprep.subr.mxu0 0.0
        %4429 = vmatpush1.msra.mxu0 0.0
        %4430 = vmatprep.mubr.f32.mxu0 0.0
        %4431 = vmatmul.mubr.f32.gmra.mrb[0].mxu0 %v4364
        %v4432 = vpop.f32.mrb[0].mxu0
        %v4433 = vadd.f32 0.0, %v4432
        %v4434 = vpop.f32.mrb[0].mxu0
        %4435 = vdwg.mxu0
        %v4436 = vadd.f32 %v3956, %v4433
        %s4437 = scalar_lea.vmem %s5, 960
        %v4438 = vld [vmem:[%s4437] sm:$0xff]
        %v4439 = vld [vmem:[%s4437 + $0x8] sm:$0xff]
        %v4440 = vld [vmem:[%s4437 + $0x10] sm:$0xff]
        %v4441 = vld [vmem:[%s4437 + $0x18] sm:$0xff]
        %v4442 = vld [vmem:[%s4437 + $0x20] sm:$0xff]
        %v4443 = vld [vmem:[%s4437 + $0x28] sm:$0xff]
        %v4444 = vld [vmem:[%s4437 + $0x30] sm:$0xff]
        %v4445 = vld [vmem:[%s4437 + $0x38] sm:$0xff]
        %s4446 = scalar_lea.vmem %s5, 1216
        %v4447 = vld [vmem:[%s4446] sm:$0xff]
        %v4448 = vld [vmem:[%s4446 + $0x8] sm:$0xff]
        %v4449 = vld [vmem:[%s4446 + $0x10] sm:$0xff]
        %v4450 = vld [vmem:[%s4446 + $0x18] sm:$0xff]
        %v4451 = vld [vmem:[%s4446 + $0x20] sm:$0xff]
        %v4452 = vld [vmem:[%s4446 + $0x28] sm:$0xff]
        %v4453 = vld [vmem:[%s4446 + $0x30] sm:$0xff]
        %v4454 = vld [vmem:[%s4446 + $0x38] sm:$0xff]
        %s4455 = scalar_lea.vmem %s5, 1472
        %v4456 = vld [vmem:[%s4455] sm:$0xff]
        %v4457 = vld [vmem:[%s4455 + $0x8] sm:$0xff]
        %v4458 = vld [vmem:[%s4455 + $0x10] sm:$0xff]
        %v4459 = vld [vmem:[%s4455 + $0x18] sm:$0xff]
        %v4460 = vld [vmem:[%s4455 + $0x20] sm:$0xff]
        %v4461 = vld [vmem:[%s4455 + $0x28] sm:$0xff]
        %v4462 = vld [vmem:[%s4455 + $0x30] sm:$0xff]
        %v4463 = vld [vmem:[%s4455 + $0x38] sm:$0xff]
        %4464 = vmatprep.subr.mxu0 0.0
        %4465 = vmatpush1.msra.mxu0 %v4438
        %4466 = vmatprep.subr.mxu0 0.0
        %4467 = vmatpush1.msra.mxu0 %v4439
        %4468 = vmatprep.subr.mxu0 0.0
        %4469 = vmatpush1.msra.mxu0 %v4440
        %4470 = vmatprep.subr.mxu0 0.0
        %4471 = vmatpush1.msra.mxu0 %v4441
        %4472 = vmatprep.subr.mxu0 0.0
        %4473 = vmatpush1.msra.mxu0 %v4442
        %4474 = vmatprep.subr.mxu0 0.0
        %4475 = vmatpush1.msra.mxu0 %v4443
        %4476 = vmatprep.subr.mxu0 0.0
        %4477 = vmatpush1.msra.mxu0 %v4444
        %4478 = vmatprep.subr.mxu0 0.0
        %4479 = vmatpush1.msra.mxu0 %v4445
        %4480 = vmatprep.subr.mxu0 0.0
        %4481 = vmatpush1.msra.mxu0 0.0
        %4482 = vmatprep.subr.mxu0 0.0
        %4483 = vmatpush1.msra.mxu0 0.0
        %4484 = vmatprep.subr.mxu0 0.0
        %4485 = vmatpush1.msra.mxu0 0.0
        %4486 = vmatprep.subr.mxu0 0.0
        %4487 = vmatpush1.msra.mxu0 0.0
        %4488 = vmatprep.subr.mxu0 0.0
        %4489 = vmatpush1.msra.mxu0 0.0
        %4490 = vmatprep.subr.mxu0 0.0
        %4491 = vmatpush1.msra.mxu0 0.0
        %4492 = vmatprep.subr.mxu0 0.0
        %4493 = vmatpush1.msra.mxu0 0.0
        %4494 = vmatprep.subr.mxu0 0.0
        %4495 = vmatpush1.msra.mxu0 0.0
        %4496 = vmatprep.subr.mxu0 0.0
        %4497 = vmatpush1.msra.mxu0 0.0
        %4498 = vmatprep.subr.mxu0 0.0
        %4499 = vmatpush1.msra.mxu0 0.0
        %4500 = vmatprep.subr.mxu0 0.0
        %4501 = vmatpush1.msra.mxu0 0.0
        %4502 = vmatprep.subr.mxu0 0.0
        %4503 = vmatpush1.msra.mxu0 0.0
        %4504 = vmatprep.subr.mxu0 0.0
        %4505 = vmatpush1.msra.mxu0 0.0
        %4506 = vmatprep.subr.mxu0 0.0
        %4507 = vmatpush1.msra.mxu0 0.0
        %4508 = vmatprep.subr.mxu0 0.0
        %4509 = vmatpush1.msra.mxu0 0.0
        %4510 = vmatprep.subr.mxu0 0.0
        %4511 = vmatpush1.msra.mxu0 0.0
        %4512 = vmatprep.subr.mxu0 0.0
        %4513 = vmatpush1.msra.mxu0 0.0
        %4514 = vmatprep.subr.mxu0 0.0
        %4515 = vmatpush1.msra.mxu0 0.0
        %4516 = vmatprep.subr.mxu0 0.0
        %4517 = vmatpush1.msra.mxu0 0.0
        %4518 = vmatprep.subr.mxu0 0.0
        %4519 = vmatpush1.msra.mxu0 0.0
        %4520 = vmatprep.subr.mxu0 0.0
        %4521 = vmatpush1.msra.mxu0 0.0
        %4522 = vmatprep.subr.mxu0 0.0
        %4523 = vmatpush1.msra.mxu0 0.0
        %4524 = vmatprep.subr.mxu0 0.0
        %4525 = vmatpush1.msra.mxu0 0.0
        %4526 = vmatprep.subr.mxu0 0.0
        %4527 = vmatpush1.msra.mxu0 0.0
        %4528 = vmatprep.mubr.f32.mxu0 0.0
        %4529 = vmatmul.mubr.f32.gmra.mrb[0].mxu0 %v3030
        %v4530 = vpop.f32.mrb[0].mxu0
        %v4531 = vadd.f32 0.0, %v4530
        %v4532 = vpop.f32.mrb[0].mxu0
        %4533 = vdwg.mxu0
        %4534 = vmatprep.subr.mxu0 0.0
        %4535 = vmatpush1.msra.mxu0 %v4447
        %4536 = vmatprep.subr.mxu0 0.0
        %4537 = vmatpush1.msra.mxu0 %v4448
        %4538 = vmatprep.subr.mxu0 0.0
        %4539 = vmatpush1.msra.mxu0 %v4449
        %4540 = vmatprep.subr.mxu0 0.0
        %4541 = vmatpush1.msra.mxu0 %v4450
        %4542 = vmatprep.subr.mxu0 0.0
        %4543 = vmatpush1.msra.mxu0 %v4451
        %4544 = vmatprep.subr.mxu0 0.0
        %4545 = vmatpush1.msra.mxu0 %v4452
        %4546 = vmatprep.subr.mxu0 0.0
        %4547 = vmatpush1.msra.mxu0 %v4453
        %4548 = vmatprep.subr.mxu0 0.0
        %4549 = vmatpush1.msra.mxu0 %v4454
        %4550 = vmatprep.subr.mxu0 0.0
        %4551 = vmatpush1.msra.mxu0 0.0
        %4552 = vmatprep.subr.mxu0 0.0
        %4553 = vmatpush1.msra.mxu0 0.0
        %4554 = vmatprep.subr.mxu0 0.0
        %4555 = vmatpush1.msra.mxu0 0.0
        %4556 = vmatprep.subr.mxu0 0.0
        %4557 = vmatpush1.msra.mxu0 0.0
        %4558 = vmatprep.subr.mxu0 0.0
        %4559 = vmatpush1.msra.mxu0 0.0
        %4560 = vmatprep.subr.mxu0 0.0
        %4561 = vmatpush1.msra.mxu0 0.0
        %4562 = vmatprep.subr.mxu0 0.0
        %4563 = vmatpush1.msra.mxu0 0.0
        %4564 = vmatprep.subr.mxu0 0.0
        %4565 = vmatpush1.msra.mxu0 0.0
        %4566 = vmatprep.subr.mxu0 0.0
        %4567 = vmatpush1.msra.mxu0 0.0
        %4568 = vmatprep.subr.mxu0 0.0
        %4569 = vmatpush1.msra.mxu0 0.0
        %4570 = vmatprep.subr.mxu0 0.0
        %4571 = vmatpush1.msra.mxu0 0.0
        %4572 = vmatprep.subr.mxu0 0.0
        %4573 = vmatpush1.msra.mxu0 0.0
        %4574 = vmatprep.subr.mxu0 0.0
        %4575 = vmatpush1.msra.mxu0 0.0
        %4576 = vmatprep.subr.mxu0 0.0
        %4577 = vmatpush1.msra.mxu0 0.0
        %4578 = vmatprep.subr.mxu0 0.0
        %4579 = vmatpush1.msra.mxu0 0.0
        %4580 = vmatprep.subr.mxu0 0.0
        %4581 = vmatpush1.msra.mxu0 0.0
        %4582 = vmatprep.subr.mxu0 0.0
        %4583 = vmatpush1.msra.mxu0 0.0
        %4584 = vmatprep.subr.mxu0 0.0
        %4585 = vmatpush1.msra.mxu0 0.0
        %4586 = vmatprep.subr.mxu0 0.0
        %4587 = vmatpush1.msra.mxu0 0.0
        %4588 = vmatprep.subr.mxu0 0.0
        %4589 = vmatpush1.msra.mxu0 0.0
        %4590 = vmatprep.subr.mxu0 0.0
        %4591 = vmatpush1.msra.mxu0 0.0
        %4592 = vmatprep.subr.mxu0 0.0
        %4593 = vmatpush1.msra.mxu0 0.0
        %4594 = vmatprep.subr.mxu0 0.0
        %4595 = vmatpush1.msra.mxu0 0.0
        %4596 = vmatprep.subr.mxu0 0.0
        %4597 = vmatpush1.msra.mxu0 0.0
        %4598 = vmatprep.mubr.f32.mxu0 0.0
        %4599 = vmatmul.mubr.f32.gmra.mrb[0].mxu0 %v3030
        %v4600 = vpop.f32.mrb[0].mxu0
        %v4601 = vadd.f32 0.0, %v4600
        %v4602 = vpop.f32.mrb[0].mxu0
        %4603 = vdwg.mxu0
        %4604 = vmatprep.subr.mxu0 0.0
        %4605 = vmatpush1.msra.mxu0 %v4456
        %4606 = vmatprep.subr.mxu0 0.0
        %4607 = vmatpush1.msra.mxu0 %v4457
        %4608 = vmatprep.subr.mxu0 0.0
        %4609 = vmatpush1.msra.mxu0 %v4458
        %4610 = vmatprep.subr.mxu0 0.0
        %4611 = vmatpush1.msra.mxu0 %v4459
        %4612 = vmatprep.subr.mxu0 0.0
        %4613 = vmatpush1.msra.mxu0 %v4460
        %4614 = vmatprep.subr.mxu0 0.0
        %4615 = vmatpush1.msra.mxu0 %v4461
        %4616 = vmatprep.subr.mxu0 0.0
        %4617 = vmatpush1.msra.mxu0 %v4462
        %4618 = vmatprep.subr.mxu0 0.0
        %4619 = vmatpush1.msra.mxu0 %v4463
        %4620 = vmatprep.subr.mxu0 0.0
        %4621 = vmatpush1.msra.mxu0 0.0
        %4622 = vmatprep.subr.mxu0 0.0
        %4623 = vmatpush1.msra.mxu0 0.0
        %4624 = vmatprep.subr.mxu0 0.0
        %4625 = vmatpush1.msra.mxu0 0.0
        %4626 = vmatprep.subr.mxu0 0.0
        %4627 = vmatpush1.msra.mxu0 0.0
        %4628 = vmatprep.subr.mxu0 0.0
        %4629 = vmatpush1.msra.mxu0 0.0
        %4630 = vmatprep.subr.mxu0 0.0
        %4631 = vmatpush1.msra.mxu0 0.0
        %4632 = vmatprep.subr.mxu0 0.0
        %4633 = vmatpush1.msra.mxu0 0.0
        %4634 = vmatprep.subr.mxu0 0.0
        %4635 = vmatpush1.msra.mxu0 0.0
        %4636 = vmatprep.subr.mxu0 0.0
        %4637 = vmatpush1.msra.mxu0 0.0
        %4638 = vmatprep.subr.mxu0 0.0
        %4639 = vmatpush1.msra.mxu0 0.0
        %4640 = vmatprep.subr.mxu0 0.0
        %4641 = vmatpush1.msra.mxu0 0.0
        %4642 = vmatprep.subr.mxu0 0.0
        %4643 = vmatpush1.msra.mxu0 0.0
        %4644 = vmatprep.subr.mxu0 0.0
        %4645 = vmatpush1.msra.mxu0 0.0
        %4646 = vmatprep.subr.mxu0 0.0
        %4647 = vmatpush1.msra.mxu0 0.0
        %4648 = vmatprep.subr.mxu0 0.0
        %4649 = vmatpush1.msra.mxu0 0.0
        %4650 = vmatprep.subr.mxu0 0.0
        %4651 = vmatpush1.msra.mxu0 0.0
        %4652 = vmatprep.subr.mxu0 0.0
        %4653 = vmatpush1.msra.mxu0 0.0
        %4654 = vmatprep.subr.mxu0 0.0
        %4655 = vmatpush1.msra.mxu0 0.0
        %4656 = vmatprep.subr.mxu0 0.0
        %4657 = vmatpush1.msra.mxu0 0.0
        %4658 = vmatprep.subr.mxu0 0.0
        %4659 = vmatpush1.msra.mxu0 0.0
        %4660 = vmatprep.subr.mxu0 0.0
        %4661 = vmatpush1.msra.mxu0 0.0
        %4662 = vmatprep.subr.mxu0 0.0
        %4663 = vmatpush1.msra.mxu0 0.0
        %4664 = vmatprep.subr.mxu0 0.0
        %4665 = vmatpush1.msra.mxu0 0.0
        %4666 = vmatprep.subr.mxu0 0.0
        %4667 = vmatpush1.msra.mxu0 0.0
        %4668 = vmatprep.mubr.f32.mxu0 0.0
        %4669 = vmatmul.mubr.f32.gmra.mrb[0].mxu0 %v3030
        %v4670 = vpop.f32.mrb[0].mxu0
        %v4671 = vadd.f32 0.0, %v4670
        %v4672 = vpop.f32.mrb[0].mxu0
        %4673 = vdwg.mxu0
        %v4675 = vsel %vm1049, %v4531, 0
        %v4678 = vsel %vm1049, %v4601, 0
        %4680 = vmatprep.subr.mxu0 0.0
        %4681 = vmatpush1.xpose.msra.mxu0 %v4678
        %4682 = vmatprep.subr.mxu0 0.0
        %4683 = vmatpush1.xpose.msra.mxu0 0.0
        %4684 = vmatprep.subr.mxu0 0.0
        %4685 = vmatpush1.xpose.msra.mxu0 0.0
        %4686 = vmatprep.subr.mxu0 0.0
        %4687 = vmatpush1.xpose.msra.mxu0 0.0
        %4688 = vmatprep.subr.mxu0 0.0
        %4689 = vmatpush1.xpose.msra.mxu0 0.0
        %4690 = vmatprep.subr.mxu0 0.0
        %4691 = vmatpush1.xpose.msra.mxu0 0.0
        %4692 = vmatprep.subr.mxu0 0.0
        %4693 = vmatpush1.xpose.msra.mxu0 0.0
        %4694 = vmatprep.subr.mxu0 0.0
        %4695 = vmatpush1.xpose.msra.mxu0 0.0
        %4696 = vmatprep.subr.mxu0 0.0
        %4697 = vmatpush1.xpose.msra.mxu0 0.0
        %4698 = vmatprep.subr.mxu0 0.0
        %4699 = vmatpush1.xpose.msra.mxu0 0.0
        %4700 = vmatprep.subr.mxu0 0.0
        %4701 = vmatpush1.xpose.msra.mxu0 0.0
        %4702 = vmatprep.subr.mxu0 0.0
        %4703 = vmatpush1.xpose.msra.mxu0 0.0
        %4704 = vmatprep.subr.mxu0 0.0
        %4705 = vmatpush1.xpose.msra.mxu0 0.0
        %4706 = vmatprep.subr.mxu0 0.0
        %4707 = vmatpush1.xpose.msra.mxu0 0.0
        %4708 = vmatprep.subr.mxu0 0.0
        %4709 = vmatpush1.xpose.msra.mxu0 0.0
        %4710 = vmatprep.subr.mxu0 0.0
        %4711 = vmatpush1.xpose.msra.mxu0 0.0
        %4712 = vmatprep.subr.mxu0 0.0
        %4713 = vmatpush1.xpose.msra.mxu0 0.0
        %4714 = vmatprep.subr.mxu0 0.0
        %4715 = vmatpush1.xpose.msra.mxu0 0.0
        %4716 = vmatprep.subr.mxu0 0.0
        %4717 = vmatpush1.xpose.msra.mxu0 0.0
        %4718 = vmatprep.subr.mxu0 0.0
        %4719 = vmatpush1.xpose.msra.mxu0 0.0
        %4720 = vmatprep.subr.mxu0 0.0
        %4721 = vmatpush1.xpose.msra.mxu0 0.0
        %4722 = vmatprep.subr.mxu0 0.0
        %4723 = vmatpush1.xpose.msra.mxu0 0.0
        %4724 = vmatprep.subr.mxu0 0.0
        %4725 = vmatpush1.xpose.msra.mxu0 0.0
        %4726 = vmatprep.subr.mxu0 0.0
        %4727 = vmatpush1.xpose.msra.mxu0 0.0
        %4728 = vmatprep.subr.mxu0 0.0
        %4729 = vmatpush1.xpose.msra.mxu0 0.0
        %4730 = vmatprep.subr.mxu0 0.0
        %4731 = vmatpush1.xpose.msra.mxu0 0.0
        %4732 = vmatprep.subr.mxu0 0.0
        %4733 = vmatpush1.xpose.msra.mxu0 0.0
        %4734 = vmatprep.subr.mxu0 0.0
        %4735 = vmatpush1.xpose.msra.mxu0 0.0
        %4736 = vmatprep.subr.mxu0 0.0
        %4737 = vmatpush1.xpose.msra.mxu0 0.0
        %4738 = vmatprep.subr.mxu0 0.0
        %4739 = vmatpush1.xpose.msra.mxu0 0.0
        %4740 = vmatprep.subr.mxu0 0.0
        %4741 = vmatpush1.xpose.msra.mxu0 0.0
        %4742 = vmatprep.subr.mxu0 0.0
        %4743 = vmatpush1.xpose.msra.mxu0 0.0
        %4744 = vmatprep.mubr.f32.mxu0 0.0
        %4745 = vmatmul.mubr.f32.gmra.mrb[0].mxu0 %v4675
        %v4746 = vpop.f32.mrb[0].mxu0
        %v4747 = vadd.f32 0.0, %v4746
        %v4748 = vpop.f32.mrb[0].mxu0
        %4749 = vdwg.mxu0
        %v4750 = vmul.f32 %v4747, 0.25
        %v4751 = vsel %vm1127, %v4750, -inf
        %4752 = vmax.xlane.f32.xlu0 %v4751
        %v4753 = vpop.xlane.xlu0 %4752
        %v4754 = vsub.f32 %v4750, %v4753
        %v4755 = vmul.f32 %v4754, 1.442695
        %v4756 = vpow.pop %v4755
        %v4757 = vsel %vm1127, %v4756, 0.0
        %4758 = vadd.xlane.f32.xlu0 %v4757
        %v4759 = vpop.xlane.xlu0 %4758
        %v4760 = vrcp.pop %v4759
        %v4761 = vmul.f32 %v4756, %v4760
        %v4763 = vsel %vm1139, %v4761, 0
        %v4766 = vsel %vm1143, %v4671, 0
        %4768 = vmatprep.subr.mxu0 0.0
        %4769 = vmatpush1.msra.mxu0 %v4766
        %4770 = vmatprep.subr.mxu0 0.0
        %4771 = vmatpush1.msra.mxu0 0.0
        %4772 = vmatprep.subr.mxu0 0.0
        %4773 = vmatpush1.msra.mxu0 0.0
        %4774 = vmatprep.subr.mxu0 0.0
        %4775 = vmatpush1.msra.mxu0 0.0
        %4776 = vmatprep.subr.mxu0 0.0
        %4777 = vmatpush1.msra.mxu0 0.0
        %4778 = vmatprep.subr.mxu0 0.0
        %4779 = vmatpush1.msra.mxu0 0.0
        %4780 = vmatprep.subr.mxu0 0.0
        %4781 = vmatpush1.msra.mxu0 0.0
        %4782 = vmatprep.subr.mxu0 0.0
        %4783 = vmatpush1.msra.mxu0 0.0
        %4784 = vmatprep.subr.mxu0 0.0
        %4785 = vmatpush1.msra.mxu0 0.0
        %4786 = vmatprep.subr.mxu0 0.0
        %4787 = vmatpush1.msra.mxu0 0.0
        %4788 = vmatprep.subr.mxu0 0.0
        %4789 = vmatpush1.msra.mxu0 0.0
        %4790 = vmatprep.subr.mxu0 0.0
        %4791 = vmatpush1.msra.mxu0 0.0
        %4792 = vmatprep.subr.mxu0 0.0
        %4793 = vmatpush1.msra.mxu0 0.0
        %4794 = vmatprep.subr.mxu0 0.0
        %4795 = vmatpush1.msra.mxu0 0.0
        %4796 = vmatprep.subr.mxu0 0.0
        %4797 = vmatpush1.msra.mxu0 0.0
        %4798 = vmatprep.subr.mxu0 0.0
        %4799 = vmatpush1.msra.mxu0 0.0
        %4800 = vmatprep.subr.mxu0 0.0
        %4801 = vmatpush1.msra.mxu0 0.0
        %4802 = vmatprep.subr.mxu0 0.0
        %4803 = vmatpush1.msra.mxu0 0.0
        %4804 = vmatprep.subr.mxu0 0.0
        %4805 = vmatpush1.msra.mxu0 0.0
        %4806 = vmatprep.subr.mxu0 0.0
        %4807 = vmatpush1.msra.mxu0 0.0
        %4808 = vmatprep.subr.mxu0 0.0
        %4809 = vmatpush1.msra.mxu0 0.0
        %4810 = vmatprep.subr.mxu0 0.0
        %4811 = vmatpush1.msra.mxu0 0.0
        %4812 = vmatprep.subr.mxu0 0.0
        %4813 = vmatpush1.msra.mxu0 0.0
        %4814 = vmatprep.subr.mxu0 0.0
        %4815 = vmatpush1.msra.mxu0 0.0
        %4816 = vmatprep.subr.mxu0 0.0
        %4817 = vmatpush1.msra.mxu0 0.0
        %4818 = vmatprep.subr.mxu0 0.0
        %4819 = vmatpush1.msra.mxu0 0.0
        %4820 = vmatprep.subr.mxu0 0.0
        %4821 = vmatpush1.msra.mxu0 0.0
        %4822 = vmatprep.subr.mxu0 0.0
        %4823 = vmatpush1.msra.mxu0 0.0
        %4824 = vmatprep.subr.mxu0 0.0
        %4825 = vmatpush1.msra.mxu0 0.0
        %4826 = vmatprep.subr.mxu0 0.0
        %4827 = vmatpush1.msra.mxu0 0.0
        %4828 = vmatprep.subr.mxu0 0.0
        %4829 = vmatpush1.msra.mxu0 0.0
        %4830 = vmatprep.subr.mxu0 0.0
        %4831 = vmatpush1.msra.mxu0 0.0
        %4832 = vmatprep.mubr.f32.mxu0 0.0
        %4833 = vmatmul.mubr.f32.gmra.mrb[0].mxu0 %v4763
        %v4834 = vpop.f32.mrb[0].mxu0
        %v4835 = vadd.f32 0.0, %v4834
        %v4836 = vpop.f32.mrb[0].mxu0
        %4837 = vdwg.mxu0
        %s4838 = scalar_lea.vmem %s6, 112
        %v4839 = vld [vmem:[%s4838] sm:$0xff]
        %v4840 = vld [vmem:[%s4838 + $0x8] sm:$0xff]
        %v4842 = vsel %vm1049, %v4835, 0
        %4844 = vmatprep.subr.mxu0 0.0
        %4845 = vmatpush1.msra.mxu0 %v4839
        %4846 = vmatprep.subr.mxu0 0.0
        %4847 = vmatpush1.msra.mxu0 %v4840
        %4848 = vmatprep.subr.mxu0 0.0
        %4849 = vmatpush1.msra.mxu0 0.0
        %4850 = vmatprep.subr.mxu0 0.0
        %4851 = vmatpush1.msra.mxu0 0.0
        %4852 = vmatprep.subr.mxu0 0.0
        %4853 = vmatpush1.msra.mxu0 0.0
        %4854 = vmatprep.subr.mxu0 0.0
        %4855 = vmatpush1.msra.mxu0 0.0
        %4856 = vmatprep.subr.mxu0 0.0
        %4857 = vmatpush1.msra.mxu0 0.0
        %4858 = vmatprep.subr.mxu0 0.0
        %4859 = vmatpush1.msra.mxu0 0.0
        %4860 = vmatprep.subr.mxu0 0.0
        %4861 = vmatpush1.msra.mxu0 0.0
        %4862 = vmatprep.subr.mxu0 0.0
        %4863 = vmatpush1.msra.mxu0 0.0
        %4864 = vmatprep.subr.mxu0 0.0
        %4865 = vmatpush1.msra.mxu0 0.0
        %4866 = vmatprep.subr.mxu0 0.0
        %4867 = vmatpush1.msra.mxu0 0.0
        %4868 = vmatprep.subr.mxu0 0.0
        %4869 = vmatpush1.msra.mxu0 0.0
        %4870 = vmatprep.subr.mxu0 0.0
        %4871 = vmatpush1.msra.mxu0 0.0
        %4872 = vmatprep.subr.mxu0 0.0
        %4873 = vmatpush1.msra.mxu0 0.0
        %4874 = vmatprep.subr.mxu0 0.0
        %4875 = vmatpush1.msra.mxu0 0.0
        %4876 = vmatprep.subr.mxu0 0.0
        %4877 = vmatpush1.msra.mxu0 0.0
        %4878 = vmatprep.subr.mxu0 0.0
        %4879 = vmatpush1.msra.mxu0 0.0
        %4880 = vmatprep.subr.mxu0 0.0
        %4881 = vmatpush1.msra.mxu0 0.0
        %4882 = vmatprep.subr.mxu0 0.0
        %4883 = vmatpush1.msra.mxu0 0.0
        %4884 = vmatprep.subr.mxu0 0.0
        %4885 = vmatpush1.msra.mxu0 0.0
        %4886 = vmatprep.subr.mxu0 0.0
        %4887 = vmatpush1.msra.mxu0 0.0
        %4888 = vmatprep.subr.mxu0 0.0
        %4889 = vmatpush1.msra.mxu0 0.0
        %4890 = vmatprep.subr.mxu0 0.0
        %4891 = vmatpush1.msra.mxu0 0.0
        %4892 = vmatprep.subr.mxu0 0.0
        %4893 = vmatpush1.msra.mxu0 0.0
        %4894 = vmatprep.subr.mxu0 0.0
        %4895 = vmatpush1.msra.mxu0 0.0
        %4896 = vmatprep.subr.mxu0 0.0
        %4897 = vmatpush1.msra.mxu0 0.0
        %4898 = vmatprep.subr.mxu0 0.0
        %4899 = vmatpush1.msra.mxu0 0.0
        %4900 = vmatprep.subr.mxu0 0.0
        %4901 = vmatpush1.msra.mxu0 0.0
        %4902 = vmatprep.subr.mxu0 0.0
        %4903 = vmatpush1.msra.mxu0 0.0
        %4904 = vmatprep.subr.mxu0 0.0
        %4905 = vmatpush1.msra.mxu0 0.0
        %4906 = vmatprep.subr.mxu0 0.0
        %4907 = vmatpush1.msra.mxu0 0.0
        %4908 = vmatprep.mubr.f32.mxu0 0.0
        %4909 = vmatmul.mubr.f32.gmra.mrb[0].mxu0 %v4842
        %v4910 = vpop.f32.mrb[0].mxu0
        %v4911 = vadd.f32 0.0, %v4910
        %v4912 = vpop.f32.mrb[0].mxu0
        %4913 = vdwg.mxu0
        %v4914 = vadd.f32 %v4436, %v4911
        %s4915 = scalar_lea.vmem %s7, 1
        %v4916 = vld [vmem:[%s4915] sm:$0x1]
        %v4918 = vlaneseq
        %v4919 = vshrl.u32 %v4918, 7
        %v4920 = vsub.s32 0, %v4919
        %v4921 = vrot.slane %v4916, %v4920
        %v4923 = vadd.f32 %v4914, %v4921
        %v4924 = vadd.f32 %v3001, %v4923
        %v4925 = vsel %vm780, %v4924, 0.0
        %4926 = vadd.xlane.f32.xlu0 %v4925
        %v4927 = vpop.xlane.xlu0 %4926
        %v4928 = vmul.f32 %v4927, %v784
        %v4929 = vsub.f32 %v4924, %v4928
        %v4930 = vmul.f32 %v4929, %v4929
        %v4931 = vsel %vm780, %v4930, 0.0
        %4932 = vadd.xlane.f32.xlu0 %v4931
        %v4933 = vpop.xlane.xlu0 %4932
        %v4934 = vmul.f32 %v4933, %v784
        %v4935 = vadd.f32 %v4934, 1e-05
        %v4936 = vrsqrt.pop %v4935
        %v4937 = vmul.f32 %v4929, %v4936
        %v4938 = vmul.f32 %v4937, %v2992
        %v4939 = vadd.f32 %v4938, %v2999
        %s4940 = scalar_lea.vmem %s8, 128
        %v4941 = vld [vmem:[%s4940] sm:$0xff]
        %v4942 = vld [vmem:[%s4940 + $0x8] sm:$0xff]
        %v4943 = vld [vmem:[%s4940 + $0x10] sm:$0xff]
        %v4944 = vld [vmem:[%s4940 + $0x18] sm:$0xff]
        %v4945 = vld [vmem:[%s4940 + $0x20] sm:$0xff]
        %v4946 = vld [vmem:[%s4940 + $0x28] sm:$0xff]
        %v4947 = vld [vmem:[%s4940 + $0x30] sm:$0xff]
        %v4948 = vld [vmem:[%s4940 + $0x38] sm:$0xff]
        %v4949 = vld [vmem:[%s4940 + $0x40] sm:$0xff]
        %v4950 = vld [vmem:[%s4940 + $0x48] sm:$0xff]
        %v4951 = vld [vmem:[%s4940 + $0x50] sm:$0xff]
        %v4952 = vld [vmem:[%s4940 + $0x58] sm:$0xff]
        %v4953 = vld [vmem:[%s4940 + $0x60] sm:$0xff]
        %v4954 = vld [vmem:[%s4940 + $0x68] sm:$0xff]
        %v4955 = vld [vmem:[%s4940 + $0x70] sm:$0xff]
        %v4956 = vld [vmem:[%s4940 + $0x78] sm:$0xff]
        %s4957 = scalar_lea.vmem %s9, 2
        %v4958 = vld [vmem:[%s4957] sm:$0x3]
        %v4960 = vlaneseq
        %v4961 = vshrl.u32 %v4960, 7
        %v4962 = vsub.s32 0, %v4961
        %v4963 = vrot.slane %v4958, %v4962
        %v4964 = vlaneseq
        %v4965 = vshrl.u32 %v4964, 7
        %v4966 = vsub.s32 1, %v4965
        %v4967 = vrot.slane %v4958, %v4966
        %v4971 = vsel %vm835, %v4939, 0
        %4973 = vmatprep.subr.mxu0 %v4942
        %4974 = vmatpush1.msra.mxu0 %v4941
        %4975 = vmatprep.subr.mxu0 %v4944
        %4976 = vmatpush1.msra.mxu0 %v4943
        %4977 = vmatprep.subr.mxu0 %v4946
        %4978 = vmatpush1.msra.mxu0 %v4945
        %4979 = vmatprep.subr.mxu0 %v4948
        %4980 = vmatpush1.msra.mxu0 %v4947
        %4981 = vmatprep.subr.mxu0 %v4950
        %4982 = vmatpush1.msra.mxu0 %v4949
        %4983 = vmatprep.subr.mxu0 %v4952
        %4984 = vmatpush1.msra.mxu0 %v4951
        %4985 = vmatprep.subr.mxu0 %v4954
        %4986 = vmatpush1.msra.mxu0 %v4953
        %4987 = vmatprep.subr.mxu0 %v4956
        %4988 = vmatpush1.msra.mxu0 %v4955
        %4989 = vmatprep.subr.mxu0 0.0
        %4990 = vmatpush1.msra.mxu0 0.0
        %4991 = vmatprep.subr.mxu0 0.0
        %4992 = vmatpush1.msra.mxu0 0.0
        %4993 = vmatprep.subr.mxu0 0.0
        %4994 = vmatpush1.msra.mxu0 0.0
        %4995 = vmatprep.subr.mxu0 0.0
        %4996 = vmatpush1.msra.mxu0 0.0
        %4997 = vmatprep.subr.mxu0 0.0
        %4998 = vmatpush1.msra.mxu0 0.0
        %4999 = vmatprep.subr.mxu0 0.0
        %5000 = vmatpush1.msra.mxu0 0.0
        %5001 = vmatprep.subr.mxu0 0.0
        %5002 = vmatpush1.msra.mxu0 0.0
        %5003 = vmatprep.subr.mxu0 0.0
        %5004 = vmatpush1.msra.mxu0 0.0
        %5005 = vmatprep.subr.mxu0 0.0
        %5006 = vmatpush1.msra.mxu0 0.0
        %5007 = vmatprep.subr.mxu0 0.0
        %5008 = vmatpush1.msra.mxu0 0.0
        %5009 = vmatprep.subr.mxu0 0.0
        %5010 = vmatpush1.msra.mxu0 0.0
        %5011 = vmatprep.subr.mxu0 0.0
        %5012 = vmatpush1.msra.mxu0 0.0
        %5013 = vmatprep.subr.mxu0 0.0
        %5014 = vmatpush1.msra.mxu0 0.0
        %5015 = vmatprep.subr.mxu0 0.0
        %5016 = vmatpush1.msra.mxu0 0.0
        %5017 = vmatprep.subr.mxu0 0.0
        %5018 = vmatpush1.msra.mxu0 0.0
        %5019 = vmatprep.subr.mxu0 0.0
        %5020 = vmatpush1.msra.mxu0 0.0
        %5021 = vmatprep.subr.mxu0 0.0
        %5022 = vmatpush1.msra.mxu0 0.0
        %5023 = vmatprep.subr.mxu0 0.0
        %5024 = vmatpush1.msra.mxu0 0.0
        %5025 = vmatprep.subr.mxu0 0.0
        %5026 = vmatpush1.msra.mxu0 0.0
        %5027 = vmatprep.subr.mxu0 0.0
        %5028 = vmatpush1.msra.mxu0 0.0
        %5029 = vmatprep.subr.mxu0 0.0
        %5030 = vmatpush1.msra.mxu0 0.0
        %5031 = vmatprep.subr.mxu0 0.0
        %5032 = vmatpush1.msra.mxu0 0.0
        %5033 = vmatprep.subr.mxu0 0.0
        %5034 = vmatpush1.msra.mxu0 0.0
        %5035 = vmatprep.subr.mxu0 0.0
        %5036 = vmatpush1.msra.mxu0 0.0
        %5037 = vmatprep.mubr.f32.mxu0 0.0
        %5038 = vmatmul.mubr.f32.gmra.mrb[0].mxu0 %v4971
        %v5039 = vpop.f32.mrb[0].mxu0
        %v5040 = vadd.f32 %v4963, %v5039
        %v5041 = vpop.f32.mrb[0].mxu0
        %v5042 = vadd.f32 %v4967, %v5041
        %5043 = vdwg.mxu0
        %v5044 = vmul.f32 %v5040, 0.5
        %v5045 = vmul.f32 %v5042, 0.5
        %v5046 = vmul.f32 %v5040, 0.70710677
        %v5047 = vmul.f32 %v5042, 0.70710677
        %v5048 = verf.f32.pop %v5046
        %v5049 = verf.f32.pop %v5047
        %v5050 = vadd.f32 %v5048, 1.0
        %v5051 = vadd.f32 %v5049, 1.0
        %v5052 = vmul.f32 %v5044, %v5050
        %v5053 = vmul.f32 %v5045, %v5051
        %s5054 = scalar_lea.vmem %s10, 256
        %v5055 = vld [vmem:[%s5054] sm:$0xff]
        %v5056 = vld [vmem:[%s5054 + $0x8] sm:$0xff]
        %v5057 = vld [vmem:[%s5054 + $0x10] sm:$0xff]
        %v5058 = vld [vmem:[%s5054 + $0x18] sm:$0xff]
        %v5059 = vld [vmem:[%s5054 + $0x20] sm:$0xff]
        %v5060 = vld [vmem:[%s5054 + $0x28] sm:$0xff]
        %v5061 = vld [vmem:[%s5054 + $0x30] sm:$0xff]
        %v5062 = vld [vmem:[%s5054 + $0x38] sm:$0xff]
        %v5063 = vld [vmem:[%s5054 + $0x40] sm:$0xff]
        %v5064 = vld [vmem:[%s5054 + $0x48] sm:$0xff]
        %v5065 = vld [vmem:[%s5054 + $0x50] sm:$0xff]
        %v5066 = vld [vmem:[%s5054 + $0x58] sm:$0xff]
        %v5067 = vld [vmem:[%s5054 + $0x60] sm:$0xff]
        %v5068 = vld [vmem:[%s5054 + $0x68] sm:$0xff]
        %v5069 = vld [vmem:[%s5054 + $0x70] sm:$0xff]
        %v5070 = vld [vmem:[%s5054 + $0x78] sm:$0xff]
        %v5071 = vld [vmem:[%s5054 + $0x80] sm:$0xff]
        %v5072 = vld [vmem:[%s5054 + $0x88] sm:$0xff]
        %v5073 = vld [vmem:[%s5054 + $0x90] sm:$0xff]
        %v5074 = vld [vmem:[%s5054 + $0x98] sm:$0xff]
        %v5075 = vld [vmem:[%s5054 + $0xa0] sm:$0xff]
        %v5076 = vld [vmem:[%s5054 + $0xa8] sm:$0xff]
        %v5077 = vld [vmem:[%s5054 + $0xb0] sm:$0xff]
        %v5078 = vld [vmem:[%s5054 + $0xb8] sm:$0xff]
        %v5079 = vld [vmem:[%s5054 + $0xc0] sm:$0xff]
        %v5080 = vld [vmem:[%s5054 + $0xc8] sm:$0xff]
        %v5081 = vld [vmem:[%s5054 + $0xd0] sm:$0xff]
        %v5082 = vld [vmem:[%s5054 + $0xd8] sm:$0xff]
        %v5083 = vld [vmem:[%s5054 + $0xe0] sm:$0xff]
        %v5084 = vld [vmem:[%s5054 + $0xe8] sm:$0xff]
        %v5085 = vld [vmem:[%s5054 + $0xf0] sm:$0xff]
        %v5086 = vld [vmem:[%s5054 + $0xf8] sm:$0xff]
        %s5087 = scalar_lea.vmem %s11, 1
        %v5088 = vld [vmem:[%s5087] sm:$0x1]
        %v5090 = vlaneseq
        %v5091 = vshrl.u32 %v5090, 7
        %v5092 = vsub.s32 0, %v5091
        %v5093 = vrot.slane %v5088, %v5092
        %5095 = vmatprep.subr.mxu0 0.0
        %5096 = vmatpush1.msra.mxu0 %v5055
        %5097 = vmatprep.subr.mxu0 0.0
        %5098 = vmatpush1.msra.mxu0 %v5056
        %5099 = vmatprep.subr.mxu0 0.0
        %5100 = vmatpush1.msra.mxu0 %v5057
        %5101 = vmatprep.subr.mxu0 0.0
        %5102 = vmatpush1.msra.mxu0 %v5058
        %5103 = vmatprep.subr.mxu0 0.0
        %5104 = vmatpush1.msra.mxu0 %v5059
        %5105 = vmatprep.subr.mxu0 0.0
        %5106 = vmatpush1.msra.mxu0 %v5060
        %5107 = vmatprep.subr.mxu0 0.0
        %5108 = vmatpush1.msra.mxu0 %v5061
        %5109 = vmatprep.subr.mxu0 0.0
        %5110 = vmatpush1.msra.mxu0 %v5062
        %5111 = vmatprep.subr.mxu0 0.0
        %5112 = vmatpush1.msra.mxu0 %v5063
        %5113 = vmatprep.subr.mxu0 0.0
        %5114 = vmatpush1.msra.mxu0 %v5064
        %5115 = vmatprep.subr.mxu0 0.0
        %5116 = vmatpush1.msra.mxu0 %v5065
        %5117 = vmatprep.subr.mxu0 0.0
        %5118 = vmatpush1.msra.mxu0 %v5066
        %5119 = vmatprep.subr.mxu0 0.0
        %5120 = vmatpush1.msra.mxu0 %v5067
        %5121 = vmatprep.subr.mxu0 0.0
        %5122 = vmatpush1.msra.mxu0 %v5068
        %5123 = vmatprep.subr.mxu0 0.0
        %5124 = vmatpush1.msra.mxu0 %v5069
        %5125 = vmatprep.subr.mxu0 0.0
        %5126 = vmatpush1.msra.mxu0 %v5070
        %5127 = vmatprep.subr.mxu0 0.0
        %5128 = vmatpush1.msra.mxu0 %v5071
        %5129 = vmatprep.subr.mxu0 0.0
        %5130 = vmatpush1.msra.mxu0 %v5072
        %5131 = vmatprep.subr.mxu0 0.0
        %5132 = vmatpush1.msra.mxu0 %v5073
        %5133 = vmatprep.subr.mxu0 0.0
        %5134 = vmatpush1.msra.mxu0 %v5074
        %5135 = vmatprep.subr.mxu0 0.0
        %5136 = vmatpush1.msra.mxu0 %v5075
        %5137 = vmatprep.subr.mxu0 0.0
        %5138 = vmatpush1.msra.mxu0 %v5076
        %5139 = vmatprep.subr.mxu0 0.0
        %5140 = vmatpush1.msra.mxu0 %v5077
        %5141 = vmatprep.subr.mxu0 0.0
        %5142 = vmatpush1.msra.mxu0 %v5078
        %5143 = vmatprep.subr.mxu0 0.0
        %5144 = vmatpush1.msra.mxu0 %v5079
        %5145 = vmatprep.subr.mxu0 0.0
        %5146 = vmatpush1.msra.mxu0 %v5080
        %5147 = vmatprep.subr.mxu0 0.0
        %5148 = vmatpush1.msra.mxu0 %v5081
        %5149 = vmatprep.subr.mxu0 0.0
        %5150 = vmatpush1.msra.mxu0 %v5082
        %5151 = vmatprep.subr.mxu0 0.0
        %5152 = vmatpush1.msra.mxu0 %v5083
        %5153 = vmatprep.subr.mxu0 0.0
        %5154 = vmatpush1.msra.mxu0 %v5084
        %5155 = vmatprep.subr.mxu0 0.0
        %5156 = vmatpush1.msra.mxu0 %v5085
        %5157 = vmatprep.subr.mxu0 0.0
        %5158 = vmatpush1.msra.mxu0 %v5086
        %5159 = vmatprep.mubr.f32.mxu0 %v5053
        %5160 = vmatmul.mubr.f32.gmra.mrb[0].mxu0 %v5052
        %v5161 = vpop.f32.mrb[0].mxu0
        %v5162 = vadd.f32 %v5093, %v5161
        %v5163 = vpop.f32.mrb[0].mxu0
        %5164 = vdwg.mxu0
        %v5165 = vadd.f32 %v4939, %v5162
        %v5166 = vld [vmem:[%s12] sm:$0xff]
        %v5167 = vld [vmem:[%s12 + $0x8] sm:$0xff]
        %v5168 = vld [vmem:[%s12 + $0x10] sm:$0xff]
        %v5169 = vld [vmem:[%s12 + $0x18] sm:$0xff]
        %v5170 = vld [vmem:[%s12 + $0x20] sm:$0xff]
        %v5171 = vld [vmem:[%s12 + $0x28] sm:$0xff]
        %v5172 = vld [vmem:[%s12 + $0x30] sm:$0xff]
        %v5173 = vld [vmem:[%s12 + $0x38] sm:$0xff]
        %v5174 = vld [vmem:[%s13] sm:$0x1]
        %v5176 = vsel %vm835, %v5165, 0
        %5178 = vmatprep.subr.mxu0 0.0
        %5179 = vmatpush1.msra.mxu0 %v5166
        %5180 = vmatprep.subr.mxu0 0.0
        %5181 = vmatpush1.msra.mxu0 %v5167
        %5182 = vmatprep.subr.mxu0 0.0
        %5183 = vmatpush1.msra.mxu0 %v5168
        %5184 = vmatprep.subr.mxu0 0.0
        %5185 = vmatpush1.msra.mxu0 %v5169
        %5186 = vmatprep.subr.mxu0 0.0
        %5187 = vmatpush1.msra.mxu0 %v5170
        %5188 = vmatprep.subr.mxu0 0.0
        %5189 = vmatpush1.msra.mxu0 %v5171
        %5190 = vmatprep.subr.mxu0 0.0
        %5191 = vmatpush1.msra.mxu0 %v5172
        %5192 = vmatprep.subr.mxu0 0.0
        %5193 = vmatpush1.msra.mxu0 %v5173
        %5194 = vmatprep.subr.mxu0 0.0
        %5195 = vmatpush1.msra.mxu0 0.0
        %5196 = vmatprep.subr.mxu0 0.0
        %5197 = vmatpush1.msra.mxu0 0.0
        %5198 = vmatprep.subr.mxu0 0.0
        %5199 = vmatpush1.msra.mxu0 0.0
        %5200 = vmatprep.subr.mxu0 0.0
        %5201 = vmatpush1.msra.mxu0 0.0
        %5202 = vmatprep.subr.mxu0 0.0
        %5203 = vmatpush1.msra.mxu0 0.0
        %5204 = vmatprep.subr.mxu0 0.0
        %5205 = vmatpush1.msra.mxu0 0.0
        %5206 = vmatprep.subr.mxu0 0.0
        %5207 = vmatpush1.msra.mxu0 0.0
        %5208 = vmatprep.subr.mxu0 0.0
        %5209 = vmatpush1.msra.mxu0 0.0
        %5210 = vmatprep.subr.mxu0 0.0
        %5211 = vmatpush1.msra.mxu0 0.0
        %5212 = vmatprep.subr.mxu0 0.0
        %5213 = vmatpush1.msra.mxu0 0.0
        %5214 = vmatprep.subr.mxu0 0.0
        %5215 = vmatpush1.msra.mxu0 0.0
        %5216 = vmatprep.subr.mxu0 0.0
        %5217 = vmatpush1.msra.mxu0 0.0
        %5218 = vmatprep.subr.mxu0 0.0
        %5219 = vmatpush1.msra.mxu0 0.0
        %5220 = vmatprep.subr.mxu0 0.0
        %5221 = vmatpush1.msra.mxu0 0.0
        %5222 = vmatprep.subr.mxu0 0.0
        %5223 = vmatpush1.msra.mxu0 0.0
        %5224 = vmatprep.subr.mxu0 0.0
        %5225 = vmatpush1.msra.mxu0 0.0
        %5226 = vmatprep.subr.mxu0 0.0
        %5227 = vmatpush1.msra.mxu0 0.0
        %5228 = vmatprep.subr.mxu0 0.0
        %5229 = vmatpush1.msra.mxu0 0.0
        %5230 = vmatprep.subr.mxu0 0.0
        %5231 = vmatpush1.msra.mxu0 0.0
        %5232 = vmatprep.subr.mxu0 0.0
        %5233 = vmatpush1.msra.mxu0 0.0
        %5234 = vmatprep.subr.mxu0 0.0
        %5235 = vmatpush1.msra.mxu0 0.0
        %5236 = vmatprep.subr.mxu0 0.0
        %5237 = vmatpush1.msra.mxu0 0.0
        %5238 = vmatprep.subr.mxu0 0.0
        %5239 = vmatpush1.msra.mxu0 0.0
        %5240 = vmatprep.subr.mxu0 0.0
        %5241 = vmatpush1.msra.mxu0 0.0
        %5242 = vmatprep.mubr.f32.mxu0 0.0
        %5243 = vmatmul.mubr.f32.gmra.mrb[0].mxu0 %v5176
        %v5244 = vpop.f32.mrb[0].mxu0
        %v5245 = vadd.f32 %v5174, %v5244
        %v5246 = vpop.f32.mrb[0].mxu0
        %5247 = vdwg.mxu0
        %5248 = vst [vmem:[%s459] sm:$0x1] %v5245
        %s5249 = sand.u32 %s335, 1
        %s5250 = scalar_lea.sflag [#allocation3], %s5249
        %s5251 = sand.u32 %s335, 1
        %s5252 = scalar_lea.vmem [#allocation2], %s5251
        // Predicated region
        $region77: #{_lambda_.1} parent=75 // pred_check
          %p5253 = pneg %p345
        $region78: #{_lambda_.1} parent=75 // pred_check_branch
          %5255 = sbr.rel (%p5253) target = $region80
        $region79: #{_lambda_.1} parent=75 // pred_region
          %s5257 = ssub.s32 16, 16
          %5258 = vsyncadd %s5250, %s5257
          %s5259 = smul.addr %s28, 16
          %s5260 = scalar_lea.hbm %s14, %s5259
          %s5262 = sshll.u32 %s5252, 4
          %s5263 = int_to_ptr.vmem [resolvable:$true] %s5262
          %5265 = dma.vmem_to_hbm [thread:$0]  %s5263, 16, %s5260, %s5250
        $region80: #{_lambda_.1} parent=75 // pred_fallthru
          _
      $region76: #{_lambda_.1} parent=5 // pred_fallthru
        _
      %p5266 = scmp.le.s32.totalorder 2, %s23
      // Predicated region
      $region81: #{_lambda_.1} parent=5 // pred_check
        %p5267 = pneg %p5266
      $region82: #{_lambda_.1} parent=5 // pred_check_branch
        %5269 = sbr.rel (%p5267) target = $region84
      $region83: #{_lambda_.1} parent=5 // pred_region
        %s5270 = ssub.s32 %s23, 2
        // Predicated region
        $region85: #{_lambda_.1} parent=83 // pred_check
          %p5271 = pneg %p351
        $region86: #{_lambda_.1} parent=83 // pred_check_branch
          %5273 = sbr.rel (%p5271) target = $region88
        $region87: #{_lambda_.1} parent=83 // pred_region
          %s5274 = sand.u32 %s336, 1
          %s5275 = scalar_lea.sflag [#allocation3], %s5274
          %s5276 = sand.u32 %s336, 1
          %s5277 = scalar_lea.vmem [#allocation2], %s5276
          %5278 = dma.done %s5275, 16
        $region88: #{_lambda_.1} parent=83 // pred_fallthru
          _
      $region84: #{_lambda_.1} parent=5 // pred_fallthru
        _
    $region6: #{_lambda_.1} parent=1 // loop_footer
      %s27 = sadd.s32 1, %s23
    $region7: #{_lambda_.1} parent=1 // loop_footer_branch
      %22 = sbr.rel target = $region3
    $region8: #{_lambda_.1} parent=1 // loop_exit
      _
    %5279 = vsyncpa [#allocation3], 1
    %s5280 = scalar_lea.sflag [#allocation3], 1
    %5281 = vsyncpa %s5280, 1

</llo_original>
